<compile_context>
chip_gen: v7x
topology: tpu7x:2x2x1
jax: 0.10.0
libtpu: 0.0.40
codegen_flags: <defaults>
</compile_context>

<pallas_src>
import functools

import jax
import jax.numpy as jnp
import numpy as np
from jax.experimental import pallas as pl
from jax.experimental.pallas import tpu as pltpu


NEG_INF = -1e30  # large negative bias for padded key columns (f32-safe, no NaN)


def _relative_attention_kernel(x_ref, wq_ref, wk_ref, wv_ref, wproj_ref,
                               bproj_ref, bias_ref, o_ref, *,
                               num_heads, head_dim, scale, n_valid):
    Bt, Np, C = x_ref.shape          # (batch tile, padded tokens, channels)
    H, hd = num_heads, head_dim
    R = Bt * Np

    # ---- Q / K / V projections: three C-wide MXU matmuls (bf16 in, f32 acc) ----
    x_bf = x_ref[...].reshape(R, C).astype(jnp.bfloat16)
    q = jnp.dot(x_bf, wq_ref[...], preferred_element_type=jnp.float32) * scale
    k = jnp.dot(x_bf, wk_ref[...], preferred_element_type=jnp.float32)
    v = jnp.dot(x_bf, wv_ref[...], preferred_element_type=jnp.float32)

    # ---- one head->batch relayout per tensor (heads leave the lane axis) ----
    # all attention math below is batched over g = h*Bt + b; no per-head unroll.
    def to_heads(t):                                   # (R, C) -> (H*Bt, Np, hd)
        t = t.reshape(Bt, Np, C)
        t = jnp.stack([t[:, :, h * hd:(h + 1) * hd] for h in range(H)], axis=0)
        return t.reshape(H * Bt, Np, hd).astype(jnp.bfloat16)

    q_g, k_g, v_g = to_heads(q), to_heads(k), to_heads(v)

    # ---- all-head scores in one batched MXU contraction ----
    s = jnp.einsum('gnd,gmd->gnm', q_g, k_g,
                   preferred_element_type=jnp.float32)          # (H*Bt, Np, Np)
    s = s.reshape(H, Bt, Np, Np) + bias_ref[...][:, None]       # bias masks pad keys

    # ---- single softmax over all heads (f32); reciprocal on the EUP slot ----
    m = jnp.max(s, axis=-1, keepdims=True)
    e = jnp.exp(s - m)
    p = e * pl.reciprocal(jnp.sum(e, axis=-1, keepdims=True), approx=True)
    # attn_drop / proj_drop have p=0.0 -> identity at inference.

    # ---- context for all heads in one batched contraction ----
    ctx = jnp.einsum('gnm,gmd->gnd',
                     p.reshape(H * Bt, Np, Np).astype(jnp.bfloat16), v_g,
                     preferred_element_type=jnp.float32)        # (H*Bt, Np, hd)

    # ---- single head->lane relayout, then ONE K=C output projection ----
    ctx = ctx.reshape(H, Bt, Np, hd)
    ctx = jnp.concatenate([ctx[h] for h in range(H)], axis=-1)  # (Bt, Np, C)
    out = jnp.dot(ctx.reshape(R, C).astype(jnp.bfloat16), wproj_ref[...],
                  preferred_element_type=jnp.float32)
    out = (out + bproj_ref[...]).reshape(Bt, Np, C)

    # store only the valid token rows (drops the padded query rows in-kernel)
    o_ref[...] = out[:, :n_valid, :].astype(o_ref.dtype)


def _tensorcores_per_chip():
    """2 TensorCores only on v7x; v5e/v6e are single-TC chips."""
    try:
        kind = jax.devices()[0].device_kind.lower()
    except Exception:
        return 1
    return 2 if "v7" in kind else 1


def _pick_batch_tile(B, n_tc):
    """Single-TC chips: one grid step (no pipeline overhead). Multi-TC: the
    largest batch tile that still leaves >= n_tc parallel grid steps."""
    if n_tc <= 1 or B < 2:
        return B
    for bt in range(max(B // n_tc, 1), 0, -1):
        if B % bt == 0:
            return bt
    return 1


def relative_attention_pallas(x, wqkv, wproj, bproj, rel_bias, *, num_heads, scale):
    B, N, C = x.shape
    head_dim = C // num_heads

    # Pad token count to a multiple of 16 (bf16 sublane tile) so the bf16 MXU
    # tiles are clean on v6e/v7x. Padded key columns are masked via the bias.
    Np = ((N + 15) // 16) * 16
    pad = Np - N
    if pad:
        x_p = jnp.pad(x, ((0, 0), (0, pad), (0, 0)))
        bias_p = jnp.pad(rel_bias, ((0, 0), (0, pad), (0, pad)))
        key_is_pad = (jnp.arange(Np) >= N)[None, None, :]
        bias_p = jnp.where(key_is_pad, jnp.float32(NEG_INF), bias_p)
    else:
        x_p, bias_p = x, rel_bias
    bias_p = bias_p.astype(jnp.float32)

    # Split the qkv weight into three C-wide projections (no in-kernel slicing
    # of a 3C-lane tensor). MXU operands pre-cast to bf16; accumulation is f32.
    wq = wqkv[:, :C].astype(jnp.bfloat16)
    wk = wqkv[:, C:2 * C].astype(jnp.bfloat16)
    wv = wqkv[:, 2 * C:].astype(jnp.bfloat16)
    wproj_bf = wproj.astype(jnp.bfloat16)
    bproj_f32 = bproj.astype(jnp.float32)

    n_tc = _tensorcores_per_chip()
    Bt = _pick_batch_tile(B, n_tc)
    grid = (B // Bt,)

    kernel = functools.partial(_relative_attention_kernel,
                               num_heads=num_heads, head_dim=head_dim,
                               scale=scale, n_valid=N)

    return pl.pallas_call(
        kernel,
        out_shape=jax.ShapeDtypeStruct((B, N, C), x.dtype),
        grid_spec=pltpu.PrefetchScalarGridSpec(
            num_scalar_prefetch=0,
            grid=grid,
            in_specs=[
                pl.BlockSpec((Bt, Np, C), lambda b: (b, 0, 0)),            # x
                pl.BlockSpec((C, C), lambda b: (0, 0)),                    # wq
                pl.BlockSpec((C, C), lambda b: (0, 0)),                    # wk
                pl.BlockSpec((C, C), lambda b: (0, 0)),                    # wv
                pl.BlockSpec((C, C), lambda b: (0, 0)),                    # wproj
                pl.BlockSpec((1, C), lambda b: (0, 0)),                    # bproj
                pl.BlockSpec((num_heads, Np, Np), lambda b: (0, 0, 0)),    # rel bias
            ],
            out_specs=pl.BlockSpec((Bt, N, C), lambda b: (b, 0, 0)),       # unpadded out
        ),
        compiler_params=pltpu.CompilerParams(
            dimension_semantics=("parallel",)),   # all blocks fit VMEM comfortably
    )(x_p, wq, wk, wv, wproj_bf, bproj_f32, bias_p)


def build_relative_position_index(img_size, extra_token_num):
    """Exactly mirrors the PyTorch buffer construction (including F.pad with 0)."""
    H, W = img_size
    coords_h = np.arange(H)
    coords_w = np.arange(W)
    coords = np.stack(np.meshgrid(coords_h, coords_w, indexing="ij"))   # (2, H, W)
    coords_flatten = coords.reshape(2, -1)                              # (2, H*W)
    relative_coords = coords_flatten[:, :, None] - coords_flatten[:, None, :]
    relative_coords = relative_coords.transpose(1, 2, 0).copy()         # (S, S, 2)
    relative_coords[:, :, 0] += H - 1
    relative_coords[:, :, 1] += W - 1
    relative_coords[:, :, 0] *= 2 * W - 1
    rel_index = relative_coords.sum(-1)                                 # (S, S)
    rel_index = np.pad(rel_index,
                       ((extra_token_num, 0), (extra_token_num, 0)),
                       constant_values=0)
    return rel_index.astype(np.int32)                                   # (N, N)


def reference_jax(x, wqkv, wproj, bproj, rel_bias, *, num_heads, scale):
    """Pure-JAX f32 replica of the PyTorch forward for verification."""
    B, N, C = x.shape
    hd = C // num_heads
    qkv = (x @ wqkv).reshape(B, N, 3, num_heads, hd).transpose(2, 0, 3, 1, 4)
    q, k, v = qkv[0] * scale, qkv[1], qkv[2]
    attn = jnp.einsum("bhnd,bhmd->bhnm", q, k) + rel_bias[None]
    attn = jax.nn.softmax(attn, axis=-1)
    out = jnp.einsum("bhnm,bhmd->bhnd", attn, v)
    out = out.transpose(0, 2, 1, 3).reshape(B, N, C)
    return out @ wproj + bproj[0]


if __name__ == "__main__":
    # Small, forward-consistent shapes (B=4, N=17, C=64, 8 heads of dim 8).
    B = 4
    dim = 64
    num_heads = 8
    img_size = (4, 4)
    extra_token_num = 1
    N = img_size[0] * img_size[1] + extra_token_num     # 17 tokens
    head_dim = dim // num_heads
    scale = head_dim ** (-0.5)

    key = jax.random.PRNGKey(0)
    k_x, k_tab, k_qkv, k_proj, k_bproj = jax.random.split(key, 5)

    x = jax.random.normal(k_x, (B, N, dim), dtype=jnp.float32)

    # Parameters (deterministic synthetic init).
    table_rows = (2 * img_size[0] - 1) * (2 * img_size[1] - 1) + 1
    rel_pos_table = 0.02 * jax.random.normal(k_tab, (table_rows, num_heads),
                                             dtype=jnp.float32)  # ~trunc_normal(0.02)
    wqkv = 0.05 * jax.random.normal(k_qkv, (dim, 3 * dim), dtype=jnp.float32)
    wproj = 0.05 * jax.random.normal(k_proj, (dim, dim), dtype=jnp.float32)
    bproj = 0.05 * jax.random.normal(k_bproj, (1, dim), dtype=jnp.float32)

    # Gather the relative position bias (glue, plain JAX indexing).
    rel_index = jnp.asarray(build_relative_position_index(img_size, extra_token_num))
    rel_bias = rel_pos_table[rel_index.reshape(-1)]                  # (N*N, H)
    rel_bias = rel_bias.reshape(N, N, num_heads).transpose(2, 0, 1)  # (H, N, N)

    out = relative_attention_pallas(x, wqkv, wproj, bproj, rel_bias,
                                    num_heads=num_heads, scale=scale)
    out = jax.block_until_ready(out)

    ref = reference_jax(x, wqkv, wproj, bproj, rel_bias,
                        num_heads=num_heads, scale=scale)
    assert out.shape == (B, N, dim)
    max_err = float(jnp.max(jnp.abs(out - ref)))
    mean_err = float(jnp.mean(jnp.abs(out - ref)))
    # Tolerances account for bf16 MXU operands (f32 accumulation) and the
    # approx EUP reciprocal in the softmax normalization.
    assert max_err < 1e-2, f"max abs err {max_err}"
    assert mean_err < 1e-3, f"mean abs err {mean_err}"

    print("KERNEL_OK")
</pallas_src>

<mosaic_0001>
module attributes {stable_mosaic.version = 11 : i64} {
  func.func @_relative_attention_kernel(%arg0: i32, %arg1: memref<4x32x64xf32, #tpu.memory_space<vmem>>, %arg2: memref<64x64xbf16, #tpu.memory_space<vmem>>, %arg3: memref<64x64xbf16, #tpu.memory_space<vmem>>, %arg4: memref<64x64xbf16, #tpu.memory_space<vmem>>, %arg5: memref<64x64xbf16, #tpu.memory_space<vmem>>, %arg6: memref<1x64xf32, #tpu.memory_space<vmem>>, %arg7: memref<8x32x32xf32, #tpu.memory_space<vmem>>, %arg8: memref<4x17x64xf32, #tpu.memory_space<vmem>>) attributes {dimension_semantics = [#tpu.dimension_semantics<parallel>], iteration_bounds = array<i64: 1>, scalar_prefetch = 0 : i64, scratch_operands = 0 : i64, tpu.core_type = #tpu.core_type<tc>, window_params = [{transform_indices = @transform_0, window_bounds = array<i64: 4, 32, 64>}, {pipeline_mode = #tpu.pipeline_mode<synchronous>, transform_indices = @transform_1, window_bounds = array<i64: 64, 64>}, {pipeline_mode = #tpu.pipeline_mode<synchronous>, transform_indices = @transform_2, window_bounds = array<i64: 64, 64>}, {pipeline_mode = #tpu.pipeline_mode<synchronous>, transform_indices = @transform_3, window_bounds = array<i64: 64, 64>}, {pipeline_mode = #tpu.pipeline_mode<synchronous>, transform_indices = @transform_4, window_bounds = array<i64: 64, 64>}, {pipeline_mode = #tpu.pipeline_mode<synchronous>, transform_indices = @transform_5, window_bounds = array<i64: 1, 64>}, {pipeline_mode = #tpu.pipeline_mode<synchronous>, transform_indices = @transform_6, window_bounds = array<i64: 8, 32, 32>}, {transform_indices = @transform_7, window_bounds = array<i64: 4, 17, 64>}]} {
    %c0 = arith.constant 0 : index
    %c0_0 = arith.constant 0 : index
    %c0_1 = arith.constant 0 : index
    %0 = vector.load %arg1[%c0, %c0_0, %c0_1] : memref<4x32x64xf32, #tpu.memory_space<vmem>>, vector<4x32x64xf32>
    %1 = vector.shape_cast %0 : vector<4x32x64xf32> to vector<128x64xf32>
    %2 = arith.truncf %1 : vector<128x64xf32> to vector<128x64xbf16>
    %c0_2 = arith.constant 0 : index
    %c0_3 = arith.constant 0 : index
    %3 = vector.load %arg2[%c0_2, %c0_3] : memref<64x64xbf16, #tpu.memory_space<vmem>>, vector<64x64xbf16>
    %cst = arith.constant dense<0.000000e+00> : vector<128x64xf32>
    %4 = tpu.matmul %2, %3, %cst {dimension_numbers = #tpu.dot_dimension_numbers<[1], [0], [0], [1], [0, 0, 1, 1], [], []>} : vector<128x64xbf16>, vector<64x64xbf16>, vector<128x64xf32> -> vector<128x64xf32>
    %cst_4 = arith.constant 0.353553385 : f32
    %5 = vector.broadcast %cst_4 : f32 to vector<128x64xf32>
    %6 = arith.mulf %4, %5 : vector<128x64xf32>
    %c0_5 = arith.constant 0 : index
    %c0_6 = arith.constant 0 : index
    %7 = vector.load %arg3[%c0_5, %c0_6] : memref<64x64xbf16, #tpu.memory_space<vmem>>, vector<64x64xbf16>
    %cst_7 = arith.constant dense<0.000000e+00> : vector<128x64xf32>
    %8 = tpu.matmul %2, %7, %cst_7 {dimension_numbers = #tpu.dot_dimension_numbers<[1], [0], [0], [1], [0, 0, 1, 1], [], []>} : vector<128x64xbf16>, vector<64x64xbf16>, vector<128x64xf32> -> vector<128x64xf32>
    %c0_8 = arith.constant 0 : index
    %c0_9 = arith.constant 0 : index
    %9 = vector.load %arg4[%c0_8, %c0_9] : memref<64x64xbf16, #tpu.memory_space<vmem>>, vector<64x64xbf16>
    %cst_10 = arith.constant dense<0.000000e+00> : vector<128x64xf32>
    %10 = tpu.matmul %2, %9, %cst_10 {dimension_numbers = #tpu.dot_dimension_numbers<[1], [0], [0], [1], [0, 0, 1, 1], [], []>} : vector<128x64xbf16>, vector<64x64xbf16>, vector<128x64xf32> -> vector<128x64xf32>
    %11 = vector.shape_cast %6 : vector<128x64xf32> to vector<4x32x64xf32>
    %12 = vector.extract_strided_slice %11 {offsets = [0, 0, 0], sizes = [4, 32, 8], strides = [1, 1, 1]} : vector<4x32x64xf32> to vector<4x32x8xf32>
    %13 = vector.extract_strided_slice %11 {offsets = [0, 0, 8], sizes = [4, 32, 8], strides = [1, 1, 1]} : vector<4x32x64xf32> to vector<4x32x8xf32>
    %14 = vector.extract_strided_slice %11 {offsets = [0, 0, 16], sizes = [4, 32, 8], strides = [1, 1, 1]} : vector<4x32x64xf32> to vector<4x32x8xf32>
    %15 = vector.extract_strided_slice %11 {offsets = [0, 0, 24], sizes = [4, 32, 8], strides = [1, 1, 1]} : vector<4x32x64xf32> to vector<4x32x8xf32>
    %16 = vector.extract_strided_slice %11 {offsets = [0, 0, 32], sizes = [4, 32, 8], strides = [1, 1, 1]} : vector<4x32x64xf32> to vector<4x32x8xf32>
    %17 = vector.extract_strided_slice %11 {offsets = [0, 0, 40], sizes = [4, 32, 8], strides = [1, 1, 1]} : vector<4x32x64xf32> to vector<4x32x8xf32>
    %18 = vector.extract_strided_slice %11 {offsets = [0, 0, 48], sizes = [4, 32, 8], strides = [1, 1, 1]} : vector<4x32x64xf32> to vector<4x32x8xf32>
    %19 = vector.extract_strided_slice %11 {offsets = [0, 0, 56], sizes = [4, 32, 8], strides = [1, 1, 1]} : vector<4x32x64xf32> to vector<4x32x8xf32>
    %20 = vector.shape_cast %12 : vector<4x32x8xf32> to vector<1x4x32x8xf32>
    %21 = vector.shape_cast %13 : vector<4x32x8xf32> to vector<1x4x32x8xf32>
    %22 = vector.shape_cast %14 : vector<4x32x8xf32> to vector<1x4x32x8xf32>
    %23 = vector.shape_cast %15 : vector<4x32x8xf32> to vector<1x4x32x8xf32>
    %24 = vector.shape_cast %16 : vector<4x32x8xf32> to vector<1x4x32x8xf32>
    %25 = vector.shape_cast %17 : vector<4x32x8xf32> to vector<1x4x32x8xf32>
    %26 = vector.shape_cast %18 : vector<4x32x8xf32> to vector<1x4x32x8xf32>
    %27 = vector.shape_cast %19 : vector<4x32x8xf32> to vector<1x4x32x8xf32>
    %28 = tpu.concatenate %20, %21, %22, %23, %24, %25, %26, %27 in 0 : vector<1x4x32x8xf32>, vector<1x4x32x8xf32>, vector<1x4x32x8xf32>, vector<1x4x32x8xf32>, vector<1x4x32x8xf32>, vector<1x4x32x8xf32>, vector<1x4x32x8xf32>, vector<1x4x32x8xf32> -> vector<8x4x32x8xf32>
    %29 = vector.shape_cast %28 : vector<8x4x32x8xf32> to vector<32x32x8xf32>
    %30 = arith.truncf %29 : vector<32x32x8xf32> to vector<32x32x8xbf16>
    %31 = vector.shape_cast %8 : vector<128x64xf32> to vector<4x32x64xf32>
    %32 = vector.extract_strided_slice %31 {offsets = [0, 0, 0], sizes = [4, 32, 8], strides = [1, 1, 1]} : vector<4x32x64xf32> to vector<4x32x8xf32>
    %33 = vector.extract_strided_slice %31 {offsets = [0, 0, 8], sizes = [4, 32, 8], strides = [1, 1, 1]} : vector<4x32x64xf32> to vector<4x32x8xf32>
    %34 = vector.extract_strided_slice %31 {offsets = [0, 0, 16], sizes = [4, 32, 8], strides = [1, 1, 1]} : vector<4x32x64xf32> to vector<4x32x8xf32>
    %35 = vector.extract_strided_slice %31 {offsets = [0, 0, 24], sizes = [4, 32, 8], strides = [1, 1, 1]} : vector<4x32x64xf32> to vector<4x32x8xf32>
    %36 = vector.extract_strided_slice %31 {offsets = [0, 0, 32], sizes = [4, 32, 8], strides = [1, 1, 1]} : vector<4x32x64xf32> to vector<4x32x8xf32>
    %37 = vector.extract_strided_slice %31 {offsets = [0, 0, 40], sizes = [4, 32, 8], strides = [1, 1, 1]} : vector<4x32x64xf32> to vector<4x32x8xf32>
    %38 = vector.extract_strided_slice %31 {offsets = [0, 0, 48], sizes = [4, 32, 8], strides = [1, 1, 1]} : vector<4x32x64xf32> to vector<4x32x8xf32>
    %39 = vector.extract_strided_slice %31 {offsets = [0, 0, 56], sizes = [4, 32, 8], strides = [1, 1, 1]} : vector<4x32x64xf32> to vector<4x32x8xf32>
    %40 = vector.shape_cast %32 : vector<4x32x8xf32> to vector<1x4x32x8xf32>
    %41 = vector.shape_cast %33 : vector<4x32x8xf32> to vector<1x4x32x8xf32>
    %42 = vector.shape_cast %34 : vector<4x32x8xf32> to vector<1x4x32x8xf32>
    %43 = vector.shape_cast %35 : vector<4x32x8xf32> to vector<1x4x32x8xf32>
    %44 = vector.shape_cast %36 : vector<4x32x8xf32> to vector<1x4x32x8xf32>
    %45 = vector.shape_cast %37 : vector<4x32x8xf32> to vector<1x4x32x8xf32>
    %46 = vector.shape_cast %38 : vector<4x32x8xf32> to vector<1x4x32x8xf32>
    %47 = vector.shape_cast %39 : vector<4x32x8xf32> to vector<1x4x32x8xf32>
    %48 = tpu.concatenate %40, %41, %42, %43, %44, %45, %46, %47 in 0 : vector<1x4x32x8xf32>, vector<1x4x32x8xf32>, vector<1x4x32x8xf32>, vector<1x4x32x8xf32>, vector<1x4x32x8xf32>, vector<1x4x32x8xf32>, vector<1x4x32x8xf32>, vector<1x4x32x8xf32> -> vector<8x4x32x8xf32>
    %49 = vector.shape_cast %48 : vector<8x4x32x8xf32> to vector<32x32x8xf32>
    %50 = arith.truncf %49 : vector<32x32x8xf32> to vector<32x32x8xbf16>
    %51 = vector.shape_cast %10 : vector<128x64xf32> to vector<4x32x64xf32>
    %52 = vector.extract_strided_slice %51 {offsets = [0, 0, 0], sizes = [4, 32, 8], strides = [1, 1, 1]} : vector<4x32x64xf32> to vector<4x32x8xf32>
    %53 = vector.extract_strided_slice %51 {offsets = [0, 0, 8], sizes = [4, 32, 8], strides = [1, 1, 1]} : vector<4x32x64xf32> to vector<4x32x8xf32>
    %54 = vector.extract_strided_slice %51 {offsets = [0, 0, 16], sizes = [4, 32, 8], strides = [1, 1, 1]} : vector<4x32x64xf32> to vector<4x32x8xf32>
    %55 = vector.extract_strided_slice %51 {offsets = [0, 0, 24], sizes = [4, 32, 8], strides = [1, 1, 1]} : vector<4x32x64xf32> to vector<4x32x8xf32>
    %56 = vector.extract_strided_slice %51 {offsets = [0, 0, 32], sizes = [4, 32, 8], strides = [1, 1, 1]} : vector<4x32x64xf32> to vector<4x32x8xf32>
    %57 = vector.extract_strided_slice %51 {offsets = [0, 0, 40], sizes = [4, 32, 8], strides = [1, 1, 1]} : vector<4x32x64xf32> to vector<4x32x8xf32>
    %58 = vector.extract_strided_slice %51 {offsets = [0, 0, 48], sizes = [4, 32, 8], strides = [1, 1, 1]} : vector<4x32x64xf32> to vector<4x32x8xf32>
    %59 = vector.extract_strided_slice %51 {offsets = [0, 0, 56], sizes = [4, 32, 8], strides = [1, 1, 1]} : vector<4x32x64xf32> to vector<4x32x8xf32>
    %60 = vector.shape_cast %52 : vector<4x32x8xf32> to vector<1x4x32x8xf32>
    %61 = vector.shape_cast %53 : vector<4x32x8xf32> to vector<1x4x32x8xf32>
    %62 = vector.shape_cast %54 : vector<4x32x8xf32> to vector<1x4x32x8xf32>
    %63 = vector.shape_cast %55 : vector<4x32x8xf32> to vector<1x4x32x8xf32>
    %64 = vector.shape_cast %56 : vector<4x32x8xf32> to vector<1x4x32x8xf32>
    %65 = vector.shape_cast %57 : vector<4x32x8xf32> to vector<1x4x32x8xf32>
    %66 = vector.shape_cast %58 : vector<4x32x8xf32> to vector<1x4x32x8xf32>
    %67 = vector.shape_cast %59 : vector<4x32x8xf32> to vector<1x4x32x8xf32>
    %68 = tpu.concatenate %60, %61, %62, %63, %64, %65, %66, %67 in 0 : vector<1x4x32x8xf32>, vector<1x4x32x8xf32>, vector<1x4x32x8xf32>, vector<1x4x32x8xf32>, vector<1x4x32x8xf32>, vector<1x4x32x8xf32>, vector<1x4x32x8xf32>, vector<1x4x32x8xf32> -> vector<8x4x32x8xf32>
    %69 = vector.shape_cast %68 : vector<8x4x32x8xf32> to vector<32x32x8xf32>
    %70 = arith.truncf %69 : vector<32x32x8xf32> to vector<32x32x8xbf16>
    "tpu.trace_start"() <{level = 10 : i32, message = "gnd,gmd->gnm"}> : () -> ()
    %cst_11 = arith.constant dense<0.000000e+00> : vector<32x32x32xf32>
    %71 = tpu.matmul %30, %50, %cst_11 {dimension_numbers = #tpu.dot_dimension_numbers<[2], [2], [1], [1], [0, 0, 0, 1, 1, 1], [0], [0]>} : vector<32x32x8xbf16>, vector<32x32x8xbf16>, vector<32x32x32xf32> -> vector<32x32x32xf32>
    "tpu.trace_stop"() : () -> ()
    %72 = vector.shape_cast %71 : vector<32x32x32xf32> to vector<8x4x32x32xf32>
    %c0_12 = arith.constant 0 : index
    %c0_13 = arith.constant 0 : index
    %c0_14 = arith.constant 0 : index
    %73 = vector.load %arg7[%c0_12, %c0_13, %c0_14] : memref<8x32x32xf32, #tpu.memory_space<vmem>>, vector<8x32x32xf32>
    %74 = vector.shape_cast %73 : vector<8x32x32xf32> to vector<8x1x32x32xf32>
    %75 = vector.broadcast %74 : vector<8x1x32x32xf32> to vector<8x4x32x32xf32>
    %76 = arith.addf %72, %75 : vector<8x4x32x32xf32>
    %cst_15 = arith.constant dense<0xFF800000> : vector<8x4x32xf32>
    %77 = vector.multi_reduction <maximumf>, %76, %cst_15 [3] : vector<8x4x32x32xf32> to vector<8x4x32xf32>
    %78 = vector.shape_cast %77 : vector<8x4x32xf32> to vector<8x4x32x1xf32>
    %79 = vector.broadcast %78 : vector<8x4x32x1xf32> to vector<8x4x32x32xf32>
    %80 = arith.subf %76, %79 : vector<8x4x32x32xf32>
    %81 = math.exp %80 : vector<8x4x32x32xf32>
    %cst_16 = arith.constant dense<0.000000e+00> : vector<8x4x32xf32>
    %82 = vector.multi_reduction <add>, %81, %cst_16 [3] : vector<8x4x32x32xf32> to vector<8x4x32xf32>
    %83 = vector.shape_cast %82 : vector<8x4x32xf32> to vector<8x4x32x1xf32>
    %84 = tpu.reciprocal %83 {approx = true} : vector<8x4x32x1xf32> -> vector<8x4x32x1xf32>
    %85 = vector.broadcast %84 : vector<8x4x32x1xf32> to vector<8x4x32x32xf32>
    %86 = arith.mulf %81, %85 : vector<8x4x32x32xf32>
    %87 = vector.shape_cast %86 : vector<8x4x32x32xf32> to vector<32x32x32xf32>
    %88 = arith.truncf %87 : vector<32x32x32xf32> to vector<32x32x32xbf16>
    "tpu.trace_start"() <{level = 10 : i32, message = "gnm,gmd->gnd"}> : () -> ()
    %cst_17 = arith.constant dense<0.000000e+00> : vector<32x32x8xf32>
    %89 = tpu.matmul %88, %70, %cst_17 {dimension_numbers = #tpu.dot_dimension_numbers<[2], [1], [1], [2], [0, 0, 0, 1, 1, 2], [0], [0]>} : vector<32x32x32xbf16>, vector<32x32x8xbf16>, vector<32x32x8xf32> -> vector<32x32x8xf32>
    "tpu.trace_stop"() : () -> ()
    %90 = vector.shape_cast %89 : vector<32x32x8xf32> to vector<8x4x32x8xf32>
    %91 = vector.extract_strided_slice %90 {offsets = [0, 0, 0, 0], sizes = [1, 4, 32, 8], strides = [1, 1, 1, 1]} : vector<8x4x32x8xf32> to vector<1x4x32x8xf32>
    %92 = vector.shape_cast %91 : vector<1x4x32x8xf32> to vector<4x32x8xf32>
    %93 = vector.extract_strided_slice %90 {offsets = [1, 0, 0, 0], sizes = [1, 4, 32, 8], strides = [1, 1, 1, 1]} : vector<8x4x32x8xf32> to vector<1x4x32x8xf32>
    %94 = vector.shape_cast %93 : vector<1x4x32x8xf32> to vector<4x32x8xf32>
    %95 = vector.extract_strided_slice %90 {offsets = [2, 0, 0, 0], sizes = [1, 4, 32, 8], strides = [1, 1, 1, 1]} : vector<8x4x32x8xf32> to vector<1x4x32x8xf32>
    %96 = vector.shape_cast %95 : vector<1x4x32x8xf32> to vector<4x32x8xf32>
    %97 = vector.extract_strided_slice %90 {offsets = [3, 0, 0, 0], sizes = [1, 4, 32, 8], strides = [1, 1, 1, 1]} : vector<8x4x32x8xf32> to vector<1x4x32x8xf32>
    %98 = vector.shape_cast %97 : vector<1x4x32x8xf32> to vector<4x32x8xf32>
    %99 = vector.extract_strided_slice %90 {offsets = [4, 0, 0, 0], sizes = [1, 4, 32, 8], strides = [1, 1, 1, 1]} : vector<8x4x32x8xf32> to vector<1x4x32x8xf32>
    %100 = vector.shape_cast %99 : vector<1x4x32x8xf32> to vector<4x32x8xf32>
    %101 = vector.extract_strided_slice %90 {offsets = [5, 0, 0, 0], sizes = [1, 4, 32, 8], strides = [1, 1, 1, 1]} : vector<8x4x32x8xf32> to vector<1x4x32x8xf32>
    %102 = vector.shape_cast %101 : vector<1x4x32x8xf32> to vector<4x32x8xf32>
    %103 = vector.extract_strided_slice %90 {offsets = [6, 0, 0, 0], sizes = [1, 4, 32, 8], strides = [1, 1, 1, 1]} : vector<8x4x32x8xf32> to vector<1x4x32x8xf32>
    %104 = vector.shape_cast %103 : vector<1x4x32x8xf32> to vector<4x32x8xf32>
    %105 = vector.extract_strided_slice %90 {offsets = [7, 0, 0, 0], sizes = [1, 4, 32, 8], strides = [1, 1, 1, 1]} : vector<8x4x32x8xf32> to vector<1x4x32x8xf32>
    %106 = vector.shape_cast %105 : vector<1x4x32x8xf32> to vector<4x32x8xf32>
    %107 = tpu.concatenate %92, %94, %96, %98, %100, %102, %104, %106 in 2 : vector<4x32x8xf32>, vector<4x32x8xf32>, vector<4x32x8xf32>, vector<4x32x8xf32>, vector<4x32x8xf32>, vector<4x32x8xf32>, vector<4x32x8xf32>, vector<4x32x8xf32> -> vector<4x32x64xf32>
    %108 = vector.shape_cast %107 : vector<4x32x64xf32> to vector<128x64xf32>
    %109 = arith.truncf %108 : vector<128x64xf32> to vector<128x64xbf16>
    %c0_18 = arith.constant 0 : index
    %c0_19 = arith.constant 0 : index
    %110 = vector.load %arg5[%c0_18, %c0_19] : memref<64x64xbf16, #tpu.memory_space<vmem>>, vector<64x64xbf16>
    %cst_20 = arith.constant dense<0.000000e+00> : vector<128x64xf32>
    %111 = tpu.matmul %109, %110, %cst_20 {dimension_numbers = #tpu.dot_dimension_numbers<[1], [0], [0], [1], [0, 0, 1, 1], [], []>} : vector<128x64xbf16>, vector<64x64xbf16>, vector<128x64xf32> -> vector<128x64xf32>
    %c0_21 = arith.constant 0 : index
    %c0_22 = arith.constant 0 : index
    %112 = vector.load %arg6[%c0_21, %c0_22] : memref<1x64xf32, #tpu.memory_space<vmem>>, vector<1x64xf32>
    %113 = vector.broadcast %112 : vector<1x64xf32> to vector<128x64xf32>
    %114 = arith.addf %111, %113 : vector<128x64xf32>
    %115 = vector.shape_cast %114 : vector<128x64xf32> to vector<4x32x64xf32>
    %116 = vector.extract_strided_slice %115 {offsets = [0, 0, 0], sizes = [4, 17, 64], strides = [1, 1, 1]} : vector<4x32x64xf32> to vector<4x17x64xf32>
    %c0_23 = arith.constant 0 : index
    %c0_24 = arith.constant 0 : index
    %c0_25 = arith.constant 0 : index
    %117 = vector.load %arg8[%c0_23, %c0_24, %c0_25] : memref<4x17x64xf32, #tpu.memory_space<vmem>>, vector<4x17x64xf32>
    tpu.vector_store %arg8[%c0_23, %c0_24, %c0_25], %116 {strides = array<i32>} : memref<4x17x64xf32, #tpu.memory_space<vmem>>, vector<4x17x64xf32>,
    return
  }
  func.func @transform_0(%arg0: i32) -> (i32, i32, i32) {
    %c0_i32 = arith.constant 0 : i32
    %c0_i32_0 = arith.constant 0 : i32
    %c0_i32_1 = arith.constant 0 : i32
    return %arg0, %c0_i32, %c0_i32_0 : i32, i32, i32
  }
  func.func @transform_1(%arg0: i32) -> (i32, i32) {
    %c0_i32 = arith.constant 0 : i32
    %c0_i32_0 = arith.constant 0 : i32
    %c0_i32_1 = arith.constant 0 : i32
    return %c0_i32, %c0_i32_0 : i32, i32
  }
  func.func @transform_2(%arg0: i32) -> (i32, i32) {
    %c0_i32 = arith.constant 0 : i32
    %c0_i32_0 = arith.constant 0 : i32
    %c0_i32_1 = arith.constant 0 : i32
    return %c0_i32, %c0_i32_0 : i32, i32
  }
  func.func @transform_3(%arg0: i32) -> (i32, i32) {
    %c0_i32 = arith.constant 0 : i32
    %c0_i32_0 = arith.constant 0 : i32
    %c0_i32_1 = arith.constant 0 : i32
    return %c0_i32, %c0_i32_0 : i32, i32
  }
  func.func @transform_4(%arg0: i32) -> (i32, i32) {
    %c0_i32 = arith.constant 0 : i32
    %c0_i32_0 = arith.constant 0 : i32
    %c0_i32_1 = arith.constant 0 : i32
    return %c0_i32, %c0_i32_0 : i32, i32
  }
  func.func @transform_5(%arg0: i32) -> (i32, i32) {
    %c0_i32 = arith.constant 0 : i32
    %c0_i32_0 = arith.constant 0 : i32
    %c0_i32_1 = arith.constant 0 : i32
    return %c0_i32, %c0_i32_0 : i32, i32
  }
  func.func @transform_6(%arg0: i32) -> (i32, i32, i32) {
    %c0_i32 = arith.constant 0 : i32
    %c0_i32_0 = arith.constant 0 : i32
    %c0_i32_1 = arith.constant 0 : i32
    %c0_i32_2 = arith.constant 0 : i32
    return %c0_i32, %c0_i32_0, %c0_i32_1 : i32, i32, i32
  }
  func.func @transform_7(%arg0: i32) -> (i32, i32, i32) {
    %c0_i32 = arith.constant 0 : i32
    %c0_i32_0 = arith.constant 0 : i32
    %c0_i32_1 = arith.constant 0 : i32
    return %arg0, %c0_i32, %c0_i32_0 : i32, i32, i32
  }
}

</mosaic_0001>

<llo_original>
// kernel: tpu_custom_call.1
$region0: #{tpu_custom_call.1}
  #allocation0 [shape = 'u32[]', space=smem, size = 0x4, offset = 0x4, fixed_abs, tag = 'smem constant byte address 0x4 - core index']
  #allocation1 [shape = 'u32[144,128]{1,0:T(1,128)}', space=vmem, size = 0x12000, scoped, tag = 'internal scratch']
  %s0 = inlined_call_operand.hbm [shape: f32[4,32,64], index: 0, kind: input, shape index: {}]
  %s1 = inlined_call_operand.hbm [shape: bf16[64,64], index: 1, kind: input, shape index: {}]
  %s2 = inlined_call_operand.hbm [shape: bf16[64,64], index: 2, kind: input, shape index: {}]
  %s3 = inlined_call_operand.hbm [shape: bf16[64,64], index: 3, kind: input, shape index: {}]
  %s4 = inlined_call_operand.hbm [shape: bf16[64,64], index: 4, kind: input, shape index: {}]
  %s5 = inlined_call_operand.vmem [shape: f32[1,64], index: 5, kind: input, shape index: {}]
  %s6 = inlined_call_operand.hbm [shape: f32[8,32,32], index: 6, kind: input, shape index: {}]
  %s7 = inlined_call_operand.vmem [shape: f32[4,17,64], index: 7, kind: output, shape index: {}]
  %s8 = sld [smem:[#allocation0]]
  $region62: #{tpu_custom_call.1} parent=0
    _
  %s10 = ssub.s32 1, %s8
  %s11 = scalar_select 0, %s10, %s8
  $region1: #{tpu_custom_call.1} parent=0
    #allocation2 [shape = 'u8[65536]{0}', space=vmem, size = 0x10000, scoped, tag = 'input window, operand 0, single buffered']
    #allocation3 [shape = 's32[1]{0}', space=sflag, size = 0x4, scoped, tag = 'scoped memory for tpu_custom_call.1']
    #allocation4 [shape = 'u8[16384]{0}', space=vmem, size = 0x4000, scoped, tag = 'input window, operand 1, single buffered']
    #allocation5 [shape = 's32[1]{0}', space=sflag, size = 0x4, scoped, tag = 'scoped memory for tpu_custom_call.1']
    #allocation6 [shape = 'u8[16384]{0}', space=vmem, size = 0x4000, scoped, tag = 'input window, operand 2, single buffered']
    #allocation7 [shape = 'u8[16384]{0}', space=vmem, size = 0x4000, scoped, tag = 'input window, operand 3, single buffered']
    #allocation8 [shape = 's32[1]{0}', space=sflag, size = 0x4, scoped, tag = 'scoped memory for tpu_custom_call.1']
    #allocation9 [shape = 'u8[16384]{0}', space=vmem, size = 0x4000, scoped, tag = 'input window, operand 4, single buffered']
    #allocation10 [shape = 'u8[131072]{0}', space=vmem, size = 0x20000, scoped, tag = 'input window, operand 6, single buffered']
    #allocation11 [shape = 's32[1]{0}', space=sflag, size = 0x4, scoped, tag = 'scoped memory for tpu_custom_call.1']
    %12 = vsyncpa [#allocation3], 0
    %13 = vsyncpa [#allocation5], 0
    %14 = vsyncpa [#allocation8], 0
    %15 = vsyncpa [#allocation11], 0
    // Predicated region
    $region2: #{tpu_custom_call.1} parent=1 // pred_check
      _
    $region3: #{tpu_custom_call.1} parent=1 // pred_check_branch
      %17 = sbr.rel (0) target = $region5
    $region4: #{tpu_custom_call.1} parent=1 // pred_region
      %s19 = ssub.s32 2048, 2048
      %20 = vsyncadd [#allocation3], %s19
      %s21 = sshll.u32 [#allocation2], 4
      %s22 = int_to_ptr.vmem [resolvable:$true] %s21
      %27 = dma.hbm_to_vmem [thread:$0]  %s0, 2048, %s22, [#allocation3], 128, 128, 8
    $region5: #{tpu_custom_call.1} parent=1 // pred_fallthru
      _
    // Predicated region
    $region6: #{tpu_custom_call.1} parent=1 // pred_check
      _
    $region7: #{tpu_custom_call.1} parent=1 // pred_check_branch
      %29 = sbr.rel (0) target = $region9
    $region8: #{tpu_custom_call.1} parent=1 // pred_region
      %s31 = ssub.s32 512, 512
      %32 = vsyncadd [#allocation5], %s31
      %s33 = sshll.u32 [#allocation4], 4
      %s34 = int_to_ptr.vmem [resolvable:$true] %s33
      %39 = dma.hbm_to_vmem [thread:$0]  %s1, 512, %s34, [#allocation5], 64, 64, 4
    $region9: #{tpu_custom_call.1} parent=1 // pred_fallthru
      _
    // Predicated region
    $region10: #{tpu_custom_call.1} parent=1 // pred_check
      _
    $region11: #{tpu_custom_call.1} parent=1 // pred_check_branch
      %41 = sbr.rel (0) target = $region13
    $region12: #{tpu_custom_call.1} parent=1 // pred_region
      %s43 = ssub.s32 512, 512
      %44 = vsyncadd [#allocation5], %s43
      %s45 = sshll.u32 [#allocation6], 4
      %s46 = int_to_ptr.vmem [resolvable:$true] %s45
      %51 = dma.hbm_to_vmem [thread:$0]  %s2, 512, %s46, [#allocation5], 64, 64, 4
    $region13: #{tpu_custom_call.1} parent=1 // pred_fallthru
      _
    // Predicated region
    $region14: #{tpu_custom_call.1} parent=1 // pred_check
      _
    $region15: #{tpu_custom_call.1} parent=1 // pred_check_branch
      %53 = sbr.rel (0) target = $region17
    $region16: #{tpu_custom_call.1} parent=1 // pred_region
      %s55 = ssub.s32 512, 512
      %56 = vsyncadd [#allocation8], %s55
      %s57 = sshll.u32 [#allocation7], 4
      %s58 = int_to_ptr.vmem [resolvable:$true] %s57
      %63 = dma.hbm_to_vmem [thread:$0]  %s3, 512, %s58, [#allocation8], 64, 64, 4
    $region17: #{tpu_custom_call.1} parent=1 // pred_fallthru
      _
    // Predicated region
    $region18: #{tpu_custom_call.1} parent=1 // pred_check
      _
    $region19: #{tpu_custom_call.1} parent=1 // pred_check_branch
      %65 = sbr.rel (0) target = $region21
    $region20: #{tpu_custom_call.1} parent=1 // pred_region
      %s67 = ssub.s32 512, 512
      %68 = vsyncadd [#allocation8], %s67
      %s69 = sshll.u32 [#allocation9], 4
      %s70 = int_to_ptr.vmem [resolvable:$true] %s69
      %75 = dma.hbm_to_vmem [thread:$0]  %s4, 512, %s70, [#allocation8], 64, 64, 4
    $region21: #{tpu_custom_call.1} parent=1 // pred_fallthru
      _
    // Predicated region
    $region22: #{tpu_custom_call.1} parent=1 // pred_check
      _
    $region23: #{tpu_custom_call.1} parent=1 // pred_check_branch
      %77 = sbr.rel (0) target = $region25
    $region24: #{tpu_custom_call.1} parent=1 // pred_region
      _
    $region25: #{tpu_custom_call.1} parent=1 // pred_fallthru
      _
    // Predicated region
    $region26: #{tpu_custom_call.1} parent=1 // pred_check
      _
    $region27: #{tpu_custom_call.1} parent=1 // pred_check_branch
      %79 = sbr.rel (0) target = $region29
    $region28: #{tpu_custom_call.1} parent=1 // pred_region
      %s81 = ssub.s32 4096, 4096
      %82 = vsyncadd [#allocation11], %s81
      %s83 = sshll.u32 [#allocation10], 4
      %s84 = int_to_ptr.vmem [resolvable:$true] %s83
      %89 = dma.hbm_to_vmem [thread:$0]  %s6, 4096, %s84, [#allocation11], 128, 128, 8
    $region29: #{tpu_custom_call.1} parent=1 // pred_fallthru
      _
    // Predicated region
    $region30: #{tpu_custom_call.1} parent=1 // pred_check
      _
    $region31: #{tpu_custom_call.1} parent=1 // pred_check_branch
      %91 = sbr.rel (0) target = $region33
    $region32: #{tpu_custom_call.1} parent=1 // pred_region
      %92 = dma.done [#allocation3], 2048
    $region33: #{tpu_custom_call.1} parent=1 // pred_fallthru
      _
    // Predicated region
    $region34: #{tpu_custom_call.1} parent=1 // pred_check
      _
    $region35: #{tpu_custom_call.1} parent=1 // pred_check_branch
      %94 = sbr.rel (0) target = $region37
    $region36: #{tpu_custom_call.1} parent=1 // pred_region
      %95 = dma.done [#allocation5], 512
    $region37: #{tpu_custom_call.1} parent=1 // pred_fallthru
      _
    // Predicated region
    $region38: #{tpu_custom_call.1} parent=1 // pred_check
      _
    $region39: #{tpu_custom_call.1} parent=1 // pred_check_branch
      %97 = sbr.rel (0) target = $region41
    $region40: #{tpu_custom_call.1} parent=1 // pred_region
      %98 = dma.done [#allocation5], 512
    $region41: #{tpu_custom_call.1} parent=1 // pred_fallthru
      _
    // Predicated region
    $region42: #{tpu_custom_call.1} parent=1 // pred_check
      _
    $region43: #{tpu_custom_call.1} parent=1 // pred_check_branch
      %100 = sbr.rel (0) target = $region45
    $region44: #{tpu_custom_call.1} parent=1 // pred_region
      %101 = dma.done [#allocation8], 512
    $region45: #{tpu_custom_call.1} parent=1 // pred_fallthru
      _
    // Predicated region
    $region46: #{tpu_custom_call.1} parent=1 // pred_check
      _
    $region47: #{tpu_custom_call.1} parent=1 // pred_check_branch
      %103 = sbr.rel (0) target = $region49
    $region48: #{tpu_custom_call.1} parent=1 // pred_region
      %104 = dma.done [#allocation8], 512
    $region49: #{tpu_custom_call.1} parent=1 // pred_fallthru
      _
    // Predicated region
    $region50: #{tpu_custom_call.1} parent=1 // pred_check
      _
    $region51: #{tpu_custom_call.1} parent=1 // pred_check_branch
      %106 = sbr.rel (0) target = $region53
    $region52: #{tpu_custom_call.1} parent=1 // pred_region
      %107 = dma.done [#allocation11], 4096
    $region53: #{tpu_custom_call.1} parent=1 // pred_fallthru
      _
    %v109 = vld [vmem:[#allocation2] sm:$0xff]
    %v110 = vld [vmem:[#allocation2 + $0x8] sm:$0xff]
    %v111 = vld [vmem:[#allocation2 + $0x10] sm:$0xff]
    %v112 = vld [vmem:[#allocation2 + $0x18] sm:$0xff]
    %v113 = vld [vmem:[#allocation2 + $0x20] sm:$0xff]
    %v114 = vld [vmem:[#allocation2 + $0x28] sm:$0xff]
    %v115 = vld [vmem:[#allocation2 + $0x30] sm:$0xff]
    %v116 = vld [vmem:[#allocation2 + $0x38] sm:$0xff]
    %v117 = vld [vmem:[#allocation2 + $0x40] sm:$0xff]
    %v118 = vld [vmem:[#allocation2 + $0x48] sm:$0xff]
    %v119 = vld [vmem:[#allocation2 + $0x50] sm:$0xff]
    %v120 = vld [vmem:[#allocation2 + $0x58] sm:$0xff]
    %v121 = vld [vmem:[#allocation2 + $0x60] sm:$0xff]
    %v122 = vld [vmem:[#allocation2 + $0x68] sm:$0xff]
    %v123 = vld [vmem:[#allocation2 + $0x70] sm:$0xff]
    %v124 = vld [vmem:[#allocation2 + $0x78] sm:$0xff]
    %v125 = vpack.c.bf16 %v110, %v109
    %v126 = vpack.c.bf16 %v112, %v111
    %v127 = vpack.c.bf16 %v114, %v113
    %v128 = vpack.c.bf16 %v116, %v115
    %v129 = vpack.c.bf16 %v118, %v117
    %v130 = vpack.c.bf16 %v120, %v119
    %v131 = vpack.c.bf16 %v122, %v121
    %v132 = vpack.c.bf16 %v124, %v123
    %v133 = vld [vmem:[#allocation4] sm:$0xf]
    %v134 = vld [vmem:[#allocation4 + $0x4] sm:$0xf]
    %v135 = vld [vmem:[#allocation4 + $0x8] sm:$0xf]
    %v136 = vld [vmem:[#allocation4 + $0xc] sm:$0xf]
    %v137 = vld [vmem:[#allocation4 + $0x10] sm:$0xf]
    %v138 = vld [vmem:[#allocation4 + $0x14] sm:$0xf]
    %v139 = vld [vmem:[#allocation4 + $0x18] sm:$0xf]
    %v140 = vld [vmem:[#allocation4 + $0x1c] sm:$0xf]
    %v149 = vunpack.c.l.b16 %v133
    %v150 = vunpack.c.l.b16 %v134
    %v151 = vunpack.c.l.b16 %v135
    %v152 = vunpack.c.l.b16 %v136
    %v153 = vunpack.c.l.b16 %v137
    %v154 = vunpack.c.l.b16 %v138
    %v155 = vunpack.c.l.b16 %v139
    %v156 = vunpack.c.l.b16 %v140
    %v157 = vpack.c.b16 %v150, %v149
    %v158 = vpack.c.b16 %v152, %v151
    %v159 = vpack.c.b16 %v154, %v153
    %v160 = vpack.c.b16 %v156, %v155
    %vm165 = vcmask 523264
    %v167 = vsel %vm165, %v125, 0
    %v170 = vsel %vm165, %v126, 0
    %v173 = vsel %vm165, %v127, 0
    %v176 = vsel %vm165, %v128, 0
    %v179 = vsel %vm165, %v129, 0
    %v182 = vsel %vm165, %v130, 0
    %v185 = vsel %vm165, %v131, 0
    %v188 = vsel %vm165, %v132, 0
    %190 = vmatprep.subr.bf16.mxu0 0
    %191 = vmatpush1.bf16.msra.mxu0 %v157
    %192 = vmatprep.subr.bf16.mxu0 0
    %193 = vmatpush1.bf16.msra.mxu0 %v158
    %194 = vmatprep.subr.bf16.mxu0 0
    %195 = vmatpush1.bf16.msra.mxu0 %v159
    %196 = vmatprep.subr.bf16.mxu0 0
    %197 = vmatpush1.bf16.msra.mxu0 %v160
    %198 = vmatprep.subr.bf16.mxu0 0
    %199 = vmatpush1.bf16.msra.mxu0 0
    %200 = vmatprep.subr.bf16.mxu0 0
    %201 = vmatpush1.bf16.msra.mxu0 0
    %202 = vmatprep.subr.bf16.mxu0 0
    %203 = vmatpush1.bf16.msra.mxu0 0
    %204 = vmatprep.subr.bf16.mxu0 0
    %205 = vmatpush1.bf16.msra.mxu0 0
    %206 = vmatprep.subr.bf16.mxu0 0
    %207 = vmatpush1.bf16.msra.mxu0 0
    %208 = vmatprep.subr.bf16.mxu0 0
    %209 = vmatpush1.bf16.msra.mxu0 0
    %210 = vmatprep.subr.bf16.mxu0 0
    %211 = vmatpush1.bf16.msra.mxu0 0
    %212 = vmatprep.subr.bf16.mxu0 0
    %213 = vmatpush1.bf16.msra.mxu0 0
    %214 = vmatprep.subr.bf16.mxu0 0
    %215 = vmatpush1.bf16.msra.mxu0 0
    %216 = vmatprep.subr.bf16.mxu0 0
    %217 = vmatpush1.bf16.msra.mxu0 0
    %218 = vmatprep.subr.bf16.mxu0 0
    %219 = vmatpush1.bf16.msra.mxu0 0
    %220 = vmatprep.subr.bf16.mxu0 0
    %221 = vmatpush1.bf16.msra.mxu0 0
    %222 = vmatprep.mubr.bf16.mxu0 0
    %223 = vmatmul.mubr.bf16.gmra.mrb[0].mxu0 %v167
    %v224 = vpop.f32.mrb[0].mxu0
    %v225 = vadd.f32 0.0, %v224
    %v226 = vpop.f32.mrb[0].mxu0
    %v227 = vpop.f32.mrb[0].mxu0
    %v228 = vadd.f32 0.0, %v227
    %v229 = vpop.f32.mrb[0].mxu0
    %230 = vmatprep.mubr.bf16.mxu0 0
    %231 = vmatmul.mubr.bf16.gmra.mrb[0].mxu0 %v170
    %v232 = vpop.f32.mrb[0].mxu0
    %v233 = vadd.f32 0.0, %v232
    %v234 = vpop.f32.mrb[0].mxu0
    %v235 = vpop.f32.mrb[0].mxu0
    %v236 = vadd.f32 0.0, %v235
    %v237 = vpop.f32.mrb[0].mxu0
    %238 = vmatprep.mubr.bf16.mxu0 0
    %239 = vmatmul.mubr.bf16.gmra.mrb[0].mxu0 %v173
    %v240 = vpop.f32.mrb[0].mxu0
    %v241 = vadd.f32 0.0, %v240
    %v242 = vpop.f32.mrb[0].mxu0
    %v243 = vpop.f32.mrb[0].mxu0
    %v244 = vadd.f32 0.0, %v243
    %v245 = vpop.f32.mrb[0].mxu0
    %246 = vmatprep.mubr.bf16.mxu0 0
    %247 = vmatmul.mubr.bf16.gmra.mrb[0].mxu0 %v176
    %v248 = vpop.f32.mrb[0].mxu0
    %v249 = vadd.f32 0.0, %v248
    %v250 = vpop.f32.mrb[0].mxu0
    %v251 = vpop.f32.mrb[0].mxu0
    %v252 = vadd.f32 0.0, %v251
    %v253 = vpop.f32.mrb[0].mxu0
    %254 = vmatprep.mubr.bf16.mxu0 0
    %255 = vmatmul.mubr.bf16.gmra.mrb[0].mxu0 %v179
    %v256 = vpop.f32.mrb[0].mxu0
    %v257 = vadd.f32 0.0, %v256
    %v258 = vpop.f32.mrb[0].mxu0
    %v259 = vpop.f32.mrb[0].mxu0
    %v260 = vadd.f32 0.0, %v259
    %v261 = vpop.f32.mrb[0].mxu0
    %262 = vmatprep.mubr.bf16.mxu0 0
    %263 = vmatmul.mubr.bf16.gmra.mrb[0].mxu0 %v182
    %v264 = vpop.f32.mrb[0].mxu0
    %v265 = vadd.f32 0.0, %v264
    %v266 = vpop.f32.mrb[0].mxu0
    %v267 = vpop.f32.mrb[0].mxu0
    %v268 = vadd.f32 0.0, %v267
    %v269 = vpop.f32.mrb[0].mxu0
    %270 = vmatprep.mubr.bf16.mxu0 0
    %271 = vmatmul.mubr.bf16.gmra.mrb[0].mxu0 %v185
    %v272 = vpop.f32.mrb[0].mxu0
    %v273 = vadd.f32 0.0, %v272
    %v274 = vpop.f32.mrb[0].mxu0
    %v275 = vpop.f32.mrb[0].mxu0
    %v276 = vadd.f32 0.0, %v275
    %v277 = vpop.f32.mrb[0].mxu0
    %278 = vmatprep.mubr.bf16.mxu0 0
    %279 = vmatmul.mubr.bf16.gmra.mrb[0].mxu0 %v188
    %v280 = vpop.f32.mrb[0].mxu0
    %v281 = vadd.f32 0.0, %v280
    %v282 = vpop.f32.mrb[0].mxu0
    %v283 = vpop.f32.mrb[0].mxu0
    %v284 = vadd.f32 0.0, %v283
    %v285 = vpop.f32.mrb[0].mxu0
    %286 = vdwg.mxu0
    %v287 = vmul.f32 %v225, 0.35355338
    %v288 = vmul.f32 %v228, 0.35355338
    %v289 = vmul.f32 %v233, 0.35355338
    %v290 = vmul.f32 %v236, 0.35355338
    %v291 = vmul.f32 %v241, 0.35355338
    %v292 = vmul.f32 %v244, 0.35355338
    %v293 = vmul.f32 %v249, 0.35355338
    %v294 = vmul.f32 %v252, 0.35355338
    %v295 = vmul.f32 %v257, 0.35355338
    %v296 = vmul.f32 %v260, 0.35355338
    %v297 = vmul.f32 %v265, 0.35355338
    %v298 = vmul.f32 %v268, 0.35355338
    %v299 = vmul.f32 %v273, 0.35355338
    %v300 = vmul.f32 %v276, 0.35355338
    %v301 = vmul.f32 %v281, 0.35355338
    %v302 = vmul.f32 %v284, 0.35355338
    %v303 = vld [vmem:[#allocation6] sm:$0xf]
    %v304 = vld [vmem:[#allocation6 + $0x4] sm:$0xf]
    %v305 = vld [vmem:[#allocation6 + $0x8] sm:$0xf]
    %v306 = vld [vmem:[#allocation6 + $0xc] sm:$0xf]
    %v307 = vld [vmem:[#allocation6 + $0x10] sm:$0xf]
    %v308 = vld [vmem:[#allocation6 + $0x14] sm:$0xf]
    %v309 = vld [vmem:[#allocation6 + $0x18] sm:$0xf]
    %v310 = vld [vmem:[#allocation6 + $0x1c] sm:$0xf]
    %v319 = vunpack.c.l.b16 %v303
    %v320 = vunpack.c.l.b16 %v304
    %v321 = vunpack.c.l.b16 %v305
    %v322 = vunpack.c.l.b16 %v306
    %v323 = vunpack.c.l.b16 %v307
    %v324 = vunpack.c.l.b16 %v308
    %v325 = vunpack.c.l.b16 %v309
    %v326 = vunpack.c.l.b16 %v310
    %v327 = vpack.c.b16 %v320, %v319
    %v328 = vpack.c.b16 %v322, %v321
    %v329 = vpack.c.b16 %v324, %v323
    %v330 = vpack.c.b16 %v326, %v325
    %335 = vmatprep.subr.bf16.mxu0 0
    %336 = vmatpush1.bf16.msra.mxu0 %v327
    %337 = vmatprep.subr.bf16.mxu0 0
    %338 = vmatpush1.bf16.msra.mxu0 %v328
    %339 = vmatprep.subr.bf16.mxu0 0
    %340 = vmatpush1.bf16.msra.mxu0 %v329
    %341 = vmatprep.subr.bf16.mxu0 0
    %342 = vmatpush1.bf16.msra.mxu0 %v330
    %343 = vmatprep.subr.bf16.mxu0 0
    %344 = vmatpush1.bf16.msra.mxu0 0
    %345 = vmatprep.subr.bf16.mxu0 0
    %346 = vmatpush1.bf16.msra.mxu0 0
    %347 = vmatprep.subr.bf16.mxu0 0
    %348 = vmatpush1.bf16.msra.mxu0 0
    %349 = vmatprep.subr.bf16.mxu0 0
    %350 = vmatpush1.bf16.msra.mxu0 0
    %351 = vmatprep.subr.bf16.mxu0 0
    %352 = vmatpush1.bf16.msra.mxu0 0
    %353 = vmatprep.subr.bf16.mxu0 0
    %354 = vmatpush1.bf16.msra.mxu0 0
    %355 = vmatprep.subr.bf16.mxu0 0
    %356 = vmatpush1.bf16.msra.mxu0 0
    %357 = vmatprep.subr.bf16.mxu0 0
    %358 = vmatpush1.bf16.msra.mxu0 0
    %359 = vmatprep.subr.bf16.mxu0 0
    %360 = vmatpush1.bf16.msra.mxu0 0
    %361 = vmatprep.subr.bf16.mxu0 0
    %362 = vmatpush1.bf16.msra.mxu0 0
    %363 = vmatprep.subr.bf16.mxu0 0
    %364 = vmatpush1.bf16.msra.mxu0 0
    %365 = vmatprep.subr.bf16.mxu0 0
    %366 = vmatpush1.bf16.msra.mxu0 0
    %367 = vmatprep.mubr.bf16.mxu0 0
    %368 = vmatmul.mubr.bf16.gmra.mrb[0].mxu0 %v167
    %v369 = vpop.f32.mrb[0].mxu0
    %v370 = vadd.f32 0.0, %v369
    %v371 = vpop.f32.mrb[0].mxu0
    %v372 = vpop.f32.mrb[0].mxu0
    %v373 = vadd.f32 0.0, %v372
    %v374 = vpop.f32.mrb[0].mxu0
    %375 = vmatprep.mubr.bf16.mxu0 0
    %376 = vmatmul.mubr.bf16.gmra.mrb[0].mxu0 %v170
    %v377 = vpop.f32.mrb[0].mxu0
    %v378 = vadd.f32 0.0, %v377
    %v379 = vpop.f32.mrb[0].mxu0
    %v380 = vpop.f32.mrb[0].mxu0
    %v381 = vadd.f32 0.0, %v380
    %v382 = vpop.f32.mrb[0].mxu0
    %383 = vmatprep.mubr.bf16.mxu0 0
    %384 = vmatmul.mubr.bf16.gmra.mrb[0].mxu0 %v173
    %v385 = vpop.f32.mrb[0].mxu0
    %v386 = vadd.f32 0.0, %v385
    %v387 = vpop.f32.mrb[0].mxu0
    %v388 = vpop.f32.mrb[0].mxu0
    %v389 = vadd.f32 0.0, %v388
    %v390 = vpop.f32.mrb[0].mxu0
    %391 = vmatprep.mubr.bf16.mxu0 0
    %392 = vmatmul.mubr.bf16.gmra.mrb[0].mxu0 %v176
    %v393 = vpop.f32.mrb[0].mxu0
    %v394 = vadd.f32 0.0, %v393
    %v395 = vpop.f32.mrb[0].mxu0
    %v396 = vpop.f32.mrb[0].mxu0
    %v397 = vadd.f32 0.0, %v396
    %v398 = vpop.f32.mrb[0].mxu0
    %399 = vmatprep.mubr.bf16.mxu0 0
    %400 = vmatmul.mubr.bf16.gmra.mrb[0].mxu0 %v179
    %v401 = vpop.f32.mrb[0].mxu0
    %v402 = vadd.f32 0.0, %v401
    %v403 = vpop.f32.mrb[0].mxu0
    %v404 = vpop.f32.mrb[0].mxu0
    %v405 = vadd.f32 0.0, %v404
    %v406 = vpop.f32.mrb[0].mxu0
    %407 = vmatprep.mubr.bf16.mxu0 0
    %408 = vmatmul.mubr.bf16.gmra.mrb[0].mxu0 %v182
    %v409 = vpop.f32.mrb[0].mxu0
    %v410 = vadd.f32 0.0, %v409
    %v411 = vpop.f32.mrb[0].mxu0
    %v412 = vpop.f32.mrb[0].mxu0
    %v413 = vadd.f32 0.0, %v412
    %v414 = vpop.f32.mrb[0].mxu0
    %415 = vmatprep.mubr.bf16.mxu0 0
    %416 = vmatmul.mubr.bf16.gmra.mrb[0].mxu0 %v185
    %v417 = vpop.f32.mrb[0].mxu0
    %v418 = vadd.f32 0.0, %v417
    %v419 = vpop.f32.mrb[0].mxu0
    %v420 = vpop.f32.mrb[0].mxu0
    %v421 = vadd.f32 0.0, %v420
    %v422 = vpop.f32.mrb[0].mxu0
    %423 = vmatprep.mubr.bf16.mxu0 0
    %424 = vmatmul.mubr.bf16.gmra.mrb[0].mxu0 %v188
    %v425 = vpop.f32.mrb[0].mxu0
    %v426 = vadd.f32 0.0, %v425
    %v427 = vpop.f32.mrb[0].mxu0
    %v428 = vpop.f32.mrb[0].mxu0
    %v429 = vadd.f32 0.0, %v428
    %v430 = vpop.f32.mrb[0].mxu0
    %431 = vdwg.mxu0
    %v432 = vld [vmem:[#allocation7] sm:$0xf]
    %v433 = vld [vmem:[#allocation7 + $0x4] sm:$0xf]
    %v434 = vld [vmem:[#allocation7 + $0x8] sm:$0xf]
    %v435 = vld [vmem:[#allocation7 + $0xc] sm:$0xf]
    %v436 = vld [vmem:[#allocation7 + $0x10] sm:$0xf]
    %v437 = vld [vmem:[#allocation7 + $0x14] sm:$0xf]
    %v438 = vld [vmem:[#allocation7 + $0x18] sm:$0xf]
    %v439 = vld [vmem:[#allocation7 + $0x1c] sm:$0xf]
    %v448 = vunpack.c.l.b16 %v432
    %v449 = vunpack.c.l.b16 %v433
    %v450 = vunpack.c.l.b16 %v434
    %v451 = vunpack.c.l.b16 %v435
    %v452 = vunpack.c.l.b16 %v436
    %v453 = vunpack.c.l.b16 %v437
    %v454 = vunpack.c.l.b16 %v438
    %v455 = vunpack.c.l.b16 %v439
    %v456 = vpack.c.b16 %v449, %v448
    %v457 = vpack.c.b16 %v451, %v450
    %v458 = vpack.c.b16 %v453, %v452
    %v459 = vpack.c.b16 %v455, %v454
    %464 = vmatprep.subr.bf16.mxu0 0
    %465 = vmatpush1.bf16.msra.mxu0 %v456
    %466 = vmatprep.subr.bf16.mxu0 0
    %467 = vmatpush1.bf16.msra.mxu0 %v457
    %468 = vmatprep.subr.bf16.mxu0 0
    %469 = vmatpush1.bf16.msra.mxu0 %v458
    %470 = vmatprep.subr.bf16.mxu0 0
    %471 = vmatpush1.bf16.msra.mxu0 %v459
    %472 = vmatprep.subr.bf16.mxu0 0
    %473 = vmatpush1.bf16.msra.mxu0 0
    %474 = vmatprep.subr.bf16.mxu0 0
    %475 = vmatpush1.bf16.msra.mxu0 0
    %476 = vmatprep.subr.bf16.mxu0 0
    %477 = vmatpush1.bf16.msra.mxu0 0
    %478 = vmatprep.subr.bf16.mxu0 0
    %479 = vmatpush1.bf16.msra.mxu0 0
    %480 = vmatprep.subr.bf16.mxu0 0
    %481 = vmatpush1.bf16.msra.mxu0 0
    %482 = vmatprep.subr.bf16.mxu0 0
    %483 = vmatpush1.bf16.msra.mxu0 0
    %484 = vmatprep.subr.bf16.mxu0 0
    %485 = vmatpush1.bf16.msra.mxu0 0
    %486 = vmatprep.subr.bf16.mxu0 0
    %487 = vmatpush1.bf16.msra.mxu0 0
    %488 = vmatprep.subr.bf16.mxu0 0
    %489 = vmatpush1.bf16.msra.mxu0 0
    %490 = vmatprep.subr.bf16.mxu0 0
    %491 = vmatpush1.bf16.msra.mxu0 0
    %492 = vmatprep.subr.bf16.mxu0 0
    %493 = vmatpush1.bf16.msra.mxu0 0
    %494 = vmatprep.subr.bf16.mxu0 0
    %495 = vmatpush1.bf16.msra.mxu0 0
    %496 = vmatprep.mubr.bf16.mxu0 0
    %497 = vmatmul.mubr.bf16.gmra.mrb[0].mxu0 %v167
    %v498 = vpop.f32.mrb[0].mxu0
    %v499 = vadd.f32 0.0, %v498
    %v500 = vpop.f32.mrb[0].mxu0
    %v501 = vpop.f32.mrb[0].mxu0
    %v502 = vadd.f32 0.0, %v501
    %v503 = vpop.f32.mrb[0].mxu0
    %504 = vmatprep.mubr.bf16.mxu0 0
    %505 = vmatmul.mubr.bf16.gmra.mrb[0].mxu0 %v170
    %v506 = vpop.f32.mrb[0].mxu0
    %v507 = vadd.f32 0.0, %v506
    %v508 = vpop.f32.mrb[0].mxu0
    %v509 = vpop.f32.mrb[0].mxu0
    %v510 = vadd.f32 0.0, %v509
    %v511 = vpop.f32.mrb[0].mxu0
    %512 = vmatprep.mubr.bf16.mxu0 0
    %513 = vmatmul.mubr.bf16.gmra.mrb[0].mxu0 %v173
    %v514 = vpop.f32.mrb[0].mxu0
    %v515 = vadd.f32 0.0, %v514
    %v516 = vpop.f32.mrb[0].mxu0
    %v517 = vpop.f32.mrb[0].mxu0
    %v518 = vadd.f32 0.0, %v517
    %v519 = vpop.f32.mrb[0].mxu0
    %520 = vmatprep.mubr.bf16.mxu0 0
    %521 = vmatmul.mubr.bf16.gmra.mrb[0].mxu0 %v176
    %v522 = vpop.f32.mrb[0].mxu0
    %v523 = vadd.f32 0.0, %v522
    %v524 = vpop.f32.mrb[0].mxu0
    %v525 = vpop.f32.mrb[0].mxu0
    %v526 = vadd.f32 0.0, %v525
    %v527 = vpop.f32.mrb[0].mxu0
    %528 = vmatprep.mubr.bf16.mxu0 0
    %529 = vmatmul.mubr.bf16.gmra.mrb[0].mxu0 %v179
    %v530 = vpop.f32.mrb[0].mxu0
    %v531 = vadd.f32 0.0, %v530
    %v532 = vpop.f32.mrb[0].mxu0
    %v533 = vpop.f32.mrb[0].mxu0
    %v534 = vadd.f32 0.0, %v533
    %v535 = vpop.f32.mrb[0].mxu0
    %536 = vmatprep.mubr.bf16.mxu0 0
    %537 = vmatmul.mubr.bf16.gmra.mrb[0].mxu0 %v182
    %v538 = vpop.f32.mrb[0].mxu0
    %v539 = vadd.f32 0.0, %v538
    %v540 = vpop.f32.mrb[0].mxu0
    %v541 = vpop.f32.mrb[0].mxu0
    %v542 = vadd.f32 0.0, %v541
    %v543 = vpop.f32.mrb[0].mxu0
    %544 = vmatprep.mubr.bf16.mxu0 0
    %545 = vmatmul.mubr.bf16.gmra.mrb[0].mxu0 %v185
    %v546 = vpop.f32.mrb[0].mxu0
    %v547 = vadd.f32 0.0, %v546
    %v548 = vpop.f32.mrb[0].mxu0
    %v549 = vpop.f32.mrb[0].mxu0
    %v550 = vadd.f32 0.0, %v549
    %v551 = vpop.f32.mrb[0].mxu0
    %552 = vmatprep.mubr.bf16.mxu0 0
    %553 = vmatmul.mubr.bf16.gmra.mrb[0].mxu0 %v188
    %v554 = vpop.f32.mrb[0].mxu0
    %v555 = vadd.f32 0.0, %v554
    %v556 = vpop.f32.mrb[0].mxu0
    %v557 = vpop.f32.mrb[0].mxu0
    %v558 = vadd.f32 0.0, %v557
    %v559 = vpop.f32.mrb[0].mxu0
    %560 = vdwg.mxu0
    %577 = vrot.lane.b32.xlu0 %v287, 120
    %v578 = vpop.permute.xlu0 %577
    %579 = vrot.lane.b32.xlu0 %v288, 120
    %v580 = vpop.permute.xlu0 %579
    %581 = vrot.lane.b32.xlu0 %v289, 120
    %v582 = vpop.permute.xlu0 %581
    %583 = vrot.lane.b32.xlu0 %v290, 120
    %v584 = vpop.permute.xlu0 %583
    %585 = vrot.lane.b32.xlu0 %v291, 120
    %v586 = vpop.permute.xlu0 %585
    %587 = vrot.lane.b32.xlu0 %v292, 120
    %v588 = vpop.permute.xlu0 %587
    %589 = vrot.lane.b32.xlu0 %v293, 120
    %v590 = vpop.permute.xlu0 %589
    %591 = vrot.lane.b32.xlu0 %v294, 120
    %v592 = vpop.permute.xlu0 %591
    %593 = vrot.lane.b32.xlu0 %v295, 120
    %v594 = vpop.permute.xlu0 %593
    %595 = vrot.lane.b32.xlu0 %v296, 120
    %v596 = vpop.permute.xlu0 %595
    %597 = vrot.lane.b32.xlu0 %v297, 120
    %v598 = vpop.permute.xlu0 %597
    %599 = vrot.lane.b32.xlu0 %v298, 120
    %v600 = vpop.permute.xlu0 %599
    %601 = vrot.lane.b32.xlu0 %v299, 120
    %v602 = vpop.permute.xlu0 %601
    %603 = vrot.lane.b32.xlu0 %v300, 120
    %v604 = vpop.permute.xlu0 %603
    %605 = vrot.lane.b32.xlu0 %v301, 120
    %v606 = vpop.permute.xlu0 %605
    %607 = vrot.lane.b32.xlu0 %v302, 120
    %v608 = vpop.permute.xlu0 %607
    %625 = vrot.lane.b32.xlu0 %v287, 112
    %v626 = vpop.permute.xlu0 %625
    %627 = vrot.lane.b32.xlu0 %v288, 112
    %v628 = vpop.permute.xlu0 %627
    %629 = vrot.lane.b32.xlu0 %v289, 112
    %v630 = vpop.permute.xlu0 %629
    %631 = vrot.lane.b32.xlu0 %v290, 112
    %v632 = vpop.permute.xlu0 %631
    %633 = vrot.lane.b32.xlu0 %v291, 112
    %v634 = vpop.permute.xlu0 %633
    %635 = vrot.lane.b32.xlu0 %v292, 112
    %v636 = vpop.permute.xlu0 %635
    %637 = vrot.lane.b32.xlu0 %v293, 112
    %v638 = vpop.permute.xlu0 %637
    %639 = vrot.lane.b32.xlu0 %v294, 112
    %v640 = vpop.permute.xlu0 %639
    %641 = vrot.lane.b32.xlu0 %v295, 112
    %v642 = vpop.permute.xlu0 %641
    %643 = vrot.lane.b32.xlu0 %v296, 112
    %v644 = vpop.permute.xlu0 %643
    %645 = vrot.lane.b32.xlu0 %v297, 112
    %v646 = vpop.permute.xlu0 %645
    %647 = vrot.lane.b32.xlu0 %v298, 112
    %v648 = vpop.permute.xlu0 %647
    %649 = vrot.lane.b32.xlu0 %v299, 112
    %v650 = vpop.permute.xlu0 %649
    %651 = vrot.lane.b32.xlu0 %v300, 112
    %v652 = vpop.permute.xlu0 %651
    %653 = vrot.lane.b32.xlu0 %v301, 112
    %v654 = vpop.permute.xlu0 %653
    %655 = vrot.lane.b32.xlu0 %v302, 112
    %v656 = vpop.permute.xlu0 %655
    %673 = vrot.lane.b32.xlu0 %v287, 104
    %v674 = vpop.permute.xlu0 %673
    %675 = vrot.lane.b32.xlu0 %v288, 104
    %v676 = vpop.permute.xlu0 %675
    %677 = vrot.lane.b32.xlu0 %v289, 104
    %v678 = vpop.permute.xlu0 %677
    %679 = vrot.lane.b32.xlu0 %v290, 104
    %v680 = vpop.permute.xlu0 %679
    %681 = vrot.lane.b32.xlu0 %v291, 104
    %v682 = vpop.permute.xlu0 %681
    %683 = vrot.lane.b32.xlu0 %v292, 104
    %v684 = vpop.permute.xlu0 %683
    %685 = vrot.lane.b32.xlu0 %v293, 104
    %v686 = vpop.permute.xlu0 %685
    %687 = vrot.lane.b32.xlu0 %v294, 104
    %v688 = vpop.permute.xlu0 %687
    %689 = vrot.lane.b32.xlu0 %v295, 104
    %v690 = vpop.permute.xlu0 %689
    %691 = vrot.lane.b32.xlu0 %v296, 104
    %v692 = vpop.permute.xlu0 %691
    %693 = vrot.lane.b32.xlu0 %v297, 104
    %v694 = vpop.permute.xlu0 %693
    %695 = vrot.lane.b32.xlu0 %v298, 104
    %v696 = vpop.permute.xlu0 %695
    %697 = vrot.lane.b32.xlu0 %v299, 104
    %v698 = vpop.permute.xlu0 %697
    %699 = vrot.lane.b32.xlu0 %v300, 104
    %v700 = vpop.permute.xlu0 %699
    %701 = vrot.lane.b32.xlu0 %v301, 104
    %v702 = vpop.permute.xlu0 %701
    %703 = vrot.lane.b32.xlu0 %v302, 104
    %v704 = vpop.permute.xlu0 %703
    %721 = vrot.lane.b32.xlu0 %v287, 96
    %v722 = vpop.permute.xlu0 %721
    %723 = vrot.lane.b32.xlu0 %v288, 96
    %v724 = vpop.permute.xlu0 %723
    %725 = vrot.lane.b32.xlu0 %v289, 96
    %v726 = vpop.permute.xlu0 %725
    %727 = vrot.lane.b32.xlu0 %v290, 96
    %v728 = vpop.permute.xlu0 %727
    %729 = vrot.lane.b32.xlu0 %v291, 96
    %v730 = vpop.permute.xlu0 %729
    %731 = vrot.lane.b32.xlu0 %v292, 96
    %v732 = vpop.permute.xlu0 %731
    %733 = vrot.lane.b32.xlu0 %v293, 96
    %v734 = vpop.permute.xlu0 %733
    %735 = vrot.lane.b32.xlu0 %v294, 96
    %v736 = vpop.permute.xlu0 %735
    %737 = vrot.lane.b32.xlu0 %v295, 96
    %v738 = vpop.permute.xlu0 %737
    %739 = vrot.lane.b32.xlu0 %v296, 96
    %v740 = vpop.permute.xlu0 %739
    %741 = vrot.lane.b32.xlu0 %v297, 96
    %v742 = vpop.permute.xlu0 %741
    %743 = vrot.lane.b32.xlu0 %v298, 96
    %v744 = vpop.permute.xlu0 %743
    %745 = vrot.lane.b32.xlu0 %v299, 96
    %v746 = vpop.permute.xlu0 %745
    %747 = vrot.lane.b32.xlu0 %v300, 96
    %v748 = vpop.permute.xlu0 %747
    %749 = vrot.lane.b32.xlu0 %v301, 96
    %v750 = vpop.permute.xlu0 %749
    %751 = vrot.lane.b32.xlu0 %v302, 96
    %v752 = vpop.permute.xlu0 %751
    %769 = vrot.lane.b32.xlu0 %v287, 88
    %v770 = vpop.permute.xlu0 %769
    %771 = vrot.lane.b32.xlu0 %v288, 88
    %v772 = vpop.permute.xlu0 %771
    %773 = vrot.lane.b32.xlu0 %v289, 88
    %v774 = vpop.permute.xlu0 %773
    %775 = vrot.lane.b32.xlu0 %v290, 88
    %v776 = vpop.permute.xlu0 %775
    %777 = vrot.lane.b32.xlu0 %v291, 88
    %v778 = vpop.permute.xlu0 %777
    %779 = vrot.lane.b32.xlu0 %v292, 88
    %v780 = vpop.permute.xlu0 %779
    %781 = vrot.lane.b32.xlu0 %v293, 88
    %v782 = vpop.permute.xlu0 %781
    %783 = vrot.lane.b32.xlu0 %v294, 88
    %v784 = vpop.permute.xlu0 %783
    %785 = vrot.lane.b32.xlu0 %v295, 88
    %v786 = vpop.permute.xlu0 %785
    %787 = vrot.lane.b32.xlu0 %v296, 88
    %v788 = vpop.permute.xlu0 %787
    %789 = vrot.lane.b32.xlu0 %v297, 88
    %v790 = vpop.permute.xlu0 %789
    %791 = vrot.lane.b32.xlu0 %v298, 88
    %v792 = vpop.permute.xlu0 %791
    %793 = vrot.lane.b32.xlu0 %v299, 88
    %v794 = vpop.permute.xlu0 %793
    %795 = vrot.lane.b32.xlu0 %v300, 88
    %v796 = vpop.permute.xlu0 %795
    %797 = vrot.lane.b32.xlu0 %v301, 88
    %v798 = vpop.permute.xlu0 %797
    %799 = vrot.lane.b32.xlu0 %v302, 88
    %v800 = vpop.permute.xlu0 %799
    %817 = vrot.lane.b32.xlu0 %v287, 80
    %v818 = vpop.permute.xlu0 %817
    %819 = vrot.lane.b32.xlu0 %v288, 80
    %v820 = vpop.permute.xlu0 %819
    %821 = vrot.lane.b32.xlu0 %v289, 80
    %v822 = vpop.permute.xlu0 %821
    %823 = vrot.lane.b32.xlu0 %v290, 80
    %v824 = vpop.permute.xlu0 %823
    %825 = vrot.lane.b32.xlu0 %v291, 80
    %v826 = vpop.permute.xlu0 %825
    %827 = vrot.lane.b32.xlu0 %v292, 80
    %v828 = vpop.permute.xlu0 %827
    %829 = vrot.lane.b32.xlu0 %v293, 80
    %v830 = vpop.permute.xlu0 %829
    %831 = vrot.lane.b32.xlu0 %v294, 80
    %v832 = vpop.permute.xlu0 %831
    %833 = vrot.lane.b32.xlu0 %v295, 80
    %v834 = vpop.permute.xlu0 %833
    %835 = vrot.lane.b32.xlu0 %v296, 80
    %v836 = vpop.permute.xlu0 %835
    %837 = vrot.lane.b32.xlu0 %v297, 80
    %v838 = vpop.permute.xlu0 %837
    %839 = vrot.lane.b32.xlu0 %v298, 80
    %v840 = vpop.permute.xlu0 %839
    %841 = vrot.lane.b32.xlu0 %v299, 80
    %v842 = vpop.permute.xlu0 %841
    %843 = vrot.lane.b32.xlu0 %v300, 80
    %v844 = vpop.permute.xlu0 %843
    %845 = vrot.lane.b32.xlu0 %v301, 80
    %v846 = vpop.permute.xlu0 %845
    %847 = vrot.lane.b32.xlu0 %v302, 80
    %v848 = vpop.permute.xlu0 %847
    %865 = vrot.lane.b32.xlu0 %v287, 72
    %v866 = vpop.permute.xlu0 %865
    %867 = vrot.lane.b32.xlu0 %v288, 72
    %v868 = vpop.permute.xlu0 %867
    %869 = vrot.lane.b32.xlu0 %v289, 72
    %v870 = vpop.permute.xlu0 %869
    %871 = vrot.lane.b32.xlu0 %v290, 72
    %v872 = vpop.permute.xlu0 %871
    %873 = vrot.lane.b32.xlu0 %v291, 72
    %v874 = vpop.permute.xlu0 %873
    %875 = vrot.lane.b32.xlu0 %v292, 72
    %v876 = vpop.permute.xlu0 %875
    %877 = vrot.lane.b32.xlu0 %v293, 72
    %v878 = vpop.permute.xlu0 %877
    %879 = vrot.lane.b32.xlu0 %v294, 72
    %v880 = vpop.permute.xlu0 %879
    %881 = vrot.lane.b32.xlu0 %v295, 72
    %v882 = vpop.permute.xlu0 %881
    %883 = vrot.lane.b32.xlu0 %v296, 72
    %v884 = vpop.permute.xlu0 %883
    %885 = vrot.lane.b32.xlu0 %v297, 72
    %v886 = vpop.permute.xlu0 %885
    %887 = vrot.lane.b32.xlu0 %v298, 72
    %v888 = vpop.permute.xlu0 %887
    %889 = vrot.lane.b32.xlu0 %v299, 72
    %v890 = vpop.permute.xlu0 %889
    %891 = vrot.lane.b32.xlu0 %v300, 72
    %v892 = vpop.permute.xlu0 %891
    %893 = vrot.lane.b32.xlu0 %v301, 72
    %v894 = vpop.permute.xlu0 %893
    %895 = vrot.lane.b32.xlu0 %v302, 72
    %v896 = vpop.permute.xlu0 %895
    %v913 = vpack.c.bf16 %v288, %v287
    %v914 = vpack.c.bf16 %v290, %v289
    %v915 = vpack.c.bf16 %v292, %v291
    %v916 = vpack.c.bf16 %v294, %v293
    %v917 = vpack.c.bf16 %v296, %v295
    %v918 = vpack.c.bf16 %v298, %v297
    %v919 = vpack.c.bf16 %v300, %v299
    %v920 = vpack.c.bf16 %v302, %v301
    %v921 = vpack.c.bf16 %v580, %v578
    %v922 = vpack.c.bf16 %v584, %v582
    %v923 = vpack.c.bf16 %v588, %v586
    %v924 = vpack.c.bf16 %v592, %v590
    %v925 = vpack.c.bf16 %v596, %v594
    %v926 = vpack.c.bf16 %v600, %v598
    %v927 = vpack.c.bf16 %v604, %v602
    %v928 = vpack.c.bf16 %v608, %v606
    %v929 = vpack.c.bf16 %v628, %v626
    %v930 = vpack.c.bf16 %v632, %v630
    %v931 = vpack.c.bf16 %v636, %v634
    %v932 = vpack.c.bf16 %v640, %v638
    %v933 = vpack.c.bf16 %v644, %v642
    %v934 = vpack.c.bf16 %v648, %v646
    %v935 = vpack.c.bf16 %v652, %v650
    %v936 = vpack.c.bf16 %v656, %v654
    %v937 = vpack.c.bf16 %v676, %v674
    %v938 = vpack.c.bf16 %v680, %v678
    %v939 = vpack.c.bf16 %v684, %v682
    %v940 = vpack.c.bf16 %v688, %v686
    %v941 = vpack.c.bf16 %v692, %v690
    %v942 = vpack.c.bf16 %v696, %v694
    %v943 = vpack.c.bf16 %v700, %v698
    %v944 = vpack.c.bf16 %v704, %v702
    %v945 = vpack.c.bf16 %v724, %v722
    %v946 = vpack.c.bf16 %v728, %v726
    %v947 = vpack.c.bf16 %v732, %v730
    %v948 = vpack.c.bf16 %v736, %v734
    %v949 = vpack.c.bf16 %v740, %v738
    %v950 = vpack.c.bf16 %v744, %v742
    %v951 = vpack.c.bf16 %v748, %v746
    %v952 = vpack.c.bf16 %v752, %v750
    %v953 = vpack.c.bf16 %v772, %v770
    %v954 = vpack.c.bf16 %v776, %v774
    %v955 = vpack.c.bf16 %v780, %v778
    %v956 = vpack.c.bf16 %v784, %v782
    %v957 = vpack.c.bf16 %v788, %v786
    %v958 = vpack.c.bf16 %v792, %v790
    %v959 = vpack.c.bf16 %v796, %v794
    %v960 = vpack.c.bf16 %v800, %v798
    %v961 = vpack.c.bf16 %v820, %v818
    %v962 = vpack.c.bf16 %v824, %v822
    %v963 = vpack.c.bf16 %v828, %v826
    %v964 = vpack.c.bf16 %v832, %v830
    %v965 = vpack.c.bf16 %v836, %v834
    %v966 = vpack.c.bf16 %v840, %v838
    %v967 = vpack.c.bf16 %v844, %v842
    %v968 = vpack.c.bf16 %v848, %v846
    %v969 = vpack.c.bf16 %v868, %v866
    %v970 = vpack.c.bf16 %v872, %v870
    %v971 = vpack.c.bf16 %v876, %v874
    %v972 = vpack.c.bf16 %v880, %v878
    %v973 = vpack.c.bf16 %v884, %v882
    %v974 = vpack.c.bf16 %v888, %v886
    %v975 = vpack.c.bf16 %v892, %v890
    %v976 = vpack.c.bf16 %v896, %v894
    %993 = vrot.lane.b32.xlu0 %v370, 120
    %v994 = vpop.permute.xlu0 %993
    %995 = vrot.lane.b32.xlu0 %v373, 120
    %v996 = vpop.permute.xlu0 %995
    %997 = vrot.lane.b32.xlu0 %v378, 120
    %v998 = vpop.permute.xlu0 %997
    %999 = vrot.lane.b32.xlu0 %v381, 120
    %v1000 = vpop.permute.xlu0 %999
    %1001 = vrot.lane.b32.xlu0 %v386, 120
    %v1002 = vpop.permute.xlu0 %1001
    %1003 = vrot.lane.b32.xlu0 %v389, 120
    %v1004 = vpop.permute.xlu0 %1003
    %1005 = vrot.lane.b32.xlu0 %v394, 120
    %v1006 = vpop.permute.xlu0 %1005
    %1007 = vrot.lane.b32.xlu0 %v397, 120
    %v1008 = vpop.permute.xlu0 %1007
    %1009 = vrot.lane.b32.xlu0 %v402, 120
    %v1010 = vpop.permute.xlu0 %1009
    %1011 = vrot.lane.b32.xlu0 %v405, 120
    %v1012 = vpop.permute.xlu0 %1011
    %1013 = vrot.lane.b32.xlu0 %v410, 120
    %v1014 = vpop.permute.xlu0 %1013
    %1015 = vrot.lane.b32.xlu0 %v413, 120
    %v1016 = vpop.permute.xlu0 %1015
    %1017 = vrot.lane.b32.xlu0 %v418, 120
    %v1018 = vpop.permute.xlu0 %1017
    %1019 = vrot.lane.b32.xlu0 %v421, 120
    %v1020 = vpop.permute.xlu0 %1019
    %1021 = vrot.lane.b32.xlu0 %v426, 120
    %v1022 = vpop.permute.xlu0 %1021
    %1023 = vrot.lane.b32.xlu0 %v429, 120
    %v1024 = vpop.permute.xlu0 %1023
    %1041 = vrot.lane.b32.xlu0 %v370, 112
    %v1042 = vpop.permute.xlu0 %1041
    %1043 = vrot.lane.b32.xlu0 %v373, 112
    %v1044 = vpop.permute.xlu0 %1043
    %1045 = vrot.lane.b32.xlu0 %v378, 112
    %v1046 = vpop.permute.xlu0 %1045
    %1047 = vrot.lane.b32.xlu0 %v381, 112
    %v1048 = vpop.permute.xlu0 %1047
    %1049 = vrot.lane.b32.xlu0 %v386, 112
    %v1050 = vpop.permute.xlu0 %1049
    %1051 = vrot.lane.b32.xlu0 %v389, 112
    %v1052 = vpop.permute.xlu0 %1051
    %1053 = vrot.lane.b32.xlu0 %v394, 112
    %v1054 = vpop.permute.xlu0 %1053
    %1055 = vrot.lane.b32.xlu0 %v397, 112
    %v1056 = vpop.permute.xlu0 %1055
    %1057 = vrot.lane.b32.xlu0 %v402, 112
    %v1058 = vpop.permute.xlu0 %1057
    %1059 = vrot.lane.b32.xlu0 %v405, 112
    %v1060 = vpop.permute.xlu0 %1059
    %1061 = vrot.lane.b32.xlu0 %v410, 112
    %v1062 = vpop.permute.xlu0 %1061
    %1063 = vrot.lane.b32.xlu0 %v413, 112
    %v1064 = vpop.permute.xlu0 %1063
    %1065 = vrot.lane.b32.xlu0 %v418, 112
    %v1066 = vpop.permute.xlu0 %1065
    %1067 = vrot.lane.b32.xlu0 %v421, 112
    %v1068 = vpop.permute.xlu0 %1067
    %1069 = vrot.lane.b32.xlu0 %v426, 112
    %v1070 = vpop.permute.xlu0 %1069
    %1071 = vrot.lane.b32.xlu0 %v429, 112
    %v1072 = vpop.permute.xlu0 %1071
    %1089 = vrot.lane.b32.xlu0 %v370, 104
    %v1090 = vpop.permute.xlu0 %1089
    %1091 = vrot.lane.b32.xlu0 %v373, 104
    %v1092 = vpop.permute.xlu0 %1091
    %1093 = vrot.lane.b32.xlu0 %v378, 104
    %v1094 = vpop.permute.xlu0 %1093
    %1095 = vrot.lane.b32.xlu0 %v381, 104
    %v1096 = vpop.permute.xlu0 %1095
    %1097 = vrot.lane.b32.xlu0 %v386, 104
    %v1098 = vpop.permute.xlu0 %1097
    %1099 = vrot.lane.b32.xlu0 %v389, 104
    %v1100 = vpop.permute.xlu0 %1099
    %1101 = vrot.lane.b32.xlu0 %v394, 104
    %v1102 = vpop.permute.xlu0 %1101
    %1103 = vrot.lane.b32.xlu0 %v397, 104
    %v1104 = vpop.permute.xlu0 %1103
    %1105 = vrot.lane.b32.xlu0 %v402, 104
    %v1106 = vpop.permute.xlu0 %1105
    %1107 = vrot.lane.b32.xlu0 %v405, 104
    %v1108 = vpop.permute.xlu0 %1107
    %1109 = vrot.lane.b32.xlu0 %v410, 104
    %v1110 = vpop.permute.xlu0 %1109
    %1111 = vrot.lane.b32.xlu0 %v413, 104
    %v1112 = vpop.permute.xlu0 %1111
    %1113 = vrot.lane.b32.xlu0 %v418, 104
    %v1114 = vpop.permute.xlu0 %1113
    %1115 = vrot.lane.b32.xlu0 %v421, 104
    %v1116 = vpop.permute.xlu0 %1115
    %1117 = vrot.lane.b32.xlu0 %v426, 104
    %v1118 = vpop.permute.xlu0 %1117
    %1119 = vrot.lane.b32.xlu0 %v429, 104
    %v1120 = vpop.permute.xlu0 %1119
    %1137 = vrot.lane.b32.xlu0 %v370, 96
    %v1138 = vpop.permute.xlu0 %1137
    %1139 = vrot.lane.b32.xlu0 %v373, 96
    %v1140 = vpop.permute.xlu0 %1139
    %1141 = vrot.lane.b32.xlu0 %v378, 96
    %v1142 = vpop.permute.xlu0 %1141
    %1143 = vrot.lane.b32.xlu0 %v381, 96
    %v1144 = vpop.permute.xlu0 %1143
    %1145 = vrot.lane.b32.xlu0 %v386, 96
    %v1146 = vpop.permute.xlu0 %1145
    %1147 = vrot.lane.b32.xlu0 %v389, 96
    %v1148 = vpop.permute.xlu0 %1147
    %1149 = vrot.lane.b32.xlu0 %v394, 96
    %v1150 = vpop.permute.xlu0 %1149
    %1151 = vrot.lane.b32.xlu0 %v397, 96
    %v1152 = vpop.permute.xlu0 %1151
    %1153 = vrot.lane.b32.xlu0 %v402, 96
    %v1154 = vpop.permute.xlu0 %1153
    %1155 = vrot.lane.b32.xlu0 %v405, 96
    %v1156 = vpop.permute.xlu0 %1155
    %1157 = vrot.lane.b32.xlu0 %v410, 96
    %v1158 = vpop.permute.xlu0 %1157
    %1159 = vrot.lane.b32.xlu0 %v413, 96
    %v1160 = vpop.permute.xlu0 %1159
    %1161 = vrot.lane.b32.xlu0 %v418, 96
    %v1162 = vpop.permute.xlu0 %1161
    %1163 = vrot.lane.b32.xlu0 %v421, 96
    %v1164 = vpop.permute.xlu0 %1163
    %1165 = vrot.lane.b32.xlu0 %v426, 96
    %v1166 = vpop.permute.xlu0 %1165
    %1167 = vrot.lane.b32.xlu0 %v429, 96
    %v1168 = vpop.permute.xlu0 %1167
    %1185 = vrot.lane.b32.xlu0 %v370, 88
    %v1186 = vpop.permute.xlu0 %1185
    %1187 = vrot.lane.b32.xlu0 %v373, 88
    %v1188 = vpop.permute.xlu0 %1187
    %1189 = vrot.lane.b32.xlu0 %v378, 88
    %v1190 = vpop.permute.xlu0 %1189
    %1191 = vrot.lane.b32.xlu0 %v381, 88
    %v1192 = vpop.permute.xlu0 %1191
    %1193 = vrot.lane.b32.xlu0 %v386, 88
    %v1194 = vpop.permute.xlu0 %1193
    %1195 = vrot.lane.b32.xlu0 %v389, 88
    %v1196 = vpop.permute.xlu0 %1195
    %1197 = vrot.lane.b32.xlu0 %v394, 88
    %v1198 = vpop.permute.xlu0 %1197
    %1199 = vrot.lane.b32.xlu0 %v397, 88
    %v1200 = vpop.permute.xlu0 %1199
    %1201 = vrot.lane.b32.xlu0 %v402, 88
    %v1202 = vpop.permute.xlu0 %1201
    %1203 = vrot.lane.b32.xlu0 %v405, 88
    %v1204 = vpop.permute.xlu0 %1203
    %1205 = vrot.lane.b32.xlu0 %v410, 88
    %v1206 = vpop.permute.xlu0 %1205
    %1207 = vrot.lane.b32.xlu0 %v413, 88
    %v1208 = vpop.permute.xlu0 %1207
    %1209 = vrot.lane.b32.xlu0 %v418, 88
    %v1210 = vpop.permute.xlu0 %1209
    %1211 = vrot.lane.b32.xlu0 %v421, 88
    %v1212 = vpop.permute.xlu0 %1211
    %1213 = vrot.lane.b32.xlu0 %v426, 88
    %v1214 = vpop.permute.xlu0 %1213
    %1215 = vrot.lane.b32.xlu0 %v429, 88
    %v1216 = vpop.permute.xlu0 %1215
    %1233 = vrot.lane.b32.xlu0 %v370, 80
    %v1234 = vpop.permute.xlu0 %1233
    %1235 = vrot.lane.b32.xlu0 %v373, 80
    %v1236 = vpop.permute.xlu0 %1235
    %1237 = vrot.lane.b32.xlu0 %v378, 80
    %v1238 = vpop.permute.xlu0 %1237
    %1239 = vrot.lane.b32.xlu0 %v381, 80
    %v1240 = vpop.permute.xlu0 %1239
    %1241 = vrot.lane.b32.xlu0 %v386, 80
    %v1242 = vpop.permute.xlu0 %1241
    %1243 = vrot.lane.b32.xlu0 %v389, 80
    %v1244 = vpop.permute.xlu0 %1243
    %1245 = vrot.lane.b32.xlu0 %v394, 80
    %v1246 = vpop.permute.xlu0 %1245
    %1247 = vrot.lane.b32.xlu0 %v397, 80
    %v1248 = vpop.permute.xlu0 %1247
    %1249 = vrot.lane.b32.xlu0 %v402, 80
    %v1250 = vpop.permute.xlu0 %1249
    %1251 = vrot.lane.b32.xlu0 %v405, 80
    %v1252 = vpop.permute.xlu0 %1251
    %1253 = vrot.lane.b32.xlu0 %v410, 80
    %v1254 = vpop.permute.xlu0 %1253
    %1255 = vrot.lane.b32.xlu0 %v413, 80
    %v1256 = vpop.permute.xlu0 %1255
    %1257 = vrot.lane.b32.xlu0 %v418, 80
    %v1258 = vpop.permute.xlu0 %1257
    %1259 = vrot.lane.b32.xlu0 %v421, 80
    %v1260 = vpop.permute.xlu0 %1259
    %1261 = vrot.lane.b32.xlu0 %v426, 80
    %v1262 = vpop.permute.xlu0 %1261
    %1263 = vrot.lane.b32.xlu0 %v429, 80
    %v1264 = vpop.permute.xlu0 %1263
    %1281 = vrot.lane.b32.xlu0 %v370, 72
    %v1282 = vpop.permute.xlu0 %1281
    %1283 = vrot.lane.b32.xlu0 %v373, 72
    %v1284 = vpop.permute.xlu0 %1283
    %1285 = vrot.lane.b32.xlu0 %v378, 72
    %v1286 = vpop.permute.xlu0 %1285
    %1287 = vrot.lane.b32.xlu0 %v381, 72
    %v1288 = vpop.permute.xlu0 %1287
    %1289 = vrot.lane.b32.xlu0 %v386, 72
    %v1290 = vpop.permute.xlu0 %1289
    %1291 = vrot.lane.b32.xlu0 %v389, 72
    %v1292 = vpop.permute.xlu0 %1291
    %1293 = vrot.lane.b32.xlu0 %v394, 72
    %v1294 = vpop.permute.xlu0 %1293
    %1295 = vrot.lane.b32.xlu0 %v397, 72
    %v1296 = vpop.permute.xlu0 %1295
    %1297 = vrot.lane.b32.xlu0 %v402, 72
    %v1298 = vpop.permute.xlu0 %1297
    %1299 = vrot.lane.b32.xlu0 %v405, 72
    %v1300 = vpop.permute.xlu0 %1299
    %1301 = vrot.lane.b32.xlu0 %v410, 72
    %v1302 = vpop.permute.xlu0 %1301
    %1303 = vrot.lane.b32.xlu0 %v413, 72
    %v1304 = vpop.permute.xlu0 %1303
    %1305 = vrot.lane.b32.xlu0 %v418, 72
    %v1306 = vpop.permute.xlu0 %1305
    %1307 = vrot.lane.b32.xlu0 %v421, 72
    %v1308 = vpop.permute.xlu0 %1307
    %1309 = vrot.lane.b32.xlu0 %v426, 72
    %v1310 = vpop.permute.xlu0 %1309
    %1311 = vrot.lane.b32.xlu0 %v429, 72
    %v1312 = vpop.permute.xlu0 %1311
    %v1329 = vpack.c.bf16 %v373, %v370
    %v1330 = vpack.c.bf16 %v381, %v378
    %v1331 = vpack.c.bf16 %v389, %v386
    %v1332 = vpack.c.bf16 %v397, %v394
    %v1333 = vpack.c.bf16 %v405, %v402
    %v1334 = vpack.c.bf16 %v413, %v410
    %v1335 = vpack.c.bf16 %v421, %v418
    %v1336 = vpack.c.bf16 %v429, %v426
    %v1337 = vpack.c.bf16 %v996, %v994
    %v1338 = vpack.c.bf16 %v1000, %v998
    %v1339 = vpack.c.bf16 %v1004, %v1002
    %v1340 = vpack.c.bf16 %v1008, %v1006
    %v1341 = vpack.c.bf16 %v1012, %v1010
    %v1342 = vpack.c.bf16 %v1016, %v1014
    %v1343 = vpack.c.bf16 %v1020, %v1018
    %v1344 = vpack.c.bf16 %v1024, %v1022
    %v1345 = vpack.c.bf16 %v1044, %v1042
    %v1346 = vpack.c.bf16 %v1048, %v1046
    %v1347 = vpack.c.bf16 %v1052, %v1050
    %v1348 = vpack.c.bf16 %v1056, %v1054
    %v1349 = vpack.c.bf16 %v1060, %v1058
    %v1350 = vpack.c.bf16 %v1064, %v1062
    %v1351 = vpack.c.bf16 %v1068, %v1066
    %v1352 = vpack.c.bf16 %v1072, %v1070
    %v1353 = vpack.c.bf16 %v1092, %v1090
    %v1354 = vpack.c.bf16 %v1096, %v1094
    %v1355 = vpack.c.bf16 %v1100, %v1098
    %v1356 = vpack.c.bf16 %v1104, %v1102
    %v1357 = vpack.c.bf16 %v1108, %v1106
    %v1358 = vpack.c.bf16 %v1112, %v1110
    %v1359 = vpack.c.bf16 %v1116, %v1114
    %v1360 = vpack.c.bf16 %v1120, %v1118
    %v1361 = vpack.c.bf16 %v1140, %v1138
    %v1362 = vpack.c.bf16 %v1144, %v1142
    %v1363 = vpack.c.bf16 %v1148, %v1146
    %v1364 = vpack.c.bf16 %v1152, %v1150
    %v1365 = vpack.c.bf16 %v1156, %v1154
    %v1366 = vpack.c.bf16 %v1160, %v1158
    %v1367 = vpack.c.bf16 %v1164, %v1162
    %v1368 = vpack.c.bf16 %v1168, %v1166
    %v1369 = vpack.c.bf16 %v1188, %v1186
    %v1370 = vpack.c.bf16 %v1192, %v1190
    %v1371 = vpack.c.bf16 %v1196, %v1194
    %v1372 = vpack.c.bf16 %v1200, %v1198
    %v1373 = vpack.c.bf16 %v1204, %v1202
    %v1374 = vpack.c.bf16 %v1208, %v1206
    %v1375 = vpack.c.bf16 %v1212, %v1210
    %v1376 = vpack.c.bf16 %v1216, %v1214
    %v1377 = vpack.c.bf16 %v1236, %v1234
    %v1378 = vpack.c.bf16 %v1240, %v1238
    %v1379 = vpack.c.bf16 %v1244, %v1242
    %v1380 = vpack.c.bf16 %v1248, %v1246
    %v1381 = vpack.c.bf16 %v1252, %v1250
    %v1382 = vpack.c.bf16 %v1256, %v1254
    %v1383 = vpack.c.bf16 %v1260, %v1258
    %v1384 = vpack.c.bf16 %v1264, %v1262
    %v1385 = vpack.c.bf16 %v1284, %v1282
    %v1386 = vpack.c.bf16 %v1288, %v1286
    %v1387 = vpack.c.bf16 %v1292, %v1290
    %v1388 = vpack.c.bf16 %v1296, %v1294
    %v1389 = vpack.c.bf16 %v1300, %v1298
    %v1390 = vpack.c.bf16 %v1304, %v1302
    %v1391 = vpack.c.bf16 %v1308, %v1306
    %v1392 = vpack.c.bf16 %v1312, %v1310
    %1409 = vrot.lane.b32.xlu0 %v499, 120
    %v1410 = vpop.permute.xlu0 %1409
    %1411 = vrot.lane.b32.xlu0 %v502, 120
    %v1412 = vpop.permute.xlu0 %1411
    %1413 = vrot.lane.b32.xlu0 %v507, 120
    %v1414 = vpop.permute.xlu0 %1413
    %1415 = vrot.lane.b32.xlu0 %v510, 120
    %v1416 = vpop.permute.xlu0 %1415
    %1417 = vrot.lane.b32.xlu0 %v515, 120
    %v1418 = vpop.permute.xlu0 %1417
    %1419 = vrot.lane.b32.xlu0 %v518, 120
    %v1420 = vpop.permute.xlu0 %1419
    %1421 = vrot.lane.b32.xlu0 %v523, 120
    %v1422 = vpop.permute.xlu0 %1421
    %1423 = vrot.lane.b32.xlu0 %v526, 120
    %v1424 = vpop.permute.xlu0 %1423
    %1425 = vrot.lane.b32.xlu0 %v531, 120
    %v1426 = vpop.permute.xlu0 %1425
    %1427 = vrot.lane.b32.xlu0 %v534, 120
    %v1428 = vpop.permute.xlu0 %1427
    %1429 = vrot.lane.b32.xlu0 %v539, 120
    %v1430 = vpop.permute.xlu0 %1429
    %1431 = vrot.lane.b32.xlu0 %v542, 120
    %v1432 = vpop.permute.xlu0 %1431
    %1433 = vrot.lane.b32.xlu0 %v547, 120
    %v1434 = vpop.permute.xlu0 %1433
    %1435 = vrot.lane.b32.xlu0 %v550, 120
    %v1436 = vpop.permute.xlu0 %1435
    %1437 = vrot.lane.b32.xlu0 %v555, 120
    %v1438 = vpop.permute.xlu0 %1437
    %1439 = vrot.lane.b32.xlu0 %v558, 120
    %v1440 = vpop.permute.xlu0 %1439
    %1457 = vrot.lane.b32.xlu0 %v499, 112
    %v1458 = vpop.permute.xlu0 %1457
    %1459 = vrot.lane.b32.xlu0 %v502, 112
    %v1460 = vpop.permute.xlu0 %1459
    %1461 = vrot.lane.b32.xlu0 %v507, 112
    %v1462 = vpop.permute.xlu0 %1461
    %1463 = vrot.lane.b32.xlu0 %v510, 112
    %v1464 = vpop.permute.xlu0 %1463
    %1465 = vrot.lane.b32.xlu0 %v515, 112
    %v1466 = vpop.permute.xlu0 %1465
    %1467 = vrot.lane.b32.xlu0 %v518, 112
    %v1468 = vpop.permute.xlu0 %1467
    %1469 = vrot.lane.b32.xlu0 %v523, 112
    %v1470 = vpop.permute.xlu0 %1469
    %1471 = vrot.lane.b32.xlu0 %v526, 112
    %v1472 = vpop.permute.xlu0 %1471
    %1473 = vrot.lane.b32.xlu0 %v531, 112
    %v1474 = vpop.permute.xlu0 %1473
    %1475 = vrot.lane.b32.xlu0 %v534, 112
    %v1476 = vpop.permute.xlu0 %1475
    %1477 = vrot.lane.b32.xlu0 %v539, 112
    %v1478 = vpop.permute.xlu0 %1477
    %1479 = vrot.lane.b32.xlu0 %v542, 112
    %v1480 = vpop.permute.xlu0 %1479
    %1481 = vrot.lane.b32.xlu0 %v547, 112
    %v1482 = vpop.permute.xlu0 %1481
    %1483 = vrot.lane.b32.xlu0 %v550, 112
    %v1484 = vpop.permute.xlu0 %1483
    %1485 = vrot.lane.b32.xlu0 %v555, 112
    %v1486 = vpop.permute.xlu0 %1485
    %1487 = vrot.lane.b32.xlu0 %v558, 112
    %v1488 = vpop.permute.xlu0 %1487
    %1505 = vrot.lane.b32.xlu0 %v499, 104
    %v1506 = vpop.permute.xlu0 %1505
    %1507 = vrot.lane.b32.xlu0 %v502, 104
    %v1508 = vpop.permute.xlu0 %1507
    %1509 = vrot.lane.b32.xlu0 %v507, 104
    %v1510 = vpop.permute.xlu0 %1509
    %1511 = vrot.lane.b32.xlu0 %v510, 104
    %v1512 = vpop.permute.xlu0 %1511
    %1513 = vrot.lane.b32.xlu0 %v515, 104
    %v1514 = vpop.permute.xlu0 %1513
    %1515 = vrot.lane.b32.xlu0 %v518, 104
    %v1516 = vpop.permute.xlu0 %1515
    %1517 = vrot.lane.b32.xlu0 %v523, 104
    %v1518 = vpop.permute.xlu0 %1517
    %1519 = vrot.lane.b32.xlu0 %v526, 104
    %v1520 = vpop.permute.xlu0 %1519
    %1521 = vrot.lane.b32.xlu0 %v531, 104
    %v1522 = vpop.permute.xlu0 %1521
    %1523 = vrot.lane.b32.xlu0 %v534, 104
    %v1524 = vpop.permute.xlu0 %1523
    %1525 = vrot.lane.b32.xlu0 %v539, 104
    %v1526 = vpop.permute.xlu0 %1525
    %1527 = vrot.lane.b32.xlu0 %v542, 104
    %v1528 = vpop.permute.xlu0 %1527
    %1529 = vrot.lane.b32.xlu0 %v547, 104
    %v1530 = vpop.permute.xlu0 %1529
    %1531 = vrot.lane.b32.xlu0 %v550, 104
    %v1532 = vpop.permute.xlu0 %1531
    %1533 = vrot.lane.b32.xlu0 %v555, 104
    %v1534 = vpop.permute.xlu0 %1533
    %1535 = vrot.lane.b32.xlu0 %v558, 104
    %v1536 = vpop.permute.xlu0 %1535
    %1553 = vrot.lane.b32.xlu0 %v499, 96
    %v1554 = vpop.permute.xlu0 %1553
    %1555 = vrot.lane.b32.xlu0 %v502, 96
    %v1556 = vpop.permute.xlu0 %1555
    %1557 = vrot.lane.b32.xlu0 %v507, 96
    %v1558 = vpop.permute.xlu0 %1557
    %1559 = vrot.lane.b32.xlu0 %v510, 96
    %v1560 = vpop.permute.xlu0 %1559
    %1561 = vrot.lane.b32.xlu0 %v515, 96
    %v1562 = vpop.permute.xlu0 %1561
    %1563 = vrot.lane.b32.xlu0 %v518, 96
    %v1564 = vpop.permute.xlu0 %1563
    %1565 = vrot.lane.b32.xlu0 %v523, 96
    %v1566 = vpop.permute.xlu0 %1565
    %1567 = vrot.lane.b32.xlu0 %v526, 96
    %v1568 = vpop.permute.xlu0 %1567
    %1569 = vrot.lane.b32.xlu0 %v531, 96
    %v1570 = vpop.permute.xlu0 %1569
    %1571 = vrot.lane.b32.xlu0 %v534, 96
    %v1572 = vpop.permute.xlu0 %1571
    %1573 = vrot.lane.b32.xlu0 %v539, 96
    %v1574 = vpop.permute.xlu0 %1573
    %1575 = vrot.lane.b32.xlu0 %v542, 96
    %v1576 = vpop.permute.xlu0 %1575
    %1577 = vrot.lane.b32.xlu0 %v547, 96
    %v1578 = vpop.permute.xlu0 %1577
    %1579 = vrot.lane.b32.xlu0 %v550, 96
    %v1580 = vpop.permute.xlu0 %1579
    %1581 = vrot.lane.b32.xlu0 %v555, 96
    %v1582 = vpop.permute.xlu0 %1581
    %1583 = vrot.lane.b32.xlu0 %v558, 96
    %v1584 = vpop.permute.xlu0 %1583
    %1601 = vrot.lane.b32.xlu0 %v499, 88
    %v1602 = vpop.permute.xlu0 %1601
    %1603 = vrot.lane.b32.xlu0 %v502, 88
    %v1604 = vpop.permute.xlu0 %1603
    %1605 = vrot.lane.b32.xlu0 %v507, 88
    %v1606 = vpop.permute.xlu0 %1605
    %1607 = vrot.lane.b32.xlu0 %v510, 88
    %v1608 = vpop.permute.xlu0 %1607
    %1609 = vrot.lane.b32.xlu0 %v515, 88
    %v1610 = vpop.permute.xlu0 %1609
    %1611 = vrot.lane.b32.xlu0 %v518, 88
    %v1612 = vpop.permute.xlu0 %1611
    %1613 = vrot.lane.b32.xlu0 %v523, 88
    %v1614 = vpop.permute.xlu0 %1613
    %1615 = vrot.lane.b32.xlu0 %v526, 88
    %v1616 = vpop.permute.xlu0 %1615
    %1617 = vrot.lane.b32.xlu0 %v531, 88
    %v1618 = vpop.permute.xlu0 %1617
    %1619 = vrot.lane.b32.xlu0 %v534, 88
    %v1620 = vpop.permute.xlu0 %1619
    %1621 = vrot.lane.b32.xlu0 %v539, 88
    %v1622 = vpop.permute.xlu0 %1621
    %1623 = vrot.lane.b32.xlu0 %v542, 88
    %v1624 = vpop.permute.xlu0 %1623
    %1625 = vrot.lane.b32.xlu0 %v547, 88
    %v1626 = vpop.permute.xlu0 %1625
    %1627 = vrot.lane.b32.xlu0 %v550, 88
    %v1628 = vpop.permute.xlu0 %1627
    %1629 = vrot.lane.b32.xlu0 %v555, 88
    %v1630 = vpop.permute.xlu0 %1629
    %1631 = vrot.lane.b32.xlu0 %v558, 88
    %v1632 = vpop.permute.xlu0 %1631
    %1649 = vrot.lane.b32.xlu0 %v499, 80
    %v1650 = vpop.permute.xlu0 %1649
    %1651 = vrot.lane.b32.xlu0 %v502, 80
    %v1652 = vpop.permute.xlu0 %1651
    %1653 = vrot.lane.b32.xlu0 %v507, 80
    %v1654 = vpop.permute.xlu0 %1653
    %1655 = vrot.lane.b32.xlu0 %v510, 80
    %v1656 = vpop.permute.xlu0 %1655
    %1657 = vrot.lane.b32.xlu0 %v515, 80
    %v1658 = vpop.permute.xlu0 %1657
    %1659 = vrot.lane.b32.xlu0 %v518, 80
    %v1660 = vpop.permute.xlu0 %1659
    %1661 = vrot.lane.b32.xlu0 %v523, 80
    %v1662 = vpop.permute.xlu0 %1661
    %1663 = vrot.lane.b32.xlu0 %v526, 80
    %v1664 = vpop.permute.xlu0 %1663
    %1665 = vrot.lane.b32.xlu0 %v531, 80
    %v1666 = vpop.permute.xlu0 %1665
    %1667 = vrot.lane.b32.xlu0 %v534, 80
    %v1668 = vpop.permute.xlu0 %1667
    %1669 = vrot.lane.b32.xlu0 %v539, 80
    %v1670 = vpop.permute.xlu0 %1669
    %1671 = vrot.lane.b32.xlu0 %v542, 80
    %v1672 = vpop.permute.xlu0 %1671
    %1673 = vrot.lane.b32.xlu0 %v547, 80
    %v1674 = vpop.permute.xlu0 %1673
    %1675 = vrot.lane.b32.xlu0 %v550, 80
    %v1676 = vpop.permute.xlu0 %1675
    %1677 = vrot.lane.b32.xlu0 %v555, 80
    %v1678 = vpop.permute.xlu0 %1677
    %1679 = vrot.lane.b32.xlu0 %v558, 80
    %v1680 = vpop.permute.xlu0 %1679
    %1697 = vrot.lane.b32.xlu0 %v499, 72
    %v1698 = vpop.permute.xlu0 %1697
    %1699 = vrot.lane.b32.xlu0 %v502, 72
    %v1700 = vpop.permute.xlu0 %1699
    %1701 = vrot.lane.b32.xlu0 %v507, 72
    %v1702 = vpop.permute.xlu0 %1701
    %1703 = vrot.lane.b32.xlu0 %v510, 72
    %v1704 = vpop.permute.xlu0 %1703
    %1705 = vrot.lane.b32.xlu0 %v515, 72
    %v1706 = vpop.permute.xlu0 %1705
    %1707 = vrot.lane.b32.xlu0 %v518, 72
    %v1708 = vpop.permute.xlu0 %1707
    %1709 = vrot.lane.b32.xlu0 %v523, 72
    %v1710 = vpop.permute.xlu0 %1709
    %1711 = vrot.lane.b32.xlu0 %v526, 72
    %v1712 = vpop.permute.xlu0 %1711
    %1713 = vrot.lane.b32.xlu0 %v531, 72
    %v1714 = vpop.permute.xlu0 %1713
    %1715 = vrot.lane.b32.xlu0 %v534, 72
    %v1716 = vpop.permute.xlu0 %1715
    %1717 = vrot.lane.b32.xlu0 %v539, 72
    %v1718 = vpop.permute.xlu0 %1717
    %1719 = vrot.lane.b32.xlu0 %v542, 72
    %v1720 = vpop.permute.xlu0 %1719
    %1721 = vrot.lane.b32.xlu0 %v547, 72
    %v1722 = vpop.permute.xlu0 %1721
    %1723 = vrot.lane.b32.xlu0 %v550, 72
    %v1724 = vpop.permute.xlu0 %1723
    %1725 = vrot.lane.b32.xlu0 %v555, 72
    %v1726 = vpop.permute.xlu0 %1725
    %1727 = vrot.lane.b32.xlu0 %v558, 72
    %v1728 = vpop.permute.xlu0 %1727
    %v1745 = vpack.c.bf16 %v502, %v499
    %v1746 = vpack.c.bf16 %v510, %v507
    %v1747 = vpack.c.bf16 %v518, %v515
    %v1748 = vpack.c.bf16 %v526, %v523
    %v1749 = vpack.c.bf16 %v534, %v531
    %v1750 = vpack.c.bf16 %v542, %v539
    %v1751 = vpack.c.bf16 %v550, %v547
    %v1752 = vpack.c.bf16 %v558, %v555
    %v1753 = vpack.c.bf16 %v1412, %v1410
    %v1754 = vpack.c.bf16 %v1416, %v1414
    %v1755 = vpack.c.bf16 %v1420, %v1418
    %v1756 = vpack.c.bf16 %v1424, %v1422
    %v1757 = vpack.c.bf16 %v1428, %v1426
    %v1758 = vpack.c.bf16 %v1432, %v1430
    %v1759 = vpack.c.bf16 %v1436, %v1434
    %v1760 = vpack.c.bf16 %v1440, %v1438
    %v1761 = vpack.c.bf16 %v1460, %v1458
    %v1762 = vpack.c.bf16 %v1464, %v1462
    %v1763 = vpack.c.bf16 %v1468, %v1466
    %v1764 = vpack.c.bf16 %v1472, %v1470
    %v1765 = vpack.c.bf16 %v1476, %v1474
    %v1766 = vpack.c.bf16 %v1480, %v1478
    %v1767 = vpack.c.bf16 %v1484, %v1482
    %v1768 = vpack.c.bf16 %v1488, %v1486
    %v1769 = vpack.c.bf16 %v1508, %v1506
    %v1770 = vpack.c.bf16 %v1512, %v1510
    %v1771 = vpack.c.bf16 %v1516, %v1514
    %v1772 = vpack.c.bf16 %v1520, %v1518
    %v1773 = vpack.c.bf16 %v1524, %v1522
    %v1774 = vpack.c.bf16 %v1528, %v1526
    %v1775 = vpack.c.bf16 %v1532, %v1530
    %v1776 = vpack.c.bf16 %v1536, %v1534
    %v1777 = vpack.c.bf16 %v1556, %v1554
    %v1778 = vpack.c.bf16 %v1560, %v1558
    %v1779 = vpack.c.bf16 %v1564, %v1562
    %v1780 = vpack.c.bf16 %v1568, %v1566
    %v1781 = vpack.c.bf16 %v1572, %v1570
    %v1782 = vpack.c.bf16 %v1576, %v1574
    %v1783 = vpack.c.bf16 %v1580, %v1578
    %v1784 = vpack.c.bf16 %v1584, %v1582
    %v1785 = vpack.c.bf16 %v1604, %v1602
    %v1786 = vpack.c.bf16 %v1608, %v1606
    %v1787 = vpack.c.bf16 %v1612, %v1610
    %v1788 = vpack.c.bf16 %v1616, %v1614
    %v1789 = vpack.c.bf16 %v1620, %v1618
    %v1790 = vpack.c.bf16 %v1624, %v1622
    %v1791 = vpack.c.bf16 %v1628, %v1626
    %v1792 = vpack.c.bf16 %v1632, %v1630
    %v1793 = vpack.c.bf16 %v1652, %v1650
    %v1794 = vpack.c.bf16 %v1656, %v1654
    %v1795 = vpack.c.bf16 %v1660, %v1658
    %v1796 = vpack.c.bf16 %v1664, %v1662
    %v1797 = vpack.c.bf16 %v1668, %v1666
    %v1798 = vpack.c.bf16 %v1672, %v1670
    %v1799 = vpack.c.bf16 %v1676, %v1674
    %v1800 = vpack.c.bf16 %v1680, %v1678
    %v1801 = vpack.c.bf16 %v1700, %v1698
    %v1802 = vpack.c.bf16 %v1704, %v1702
    %v1803 = vpack.c.bf16 %v1708, %v1706
    %v1804 = vpack.c.bf16 %v1712, %v1710
    %v1805 = vpack.c.bf16 %v1716, %v1714
    %v1806 = vpack.c.bf16 %v1720, %v1718
    %v1807 = vpack.c.bf16 %v1724, %v1722
    %v1808 = vpack.c.bf16 %v1728, %v1726
    %vm1809 = vcmask 64512
    %v1811 = vsel %vm1809, %v913, 0
    %v1814 = vsel %vm1809, %v914, 0
    %v1817 = vsel %vm1809, %v1329, 0
    %v1820 = vsel %vm1809, %v1330, 0
    %1822 = vmatprep.subr.bf16.mxu0 0
    %1823 = vmatpush1.bf16.xpose.msra.mxu0 %v1817
    %1824 = vmatprep.subr.bf16.mxu0 0
    %1825 = vmatpush1.bf16.xpose.msra.mxu0 %v1820
    %1826 = vmatprep.subr.bf16.mxu0 0
    %1827 = vmatpush1.bf16.xpose.msra.mxu0 0
    %1828 = vmatprep.subr.bf16.mxu0 0
    %1829 = vmatpush1.bf16.xpose.msra.mxu0 0
    %1830 = vmatprep.subr.bf16.mxu0 0
    %1831 = vmatpush1.bf16.xpose.msra.mxu0 0
    %1832 = vmatprep.subr.bf16.mxu0 0
    %1833 = vmatpush1.bf16.xpose.msra.mxu0 0
    %1834 = vmatprep.subr.bf16.mxu0 0
    %1835 = vmatpush1.bf16.xpose.msra.mxu0 0
    %1836 = vmatprep.subr.bf16.mxu0 0
    %1837 = vmatpush1.bf16.xpose.msra.mxu0 0
    %1838 = vmatprep.subr.bf16.mxu0 0
    %1839 = vmatpush1.bf16.xpose.msra.mxu0 0
    %1840 = vmatprep.subr.bf16.mxu0 0
    %1841 = vmatpush1.bf16.xpose.msra.mxu0 0
    %1842 = vmatprep.subr.bf16.mxu0 0
    %1843 = vmatpush1.bf16.xpose.msra.mxu0 0
    %1844 = vmatprep.subr.bf16.mxu0 0
    %1845 = vmatpush1.bf16.xpose.msra.mxu0 0
    %1846 = vmatprep.subr.bf16.mxu0 0
    %1847 = vmatpush1.bf16.xpose.msra.mxu0 0
    %1848 = vmatprep.subr.bf16.mxu0 0
    %1849 = vmatpush1.bf16.xpose.msra.mxu0 0
    %1850 = vmatprep.subr.bf16.mxu0 0
    %1851 = vmatpush1.bf16.xpose.msra.mxu0 0
    %1852 = vmatprep.subr.bf16.mxu0 0
    %1853 = vmatpush1.bf16.xpose.msra.mxu0 0
    %1854 = vmatprep.mubr.bf16.mxu0 0
    %1855 = vmatmul.mubr.bf16.gmra.mrb[0].mxu0 %v1811
    %v1856 = vpop.f32.mrb[0].mxu0
    %v1857 = vadd.f32 0.0, %v1856
    %v1858 = vpop.f32.mrb[0].mxu0
    %v1859 = vpop.f32.mrb[0].mxu0
    %v1860 = vadd.f32 0.0, %v1859
    %v1861 = vpop.f32.mrb[0].mxu0
    %1862 = vmatprep.mubr.bf16.mxu0 0
    %1863 = vmatmul.mubr.bf16.gmra.mrb[0].mxu0 %v1814
    %v1864 = vpop.f32.mrb[0].mxu0
    %v1865 = vadd.f32 0.0, %v1864
    %v1866 = vpop.f32.mrb[0].mxu0
    %v1867 = vpop.f32.mrb[0].mxu0
    %v1868 = vadd.f32 0.0, %v1867
    %v1869 = vpop.f32.mrb[0].mxu0
    %1870 = vdwg.mxu0
    %v1872 = vsel %vm1809, %v915, 0
    %v1875 = vsel %vm1809, %v916, 0
    %v1878 = vsel %vm1809, %v1331, 0
    %v1881 = vsel %vm1809, %v1332, 0
    %1883 = vmatprep.subr.bf16.mxu0 0
    %1884 = vmatpush1.bf16.xpose.msra.mxu0 %v1878
    %1885 = vmatprep.subr.bf16.mxu0 0
    %1886 = vmatpush1.bf16.xpose.msra.mxu0 %v1881
    %1887 = vmatprep.subr.bf16.mxu0 0
    %1888 = vmatpush1.bf16.xpose.msra.mxu0 0
    %1889 = vmatprep.subr.bf16.mxu0 0
    %1890 = vmatpush1.bf16.xpose.msra.mxu0 0
    %1891 = vmatprep.subr.bf16.mxu0 0
    %1892 = vmatpush1.bf16.xpose.msra.mxu0 0
    %1893 = vmatprep.subr.bf16.mxu0 0
    %1894 = vmatpush1.bf16.xpose.msra.mxu0 0
    %1895 = vmatprep.subr.bf16.mxu0 0
    %1896 = vmatpush1.bf16.xpose.msra.mxu0 0
    %1897 = vmatprep.subr.bf16.mxu0 0
    %1898 = vmatpush1.bf16.xpose.msra.mxu0 0
    %1899 = vmatprep.subr.bf16.mxu0 0
    %1900 = vmatpush1.bf16.xpose.msra.mxu0 0
    %1901 = vmatprep.subr.bf16.mxu0 0
    %1902 = vmatpush1.bf16.xpose.msra.mxu0 0
    %1903 = vmatprep.subr.bf16.mxu0 0
    %1904 = vmatpush1.bf16.xpose.msra.mxu0 0
    %1905 = vmatprep.subr.bf16.mxu0 0
    %1906 = vmatpush1.bf16.xpose.msra.mxu0 0
    %1907 = vmatprep.subr.bf16.mxu0 0
    %1908 = vmatpush1.bf16.xpose.msra.mxu0 0
    %1909 = vmatprep.subr.bf16.mxu0 0
    %1910 = vmatpush1.bf16.xpose.msra.mxu0 0
    %1911 = vmatprep.subr.bf16.mxu0 0
    %1912 = vmatpush1.bf16.xpose.msra.mxu0 0
    %1913 = vmatprep.subr.bf16.mxu0 0
    %1914 = vmatpush1.bf16.xpose.msra.mxu0 0
    %1915 = vmatprep.mubr.bf16.mxu0 0
    %1916 = vmatmul.mubr.bf16.gmra.mrb[0].mxu0 %v1872
    %v1917 = vpop.f32.mrb[0].mxu0
    %v1918 = vadd.f32 0.0, %v1917
    %v1919 = vpop.f32.mrb[0].mxu0
    %v1920 = vpop.f32.mrb[0].mxu0
    %v1921 = vadd.f32 0.0, %v1920
    %v1922 = vpop.f32.mrb[0].mxu0
    %1923 = vmatprep.mubr.bf16.mxu0 0
    %1924 = vmatmul.mubr.bf16.gmra.mrb[0].mxu0 %v1875
    %v1925 = vpop.f32.mrb[0].mxu0
    %v1926 = vadd.f32 0.0, %v1925
    %v1927 = vpop.f32.mrb[0].mxu0
    %v1928 = vpop.f32.mrb[0].mxu0
    %v1929 = vadd.f32 0.0, %v1928
    %v1930 = vpop.f32.mrb[0].mxu0
    %1931 = vdwg.mxu0
    %v1933 = vsel %vm1809, %v917, 0
    %v1936 = vsel %vm1809, %v918, 0
    %v1939 = vsel %vm1809, %v1333, 0
    %v1942 = vsel %vm1809, %v1334, 0
    %1944 = vmatprep.subr.bf16.mxu0 0
    %1945 = vmatpush1.bf16.xpose.msra.mxu0 %v1939
    %1946 = vmatprep.subr.bf16.mxu0 0
    %1947 = vmatpush1.bf16.xpose.msra.mxu0 %v1942
    %1948 = vmatprep.subr.bf16.mxu0 0
    %1949 = vmatpush1.bf16.xpose.msra.mxu0 0
    %1950 = vmatprep.subr.bf16.mxu0 0
    %1951 = vmatpush1.bf16.xpose.msra.mxu0 0
    %1952 = vmatprep.subr.bf16.mxu0 0
    %1953 = vmatpush1.bf16.xpose.msra.mxu0 0
    %1954 = vmatprep.subr.bf16.mxu0 0
    %1955 = vmatpush1.bf16.xpose.msra.mxu0 0
    %1956 = vmatprep.subr.bf16.mxu0 0
    %1957 = vmatpush1.bf16.xpose.msra.mxu0 0
    %1958 = vmatprep.subr.bf16.mxu0 0
    %1959 = vmatpush1.bf16.xpose.msra.mxu0 0
    %1960 = vmatprep.subr.bf16.mxu0 0
    %1961 = vmatpush1.bf16.xpose.msra.mxu0 0
    %1962 = vmatprep.subr.bf16.mxu0 0
    %1963 = vmatpush1.bf16.xpose.msra.mxu0 0
    %1964 = vmatprep.subr.bf16.mxu0 0
    %1965 = vmatpush1.bf16.xpose.msra.mxu0 0
    %1966 = vmatprep.subr.bf16.mxu0 0
    %1967 = vmatpush1.bf16.xpose.msra.mxu0 0
    %1968 = vmatprep.subr.bf16.mxu0 0
    %1969 = vmatpush1.bf16.xpose.msra.mxu0 0
    %1970 = vmatprep.subr.bf16.mxu0 0
    %1971 = vmatpush1.bf16.xpose.msra.mxu0 0
    %1972 = vmatprep.subr.bf16.mxu0 0
    %1973 = vmatpush1.bf16.xpose.msra.mxu0 0
    %1974 = vmatprep.subr.bf16.mxu0 0
    %1975 = vmatpush1.bf16.xpose.msra.mxu0 0
    %1976 = vmatprep.mubr.bf16.mxu0 0
    %1977 = vmatmul.mubr.bf16.gmra.mrb[0].mxu0 %v1933
    %v1978 = vpop.f32.mrb[0].mxu0
    %v1979 = vadd.f32 0.0, %v1978
    %v1980 = vpop.f32.mrb[0].mxu0
    %v1981 = vpop.f32.mrb[0].mxu0
    %v1982 = vadd.f32 0.0, %v1981
    %v1983 = vpop.f32.mrb[0].mxu0
    %1984 = vmatprep.mubr.bf16.mxu0 0
    %1985 = vmatmul.mubr.bf16.gmra.mrb[0].mxu0 %v1936
    %v1986 = vpop.f32.mrb[0].mxu0
    %v1987 = vadd.f32 0.0, %v1986
    %v1988 = vpop.f32.mrb[0].mxu0
    %v1989 = vpop.f32.mrb[0].mxu0
    %v1990 = vadd.f32 0.0, %v1989
    %v1991 = vpop.f32.mrb[0].mxu0
    %1992 = vdwg.mxu0
    %v1994 = vsel %vm1809, %v919, 0
    %v1997 = vsel %vm1809, %v920, 0
    %v2000 = vsel %vm1809, %v1335, 0
    %v2003 = vsel %vm1809, %v1336, 0
    %2005 = vmatprep.subr.bf16.mxu0 0
    %2006 = vmatpush1.bf16.xpose.msra.mxu0 %v2000
    %2007 = vmatprep.subr.bf16.mxu0 0
    %2008 = vmatpush1.bf16.xpose.msra.mxu0 %v2003
    %2009 = vmatprep.subr.bf16.mxu0 0
    %2010 = vmatpush1.bf16.xpose.msra.mxu0 0
    %2011 = vmatprep.subr.bf16.mxu0 0
    %2012 = vmatpush1.bf16.xpose.msra.mxu0 0
    %2013 = vmatprep.subr.bf16.mxu0 0
    %2014 = vmatpush1.bf16.xpose.msra.mxu0 0
    %2015 = vmatprep.subr.bf16.mxu0 0
    %2016 = vmatpush1.bf16.xpose.msra.mxu0 0
    %2017 = vmatprep.subr.bf16.mxu0 0
    %2018 = vmatpush1.bf16.xpose.msra.mxu0 0
    %2019 = vmatprep.subr.bf16.mxu0 0
    %2020 = vmatpush1.bf16.xpose.msra.mxu0 0
    %2021 = vmatprep.subr.bf16.mxu0 0
    %2022 = vmatpush1.bf16.xpose.msra.mxu0 0
    %2023 = vmatprep.subr.bf16.mxu0 0
    %2024 = vmatpush1.bf16.xpose.msra.mxu0 0
    %2025 = vmatprep.subr.bf16.mxu0 0
    %2026 = vmatpush1.bf16.xpose.msra.mxu0 0
    %2027 = vmatprep.subr.bf16.mxu0 0
    %2028 = vmatpush1.bf16.xpose.msra.mxu0 0
    %2029 = vmatprep.subr.bf16.mxu0 0
    %2030 = vmatpush1.bf16.xpose.msra.mxu0 0
    %2031 = vmatprep.subr.bf16.mxu0 0
    %2032 = vmatpush1.bf16.xpose.msra.mxu0 0
    %2033 = vmatprep.subr.bf16.mxu0 0
    %2034 = vmatpush1.bf16.xpose.msra.mxu0 0
    %2035 = vmatprep.subr.bf16.mxu0 0
    %2036 = vmatpush1.bf16.xpose.msra.mxu0 0
    %2037 = vmatprep.mubr.bf16.mxu0 0
    %2038 = vmatmul.mubr.bf16.gmra.mrb[0].mxu0 %v1994
    %v2039 = vpop.f32.mrb[0].mxu0
    %v2040 = vadd.f32 0.0, %v2039
    %v2041 = vpop.f32.mrb[0].mxu0
    %v2042 = vpop.f32.mrb[0].mxu0
    %v2043 = vadd.f32 0.0, %v2042
    %v2044 = vpop.f32.mrb[0].mxu0
    %2045 = vmatprep.mubr.bf16.mxu0 0
    %2046 = vmatmul.mubr.bf16.gmra.mrb[0].mxu0 %v1997
    %v2047 = vpop.f32.mrb[0].mxu0
    %v2048 = vadd.f32 0.0, %v2047
    %v2049 = vpop.f32.mrb[0].mxu0
    %v2050 = vpop.f32.mrb[0].mxu0
    %v2051 = vadd.f32 0.0, %v2050
    %v2052 = vpop.f32.mrb[0].mxu0
    %2053 = vdwg.mxu0
    %v2055 = vsel %vm1809, %v921, 0
    %v2058 = vsel %vm1809, %v922, 0
    %v2061 = vsel %vm1809, %v1337, 0
    %v2064 = vsel %vm1809, %v1338, 0
    %2066 = vmatprep.subr.bf16.mxu0 0
    %2067 = vmatpush1.bf16.xpose.msra.mxu0 %v2061
    %2068 = vmatprep.subr.bf16.mxu0 0
    %2069 = vmatpush1.bf16.xpose.msra.mxu0 %v2064
    %2070 = vmatprep.subr.bf16.mxu0 0
    %2071 = vmatpush1.bf16.xpose.msra.mxu0 0
    %2072 = vmatprep.subr.bf16.mxu0 0
    %2073 = vmatpush1.bf16.xpose.msra.mxu0 0
    %2074 = vmatprep.subr.bf16.mxu0 0
    %2075 = vmatpush1.bf16.xpose.msra.mxu0 0
    %2076 = vmatprep.subr.bf16.mxu0 0
    %2077 = vmatpush1.bf16.xpose.msra.mxu0 0
    %2078 = vmatprep.subr.bf16.mxu0 0
    %2079 = vmatpush1.bf16.xpose.msra.mxu0 0
    %2080 = vmatprep.subr.bf16.mxu0 0
    %2081 = vmatpush1.bf16.xpose.msra.mxu0 0
    %2082 = vmatprep.subr.bf16.mxu0 0
    %2083 = vmatpush1.bf16.xpose.msra.mxu0 0
    %2084 = vmatprep.subr.bf16.mxu0 0
    %2085 = vmatpush1.bf16.xpose.msra.mxu0 0
    %2086 = vmatprep.subr.bf16.mxu0 0
    %2087 = vmatpush1.bf16.xpose.msra.mxu0 0
    %2088 = vmatprep.subr.bf16.mxu0 0
    %2089 = vmatpush1.bf16.xpose.msra.mxu0 0
    %2090 = vmatprep.subr.bf16.mxu0 0
    %2091 = vmatpush1.bf16.xpose.msra.mxu0 0
    %2092 = vmatprep.subr.bf16.mxu0 0
    %2093 = vmatpush1.bf16.xpose.msra.mxu0 0
    %2094 = vmatprep.subr.bf16.mxu0 0
    %2095 = vmatpush1.bf16.xpose.msra.mxu0 0
    %2096 = vmatprep.subr.bf16.mxu0 0
    %2097 = vmatpush1.bf16.xpose.msra.mxu0 0
    %2098 = vmatprep.mubr.bf16.mxu0 0
    %2099 = vmatmul.mubr.bf16.gmra.mrb[0].mxu0 %v2055
    %v2100 = vpop.f32.mrb[0].mxu0
    %v2101 = vadd.f32 0.0, %v2100
    %v2102 = vpop.f32.mrb[0].mxu0
    %v2103 = vpop.f32.mrb[0].mxu0
    %v2104 = vadd.f32 0.0, %v2103
    %v2105 = vpop.f32.mrb[0].mxu0
    %2106 = vmatprep.mubr.bf16.mxu0 0
    %2107 = vmatmul.mubr.bf16.gmra.mrb[0].mxu0 %v2058
    %v2108 = vpop.f32.mrb[0].mxu0
    %v2109 = vadd.f32 0.0, %v2108
    %v2110 = vpop.f32.mrb[0].mxu0
    %v2111 = vpop.f32.mrb[0].mxu0
    %v2112 = vadd.f32 0.0, %v2111
    %v2113 = vpop.f32.mrb[0].mxu0
    %2114 = vdwg.mxu0
    %v2116 = vsel %vm1809, %v923, 0
    %v2119 = vsel %vm1809, %v924, 0
    %v2122 = vsel %vm1809, %v1339, 0
    %v2125 = vsel %vm1809, %v1340, 0
    %2127 = vmatprep.subr.bf16.mxu0 0
    %2128 = vmatpush1.bf16.xpose.msra.mxu0 %v2122
    %2129 = vmatprep.subr.bf16.mxu0 0
    %2130 = vmatpush1.bf16.xpose.msra.mxu0 %v2125
    %2131 = vmatprep.subr.bf16.mxu0 0
    %2132 = vmatpush1.bf16.xpose.msra.mxu0 0
    %2133 = vmatprep.subr.bf16.mxu0 0
    %2134 = vmatpush1.bf16.xpose.msra.mxu0 0
    %2135 = vmatprep.subr.bf16.mxu0 0
    %2136 = vmatpush1.bf16.xpose.msra.mxu0 0
    %2137 = vmatprep.subr.bf16.mxu0 0
    %2138 = vmatpush1.bf16.xpose.msra.mxu0 0
    %2139 = vmatprep.subr.bf16.mxu0 0
    %2140 = vmatpush1.bf16.xpose.msra.mxu0 0
    %2141 = vmatprep.subr.bf16.mxu0 0
    %2142 = vmatpush1.bf16.xpose.msra.mxu0 0
    %2143 = vmatprep.subr.bf16.mxu0 0
    %2144 = vmatpush1.bf16.xpose.msra.mxu0 0
    %2145 = vmatprep.subr.bf16.mxu0 0
    %2146 = vmatpush1.bf16.xpose.msra.mxu0 0
    %2147 = vmatprep.subr.bf16.mxu0 0
    %2148 = vmatpush1.bf16.xpose.msra.mxu0 0
    %2149 = vmatprep.subr.bf16.mxu0 0
    %2150 = vmatpush1.bf16.xpose.msra.mxu0 0
    %2151 = vmatprep.subr.bf16.mxu0 0
    %2152 = vmatpush1.bf16.xpose.msra.mxu0 0
    %2153 = vmatprep.subr.bf16.mxu0 0
    %2154 = vmatpush1.bf16.xpose.msra.mxu0 0
    %2155 = vmatprep.subr.bf16.mxu0 0
    %2156 = vmatpush1.bf16.xpose.msra.mxu0 0
    %2157 = vmatprep.subr.bf16.mxu0 0
    %2158 = vmatpush1.bf16.xpose.msra.mxu0 0
    %2159 = vmatprep.mubr.bf16.mxu0 0
    %2160 = vmatmul.mubr.bf16.gmra.mrb[0].mxu0 %v2116
    %v2161 = vpop.f32.mrb[0].mxu0
    %v2162 = vadd.f32 0.0, %v2161
    %v2163 = vpop.f32.mrb[0].mxu0
    %v2164 = vpop.f32.mrb[0].mxu0
    %v2165 = vadd.f32 0.0, %v2164
    %v2166 = vpop.f32.mrb[0].mxu0
    %2167 = vmatprep.mubr.bf16.mxu0 0
    %2168 = vmatmul.mubr.bf16.gmra.mrb[0].mxu0 %v2119
    %v2169 = vpop.f32.mrb[0].mxu0
    %v2170 = vadd.f32 0.0, %v2169
    %v2171 = vpop.f32.mrb[0].mxu0
    %v2172 = vpop.f32.mrb[0].mxu0
    %v2173 = vadd.f32 0.0, %v2172
    %v2174 = vpop.f32.mrb[0].mxu0
    %2175 = vdwg.mxu0
    %v2177 = vsel %vm1809, %v925, 0
    %v2180 = vsel %vm1809, %v926, 0
    %v2183 = vsel %vm1809, %v1341, 0
    %v2186 = vsel %vm1809, %v1342, 0
    %2188 = vmatprep.subr.bf16.mxu0 0
    %2189 = vmatpush1.bf16.xpose.msra.mxu0 %v2183
    %2190 = vmatprep.subr.bf16.mxu0 0
    %2191 = vmatpush1.bf16.xpose.msra.mxu0 %v2186
    %2192 = vmatprep.subr.bf16.mxu0 0
    %2193 = vmatpush1.bf16.xpose.msra.mxu0 0
    %2194 = vmatprep.subr.bf16.mxu0 0
    %2195 = vmatpush1.bf16.xpose.msra.mxu0 0
    %2196 = vmatprep.subr.bf16.mxu0 0
    %2197 = vmatpush1.bf16.xpose.msra.mxu0 0
    %2198 = vmatprep.subr.bf16.mxu0 0
    %2199 = vmatpush1.bf16.xpose.msra.mxu0 0
    %2200 = vmatprep.subr.bf16.mxu0 0
    %2201 = vmatpush1.bf16.xpose.msra.mxu0 0
    %2202 = vmatprep.subr.bf16.mxu0 0
    %2203 = vmatpush1.bf16.xpose.msra.mxu0 0
    %2204 = vmatprep.subr.bf16.mxu0 0
    %2205 = vmatpush1.bf16.xpose.msra.mxu0 0
    %2206 = vmatprep.subr.bf16.mxu0 0
    %2207 = vmatpush1.bf16.xpose.msra.mxu0 0
    %2208 = vmatprep.subr.bf16.mxu0 0
    %2209 = vmatpush1.bf16.xpose.msra.mxu0 0
    %2210 = vmatprep.subr.bf16.mxu0 0
    %2211 = vmatpush1.bf16.xpose.msra.mxu0 0
    %2212 = vmatprep.subr.bf16.mxu0 0
    %2213 = vmatpush1.bf16.xpose.msra.mxu0 0
    %2214 = vmatprep.subr.bf16.mxu0 0
    %2215 = vmatpush1.bf16.xpose.msra.mxu0 0
    %2216 = vmatprep.subr.bf16.mxu0 0
    %2217 = vmatpush1.bf16.xpose.msra.mxu0 0
    %2218 = vmatprep.subr.bf16.mxu0 0
    %2219 = vmatpush1.bf16.xpose.msra.mxu0 0
    %2220 = vmatprep.mubr.bf16.mxu0 0
    %2221 = vmatmul.mubr.bf16.gmra.mrb[0].mxu0 %v2177
    %v2222 = vpop.f32.mrb[0].mxu0
    %v2223 = vadd.f32 0.0, %v2222
    %v2224 = vpop.f32.mrb[0].mxu0
    %v2225 = vpop.f32.mrb[0].mxu0
    %v2226 = vadd.f32 0.0, %v2225
    %v2227 = vpop.f32.mrb[0].mxu0
    %2228 = vmatprep.mubr.bf16.mxu0 0
    %2229 = vmatmul.mubr.bf16.gmra.mrb[0].mxu0 %v2180
    %v2230 = vpop.f32.mrb[0].mxu0
    %v2231 = vadd.f32 0.0, %v2230
    %v2232 = vpop.f32.mrb[0].mxu0
    %v2233 = vpop.f32.mrb[0].mxu0
    %v2234 = vadd.f32 0.0, %v2233
    %v2235 = vpop.f32.mrb[0].mxu0
    %2236 = vdwg.mxu0
    %v2238 = vsel %vm1809, %v927, 0
    %v2241 = vsel %vm1809, %v928, 0
    %v2244 = vsel %vm1809, %v1343, 0
    %v2247 = vsel %vm1809, %v1344, 0
    %2249 = vmatprep.subr.bf16.mxu0 0
    %2250 = vmatpush1.bf16.xpose.msra.mxu0 %v2244
    %2251 = vmatprep.subr.bf16.mxu0 0
    %2252 = vmatpush1.bf16.xpose.msra.mxu0 %v2247
    %2253 = vmatprep.subr.bf16.mxu0 0
    %2254 = vmatpush1.bf16.xpose.msra.mxu0 0
    %2255 = vmatprep.subr.bf16.mxu0 0
    %2256 = vmatpush1.bf16.xpose.msra.mxu0 0
    %2257 = vmatprep.subr.bf16.mxu0 0
    %2258 = vmatpush1.bf16.xpose.msra.mxu0 0
    %2259 = vmatprep.subr.bf16.mxu0 0
    %2260 = vmatpush1.bf16.xpose.msra.mxu0 0
    %2261 = vmatprep.subr.bf16.mxu0 0
    %2262 = vmatpush1.bf16.xpose.msra.mxu0 0
    %2263 = vmatprep.subr.bf16.mxu0 0
    %2264 = vmatpush1.bf16.xpose.msra.mxu0 0
    %2265 = vmatprep.subr.bf16.mxu0 0
    %2266 = vmatpush1.bf16.xpose.msra.mxu0 0
    %2267 = vmatprep.subr.bf16.mxu0 0
    %2268 = vmatpush1.bf16.xpose.msra.mxu0 0
    %2269 = vmatprep.subr.bf16.mxu0 0
    %2270 = vmatpush1.bf16.xpose.msra.mxu0 0
    %2271 = vmatprep.subr.bf16.mxu0 0
    %2272 = vmatpush1.bf16.xpose.msra.mxu0 0
    %2273 = vmatprep.subr.bf16.mxu0 0
    %2274 = vmatpush1.bf16.xpose.msra.mxu0 0
    %2275 = vmatprep.subr.bf16.mxu0 0
    %2276 = vmatpush1.bf16.xpose.msra.mxu0 0
    %2277 = vmatprep.subr.bf16.mxu0 0
    %2278 = vmatpush1.bf16.xpose.msra.mxu0 0
    %2279 = vmatprep.subr.bf16.mxu0 0
    %2280 = vmatpush1.bf16.xpose.msra.mxu0 0
    %2281 = vmatprep.mubr.bf16.mxu0 0
    %2282 = vmatmul.mubr.bf16.gmra.mrb[0].mxu0 %v2238
    %v2283 = vpop.f32.mrb[0].mxu0
    %v2284 = vadd.f32 0.0, %v2283
    %v2285 = vpop.f32.mrb[0].mxu0
    %v2286 = vpop.f32.mrb[0].mxu0
    %v2287 = vadd.f32 0.0, %v2286
    %v2288 = vpop.f32.mrb[0].mxu0
    %2289 = vmatprep.mubr.bf16.mxu0 0
    %2290 = vmatmul.mubr.bf16.gmra.mrb[0].mxu0 %v2241
    %v2291 = vpop.f32.mrb[0].mxu0
    %v2292 = vadd.f32 0.0, %v2291
    %v2293 = vpop.f32.mrb[0].mxu0
    %v2294 = vpop.f32.mrb[0].mxu0
    %v2295 = vadd.f32 0.0, %v2294
    %v2296 = vpop.f32.mrb[0].mxu0
    %2297 = vdwg.mxu0
    %v2299 = vsel %vm1809, %v929, 0
    %v2302 = vsel %vm1809, %v930, 0
    %v2305 = vsel %vm1809, %v1345, 0
    %v2308 = vsel %vm1809, %v1346, 0
    %2310 = vmatprep.subr.bf16.mxu0 0
    %2311 = vmatpush1.bf16.xpose.msra.mxu0 %v2305
    %2312 = vmatprep.subr.bf16.mxu0 0
    %2313 = vmatpush1.bf16.xpose.msra.mxu0 %v2308
    %2314 = vmatprep.subr.bf16.mxu0 0
    %2315 = vmatpush1.bf16.xpose.msra.mxu0 0
    %2316 = vmatprep.subr.bf16.mxu0 0
    %2317 = vmatpush1.bf16.xpose.msra.mxu0 0
    %2318 = vmatprep.subr.bf16.mxu0 0
    %2319 = vmatpush1.bf16.xpose.msra.mxu0 0
    %2320 = vmatprep.subr.bf16.mxu0 0
    %2321 = vmatpush1.bf16.xpose.msra.mxu0 0
    %2322 = vmatprep.subr.bf16.mxu0 0
    %2323 = vmatpush1.bf16.xpose.msra.mxu0 0
    %2324 = vmatprep.subr.bf16.mxu0 0
    %2325 = vmatpush1.bf16.xpose.msra.mxu0 0
    %2326 = vmatprep.subr.bf16.mxu0 0
    %2327 = vmatpush1.bf16.xpose.msra.mxu0 0
    %2328 = vmatprep.subr.bf16.mxu0 0
    %2329 = vmatpush1.bf16.xpose.msra.mxu0 0
    %2330 = vmatprep.subr.bf16.mxu0 0
    %2331 = vmatpush1.bf16.xpose.msra.mxu0 0
    %2332 = vmatprep.subr.bf16.mxu0 0
    %2333 = vmatpush1.bf16.xpose.msra.mxu0 0
    %2334 = vmatprep.subr.bf16.mxu0 0
    %2335 = vmatpush1.bf16.xpose.msra.mxu0 0
    %2336 = vmatprep.subr.bf16.mxu0 0
    %2337 = vmatpush1.bf16.xpose.msra.mxu0 0
    %2338 = vmatprep.subr.bf16.mxu0 0
    %2339 = vmatpush1.bf16.xpose.msra.mxu0 0
    %2340 = vmatprep.subr.bf16.mxu0 0
    %2341 = vmatpush1.bf16.xpose.msra.mxu0 0
    %2342 = vmatprep.mubr.bf16.mxu0 0
    %2343 = vmatmul.mubr.bf16.gmra.mrb[0].mxu0 %v2299
    %v2344 = vpop.f32.mrb[0].mxu0
    %v2345 = vadd.f32 0.0, %v2344
    %v2346 = vpop.f32.mrb[0].mxu0
    %v2347 = vpop.f32.mrb[0].mxu0
    %v2348 = vadd.f32 0.0, %v2347
    %v2349 = vpop.f32.mrb[0].mxu0
    %2350 = vmatprep.mubr.bf16.mxu0 0
    %2351 = vmatmul.mubr.bf16.gmra.mrb[0].mxu0 %v2302
    %v2352 = vpop.f32.mrb[0].mxu0
    %v2353 = vadd.f32 0.0, %v2352
    %v2354 = vpop.f32.mrb[0].mxu0
    %v2355 = vpop.f32.mrb[0].mxu0
    %v2356 = vadd.f32 0.0, %v2355
    %v2357 = vpop.f32.mrb[0].mxu0
    %2358 = vdwg.mxu0
    %v2360 = vsel %vm1809, %v931, 0
    %v2363 = vsel %vm1809, %v932, 0
    %v2366 = vsel %vm1809, %v1347, 0
    %v2369 = vsel %vm1809, %v1348, 0
    %2371 = vmatprep.subr.bf16.mxu0 0
    %2372 = vmatpush1.bf16.xpose.msra.mxu0 %v2366
    %2373 = vmatprep.subr.bf16.mxu0 0
    %2374 = vmatpush1.bf16.xpose.msra.mxu0 %v2369
    %2375 = vmatprep.subr.bf16.mxu0 0
    %2376 = vmatpush1.bf16.xpose.msra.mxu0 0
    %2377 = vmatprep.subr.bf16.mxu0 0
    %2378 = vmatpush1.bf16.xpose.msra.mxu0 0
    %2379 = vmatprep.subr.bf16.mxu0 0
    %2380 = vmatpush1.bf16.xpose.msra.mxu0 0
    %2381 = vmatprep.subr.bf16.mxu0 0
    %2382 = vmatpush1.bf16.xpose.msra.mxu0 0
    %2383 = vmatprep.subr.bf16.mxu0 0
    %2384 = vmatpush1.bf16.xpose.msra.mxu0 0
    %2385 = vmatprep.subr.bf16.mxu0 0
    %2386 = vmatpush1.bf16.xpose.msra.mxu0 0
    %2387 = vmatprep.subr.bf16.mxu0 0
    %2388 = vmatpush1.bf16.xpose.msra.mxu0 0
    %2389 = vmatprep.subr.bf16.mxu0 0
    %2390 = vmatpush1.bf16.xpose.msra.mxu0 0
    %2391 = vmatprep.subr.bf16.mxu0 0
    %2392 = vmatpush1.bf16.xpose.msra.mxu0 0
    %2393 = vmatprep.subr.bf16.mxu0 0
    %2394 = vmatpush1.bf16.xpose.msra.mxu0 0
    %2395 = vmatprep.subr.bf16.mxu0 0
    %2396 = vmatpush1.bf16.xpose.msra.mxu0 0
    %2397 = vmatprep.subr.bf16.mxu0 0
    %2398 = vmatpush1.bf16.xpose.msra.mxu0 0
    %2399 = vmatprep.subr.bf16.mxu0 0
    %2400 = vmatpush1.bf16.xpose.msra.mxu0 0
    %2401 = vmatprep.subr.bf16.mxu0 0
    %2402 = vmatpush1.bf16.xpose.msra.mxu0 0
    %2403 = vmatprep.mubr.bf16.mxu0 0
    %2404 = vmatmul.mubr.bf16.gmra.mrb[0].mxu0 %v2360
    %v2405 = vpop.f32.mrb[0].mxu0
    %v2406 = vadd.f32 0.0, %v2405
    %v2407 = vpop.f32.mrb[0].mxu0
    %v2408 = vpop.f32.mrb[0].mxu0
    %v2409 = vadd.f32 0.0, %v2408
    %v2410 = vpop.f32.mrb[0].mxu0
    %2411 = vmatprep.mubr.bf16.mxu0 0
    %2412 = vmatmul.mubr.bf16.gmra.mrb[0].mxu0 %v2363
    %v2413 = vpop.f32.mrb[0].mxu0
    %v2414 = vadd.f32 0.0, %v2413
    %v2415 = vpop.f32.mrb[0].mxu0
    %v2416 = vpop.f32.mrb[0].mxu0
    %v2417 = vadd.f32 0.0, %v2416
    %v2418 = vpop.f32.mrb[0].mxu0
    %2419 = vdwg.mxu0
    %v2421 = vsel %vm1809, %v933, 0
    %v2424 = vsel %vm1809, %v934, 0
    %v2427 = vsel %vm1809, %v1349, 0
    %v2430 = vsel %vm1809, %v1350, 0
    %2432 = vmatprep.subr.bf16.mxu0 0
    %2433 = vmatpush1.bf16.xpose.msra.mxu0 %v2427
    %2434 = vmatprep.subr.bf16.mxu0 0
    %2435 = vmatpush1.bf16.xpose.msra.mxu0 %v2430
    %2436 = vmatprep.subr.bf16.mxu0 0
    %2437 = vmatpush1.bf16.xpose.msra.mxu0 0
    %2438 = vmatprep.subr.bf16.mxu0 0
    %2439 = vmatpush1.bf16.xpose.msra.mxu0 0
    %2440 = vmatprep.subr.bf16.mxu0 0
    %2441 = vmatpush1.bf16.xpose.msra.mxu0 0
    %2442 = vmatprep.subr.bf16.mxu0 0
    %2443 = vmatpush1.bf16.xpose.msra.mxu0 0
    %2444 = vmatprep.subr.bf16.mxu0 0
    %2445 = vmatpush1.bf16.xpose.msra.mxu0 0
    %2446 = vmatprep.subr.bf16.mxu0 0
    %2447 = vmatpush1.bf16.xpose.msra.mxu0 0
    %2448 = vmatprep.subr.bf16.mxu0 0
    %2449 = vmatpush1.bf16.xpose.msra.mxu0 0
    %2450 = vmatprep.subr.bf16.mxu0 0
    %2451 = vmatpush1.bf16.xpose.msra.mxu0 0
    %2452 = vmatprep.subr.bf16.mxu0 0
    %2453 = vmatpush1.bf16.xpose.msra.mxu0 0
    %2454 = vmatprep.subr.bf16.mxu0 0
    %2455 = vmatpush1.bf16.xpose.msra.mxu0 0
    %2456 = vmatprep.subr.bf16.mxu0 0
    %2457 = vmatpush1.bf16.xpose.msra.mxu0 0
    %2458 = vmatprep.subr.bf16.mxu0 0
    %2459 = vmatpush1.bf16.xpose.msra.mxu0 0
    %2460 = vmatprep.subr.bf16.mxu0 0
    %2461 = vmatpush1.bf16.xpose.msra.mxu0 0
    %2462 = vmatprep.subr.bf16.mxu0 0
    %2463 = vmatpush1.bf16.xpose.msra.mxu0 0
    %2464 = vmatprep.mubr.bf16.mxu0 0
    %2465 = vmatmul.mubr.bf16.gmra.mrb[0].mxu0 %v2421
    %v2466 = vpop.f32.mrb[0].mxu0
    %v2467 = vadd.f32 0.0, %v2466
    %v2468 = vpop.f32.mrb[0].mxu0
    %v2469 = vpop.f32.mrb[0].mxu0
    %v2470 = vadd.f32 0.0, %v2469
    %v2471 = vpop.f32.mrb[0].mxu0
    %2472 = vmatprep.mubr.bf16.mxu0 0
    %2473 = vmatmul.mubr.bf16.gmra.mrb[0].mxu0 %v2424
    %v2474 = vpop.f32.mrb[0].mxu0
    %v2475 = vadd.f32 0.0, %v2474
    %v2476 = vpop.f32.mrb[0].mxu0
    %v2477 = vpop.f32.mrb[0].mxu0
    %v2478 = vadd.f32 0.0, %v2477
    %v2479 = vpop.f32.mrb[0].mxu0
    %2480 = vdwg.mxu0
    %v2482 = vsel %vm1809, %v935, 0
    %v2485 = vsel %vm1809, %v936, 0
    %v2488 = vsel %vm1809, %v1351, 0
    %v2491 = vsel %vm1809, %v1352, 0
    %2493 = vmatprep.subr.bf16.mxu0 0
    %2494 = vmatpush1.bf16.xpose.msra.mxu0 %v2488
    %2495 = vmatprep.subr.bf16.mxu0 0
    %2496 = vmatpush1.bf16.xpose.msra.mxu0 %v2491
    %2497 = vmatprep.subr.bf16.mxu0 0
    %2498 = vmatpush1.bf16.xpose.msra.mxu0 0
    %2499 = vmatprep.subr.bf16.mxu0 0
    %2500 = vmatpush1.bf16.xpose.msra.mxu0 0
    %2501 = vmatprep.subr.bf16.mxu0 0
    %2502 = vmatpush1.bf16.xpose.msra.mxu0 0
    %2503 = vmatprep.subr.bf16.mxu0 0
    %2504 = vmatpush1.bf16.xpose.msra.mxu0 0
    %2505 = vmatprep.subr.bf16.mxu0 0
    %2506 = vmatpush1.bf16.xpose.msra.mxu0 0
    %2507 = vmatprep.subr.bf16.mxu0 0
    %2508 = vmatpush1.bf16.xpose.msra.mxu0 0
    %2509 = vmatprep.subr.bf16.mxu0 0
    %2510 = vmatpush1.bf16.xpose.msra.mxu0 0
    %2511 = vmatprep.subr.bf16.mxu0 0
    %2512 = vmatpush1.bf16.xpose.msra.mxu0 0
    %2513 = vmatprep.subr.bf16.mxu0 0
    %2514 = vmatpush1.bf16.xpose.msra.mxu0 0
    %2515 = vmatprep.subr.bf16.mxu0 0
    %2516 = vmatpush1.bf16.xpose.msra.mxu0 0
    %2517 = vmatprep.subr.bf16.mxu0 0
    %2518 = vmatpush1.bf16.xpose.msra.mxu0 0
    %2519 = vmatprep.subr.bf16.mxu0 0
    %2520 = vmatpush1.bf16.xpose.msra.mxu0 0
    %2521 = vmatprep.subr.bf16.mxu0 0
    %2522 = vmatpush1.bf16.xpose.msra.mxu0 0
    %2523 = vmatprep.subr.bf16.mxu0 0
    %2524 = vmatpush1.bf16.xpose.msra.mxu0 0
    %2525 = vmatprep.mubr.bf16.mxu0 0
    %2526 = vmatmul.mubr.bf16.gmra.mrb[0].mxu0 %v2482
    %v2527 = vpop.f32.mrb[0].mxu0
    %v2528 = vadd.f32 0.0, %v2527
    %v2529 = vpop.f32.mrb[0].mxu0
    %v2530 = vpop.f32.mrb[0].mxu0
    %v2531 = vadd.f32 0.0, %v2530
    %v2532 = vpop.f32.mrb[0].mxu0
    %2533 = vmatprep.mubr.bf16.mxu0 0
    %2534 = vmatmul.mubr.bf16.gmra.mrb[0].mxu0 %v2485
    %v2535 = vpop.f32.mrb[0].mxu0
    %v2536 = vadd.f32 0.0, %v2535
    %v2537 = vpop.f32.mrb[0].mxu0
    %v2538 = vpop.f32.mrb[0].mxu0
    %v2539 = vadd.f32 0.0, %v2538
    %v2540 = vpop.f32.mrb[0].mxu0
    %2541 = vdwg.mxu0
    %v2543 = vsel %vm1809, %v937, 0
    %v2546 = vsel %vm1809, %v938, 0
    %v2549 = vsel %vm1809, %v1353, 0
    %v2552 = vsel %vm1809, %v1354, 0
    %2554 = vmatprep.subr.bf16.mxu0 0
    %2555 = vmatpush1.bf16.xpose.msra.mxu0 %v2549
    %2556 = vmatprep.subr.bf16.mxu0 0
    %2557 = vmatpush1.bf16.xpose.msra.mxu0 %v2552
    %2558 = vmatprep.subr.bf16.mxu0 0
    %2559 = vmatpush1.bf16.xpose.msra.mxu0 0
    %2560 = vmatprep.subr.bf16.mxu0 0
    %2561 = vmatpush1.bf16.xpose.msra.mxu0 0
    %2562 = vmatprep.subr.bf16.mxu0 0
    %2563 = vmatpush1.bf16.xpose.msra.mxu0 0
    %2564 = vmatprep.subr.bf16.mxu0 0
    %2565 = vmatpush1.bf16.xpose.msra.mxu0 0
    %2566 = vmatprep.subr.bf16.mxu0 0
    %2567 = vmatpush1.bf16.xpose.msra.mxu0 0
    %2568 = vmatprep.subr.bf16.mxu0 0
    %2569 = vmatpush1.bf16.xpose.msra.mxu0 0
    %2570 = vmatprep.subr.bf16.mxu0 0
    %2571 = vmatpush1.bf16.xpose.msra.mxu0 0
    %2572 = vmatprep.subr.bf16.mxu0 0
    %2573 = vmatpush1.bf16.xpose.msra.mxu0 0
    %2574 = vmatprep.subr.bf16.mxu0 0
    %2575 = vmatpush1.bf16.xpose.msra.mxu0 0
    %2576 = vmatprep.subr.bf16.mxu0 0
    %2577 = vmatpush1.bf16.xpose.msra.mxu0 0
    %2578 = vmatprep.subr.bf16.mxu0 0
    %2579 = vmatpush1.bf16.xpose.msra.mxu0 0
    %2580 = vmatprep.subr.bf16.mxu0 0
    %2581 = vmatpush1.bf16.xpose.msra.mxu0 0
    %2582 = vmatprep.subr.bf16.mxu0 0
    %2583 = vmatpush1.bf16.xpose.msra.mxu0 0
    %2584 = vmatprep.subr.bf16.mxu0 0
    %2585 = vmatpush1.bf16.xpose.msra.mxu0 0
    %2586 = vmatprep.mubr.bf16.mxu0 0
    %2587 = vmatmul.mubr.bf16.gmra.mrb[0].mxu0 %v2543
    %v2588 = vpop.f32.mrb[0].mxu0
    %v2589 = vadd.f32 0.0, %v2588
    %v2590 = vpop.f32.mrb[0].mxu0
    %v2591 = vpop.f32.mrb[0].mxu0
    %v2592 = vadd.f32 0.0, %v2591
    %v2593 = vpop.f32.mrb[0].mxu0
    %2594 = vmatprep.mubr.bf16.mxu0 0
    %2595 = vmatmul.mubr.bf16.gmra.mrb[0].mxu0 %v2546
    %v2596 = vpop.f32.mrb[0].mxu0
    %v2597 = vadd.f32 0.0, %v2596
    %v2598 = vpop.f32.mrb[0].mxu0
    %v2599 = vpop.f32.mrb[0].mxu0
    %v2600 = vadd.f32 0.0, %v2599
    %v2601 = vpop.f32.mrb[0].mxu0
    %2602 = vdwg.mxu0
    %v2604 = vsel %vm1809, %v939, 0
    %v2607 = vsel %vm1809, %v940, 0
    %v2610 = vsel %vm1809, %v1355, 0
    %v2613 = vsel %vm1809, %v1356, 0
    %2615 = vmatprep.subr.bf16.mxu0 0
    %2616 = vmatpush1.bf16.xpose.msra.mxu0 %v2610
    %2617 = vmatprep.subr.bf16.mxu0 0
    %2618 = vmatpush1.bf16.xpose.msra.mxu0 %v2613
    %2619 = vmatprep.subr.bf16.mxu0 0
    %2620 = vmatpush1.bf16.xpose.msra.mxu0 0
    %2621 = vmatprep.subr.bf16.mxu0 0
    %2622 = vmatpush1.bf16.xpose.msra.mxu0 0
    %2623 = vmatprep.subr.bf16.mxu0 0
    %2624 = vmatpush1.bf16.xpose.msra.mxu0 0
    %2625 = vmatprep.subr.bf16.mxu0 0
    %2626 = vmatpush1.bf16.xpose.msra.mxu0 0
    %2627 = vmatprep.subr.bf16.mxu0 0
    %2628 = vmatpush1.bf16.xpose.msra.mxu0 0
    %2629 = vmatprep.subr.bf16.mxu0 0
    %2630 = vmatpush1.bf16.xpose.msra.mxu0 0
    %2631 = vmatprep.subr.bf16.mxu0 0
    %2632 = vmatpush1.bf16.xpose.msra.mxu0 0
    %2633 = vmatprep.subr.bf16.mxu0 0
    %2634 = vmatpush1.bf16.xpose.msra.mxu0 0
    %2635 = vmatprep.subr.bf16.mxu0 0
    %2636 = vmatpush1.bf16.xpose.msra.mxu0 0
    %2637 = vmatprep.subr.bf16.mxu0 0
    %2638 = vmatpush1.bf16.xpose.msra.mxu0 0
    %2639 = vmatprep.subr.bf16.mxu0 0
    %2640 = vmatpush1.bf16.xpose.msra.mxu0 0
    %2641 = vmatprep.subr.bf16.mxu0 0
    %2642 = vmatpush1.bf16.xpose.msra.mxu0 0
    %2643 = vmatprep.subr.bf16.mxu0 0
    %2644 = vmatpush1.bf16.xpose.msra.mxu0 0
    %2645 = vmatprep.subr.bf16.mxu0 0
    %2646 = vmatpush1.bf16.xpose.msra.mxu0 0
    %2647 = vmatprep.mubr.bf16.mxu0 0
    %2648 = vmatmul.mubr.bf16.gmra.mrb[0].mxu0 %v2604
    %v2649 = vpop.f32.mrb[0].mxu0
    %v2650 = vadd.f32 0.0, %v2649
    %v2651 = vpop.f32.mrb[0].mxu0
    %v2652 = vpop.f32.mrb[0].mxu0
    %v2653 = vadd.f32 0.0, %v2652
    %v2654 = vpop.f32.mrb[0].mxu0
    %2655 = vmatprep.mubr.bf16.mxu0 0
    %2656 = vmatmul.mubr.bf16.gmra.mrb[0].mxu0 %v2607
    %v2657 = vpop.f32.mrb[0].mxu0
    %v2658 = vadd.f32 0.0, %v2657
    %v2659 = vpop.f32.mrb[0].mxu0
    %v2660 = vpop.f32.mrb[0].mxu0
    %v2661 = vadd.f32 0.0, %v2660
    %v2662 = vpop.f32.mrb[0].mxu0
    %2663 = vdwg.mxu0
    %v2665 = vsel %vm1809, %v941, 0
    %v2668 = vsel %vm1809, %v942, 0
    %v2671 = vsel %vm1809, %v1357, 0
    %v2674 = vsel %vm1809, %v1358, 0
    %2676 = vmatprep.subr.bf16.mxu0 0
    %2677 = vmatpush1.bf16.xpose.msra.mxu0 %v2671
    %2678 = vmatprep.subr.bf16.mxu0 0
    %2679 = vmatpush1.bf16.xpose.msra.mxu0 %v2674
    %2680 = vmatprep.subr.bf16.mxu0 0
    %2681 = vmatpush1.bf16.xpose.msra.mxu0 0
    %2682 = vmatprep.subr.bf16.mxu0 0
    %2683 = vmatpush1.bf16.xpose.msra.mxu0 0
    %2684 = vmatprep.subr.bf16.mxu0 0
    %2685 = vmatpush1.bf16.xpose.msra.mxu0 0
    %2686 = vmatprep.subr.bf16.mxu0 0
    %2687 = vmatpush1.bf16.xpose.msra.mxu0 0
    %2688 = vmatprep.subr.bf16.mxu0 0
    %2689 = vmatpush1.bf16.xpose.msra.mxu0 0
    %2690 = vmatprep.subr.bf16.mxu0 0
    %2691 = vmatpush1.bf16.xpose.msra.mxu0 0
    %2692 = vmatprep.subr.bf16.mxu0 0
    %2693 = vmatpush1.bf16.xpose.msra.mxu0 0
    %2694 = vmatprep.subr.bf16.mxu0 0
    %2695 = vmatpush1.bf16.xpose.msra.mxu0 0
    %2696 = vmatprep.subr.bf16.mxu0 0
    %2697 = vmatpush1.bf16.xpose.msra.mxu0 0
    %2698 = vmatprep.subr.bf16.mxu0 0
    %2699 = vmatpush1.bf16.xpose.msra.mxu0 0
    %2700 = vmatprep.subr.bf16.mxu0 0
    %2701 = vmatpush1.bf16.xpose.msra.mxu0 0
    %2702 = vmatprep.subr.bf16.mxu0 0
    %2703 = vmatpush1.bf16.xpose.msra.mxu0 0
    %2704 = vmatprep.subr.bf16.mxu0 0
    %2705 = vmatpush1.bf16.xpose.msra.mxu0 0
    %2706 = vmatprep.subr.bf16.mxu0 0
    %2707 = vmatpush1.bf16.xpose.msra.mxu0 0
    %2708 = vmatprep.mubr.bf16.mxu0 0
    %2709 = vmatmul.mubr.bf16.gmra.mrb[0].mxu0 %v2665
    %v2710 = vpop.f32.mrb[0].mxu0
    %v2711 = vadd.f32 0.0, %v2710
    %v2712 = vpop.f32.mrb[0].mxu0
    %v2713 = vpop.f32.mrb[0].mxu0
    %v2714 = vadd.f32 0.0, %v2713
    %v2715 = vpop.f32.mrb[0].mxu0
    %2716 = vmatprep.mubr.bf16.mxu0 0
    %2717 = vmatmul.mubr.bf16.gmra.mrb[0].mxu0 %v2668
    %v2718 = vpop.f32.mrb[0].mxu0
    %v2719 = vadd.f32 0.0, %v2718
    %v2720 = vpop.f32.mrb[0].mxu0
    %v2721 = vpop.f32.mrb[0].mxu0
    %v2722 = vadd.f32 0.0, %v2721
    %v2723 = vpop.f32.mrb[0].mxu0
    %2724 = vdwg.mxu0
    %v2726 = vsel %vm1809, %v943, 0
    %v2729 = vsel %vm1809, %v944, 0
    %v2732 = vsel %vm1809, %v1359, 0
    %v2735 = vsel %vm1809, %v1360, 0
    %2737 = vmatprep.subr.bf16.mxu0 0
    %2738 = vmatpush1.bf16.xpose.msra.mxu0 %v2732
    %2739 = vmatprep.subr.bf16.mxu0 0
    %2740 = vmatpush1.bf16.xpose.msra.mxu0 %v2735
    %2741 = vmatprep.subr.bf16.mxu0 0
    %2742 = vmatpush1.bf16.xpose.msra.mxu0 0
    %2743 = vmatprep.subr.bf16.mxu0 0
    %2744 = vmatpush1.bf16.xpose.msra.mxu0 0
    %2745 = vmatprep.subr.bf16.mxu0 0
    %2746 = vmatpush1.bf16.xpose.msra.mxu0 0
    %2747 = vmatprep.subr.bf16.mxu0 0
    %2748 = vmatpush1.bf16.xpose.msra.mxu0 0
    %2749 = vmatprep.subr.bf16.mxu0 0
    %2750 = vmatpush1.bf16.xpose.msra.mxu0 0
    %2751 = vmatprep.subr.bf16.mxu0 0
    %2752 = vmatpush1.bf16.xpose.msra.mxu0 0
    %2753 = vmatprep.subr.bf16.mxu0 0
    %2754 = vmatpush1.bf16.xpose.msra.mxu0 0
    %2755 = vmatprep.subr.bf16.mxu0 0
    %2756 = vmatpush1.bf16.xpose.msra.mxu0 0
    %2757 = vmatprep.subr.bf16.mxu0 0
    %2758 = vmatpush1.bf16.xpose.msra.mxu0 0
    %2759 = vmatprep.subr.bf16.mxu0 0
    %2760 = vmatpush1.bf16.xpose.msra.mxu0 0
    %2761 = vmatprep.subr.bf16.mxu0 0
    %2762 = vmatpush1.bf16.xpose.msra.mxu0 0
    %2763 = vmatprep.subr.bf16.mxu0 0
    %2764 = vmatpush1.bf16.xpose.msra.mxu0 0
    %2765 = vmatprep.subr.bf16.mxu0 0
    %2766 = vmatpush1.bf16.xpose.msra.mxu0 0
    %2767 = vmatprep.subr.bf16.mxu0 0
    %2768 = vmatpush1.bf16.xpose.msra.mxu0 0
    %2769 = vmatprep.mubr.bf16.mxu0 0
    %2770 = vmatmul.mubr.bf16.gmra.mrb[0].mxu0 %v2726
    %v2771 = vpop.f32.mrb[0].mxu0
    %v2772 = vadd.f32 0.0, %v2771
    %v2773 = vpop.f32.mrb[0].mxu0
    %v2774 = vpop.f32.mrb[0].mxu0
    %v2775 = vadd.f32 0.0, %v2774
    %v2776 = vpop.f32.mrb[0].mxu0
    %2777 = vmatprep.mubr.bf16.mxu0 0
    %2778 = vmatmul.mubr.bf16.gmra.mrb[0].mxu0 %v2729
    %v2779 = vpop.f32.mrb[0].mxu0
    %v2780 = vadd.f32 0.0, %v2779
    %v2781 = vpop.f32.mrb[0].mxu0
    %v2782 = vpop.f32.mrb[0].mxu0
    %v2783 = vadd.f32 0.0, %v2782
    %v2784 = vpop.f32.mrb[0].mxu0
    %2785 = vdwg.mxu0
    %v2787 = vsel %vm1809, %v945, 0
    %v2790 = vsel %vm1809, %v946, 0
    %v2793 = vsel %vm1809, %v1361, 0
    %v2796 = vsel %vm1809, %v1362, 0
    %2798 = vmatprep.subr.bf16.mxu0 0
    %2799 = vmatpush1.bf16.xpose.msra.mxu0 %v2793
    %2800 = vmatprep.subr.bf16.mxu0 0
    %2801 = vmatpush1.bf16.xpose.msra.mxu0 %v2796
    %2802 = vmatprep.subr.bf16.mxu0 0
    %2803 = vmatpush1.bf16.xpose.msra.mxu0 0
    %2804 = vmatprep.subr.bf16.mxu0 0
    %2805 = vmatpush1.bf16.xpose.msra.mxu0 0
    %2806 = vmatprep.subr.bf16.mxu0 0
    %2807 = vmatpush1.bf16.xpose.msra.mxu0 0
    %2808 = vmatprep.subr.bf16.mxu0 0
    %2809 = vmatpush1.bf16.xpose.msra.mxu0 0
    %2810 = vmatprep.subr.bf16.mxu0 0
    %2811 = vmatpush1.bf16.xpose.msra.mxu0 0
    %2812 = vmatprep.subr.bf16.mxu0 0
    %2813 = vmatpush1.bf16.xpose.msra.mxu0 0
    %2814 = vmatprep.subr.bf16.mxu0 0
    %2815 = vmatpush1.bf16.xpose.msra.mxu0 0
    %2816 = vmatprep.subr.bf16.mxu0 0
    %2817 = vmatpush1.bf16.xpose.msra.mxu0 0
    %2818 = vmatprep.subr.bf16.mxu0 0
    %2819 = vmatpush1.bf16.xpose.msra.mxu0 0
    %2820 = vmatprep.subr.bf16.mxu0 0
    %2821 = vmatpush1.bf16.xpose.msra.mxu0 0
    %2822 = vmatprep.subr.bf16.mxu0 0
    %2823 = vmatpush1.bf16.xpose.msra.mxu0 0
    %2824 = vmatprep.subr.bf16.mxu0 0
    %2825 = vmatpush1.bf16.xpose.msra.mxu0 0
    %2826 = vmatprep.subr.bf16.mxu0 0
    %2827 = vmatpush1.bf16.xpose.msra.mxu0 0
    %2828 = vmatprep.subr.bf16.mxu0 0
    %2829 = vmatpush1.bf16.xpose.msra.mxu0 0
    %2830 = vmatprep.mubr.bf16.mxu0 0
    %2831 = vmatmul.mubr.bf16.gmra.mrb[0].mxu0 %v2787
    %v2832 = vpop.f32.mrb[0].mxu0
    %v2833 = vadd.f32 0.0, %v2832
    %v2834 = vpop.f32.mrb[0].mxu0
    %v2835 = vpop.f32.mrb[0].mxu0
    %v2836 = vadd.f32 0.0, %v2835
    %v2837 = vpop.f32.mrb[0].mxu0
    %2838 = vmatprep.mubr.bf16.mxu0 0
    %2839 = vmatmul.mubr.bf16.gmra.mrb[0].mxu0 %v2790
    %v2840 = vpop.f32.mrb[0].mxu0
    %v2841 = vadd.f32 0.0, %v2840
    %v2842 = vpop.f32.mrb[0].mxu0
    %v2843 = vpop.f32.mrb[0].mxu0
    %v2844 = vadd.f32 0.0, %v2843
    %v2845 = vpop.f32.mrb[0].mxu0
    %2846 = vdwg.mxu0
    %v2848 = vsel %vm1809, %v947, 0
    %v2851 = vsel %vm1809, %v948, 0
    %v2854 = vsel %vm1809, %v1363, 0
    %v2857 = vsel %vm1809, %v1364, 0
    %2859 = vmatprep.subr.bf16.mxu0 0
    %2860 = vmatpush1.bf16.xpose.msra.mxu0 %v2854
    %2861 = vmatprep.subr.bf16.mxu0 0
    %2862 = vmatpush1.bf16.xpose.msra.mxu0 %v2857
    %2863 = vmatprep.subr.bf16.mxu0 0
    %2864 = vmatpush1.bf16.xpose.msra.mxu0 0
    %2865 = vmatprep.subr.bf16.mxu0 0
    %2866 = vmatpush1.bf16.xpose.msra.mxu0 0
    %2867 = vmatprep.subr.bf16.mxu0 0
    %2868 = vmatpush1.bf16.xpose.msra.mxu0 0
    %2869 = vmatprep.subr.bf16.mxu0 0
    %2870 = vmatpush1.bf16.xpose.msra.mxu0 0
    %2871 = vmatprep.subr.bf16.mxu0 0
    %2872 = vmatpush1.bf16.xpose.msra.mxu0 0
    %2873 = vmatprep.subr.bf16.mxu0 0
    %2874 = vmatpush1.bf16.xpose.msra.mxu0 0
    %2875 = vmatprep.subr.bf16.mxu0 0
    %2876 = vmatpush1.bf16.xpose.msra.mxu0 0
    %2877 = vmatprep.subr.bf16.mxu0 0
    %2878 = vmatpush1.bf16.xpose.msra.mxu0 0
    %2879 = vmatprep.subr.bf16.mxu0 0
    %2880 = vmatpush1.bf16.xpose.msra.mxu0 0
    %2881 = vmatprep.subr.bf16.mxu0 0
    %2882 = vmatpush1.bf16.xpose.msra.mxu0 0
    %2883 = vmatprep.subr.bf16.mxu0 0
    %2884 = vmatpush1.bf16.xpose.msra.mxu0 0
    %2885 = vmatprep.subr.bf16.mxu0 0
    %2886 = vmatpush1.bf16.xpose.msra.mxu0 0
    %2887 = vmatprep.subr.bf16.mxu0 0
    %2888 = vmatpush1.bf16.xpose.msra.mxu0 0
    %2889 = vmatprep.subr.bf16.mxu0 0
    %2890 = vmatpush1.bf16.xpose.msra.mxu0 0
    %2891 = vmatprep.mubr.bf16.mxu0 0
    %2892 = vmatmul.mubr.bf16.gmra.mrb[0].mxu0 %v2848
    %v2893 = vpop.f32.mrb[0].mxu0
    %v2894 = vadd.f32 0.0, %v2893
    %v2895 = vpop.f32.mrb[0].mxu0
    %v2896 = vpop.f32.mrb[0].mxu0
    %v2897 = vadd.f32 0.0, %v2896
    %v2898 = vpop.f32.mrb[0].mxu0
    %2899 = vmatprep.mubr.bf16.mxu0 0
    %2900 = vmatmul.mubr.bf16.gmra.mrb[0].mxu0 %v2851
    %v2901 = vpop.f32.mrb[0].mxu0
    %v2902 = vadd.f32 0.0, %v2901
    %v2903 = vpop.f32.mrb[0].mxu0
    %v2904 = vpop.f32.mrb[0].mxu0
    %v2905 = vadd.f32 0.0, %v2904
    %v2906 = vpop.f32.mrb[0].mxu0
    %2907 = vdwg.mxu0
    %v2909 = vsel %vm1809, %v949, 0
    %v2912 = vsel %vm1809, %v950, 0
    %v2915 = vsel %vm1809, %v1365, 0
    %v2918 = vsel %vm1809, %v1366, 0
    %2920 = vmatprep.subr.bf16.mxu0 0
    %2921 = vmatpush1.bf16.xpose.msra.mxu0 %v2915
    %2922 = vmatprep.subr.bf16.mxu0 0
    %2923 = vmatpush1.bf16.xpose.msra.mxu0 %v2918
    %2924 = vmatprep.subr.bf16.mxu0 0
    %2925 = vmatpush1.bf16.xpose.msra.mxu0 0
    %2926 = vmatprep.subr.bf16.mxu0 0
    %2927 = vmatpush1.bf16.xpose.msra.mxu0 0
    %2928 = vmatprep.subr.bf16.mxu0 0
    %2929 = vmatpush1.bf16.xpose.msra.mxu0 0
    %2930 = vmatprep.subr.bf16.mxu0 0
    %2931 = vmatpush1.bf16.xpose.msra.mxu0 0
    %2932 = vmatprep.subr.bf16.mxu0 0
    %2933 = vmatpush1.bf16.xpose.msra.mxu0 0
    %2934 = vmatprep.subr.bf16.mxu0 0
    %2935 = vmatpush1.bf16.xpose.msra.mxu0 0
    %2936 = vmatprep.subr.bf16.mxu0 0
    %2937 = vmatpush1.bf16.xpose.msra.mxu0 0
    %2938 = vmatprep.subr.bf16.mxu0 0
    %2939 = vmatpush1.bf16.xpose.msra.mxu0 0
    %2940 = vmatprep.subr.bf16.mxu0 0
    %2941 = vmatpush1.bf16.xpose.msra.mxu0 0
    %2942 = vmatprep.subr.bf16.mxu0 0
    %2943 = vmatpush1.bf16.xpose.msra.mxu0 0
    %2944 = vmatprep.subr.bf16.mxu0 0
    %2945 = vmatpush1.bf16.xpose.msra.mxu0 0
    %2946 = vmatprep.subr.bf16.mxu0 0
    %2947 = vmatpush1.bf16.xpose.msra.mxu0 0
    %2948 = vmatprep.subr.bf16.mxu0 0
    %2949 = vmatpush1.bf16.xpose.msra.mxu0 0
    %2950 = vmatprep.subr.bf16.mxu0 0
    %2951 = vmatpush1.bf16.xpose.msra.mxu0 0
    %2952 = vmatprep.mubr.bf16.mxu0 0
    %2953 = vmatmul.mubr.bf16.gmra.mrb[0].mxu0 %v2909
    %v2954 = vpop.f32.mrb[0].mxu0
    %v2955 = vadd.f32 0.0, %v2954
    %v2956 = vpop.f32.mrb[0].mxu0
    %v2957 = vpop.f32.mrb[0].mxu0
    %v2958 = vadd.f32 0.0, %v2957
    %v2959 = vpop.f32.mrb[0].mxu0
    %2960 = vmatprep.mubr.bf16.mxu0 0
    %2961 = vmatmul.mubr.bf16.gmra.mrb[0].mxu0 %v2912
    %v2962 = vpop.f32.mrb[0].mxu0
    %v2963 = vadd.f32 0.0, %v2962
    %v2964 = vpop.f32.mrb[0].mxu0
    %v2965 = vpop.f32.mrb[0].mxu0
    %v2966 = vadd.f32 0.0, %v2965
    %v2967 = vpop.f32.mrb[0].mxu0
    %2968 = vdwg.mxu0
    %v2970 = vsel %vm1809, %v951, 0
    %v2973 = vsel %vm1809, %v952, 0
    %v2976 = vsel %vm1809, %v1367, 0
    %v2979 = vsel %vm1809, %v1368, 0
    %2981 = vmatprep.subr.bf16.mxu0 0
    %2982 = vmatpush1.bf16.xpose.msra.mxu0 %v2976
    %2983 = vmatprep.subr.bf16.mxu0 0
    %2984 = vmatpush1.bf16.xpose.msra.mxu0 %v2979
    %2985 = vmatprep.subr.bf16.mxu0 0
    %2986 = vmatpush1.bf16.xpose.msra.mxu0 0
    %2987 = vmatprep.subr.bf16.mxu0 0
    %2988 = vmatpush1.bf16.xpose.msra.mxu0 0
    %2989 = vmatprep.subr.bf16.mxu0 0
    %2990 = vmatpush1.bf16.xpose.msra.mxu0 0
    %2991 = vmatprep.subr.bf16.mxu0 0
    %2992 = vmatpush1.bf16.xpose.msra.mxu0 0
    %2993 = vmatprep.subr.bf16.mxu0 0
    %2994 = vmatpush1.bf16.xpose.msra.mxu0 0
    %2995 = vmatprep.subr.bf16.mxu0 0
    %2996 = vmatpush1.bf16.xpose.msra.mxu0 0
    %2997 = vmatprep.subr.bf16.mxu0 0
    %2998 = vmatpush1.bf16.xpose.msra.mxu0 0
    %2999 = vmatprep.subr.bf16.mxu0 0
    %3000 = vmatpush1.bf16.xpose.msra.mxu0 0
    %3001 = vmatprep.subr.bf16.mxu0 0
    %3002 = vmatpush1.bf16.xpose.msra.mxu0 0
    %3003 = vmatprep.subr.bf16.mxu0 0
    %3004 = vmatpush1.bf16.xpose.msra.mxu0 0
    %3005 = vmatprep.subr.bf16.mxu0 0
    %3006 = vmatpush1.bf16.xpose.msra.mxu0 0
    %3007 = vmatprep.subr.bf16.mxu0 0
    %3008 = vmatpush1.bf16.xpose.msra.mxu0 0
    %3009 = vmatprep.subr.bf16.mxu0 0
    %3010 = vmatpush1.bf16.xpose.msra.mxu0 0
    %3011 = vmatprep.subr.bf16.mxu0 0
    %3012 = vmatpush1.bf16.xpose.msra.mxu0 0
    %3013 = vmatprep.mubr.bf16.mxu0 0
    %3014 = vmatmul.mubr.bf16.gmra.mrb[0].mxu0 %v2970
    %v3015 = vpop.f32.mrb[0].mxu0
    %v3016 = vadd.f32 0.0, %v3015
    %v3017 = vpop.f32.mrb[0].mxu0
    %v3018 = vpop.f32.mrb[0].mxu0
    %v3019 = vadd.f32 0.0, %v3018
    %v3020 = vpop.f32.mrb[0].mxu0
    %3021 = vmatprep.mubr.bf16.mxu0 0
    %3022 = vmatmul.mubr.bf16.gmra.mrb[0].mxu0 %v2973
    %v3023 = vpop.f32.mrb[0].mxu0
    %v3024 = vadd.f32 0.0, %v3023
    %v3025 = vpop.f32.mrb[0].mxu0
    %v3026 = vpop.f32.mrb[0].mxu0
    %v3027 = vadd.f32 0.0, %v3026
    %v3028 = vpop.f32.mrb[0].mxu0
    %3029 = vdwg.mxu0
    %v3031 = vsel %vm1809, %v953, 0
    %v3034 = vsel %vm1809, %v954, 0
    %v3037 = vsel %vm1809, %v1369, 0
    %v3040 = vsel %vm1809, %v1370, 0
    %3042 = vmatprep.subr.bf16.mxu0 0
    %3043 = vmatpush1.bf16.xpose.msra.mxu0 %v3037
    %3044 = vmatprep.subr.bf16.mxu0 0
    %3045 = vmatpush1.bf16.xpose.msra.mxu0 %v3040
    %3046 = vmatprep.subr.bf16.mxu0 0
    %3047 = vmatpush1.bf16.xpose.msra.mxu0 0
    %3048 = vmatprep.subr.bf16.mxu0 0
    %3049 = vmatpush1.bf16.xpose.msra.mxu0 0
    %3050 = vmatprep.subr.bf16.mxu0 0
    %3051 = vmatpush1.bf16.xpose.msra.mxu0 0
    %3052 = vmatprep.subr.bf16.mxu0 0
    %3053 = vmatpush1.bf16.xpose.msra.mxu0 0
    %3054 = vmatprep.subr.bf16.mxu0 0
    %3055 = vmatpush1.bf16.xpose.msra.mxu0 0
    %3056 = vmatprep.subr.bf16.mxu0 0
    %3057 = vmatpush1.bf16.xpose.msra.mxu0 0
    %3058 = vmatprep.subr.bf16.mxu0 0
    %3059 = vmatpush1.bf16.xpose.msra.mxu0 0
    %3060 = vmatprep.subr.bf16.mxu0 0
    %3061 = vmatpush1.bf16.xpose.msra.mxu0 0
    %3062 = vmatprep.subr.bf16.mxu0 0
    %3063 = vmatpush1.bf16.xpose.msra.mxu0 0
    %3064 = vmatprep.subr.bf16.mxu0 0
    %3065 = vmatpush1.bf16.xpose.msra.mxu0 0
    %3066 = vmatprep.subr.bf16.mxu0 0
    %3067 = vmatpush1.bf16.xpose.msra.mxu0 0
    %3068 = vmatprep.subr.bf16.mxu0 0
    %3069 = vmatpush1.bf16.xpose.msra.mxu0 0
    %3070 = vmatprep.subr.bf16.mxu0 0
    %3071 = vmatpush1.bf16.xpose.msra.mxu0 0
    %3072 = vmatprep.subr.bf16.mxu0 0
    %3073 = vmatpush1.bf16.xpose.msra.mxu0 0
    %3074 = vmatprep.mubr.bf16.mxu0 0
    %3075 = vmatmul.mubr.bf16.gmra.mrb[0].mxu0 %v3031
    %v3076 = vpop.f32.mrb[0].mxu0
    %v3077 = vadd.f32 0.0, %v3076
    %v3078 = vpop.f32.mrb[0].mxu0
    %v3079 = vpop.f32.mrb[0].mxu0
    %v3080 = vadd.f32 0.0, %v3079
    %v3081 = vpop.f32.mrb[0].mxu0
    %3082 = vmatprep.mubr.bf16.mxu0 0
    %3083 = vmatmul.mubr.bf16.gmra.mrb[0].mxu0 %v3034
    %v3084 = vpop.f32.mrb[0].mxu0
    %v3085 = vadd.f32 0.0, %v3084
    %v3086 = vpop.f32.mrb[0].mxu0
    %v3087 = vpop.f32.mrb[0].mxu0
    %v3088 = vadd.f32 0.0, %v3087
    %v3089 = vpop.f32.mrb[0].mxu0
    %3090 = vdwg.mxu0
    %v3092 = vsel %vm1809, %v955, 0
    %v3095 = vsel %vm1809, %v956, 0
    %v3098 = vsel %vm1809, %v1371, 0
    %v3101 = vsel %vm1809, %v1372, 0
    %3103 = vmatprep.subr.bf16.mxu0 0
    %3104 = vmatpush1.bf16.xpose.msra.mxu0 %v3098
    %3105 = vmatprep.subr.bf16.mxu0 0
    %3106 = vmatpush1.bf16.xpose.msra.mxu0 %v3101
    %3107 = vmatprep.subr.bf16.mxu0 0
    %3108 = vmatpush1.bf16.xpose.msra.mxu0 0
    %3109 = vmatprep.subr.bf16.mxu0 0
    %3110 = vmatpush1.bf16.xpose.msra.mxu0 0
    %3111 = vmatprep.subr.bf16.mxu0 0
    %3112 = vmatpush1.bf16.xpose.msra.mxu0 0
    %3113 = vmatprep.subr.bf16.mxu0 0
    %3114 = vmatpush1.bf16.xpose.msra.mxu0 0
    %3115 = vmatprep.subr.bf16.mxu0 0
    %3116 = vmatpush1.bf16.xpose.msra.mxu0 0
    %3117 = vmatprep.subr.bf16.mxu0 0
    %3118 = vmatpush1.bf16.xpose.msra.mxu0 0
    %3119 = vmatprep.subr.bf16.mxu0 0
    %3120 = vmatpush1.bf16.xpose.msra.mxu0 0
    %3121 = vmatprep.subr.bf16.mxu0 0
    %3122 = vmatpush1.bf16.xpose.msra.mxu0 0
    %3123 = vmatprep.subr.bf16.mxu0 0
    %3124 = vmatpush1.bf16.xpose.msra.mxu0 0
    %3125 = vmatprep.subr.bf16.mxu0 0
    %3126 = vmatpush1.bf16.xpose.msra.mxu0 0
    %3127 = vmatprep.subr.bf16.mxu0 0
    %3128 = vmatpush1.bf16.xpose.msra.mxu0 0
    %3129 = vmatprep.subr.bf16.mxu0 0
    %3130 = vmatpush1.bf16.xpose.msra.mxu0 0
    %3131 = vmatprep.subr.bf16.mxu0 0
    %3132 = vmatpush1.bf16.xpose.msra.mxu0 0
    %3133 = vmatprep.subr.bf16.mxu0 0
    %3134 = vmatpush1.bf16.xpose.msra.mxu0 0
    %3135 = vmatprep.mubr.bf16.mxu0 0
    %3136 = vmatmul.mubr.bf16.gmra.mrb[0].mxu0 %v3092
    %v3137 = vpop.f32.mrb[0].mxu0
    %v3138 = vadd.f32 0.0, %v3137
    %v3139 = vpop.f32.mrb[0].mxu0
    %v3140 = vpop.f32.mrb[0].mxu0
    %v3141 = vadd.f32 0.0, %v3140
    %v3142 = vpop.f32.mrb[0].mxu0
    %3143 = vmatprep.mubr.bf16.mxu0 0
    %3144 = vmatmul.mubr.bf16.gmra.mrb[0].mxu0 %v3095
    %v3145 = vpop.f32.mrb[0].mxu0
    %v3146 = vadd.f32 0.0, %v3145
    %v3147 = vpop.f32.mrb[0].mxu0
    %v3148 = vpop.f32.mrb[0].mxu0
    %v3149 = vadd.f32 0.0, %v3148
    %v3150 = vpop.f32.mrb[0].mxu0
    %3151 = vdwg.mxu0
    %v3153 = vsel %vm1809, %v957, 0
    %v3156 = vsel %vm1809, %v958, 0
    %v3159 = vsel %vm1809, %v1373, 0
    %v3162 = vsel %vm1809, %v1374, 0
    %3164 = vmatprep.subr.bf16.mxu0 0
    %3165 = vmatpush1.bf16.xpose.msra.mxu0 %v3159
    %3166 = vmatprep.subr.bf16.mxu0 0
    %3167 = vmatpush1.bf16.xpose.msra.mxu0 %v3162
    %3168 = vmatprep.subr.bf16.mxu0 0
    %3169 = vmatpush1.bf16.xpose.msra.mxu0 0
    %3170 = vmatprep.subr.bf16.mxu0 0
    %3171 = vmatpush1.bf16.xpose.msra.mxu0 0
    %3172 = vmatprep.subr.bf16.mxu0 0
    %3173 = vmatpush1.bf16.xpose.msra.mxu0 0
    %3174 = vmatprep.subr.bf16.mxu0 0
    %3175 = vmatpush1.bf16.xpose.msra.mxu0 0
    %3176 = vmatprep.subr.bf16.mxu0 0
    %3177 = vmatpush1.bf16.xpose.msra.mxu0 0
    %3178 = vmatprep.subr.bf16.mxu0 0
    %3179 = vmatpush1.bf16.xpose.msra.mxu0 0
    %3180 = vmatprep.subr.bf16.mxu0 0
    %3181 = vmatpush1.bf16.xpose.msra.mxu0 0
    %3182 = vmatprep.subr.bf16.mxu0 0
    %3183 = vmatpush1.bf16.xpose.msra.mxu0 0
    %3184 = vmatprep.subr.bf16.mxu0 0
    %3185 = vmatpush1.bf16.xpose.msra.mxu0 0
    %3186 = vmatprep.subr.bf16.mxu0 0
    %3187 = vmatpush1.bf16.xpose.msra.mxu0 0
    %3188 = vmatprep.subr.bf16.mxu0 0
    %3189 = vmatpush1.bf16.xpose.msra.mxu0 0
    %3190 = vmatprep.subr.bf16.mxu0 0
    %3191 = vmatpush1.bf16.xpose.msra.mxu0 0
    %3192 = vmatprep.subr.bf16.mxu0 0
    %3193 = vmatpush1.bf16.xpose.msra.mxu0 0
    %3194 = vmatprep.subr.bf16.mxu0 0
    %3195 = vmatpush1.bf16.xpose.msra.mxu0 0
    %3196 = vmatprep.mubr.bf16.mxu0 0
    %3197 = vmatmul.mubr.bf16.gmra.mrb[0].mxu0 %v3153
    %v3198 = vpop.f32.mrb[0].mxu0
    %v3199 = vadd.f32 0.0, %v3198
    %v3200 = vpop.f32.mrb[0].mxu0
    %v3201 = vpop.f32.mrb[0].mxu0
    %v3202 = vadd.f32 0.0, %v3201
    %v3203 = vpop.f32.mrb[0].mxu0
    %3204 = vmatprep.mubr.bf16.mxu0 0
    %3205 = vmatmul.mubr.bf16.gmra.mrb[0].mxu0 %v3156
    %v3206 = vpop.f32.mrb[0].mxu0
    %v3207 = vadd.f32 0.0, %v3206
    %v3208 = vpop.f32.mrb[0].mxu0
    %v3209 = vpop.f32.mrb[0].mxu0
    %v3210 = vadd.f32 0.0, %v3209
    %v3211 = vpop.f32.mrb[0].mxu0
    %3212 = vdwg.mxu0
    %v3214 = vsel %vm1809, %v959, 0
    %v3217 = vsel %vm1809, %v960, 0
    %v3220 = vsel %vm1809, %v1375, 0
    %v3223 = vsel %vm1809, %v1376, 0
    %3225 = vmatprep.subr.bf16.mxu0 0
    %3226 = vmatpush1.bf16.xpose.msra.mxu0 %v3220
    %3227 = vmatprep.subr.bf16.mxu0 0
    %3228 = vmatpush1.bf16.xpose.msra.mxu0 %v3223
    %3229 = vmatprep.subr.bf16.mxu0 0
    %3230 = vmatpush1.bf16.xpose.msra.mxu0 0
    %3231 = vmatprep.subr.bf16.mxu0 0
    %3232 = vmatpush1.bf16.xpose.msra.mxu0 0
    %3233 = vmatprep.subr.bf16.mxu0 0
    %3234 = vmatpush1.bf16.xpose.msra.mxu0 0
    %3235 = vmatprep.subr.bf16.mxu0 0
    %3236 = vmatpush1.bf16.xpose.msra.mxu0 0
    %3237 = vmatprep.subr.bf16.mxu0 0
    %3238 = vmatpush1.bf16.xpose.msra.mxu0 0
    %3239 = vmatprep.subr.bf16.mxu0 0
    %3240 = vmatpush1.bf16.xpose.msra.mxu0 0
    %3241 = vmatprep.subr.bf16.mxu0 0
    %3242 = vmatpush1.bf16.xpose.msra.mxu0 0
    %3243 = vmatprep.subr.bf16.mxu0 0
    %3244 = vmatpush1.bf16.xpose.msra.mxu0 0
    %3245 = vmatprep.subr.bf16.mxu0 0
    %3246 = vmatpush1.bf16.xpose.msra.mxu0 0
    %3247 = vmatprep.subr.bf16.mxu0 0
    %3248 = vmatpush1.bf16.xpose.msra.mxu0 0
    %3249 = vmatprep.subr.bf16.mxu0 0
    %3250 = vmatpush1.bf16.xpose.msra.mxu0 0
    %3251 = vmatprep.subr.bf16.mxu0 0
    %3252 = vmatpush1.bf16.xpose.msra.mxu0 0
    %3253 = vmatprep.subr.bf16.mxu0 0
    %3254 = vmatpush1.bf16.xpose.msra.mxu0 0
    %3255 = vmatprep.subr.bf16.mxu0 0
    %3256 = vmatpush1.bf16.xpose.msra.mxu0 0
    %3257 = vmatprep.mubr.bf16.mxu0 0
    %3258 = vmatmul.mubr.bf16.gmra.mrb[0].mxu0 %v3214
    %v3259 = vpop.f32.mrb[0].mxu0
    %v3260 = vadd.f32 0.0, %v3259
    %v3261 = vpop.f32.mrb[0].mxu0
    %v3262 = vpop.f32.mrb[0].mxu0
    %v3263 = vadd.f32 0.0, %v3262
    %v3264 = vpop.f32.mrb[0].mxu0
    %3265 = vmatprep.mubr.bf16.mxu0 0
    %3266 = vmatmul.mubr.bf16.gmra.mrb[0].mxu0 %v3217
    %v3267 = vpop.f32.mrb[0].mxu0
    %v3268 = vadd.f32 0.0, %v3267
    %v3269 = vpop.f32.mrb[0].mxu0
    %v3270 = vpop.f32.mrb[0].mxu0
    %v3271 = vadd.f32 0.0, %v3270
    %v3272 = vpop.f32.mrb[0].mxu0
    %3273 = vdwg.mxu0
    %v3275 = vsel %vm1809, %v961, 0
    %v3278 = vsel %vm1809, %v962, 0
    %v3281 = vsel %vm1809, %v1377, 0
    %v3284 = vsel %vm1809, %v1378, 0
    %3286 = vmatprep.subr.bf16.mxu0 0
    %3287 = vmatpush1.bf16.xpose.msra.mxu0 %v3281
    %3288 = vmatprep.subr.bf16.mxu0 0
    %3289 = vmatpush1.bf16.xpose.msra.mxu0 %v3284
    %3290 = vmatprep.subr.bf16.mxu0 0
    %3291 = vmatpush1.bf16.xpose.msra.mxu0 0
    %3292 = vmatprep.subr.bf16.mxu0 0
    %3293 = vmatpush1.bf16.xpose.msra.mxu0 0
    %3294 = vmatprep.subr.bf16.mxu0 0
    %3295 = vmatpush1.bf16.xpose.msra.mxu0 0
    %3296 = vmatprep.subr.bf16.mxu0 0
    %3297 = vmatpush1.bf16.xpose.msra.mxu0 0
    %3298 = vmatprep.subr.bf16.mxu0 0
    %3299 = vmatpush1.bf16.xpose.msra.mxu0 0
    %3300 = vmatprep.subr.bf16.mxu0 0
    %3301 = vmatpush1.bf16.xpose.msra.mxu0 0
    %3302 = vmatprep.subr.bf16.mxu0 0
    %3303 = vmatpush1.bf16.xpose.msra.mxu0 0
    %3304 = vmatprep.subr.bf16.mxu0 0
    %3305 = vmatpush1.bf16.xpose.msra.mxu0 0
    %3306 = vmatprep.subr.bf16.mxu0 0
    %3307 = vmatpush1.bf16.xpose.msra.mxu0 0
    %3308 = vmatprep.subr.bf16.mxu0 0
    %3309 = vmatpush1.bf16.xpose.msra.mxu0 0
    %3310 = vmatprep.subr.bf16.mxu0 0
    %3311 = vmatpush1.bf16.xpose.msra.mxu0 0
    %3312 = vmatprep.subr.bf16.mxu0 0
    %3313 = vmatpush1.bf16.xpose.msra.mxu0 0
    %3314 = vmatprep.subr.bf16.mxu0 0
    %3315 = vmatpush1.bf16.xpose.msra.mxu0 0
    %3316 = vmatprep.subr.bf16.mxu0 0
    %3317 = vmatpush1.bf16.xpose.msra.mxu0 0
    %3318 = vmatprep.mubr.bf16.mxu0 0
    %3319 = vmatmul.mubr.bf16.gmra.mrb[0].mxu0 %v3275
    %v3320 = vpop.f32.mrb[0].mxu0
    %v3321 = vadd.f32 0.0, %v3320
    %v3322 = vpop.f32.mrb[0].mxu0
    %v3323 = vpop.f32.mrb[0].mxu0
    %v3324 = vadd.f32 0.0, %v3323
    %v3325 = vpop.f32.mrb[0].mxu0
    %3326 = vmatprep.mubr.bf16.mxu0 0
    %3327 = vmatmul.mubr.bf16.gmra.mrb[0].mxu0 %v3278
    %v3328 = vpop.f32.mrb[0].mxu0
    %v3329 = vadd.f32 0.0, %v3328
    %v3330 = vpop.f32.mrb[0].mxu0
    %v3331 = vpop.f32.mrb[0].mxu0
    %v3332 = vadd.f32 0.0, %v3331
    %v3333 = vpop.f32.mrb[0].mxu0
    %3334 = vdwg.mxu0
    %v3336 = vsel %vm1809, %v963, 0
    %v3339 = vsel %vm1809, %v964, 0
    %v3342 = vsel %vm1809, %v1379, 0
    %v3345 = vsel %vm1809, %v1380, 0
    %3347 = vmatprep.subr.bf16.mxu0 0
    %3348 = vmatpush1.bf16.xpose.msra.mxu0 %v3342
    %3349 = vmatprep.subr.bf16.mxu0 0
    %3350 = vmatpush1.bf16.xpose.msra.mxu0 %v3345
    %3351 = vmatprep.subr.bf16.mxu0 0
    %3352 = vmatpush1.bf16.xpose.msra.mxu0 0
    %3353 = vmatprep.subr.bf16.mxu0 0
    %3354 = vmatpush1.bf16.xpose.msra.mxu0 0
    %3355 = vmatprep.subr.bf16.mxu0 0
    %3356 = vmatpush1.bf16.xpose.msra.mxu0 0
    %3357 = vmatprep.subr.bf16.mxu0 0
    %3358 = vmatpush1.bf16.xpose.msra.mxu0 0
    %3359 = vmatprep.subr.bf16.mxu0 0
    %3360 = vmatpush1.bf16.xpose.msra.mxu0 0
    %3361 = vmatprep.subr.bf16.mxu0 0
    %3362 = vmatpush1.bf16.xpose.msra.mxu0 0
    %3363 = vmatprep.subr.bf16.mxu0 0
    %3364 = vmatpush1.bf16.xpose.msra.mxu0 0
    %3365 = vmatprep.subr.bf16.mxu0 0
    %3366 = vmatpush1.bf16.xpose.msra.mxu0 0
    %3367 = vmatprep.subr.bf16.mxu0 0
    %3368 = vmatpush1.bf16.xpose.msra.mxu0 0
    %3369 = vmatprep.subr.bf16.mxu0 0
    %3370 = vmatpush1.bf16.xpose.msra.mxu0 0
    %3371 = vmatprep.subr.bf16.mxu0 0
    %3372 = vmatpush1.bf16.xpose.msra.mxu0 0
    %3373 = vmatprep.subr.bf16.mxu0 0
    %3374 = vmatpush1.bf16.xpose.msra.mxu0 0
    %3375 = vmatprep.subr.bf16.mxu0 0
    %3376 = vmatpush1.bf16.xpose.msra.mxu0 0
    %3377 = vmatprep.subr.bf16.mxu0 0
    %3378 = vmatpush1.bf16.xpose.msra.mxu0 0
    %3379 = vmatprep.mubr.bf16.mxu0 0
    %3380 = vmatmul.mubr.bf16.gmra.mrb[0].mxu0 %v3336
    %v3381 = vpop.f32.mrb[0].mxu0
    %v3382 = vadd.f32 0.0, %v3381
    %v3383 = vpop.f32.mrb[0].mxu0
    %v3384 = vpop.f32.mrb[0].mxu0
    %v3385 = vadd.f32 0.0, %v3384
    %v3386 = vpop.f32.mrb[0].mxu0
    %3387 = vmatprep.mubr.bf16.mxu0 0
    %3388 = vmatmul.mubr.bf16.gmra.mrb[0].mxu0 %v3339
    %v3389 = vpop.f32.mrb[0].mxu0
    %v3390 = vadd.f32 0.0, %v3389
    %v3391 = vpop.f32.mrb[0].mxu0
    %v3392 = vpop.f32.mrb[0].mxu0
    %v3393 = vadd.f32 0.0, %v3392
    %v3394 = vpop.f32.mrb[0].mxu0
    %3395 = vdwg.mxu0
    %v3397 = vsel %vm1809, %v965, 0
    %v3400 = vsel %vm1809, %v966, 0
    %v3403 = vsel %vm1809, %v1381, 0
    %v3406 = vsel %vm1809, %v1382, 0
    %3408 = vmatprep.subr.bf16.mxu0 0
    %3409 = vmatpush1.bf16.xpose.msra.mxu0 %v3403
    %3410 = vmatprep.subr.bf16.mxu0 0
    %3411 = vmatpush1.bf16.xpose.msra.mxu0 %v3406
    %3412 = vmatprep.subr.bf16.mxu0 0
    %3413 = vmatpush1.bf16.xpose.msra.mxu0 0
    %3414 = vmatprep.subr.bf16.mxu0 0
    %3415 = vmatpush1.bf16.xpose.msra.mxu0 0
    %3416 = vmatprep.subr.bf16.mxu0 0
    %3417 = vmatpush1.bf16.xpose.msra.mxu0 0
    %3418 = vmatprep.subr.bf16.mxu0 0
    %3419 = vmatpush1.bf16.xpose.msra.mxu0 0
    %3420 = vmatprep.subr.bf16.mxu0 0
    %3421 = vmatpush1.bf16.xpose.msra.mxu0 0
    %3422 = vmatprep.subr.bf16.mxu0 0
    %3423 = vmatpush1.bf16.xpose.msra.mxu0 0
    %3424 = vmatprep.subr.bf16.mxu0 0
    %3425 = vmatpush1.bf16.xpose.msra.mxu0 0
    %3426 = vmatprep.subr.bf16.mxu0 0
    %3427 = vmatpush1.bf16.xpose.msra.mxu0 0
    %3428 = vmatprep.subr.bf16.mxu0 0
    %3429 = vmatpush1.bf16.xpose.msra.mxu0 0
    %3430 = vmatprep.subr.bf16.mxu0 0
    %3431 = vmatpush1.bf16.xpose.msra.mxu0 0
    %3432 = vmatprep.subr.bf16.mxu0 0
    %3433 = vmatpush1.bf16.xpose.msra.mxu0 0
    %3434 = vmatprep.subr.bf16.mxu0 0
    %3435 = vmatpush1.bf16.xpose.msra.mxu0 0
    %3436 = vmatprep.subr.bf16.mxu0 0
    %3437 = vmatpush1.bf16.xpose.msra.mxu0 0
    %3438 = vmatprep.subr.bf16.mxu0 0
    %3439 = vmatpush1.bf16.xpose.msra.mxu0 0
    %3440 = vmatprep.mubr.bf16.mxu0 0
    %3441 = vmatmul.mubr.bf16.gmra.mrb[0].mxu0 %v3397
    %v3442 = vpop.f32.mrb[0].mxu0
    %v3443 = vadd.f32 0.0, %v3442
    %v3444 = vpop.f32.mrb[0].mxu0
    %v3445 = vpop.f32.mrb[0].mxu0
    %v3446 = vadd.f32 0.0, %v3445
    %v3447 = vpop.f32.mrb[0].mxu0
    %3448 = vmatprep.mubr.bf16.mxu0 0
    %3449 = vmatmul.mubr.bf16.gmra.mrb[0].mxu0 %v3400
    %v3450 = vpop.f32.mrb[0].mxu0
    %v3451 = vadd.f32 0.0, %v3450
    %v3452 = vpop.f32.mrb[0].mxu0
    %v3453 = vpop.f32.mrb[0].mxu0
    %v3454 = vadd.f32 0.0, %v3453
    %v3455 = vpop.f32.mrb[0].mxu0
    %3456 = vdwg.mxu0
    %v3458 = vsel %vm1809, %v967, 0
    %v3461 = vsel %vm1809, %v968, 0
    %v3464 = vsel %vm1809, %v1383, 0
    %v3467 = vsel %vm1809, %v1384, 0
    %3469 = vmatprep.subr.bf16.mxu0 0
    %3470 = vmatpush1.bf16.xpose.msra.mxu0 %v3464
    %3471 = vmatprep.subr.bf16.mxu0 0
    %3472 = vmatpush1.bf16.xpose.msra.mxu0 %v3467
    %3473 = vmatprep.subr.bf16.mxu0 0
    %3474 = vmatpush1.bf16.xpose.msra.mxu0 0
    %3475 = vmatprep.subr.bf16.mxu0 0
    %3476 = vmatpush1.bf16.xpose.msra.mxu0 0
    %3477 = vmatprep.subr.bf16.mxu0 0
    %3478 = vmatpush1.bf16.xpose.msra.mxu0 0
    %3479 = vmatprep.subr.bf16.mxu0 0
    %3480 = vmatpush1.bf16.xpose.msra.mxu0 0
    %3481 = vmatprep.subr.bf16.mxu0 0
    %3482 = vmatpush1.bf16.xpose.msra.mxu0 0
    %3483 = vmatprep.subr.bf16.mxu0 0
    %3484 = vmatpush1.bf16.xpose.msra.mxu0 0
    %3485 = vmatprep.subr.bf16.mxu0 0
    %3486 = vmatpush1.bf16.xpose.msra.mxu0 0
    %3487 = vmatprep.subr.bf16.mxu0 0
    %3488 = vmatpush1.bf16.xpose.msra.mxu0 0
    %3489 = vmatprep.subr.bf16.mxu0 0
    %3490 = vmatpush1.bf16.xpose.msra.mxu0 0
    %3491 = vmatprep.subr.bf16.mxu0 0
    %3492 = vmatpush1.bf16.xpose.msra.mxu0 0
    %3493 = vmatprep.subr.bf16.mxu0 0
    %3494 = vmatpush1.bf16.xpose.msra.mxu0 0
    %3495 = vmatprep.subr.bf16.mxu0 0
    %3496 = vmatpush1.bf16.xpose.msra.mxu0 0
    %3497 = vmatprep.subr.bf16.mxu0 0
    %3498 = vmatpush1.bf16.xpose.msra.mxu0 0
    %3499 = vmatprep.subr.bf16.mxu0 0
    %3500 = vmatpush1.bf16.xpose.msra.mxu0 0
    %3501 = vmatprep.mubr.bf16.mxu0 0
    %3502 = vmatmul.mubr.bf16.gmra.mrb[0].mxu0 %v3458
    %v3503 = vpop.f32.mrb[0].mxu0
    %v3504 = vadd.f32 0.0, %v3503
    %v3505 = vpop.f32.mrb[0].mxu0
    %v3506 = vpop.f32.mrb[0].mxu0
    %v3507 = vadd.f32 0.0, %v3506
    %v3508 = vpop.f32.mrb[0].mxu0
    %3509 = vmatprep.mubr.bf16.mxu0 0
    %3510 = vmatmul.mubr.bf16.gmra.mrb[0].mxu0 %v3461
    %v3511 = vpop.f32.mrb[0].mxu0
    %v3512 = vadd.f32 0.0, %v3511
    %v3513 = vpop.f32.mrb[0].mxu0
    %v3514 = vpop.f32.mrb[0].mxu0
    %v3515 = vadd.f32 0.0, %v3514
    %v3516 = vpop.f32.mrb[0].mxu0
    %3517 = vdwg.mxu0
    %v3519 = vsel %vm1809, %v969, 0
    %v3522 = vsel %vm1809, %v970, 0
    %v3525 = vsel %vm1809, %v1385, 0
    %v3528 = vsel %vm1809, %v1386, 0
    %3530 = vmatprep.subr.bf16.mxu0 0
    %3531 = vmatpush1.bf16.xpose.msra.mxu0 %v3525
    %3532 = vmatprep.subr.bf16.mxu0 0
    %3533 = vmatpush1.bf16.xpose.msra.mxu0 %v3528
    %3534 = vmatprep.subr.bf16.mxu0 0
    %3535 = vmatpush1.bf16.xpose.msra.mxu0 0
    %3536 = vmatprep.subr.bf16.mxu0 0
    %3537 = vmatpush1.bf16.xpose.msra.mxu0 0
    %3538 = vmatprep.subr.bf16.mxu0 0
    %3539 = vmatpush1.bf16.xpose.msra.mxu0 0
    %3540 = vmatprep.subr.bf16.mxu0 0
    %3541 = vmatpush1.bf16.xpose.msra.mxu0 0
    %3542 = vmatprep.subr.bf16.mxu0 0
    %3543 = vmatpush1.bf16.xpose.msra.mxu0 0
    %3544 = vmatprep.subr.bf16.mxu0 0
    %3545 = vmatpush1.bf16.xpose.msra.mxu0 0
    %3546 = vmatprep.subr.bf16.mxu0 0
    %3547 = vmatpush1.bf16.xpose.msra.mxu0 0
    %3548 = vmatprep.subr.bf16.mxu0 0
    %3549 = vmatpush1.bf16.xpose.msra.mxu0 0
    %3550 = vmatprep.subr.bf16.mxu0 0
    %3551 = vmatpush1.bf16.xpose.msra.mxu0 0
    %3552 = vmatprep.subr.bf16.mxu0 0
    %3553 = vmatpush1.bf16.xpose.msra.mxu0 0
    %3554 = vmatprep.subr.bf16.mxu0 0
    %3555 = vmatpush1.bf16.xpose.msra.mxu0 0
    %3556 = vmatprep.subr.bf16.mxu0 0
    %3557 = vmatpush1.bf16.xpose.msra.mxu0 0
    %3558 = vmatprep.subr.bf16.mxu0 0
    %3559 = vmatpush1.bf16.xpose.msra.mxu0 0
    %3560 = vmatprep.subr.bf16.mxu0 0
    %3561 = vmatpush1.bf16.xpose.msra.mxu0 0
    %3562 = vmatprep.mubr.bf16.mxu0 0
    %3563 = vmatmul.mubr.bf16.gmra.mrb[0].mxu0 %v3519
    %v3564 = vpop.f32.mrb[0].mxu0
    %v3565 = vadd.f32 0.0, %v3564
    %v3566 = vpop.f32.mrb[0].mxu0
    %v3567 = vpop.f32.mrb[0].mxu0
    %v3568 = vadd.f32 0.0, %v3567
    %v3569 = vpop.f32.mrb[0].mxu0
    %3570 = vmatprep.mubr.bf16.mxu0 0
    %3571 = vmatmul.mubr.bf16.gmra.mrb[0].mxu0 %v3522
    %v3572 = vpop.f32.mrb[0].mxu0
    %v3573 = vadd.f32 0.0, %v3572
    %v3574 = vpop.f32.mrb[0].mxu0
    %v3575 = vpop.f32.mrb[0].mxu0
    %v3576 = vadd.f32 0.0, %v3575
    %v3577 = vpop.f32.mrb[0].mxu0
    %3578 = vdwg.mxu0
    %v3580 = vsel %vm1809, %v971, 0
    %v3583 = vsel %vm1809, %v972, 0
    %v3586 = vsel %vm1809, %v1387, 0
    %v3589 = vsel %vm1809, %v1388, 0
    %3591 = vmatprep.subr.bf16.mxu0 0
    %3592 = vmatpush1.bf16.xpose.msra.mxu0 %v3586
    %3593 = vmatprep.subr.bf16.mxu0 0
    %3594 = vmatpush1.bf16.xpose.msra.mxu0 %v3589
    %3595 = vmatprep.subr.bf16.mxu0 0
    %3596 = vmatpush1.bf16.xpose.msra.mxu0 0
    %3597 = vmatprep.subr.bf16.mxu0 0
    %3598 = vmatpush1.bf16.xpose.msra.mxu0 0
    %3599 = vmatprep.subr.bf16.mxu0 0
    %3600 = vmatpush1.bf16.xpose.msra.mxu0 0
    %3601 = vmatprep.subr.bf16.mxu0 0
    %3602 = vmatpush1.bf16.xpose.msra.mxu0 0
    %3603 = vmatprep.subr.bf16.mxu0 0
    %3604 = vmatpush1.bf16.xpose.msra.mxu0 0
    %3605 = vmatprep.subr.bf16.mxu0 0
    %3606 = vmatpush1.bf16.xpose.msra.mxu0 0
    %3607 = vmatprep.subr.bf16.mxu0 0
    %3608 = vmatpush1.bf16.xpose.msra.mxu0 0
    %3609 = vmatprep.subr.bf16.mxu0 0
    %3610 = vmatpush1.bf16.xpose.msra.mxu0 0
    %3611 = vmatprep.subr.bf16.mxu0 0
    %3612 = vmatpush1.bf16.xpose.msra.mxu0 0
    %3613 = vmatprep.subr.bf16.mxu0 0
    %3614 = vmatpush1.bf16.xpose.msra.mxu0 0
    %3615 = vmatprep.subr.bf16.mxu0 0
    %3616 = vmatpush1.bf16.xpose.msra.mxu0 0
    %3617 = vmatprep.subr.bf16.mxu0 0
    %3618 = vmatpush1.bf16.xpose.msra.mxu0 0
    %3619 = vmatprep.subr.bf16.mxu0 0
    %3620 = vmatpush1.bf16.xpose.msra.mxu0 0
    %3621 = vmatprep.subr.bf16.mxu0 0
    %3622 = vmatpush1.bf16.xpose.msra.mxu0 0
    %3623 = vmatprep.mubr.bf16.mxu0 0
    %3624 = vmatmul.mubr.bf16.gmra.mrb[0].mxu0 %v3580
    %v3625 = vpop.f32.mrb[0].mxu0
    %v3626 = vadd.f32 0.0, %v3625
    %v3627 = vpop.f32.mrb[0].mxu0
    %v3628 = vpop.f32.mrb[0].mxu0
    %v3629 = vadd.f32 0.0, %v3628
    %v3630 = vpop.f32.mrb[0].mxu0
    %3631 = vmatprep.mubr.bf16.mxu0 0
    %3632 = vmatmul.mubr.bf16.gmra.mrb[0].mxu0 %v3583
    %v3633 = vpop.f32.mrb[0].mxu0
    %v3634 = vadd.f32 0.0, %v3633
    %v3635 = vpop.f32.mrb[0].mxu0
    %v3636 = vpop.f32.mrb[0].mxu0
    %v3637 = vadd.f32 0.0, %v3636
    %v3638 = vpop.f32.mrb[0].mxu0
    %3639 = vdwg.mxu0
    %v3641 = vsel %vm1809, %v973, 0
    %v3644 = vsel %vm1809, %v974, 0
    %v3647 = vsel %vm1809, %v1389, 0
    %v3650 = vsel %vm1809, %v1390, 0
    %3652 = vmatprep.subr.bf16.mxu0 0
    %3653 = vmatpush1.bf16.xpose.msra.mxu0 %v3647
    %3654 = vmatprep.subr.bf16.mxu0 0
    %3655 = vmatpush1.bf16.xpose.msra.mxu0 %v3650
    %3656 = vmatprep.subr.bf16.mxu0 0
    %3657 = vmatpush1.bf16.xpose.msra.mxu0 0
    %3658 = vmatprep.subr.bf16.mxu0 0
    %3659 = vmatpush1.bf16.xpose.msra.mxu0 0
    %3660 = vmatprep.subr.bf16.mxu0 0
    %3661 = vmatpush1.bf16.xpose.msra.mxu0 0
    %3662 = vmatprep.subr.bf16.mxu0 0
    %3663 = vmatpush1.bf16.xpose.msra.mxu0 0
    %3664 = vmatprep.subr.bf16.mxu0 0
    %3665 = vmatpush1.bf16.xpose.msra.mxu0 0
    %3666 = vmatprep.subr.bf16.mxu0 0
    %3667 = vmatpush1.bf16.xpose.msra.mxu0 0
    %3668 = vmatprep.subr.bf16.mxu0 0
    %3669 = vmatpush1.bf16.xpose.msra.mxu0 0
    %3670 = vmatprep.subr.bf16.mxu0 0
    %3671 = vmatpush1.bf16.xpose.msra.mxu0 0
    %3672 = vmatprep.subr.bf16.mxu0 0
    %3673 = vmatpush1.bf16.xpose.msra.mxu0 0
    %3674 = vmatprep.subr.bf16.mxu0 0
    %3675 = vmatpush1.bf16.xpose.msra.mxu0 0
    %3676 = vmatprep.subr.bf16.mxu0 0
    %3677 = vmatpush1.bf16.xpose.msra.mxu0 0
    %3678 = vmatprep.subr.bf16.mxu0 0
    %3679 = vmatpush1.bf16.xpose.msra.mxu0 0
    %3680 = vmatprep.subr.bf16.mxu0 0
    %3681 = vmatpush1.bf16.xpose.msra.mxu0 0
    %3682 = vmatprep.subr.bf16.mxu0 0
    %3683 = vmatpush1.bf16.xpose.msra.mxu0 0
    %3684 = vmatprep.mubr.bf16.mxu0 0
    %3685 = vmatmul.mubr.bf16.gmra.mrb[0].mxu0 %v3641
    %v3686 = vpop.f32.mrb[0].mxu0
    %v3687 = vadd.f32 0.0, %v3686
    %v3688 = vpop.f32.mrb[0].mxu0
    %v3689 = vpop.f32.mrb[0].mxu0
    %v3690 = vadd.f32 0.0, %v3689
    %v3691 = vpop.f32.mrb[0].mxu0
    %3692 = vmatprep.mubr.bf16.mxu0 0
    %3693 = vmatmul.mubr.bf16.gmra.mrb[0].mxu0 %v3644
    %v3694 = vpop.f32.mrb[0].mxu0
    %v3695 = vadd.f32 0.0, %v3694
    %v3696 = vpop.f32.mrb[0].mxu0
    %v3697 = vpop.f32.mrb[0].mxu0
    %v3698 = vadd.f32 0.0, %v3697
    %v3699 = vpop.f32.mrb[0].mxu0
    %3700 = vdwg.mxu0
    %v3702 = vsel %vm1809, %v975, 0
    %v3705 = vsel %vm1809, %v976, 0
    %v3708 = vsel %vm1809, %v1391, 0
    %v3711 = vsel %vm1809, %v1392, 0
    %3713 = vmatprep.subr.bf16.mxu0 0
    %3714 = vmatpush1.bf16.xpose.msra.mxu0 %v3708
    %3715 = vmatprep.subr.bf16.mxu0 0
    %3716 = vmatpush1.bf16.xpose.msra.mxu0 %v3711
    %3717 = vmatprep.subr.bf16.mxu0 0
    %3718 = vmatpush1.bf16.xpose.msra.mxu0 0
    %3719 = vmatprep.subr.bf16.mxu0 0
    %3720 = vmatpush1.bf16.xpose.msra.mxu0 0
    %3721 = vmatprep.subr.bf16.mxu0 0
    %3722 = vmatpush1.bf16.xpose.msra.mxu0 0
    %3723 = vmatprep.subr.bf16.mxu0 0
    %3724 = vmatpush1.bf16.xpose.msra.mxu0 0
    %3725 = vmatprep.subr.bf16.mxu0 0
    %3726 = vmatpush1.bf16.xpose.msra.mxu0 0
    %3727 = vmatprep.subr.bf16.mxu0 0
    %3728 = vmatpush1.bf16.xpose.msra.mxu0 0
    %3729 = vmatprep.subr.bf16.mxu0 0
    %3730 = vmatpush1.bf16.xpose.msra.mxu0 0
    %3731 = vmatprep.subr.bf16.mxu0 0
    %3732 = vmatpush1.bf16.xpose.msra.mxu0 0
    %3733 = vmatprep.subr.bf16.mxu0 0
    %3734 = vmatpush1.bf16.xpose.msra.mxu0 0
    %3735 = vmatprep.subr.bf16.mxu0 0
    %3736 = vmatpush1.bf16.xpose.msra.mxu0 0
    %3737 = vmatprep.subr.bf16.mxu0 0
    %3738 = vmatpush1.bf16.xpose.msra.mxu0 0
    %3739 = vmatprep.subr.bf16.mxu0 0
    %3740 = vmatpush1.bf16.xpose.msra.mxu0 0
    %3741 = vmatprep.subr.bf16.mxu0 0
    %3742 = vmatpush1.bf16.xpose.msra.mxu0 0
    %3743 = vmatprep.subr.bf16.mxu0 0
    %3744 = vmatpush1.bf16.xpose.msra.mxu0 0
    %3745 = vmatprep.mubr.bf16.mxu0 0
    %3746 = vmatmul.mubr.bf16.gmra.mrb[0].mxu0 %v3702
    %v3747 = vpop.f32.mrb[0].mxu0
    %v3748 = vadd.f32 0.0, %v3747
    %v3749 = vpop.f32.mrb[0].mxu0
    %v3750 = vpop.f32.mrb[0].mxu0
    %v3751 = vadd.f32 0.0, %v3750
    %v3752 = vpop.f32.mrb[0].mxu0
    %3753 = vmatprep.mubr.bf16.mxu0 0
    %3754 = vmatmul.mubr.bf16.gmra.mrb[0].mxu0 %v3705
    %v3755 = vpop.f32.mrb[0].mxu0
    %v3756 = vadd.f32 0.0, %v3755
    %v3757 = vpop.f32.mrb[0].mxu0
    %v3758 = vpop.f32.mrb[0].mxu0
    %v3759 = vadd.f32 0.0, %v3758
    %v3760 = vpop.f32.mrb[0].mxu0
    %3761 = vdwg.mxu0
    %v3762 = vld [vmem:[#allocation10] sm:$0xff]
    %v3763 = vld [vmem:[#allocation10 + $0x8] sm:$0xff]
    %v3764 = vld [vmem:[#allocation10 + $0x10] sm:$0xff]
    %v3765 = vld [vmem:[#allocation10 + $0x18] sm:$0xff]
    %v3766 = vld [vmem:[#allocation10 + $0x20] sm:$0xff]
    %v3767 = vld [vmem:[#allocation10 + $0x28] sm:$0xff]
    %v3768 = vld [vmem:[#allocation10 + $0x30] sm:$0xff]
    %v3769 = vld [vmem:[#allocation10 + $0x38] sm:$0xff]
    %v3770 = vld [vmem:[#allocation10 + $0x40] sm:$0xff]
    %v3771 = vld [vmem:[#allocation10 + $0x48] sm:$0xff]
    %v3772 = vld [vmem:[#allocation10 + $0x50] sm:$0xff]
    %v3773 = vld [vmem:[#allocation10 + $0x58] sm:$0xff]
    %v3774 = vld [vmem:[#allocation10 + $0x60] sm:$0xff]
    %v3775 = vld [vmem:[#allocation10 + $0x68] sm:$0xff]
    %v3776 = vld [vmem:[#allocation10 + $0x70] sm:$0xff]
    %v3777 = vld [vmem:[#allocation10 + $0x78] sm:$0xff]
    %v3778 = vld [vmem:[#allocation10 + $0x80] sm:$0xff]
    %v3779 = vld [vmem:[#allocation10 + $0x88] sm:$0xff]
    %v3780 = vld [vmem:[#allocation10 + $0x90] sm:$0xff]
    %v3781 = vld [vmem:[#allocation10 + $0x98] sm:$0xff]
    %v3782 = vld [vmem:[#allocation10 + $0xa0] sm:$0xff]
    %v3783 = vld [vmem:[#allocation10 + $0xa8] sm:$0xff]
    %v3784 = vld [vmem:[#allocation10 + $0xb0] sm:$0xff]
    %v3785 = vld [vmem:[#allocation10 + $0xb8] sm:$0xff]
    %v3786 = vld [vmem:[#allocation10 + $0xc0] sm:$0xff]
    %v3787 = vld [vmem:[#allocation10 + $0xc8] sm:$0xff]
    %v3788 = vld [vmem:[#allocation10 + $0xd0] sm:$0xff]
    %v3789 = vld [vmem:[#allocation10 + $0xd8] sm:$0xff]
    %v3790 = vld [vmem:[#allocation10 + $0xe0] sm:$0xff]
    %v3791 = vld [vmem:[#allocation10 + $0xe8] sm:$0xff]
    %v3792 = vld [vmem:[#allocation10 + $0xf0] sm:$0xff]
    %v3793 = vld [vmem:[#allocation10 + $0xf8] sm:$0xff]
    %v3794 = vadd.f32 %v1857, %v3762
    %v3795 = vadd.f32 %v1860, %v3763
    %v3796 = vadd.f32 %v1865, %v3764
    %v3797 = vadd.f32 %v1868, %v3765
    %v3798 = vadd.f32 %v1918, %v3762
    %v3799 = vadd.f32 %v1921, %v3763
    %v3800 = vadd.f32 %v1926, %v3764
    %v3801 = vadd.f32 %v1929, %v3765
    %v3802 = vadd.f32 %v1979, %v3762
    %v3803 = vadd.f32 %v1982, %v3763
    %v3804 = vadd.f32 %v1987, %v3764
    %v3805 = vadd.f32 %v1990, %v3765
    %v3806 = vadd.f32 %v2040, %v3762
    %v3807 = vadd.f32 %v2043, %v3763
    %v3808 = vadd.f32 %v2048, %v3764
    %v3809 = vadd.f32 %v2051, %v3765
    %v3810 = vadd.f32 %v2101, %v3766
    %v3811 = vadd.f32 %v2104, %v3767
    %v3812 = vadd.f32 %v2109, %v3768
    %v3813 = vadd.f32 %v2112, %v3769
    %v3814 = vadd.f32 %v2162, %v3766
    %v3815 = vadd.f32 %v2165, %v3767
    %v3816 = vadd.f32 %v2170, %v3768
    %v3817 = vadd.f32 %v2173, %v3769
    %v3818 = vadd.f32 %v2223, %v3766
    %v3819 = vadd.f32 %v2226, %v3767
    %v3820 = vadd.f32 %v2231, %v3768
    %v3821 = vadd.f32 %v2234, %v3769
    %v3822 = vadd.f32 %v2284, %v3766
    %v3823 = vadd.f32 %v2287, %v3767
    %v3824 = vadd.f32 %v2292, %v3768
    %v3825 = vadd.f32 %v2295, %v3769
    %v3826 = vadd.f32 %v2345, %v3770
    %v3827 = vadd.f32 %v2348, %v3771
    %v3828 = vadd.f32 %v2353, %v3772
    %v3829 = vadd.f32 %v2356, %v3773
    %v3830 = vadd.f32 %v2406, %v3770
    %v3831 = vadd.f32 %v2409, %v3771
    %v3832 = vadd.f32 %v2414, %v3772
    %v3833 = vadd.f32 %v2417, %v3773
    %v3834 = vadd.f32 %v2467, %v3770
    %v3835 = vadd.f32 %v2470, %v3771
    %v3836 = vadd.f32 %v2475, %v3772
    %v3837 = vadd.f32 %v2478, %v3773
    %v3838 = vadd.f32 %v2528, %v3770
    %v3839 = vadd.f32 %v2531, %v3771
    %v3840 = vadd.f32 %v2536, %v3772
    %v3841 = vadd.f32 %v2539, %v3773
    %v3842 = vadd.f32 %v2589, %v3774
    %v3843 = vadd.f32 %v2592, %v3775
    %v3844 = vadd.f32 %v2597, %v3776
    %v3845 = vadd.f32 %v2600, %v3777
    %v3846 = vadd.f32 %v2650, %v3774
    %v3847 = vadd.f32 %v2653, %v3775
    %v3848 = vadd.f32 %v2658, %v3776
    %v3849 = vadd.f32 %v2661, %v3777
    %v3850 = vadd.f32 %v2711, %v3774
    %v3851 = vadd.f32 %v2714, %v3775
    %v3852 = vadd.f32 %v2719, %v3776
    %v3853 = vadd.f32 %v2722, %v3777
    %v3854 = vadd.f32 %v2772, %v3774
    %v3855 = vadd.f32 %v2775, %v3775
    %v3856 = vadd.f32 %v2780, %v3776
    %v3857 = vadd.f32 %v2783, %v3777
    %v3858 = vadd.f32 %v2833, %v3778
    %v3859 = vadd.f32 %v2836, %v3779
    %v3860 = vadd.f32 %v2841, %v3780
    %v3861 = vadd.f32 %v2844, %v3781
    %v3862 = vadd.f32 %v2894, %v3778
    %v3863 = vadd.f32 %v2897, %v3779
    %v3864 = vadd.f32 %v2902, %v3780
    %v3865 = vadd.f32 %v2905, %v3781
    %v3866 = vadd.f32 %v2955, %v3778
    %v3867 = vadd.f32 %v2958, %v3779
    %v3868 = vadd.f32 %v2963, %v3780
    %v3869 = vadd.f32 %v2966, %v3781
    %v3870 = vadd.f32 %v3016, %v3778
    %v3871 = vadd.f32 %v3019, %v3779
    %v3872 = vadd.f32 %v3024, %v3780
    %v3873 = vadd.f32 %v3027, %v3781
    %v3874 = vadd.f32 %v3077, %v3782
    %v3875 = vadd.f32 %v3080, %v3783
    %v3876 = vadd.f32 %v3085, %v3784
    %v3877 = vadd.f32 %v3088, %v3785
    %v3878 = vadd.f32 %v3138, %v3782
    %v3879 = vadd.f32 %v3141, %v3783
    %v3880 = vadd.f32 %v3146, %v3784
    %v3881 = vadd.f32 %v3149, %v3785
    %v3882 = vadd.f32 %v3199, %v3782
    %v3883 = vadd.f32 %v3202, %v3783
    %v3884 = vadd.f32 %v3207, %v3784
    %v3885 = vadd.f32 %v3210, %v3785
    %v3886 = vadd.f32 %v3260, %v3782
    %v3887 = vadd.f32 %v3263, %v3783
    %v3888 = vadd.f32 %v3268, %v3784
    %v3889 = vadd.f32 %v3271, %v3785
    %v3890 = vadd.f32 %v3321, %v3786
    %v3891 = vadd.f32 %v3324, %v3787
    %v3892 = vadd.f32 %v3329, %v3788
    %v3893 = vadd.f32 %v3332, %v3789
    %v3894 = vadd.f32 %v3382, %v3786
    %v3895 = vadd.f32 %v3385, %v3787
    %v3896 = vadd.f32 %v3390, %v3788
    %v3897 = vadd.f32 %v3393, %v3789
    %v3898 = vadd.f32 %v3443, %v3786
    %v3899 = vadd.f32 %v3446, %v3787
    %v3900 = vadd.f32 %v3451, %v3788
    %v3901 = vadd.f32 %v3454, %v3789
    %v3902 = vadd.f32 %v3504, %v3786
    %v3903 = vadd.f32 %v3507, %v3787
    %v3904 = vadd.f32 %v3512, %v3788
    %v3905 = vadd.f32 %v3515, %v3789
    %v3906 = vadd.f32 %v3565, %v3790
    %v3907 = vadd.f32 %v3568, %v3791
    %v3908 = vadd.f32 %v3573, %v3792
    %v3909 = vadd.f32 %v3576, %v3793
    %v3910 = vadd.f32 %v3626, %v3790
    %v3911 = vadd.f32 %v3629, %v3791
    %v3912 = vadd.f32 %v3634, %v3792
    %v3913 = vadd.f32 %v3637, %v3793
    %v3914 = vadd.f32 %v3687, %v3790
    %v3915 = vadd.f32 %v3690, %v3791
    %v3916 = vadd.f32 %v3695, %v3792
    %v3917 = vadd.f32 %v3698, %v3793
    %v3918 = vadd.f32 %v3748, %v3790
    %v3919 = vadd.f32 %v3751, %v3791
    %v3920 = vadd.f32 %v3756, %v3792
    %v3921 = vadd.f32 %v3759, %v3793
    %vm3922 = vcmask 261120
    %v3923 = vsel %vm3922, %v3794, -inf
    %3924 = vmax.xlane.f32.xlu0 %v3923
    %v3925 = vpop.xlane.xlu0 %3924
    %v3926 = vsel %vm3922, %v3795, -inf
    %3927 = vmax.xlane.f32.xlu0 %v3926
    %v3928 = vpop.xlane.xlu0 %3927
    %v3929 = vsel %vm3922, %v3796, -inf
    %3930 = vmax.xlane.f32.xlu0 %v3929
    %v3931 = vpop.xlane.xlu0 %3930
    %v3932 = vsel %vm3922, %v3797, -inf
    %3933 = vmax.xlane.f32.xlu0 %v3932
    %v3934 = vpop.xlane.xlu0 %3933
    %v3935 = vsel %vm3922, %v3798, -inf
    %3936 = vmax.xlane.f32.xlu0 %v3935
    %v3937 = vpop.xlane.xlu0 %3936
    %v3938 = vsel %vm3922, %v3799, -inf
    %3939 = vmax.xlane.f32.xlu0 %v3938
    %v3940 = vpop.xlane.xlu0 %3939
    %v3941 = vsel %vm3922, %v3800, -inf
    %3942 = vmax.xlane.f32.xlu0 %v3941
    %v3943 = vpop.xlane.xlu0 %3942
    %v3944 = vsel %vm3922, %v3801, -inf
    %3945 = vmax.xlane.f32.xlu0 %v3944
    %v3946 = vpop.xlane.xlu0 %3945
    %v3947 = vsel %vm3922, %v3802, -inf
    %3948 = vmax.xlane.f32.xlu0 %v3947
    %v3949 = vpop.xlane.xlu0 %3948
    %v3950 = vsel %vm3922, %v3803, -inf
    %3951 = vmax.xlane.f32.xlu0 %v3950
    %v3952 = vpop.xlane.xlu0 %3951
    %v3953 = vsel %vm3922, %v3804, -inf
    %3954 = vmax.xlane.f32.xlu0 %v3953
    %v3955 = vpop.xlane.xlu0 %3954
    %v3956 = vsel %vm3922, %v3805, -inf
    %3957 = vmax.xlane.f32.xlu0 %v3956
    %v3958 = vpop.xlane.xlu0 %3957
    %v3959 = vsel %vm3922, %v3806, -inf
    %3960 = vmax.xlane.f32.xlu0 %v3959
    %v3961 = vpop.xlane.xlu0 %3960
    %v3962 = vsel %vm3922, %v3807, -inf
    %3963 = vmax.xlane.f32.xlu0 %v3962
    %v3964 = vpop.xlane.xlu0 %3963
    %v3965 = vsel %vm3922, %v3808, -inf
    %3966 = vmax.xlane.f32.xlu0 %v3965
    %v3967 = vpop.xlane.xlu0 %3966
    %v3968 = vsel %vm3922, %v3809, -inf
    %3969 = vmax.xlane.f32.xlu0 %v3968
    %v3970 = vpop.xlane.xlu0 %3969
    %v3971 = vsel %vm3922, %v3810, -inf
    %3972 = vmax.xlane.f32.xlu0 %v3971
    %v3973 = vpop.xlane.xlu0 %3972
    %v3974 = vsel %vm3922, %v3811, -inf
    %3975 = vmax.xlane.f32.xlu0 %v3974
    %v3976 = vpop.xlane.xlu0 %3975
    %v3977 = vsel %vm3922, %v3812, -inf
    %3978 = vmax.xlane.f32.xlu0 %v3977
    %v3979 = vpop.xlane.xlu0 %3978
    %v3980 = vsel %vm3922, %v3813, -inf
    %3981 = vmax.xlane.f32.xlu0 %v3980
    %v3982 = vpop.xlane.xlu0 %3981
    %v3983 = vsel %vm3922, %v3814, -inf
    %3984 = vmax.xlane.f32.xlu0 %v3983
    %v3985 = vpop.xlane.xlu0 %3984
    %v3986 = vsel %vm3922, %v3815, -inf
    %3987 = vmax.xlane.f32.xlu0 %v3986
    %v3988 = vpop.xlane.xlu0 %3987
    %v3989 = vsel %vm3922, %v3816, -inf
    %3990 = vmax.xlane.f32.xlu0 %v3989
    %v3991 = vpop.xlane.xlu0 %3990
    %v3992 = vsel %vm3922, %v3817, -inf
    %3993 = vmax.xlane.f32.xlu0 %v3992
    %v3994 = vpop.xlane.xlu0 %3993
    %v3995 = vsel %vm3922, %v3818, -inf
    %3996 = vmax.xlane.f32.xlu0 %v3995
    %v3997 = vpop.xlane.xlu0 %3996
    %v3998 = vsel %vm3922, %v3819, -inf
    %3999 = vmax.xlane.f32.xlu0 %v3998
    %v4000 = vpop.xlane.xlu0 %3999
    %v4001 = vsel %vm3922, %v3820, -inf
    %4002 = vmax.xlane.f32.xlu0 %v4001
    %v4003 = vpop.xlane.xlu0 %4002
    %v4004 = vsel %vm3922, %v3821, -inf
    %4005 = vmax.xlane.f32.xlu0 %v4004
    %v4006 = vpop.xlane.xlu0 %4005
    %v4007 = vsel %vm3922, %v3822, -inf
    %4008 = vmax.xlane.f32.xlu0 %v4007
    %v4009 = vpop.xlane.xlu0 %4008
    %v4010 = vsel %vm3922, %v3823, -inf
    %4011 = vmax.xlane.f32.xlu0 %v4010
    %v4012 = vpop.xlane.xlu0 %4011
    %v4013 = vsel %vm3922, %v3824, -inf
    %4014 = vmax.xlane.f32.xlu0 %v4013
    %v4015 = vpop.xlane.xlu0 %4014
    %v4016 = vsel %vm3922, %v3825, -inf
    %4017 = vmax.xlane.f32.xlu0 %v4016
    %v4018 = vpop.xlane.xlu0 %4017
    %v4019 = vsel %vm3922, %v3826, -inf
    %4020 = vmax.xlane.f32.xlu0 %v4019
    %v4021 = vpop.xlane.xlu0 %4020
    %v4022 = vsel %vm3922, %v3827, -inf
    %4023 = vmax.xlane.f32.xlu0 %v4022
    %v4024 = vpop.xlane.xlu0 %4023
    %v4025 = vsel %vm3922, %v3828, -inf
    %4026 = vmax.xlane.f32.xlu0 %v4025
    %v4027 = vpop.xlane.xlu0 %4026
    %v4028 = vsel %vm3922, %v3829, -inf
    %4029 = vmax.xlane.f32.xlu0 %v4028
    %v4030 = vpop.xlane.xlu0 %4029
    %v4031 = vsel %vm3922, %v3830, -inf
    %4032 = vmax.xlane.f32.xlu0 %v4031
    %v4033 = vpop.xlane.xlu0 %4032
    %v4034 = vsel %vm3922, %v3831, -inf
    %4035 = vmax.xlane.f32.xlu0 %v4034
    %v4036 = vpop.xlane.xlu0 %4035
    %v4037 = vsel %vm3922, %v3832, -inf
    %4038 = vmax.xlane.f32.xlu0 %v4037
    %v4039 = vpop.xlane.xlu0 %4038
    %v4040 = vsel %vm3922, %v3833, -inf
    %4041 = vmax.xlane.f32.xlu0 %v4040
    %v4042 = vpop.xlane.xlu0 %4041
    %v4043 = vsel %vm3922, %v3834, -inf
    %4044 = vmax.xlane.f32.xlu0 %v4043
    %v4045 = vpop.xlane.xlu0 %4044
    %v4046 = vsel %vm3922, %v3835, -inf
    %4047 = vmax.xlane.f32.xlu0 %v4046
    %v4048 = vpop.xlane.xlu0 %4047
    %v4049 = vsel %vm3922, %v3836, -inf
    %4050 = vmax.xlane.f32.xlu0 %v4049
    %v4051 = vpop.xlane.xlu0 %4050
    %v4052 = vsel %vm3922, %v3837, -inf
    %4053 = vmax.xlane.f32.xlu0 %v4052
    %v4054 = vpop.xlane.xlu0 %4053
    %v4055 = vsel %vm3922, %v3838, -inf
    %4056 = vmax.xlane.f32.xlu0 %v4055
    %v4057 = vpop.xlane.xlu0 %4056
    %v4058 = vsel %vm3922, %v3839, -inf
    %4059 = vmax.xlane.f32.xlu0 %v4058
    %v4060 = vpop.xlane.xlu0 %4059
    %v4061 = vsel %vm3922, %v3840, -inf
    %4062 = vmax.xlane.f32.xlu0 %v4061
    %v4063 = vpop.xlane.xlu0 %4062
    %v4064 = vsel %vm3922, %v3841, -inf
    %4065 = vmax.xlane.f32.xlu0 %v4064
    %v4066 = vpop.xlane.xlu0 %4065
    %v4067 = vsel %vm3922, %v3842, -inf
    %4068 = vmax.xlane.f32.xlu0 %v4067
    %v4069 = vpop.xlane.xlu0 %4068
    %v4070 = vsel %vm3922, %v3843, -inf
    %4071 = vmax.xlane.f32.xlu0 %v4070
    %v4072 = vpop.xlane.xlu0 %4071
    %v4073 = vsel %vm3922, %v3844, -inf
    %4074 = vmax.xlane.f32.xlu0 %v4073
    %v4075 = vpop.xlane.xlu0 %4074
    %v4076 = vsel %vm3922, %v3845, -inf
    %4077 = vmax.xlane.f32.xlu0 %v4076
    %v4078 = vpop.xlane.xlu0 %4077
    %v4079 = vsel %vm3922, %v3846, -inf
    %4080 = vmax.xlane.f32.xlu0 %v4079
    %v4081 = vpop.xlane.xlu0 %4080
    %v4082 = vsel %vm3922, %v3847, -inf
    %4083 = vmax.xlane.f32.xlu0 %v4082
    %v4084 = vpop.xlane.xlu0 %4083
    %v4085 = vsel %vm3922, %v3848, -inf
    %4086 = vmax.xlane.f32.xlu0 %v4085
    %v4087 = vpop.xlane.xlu0 %4086
    %v4088 = vsel %vm3922, %v3849, -inf
    %4089 = vmax.xlane.f32.xlu0 %v4088
    %v4090 = vpop.xlane.xlu0 %4089
    %v4091 = vsel %vm3922, %v3850, -inf
    %4092 = vmax.xlane.f32.xlu0 %v4091
    %v4093 = vpop.xlane.xlu0 %4092
    %v4094 = vsel %vm3922, %v3851, -inf
    %4095 = vmax.xlane.f32.xlu0 %v4094
    %v4096 = vpop.xlane.xlu0 %4095
    %v4097 = vsel %vm3922, %v3852, -inf
    %4098 = vmax.xlane.f32.xlu0 %v4097
    %v4099 = vpop.xlane.xlu0 %4098
    %v4100 = vsel %vm3922, %v3853, -inf
    %4101 = vmax.xlane.f32.xlu0 %v4100
    %v4102 = vpop.xlane.xlu0 %4101
    %v4103 = vsel %vm3922, %v3854, -inf
    %4104 = vmax.xlane.f32.xlu0 %v4103
    %v4105 = vpop.xlane.xlu0 %4104
    %v4106 = vsel %vm3922, %v3855, -inf
    %4107 = vmax.xlane.f32.xlu0 %v4106
    %v4108 = vpop.xlane.xlu0 %4107
    %v4109 = vsel %vm3922, %v3856, -inf
    %4110 = vmax.xlane.f32.xlu0 %v4109
    %v4111 = vpop.xlane.xlu0 %4110
    %v4112 = vsel %vm3922, %v3857, -inf
    %4113 = vmax.xlane.f32.xlu0 %v4112
    %v4114 = vpop.xlane.xlu0 %4113
    %v4115 = vsel %vm3922, %v3858, -inf
    %4116 = vmax.xlane.f32.xlu0 %v4115
    %v4117 = vpop.xlane.xlu0 %4116
    %v4118 = vsel %vm3922, %v3859, -inf
    %4119 = vmax.xlane.f32.xlu0 %v4118
    %v4120 = vpop.xlane.xlu0 %4119
    %v4121 = vsel %vm3922, %v3860, -inf
    %4122 = vmax.xlane.f32.xlu0 %v4121
    %v4123 = vpop.xlane.xlu0 %4122
    %v4124 = vsel %vm3922, %v3861, -inf
    %4125 = vmax.xlane.f32.xlu0 %v4124
    %v4126 = vpop.xlane.xlu0 %4125
    %v4127 = vsel %vm3922, %v3862, -inf
    %4128 = vmax.xlane.f32.xlu0 %v4127
    %v4129 = vpop.xlane.xlu0 %4128
    %v4130 = vsel %vm3922, %v3863, -inf
    %4131 = vmax.xlane.f32.xlu0 %v4130
    %v4132 = vpop.xlane.xlu0 %4131
    %v4133 = vsel %vm3922, %v3864, -inf
    %4134 = vmax.xlane.f32.xlu0 %v4133
    %v4135 = vpop.xlane.xlu0 %4134
    %v4136 = vsel %vm3922, %v3865, -inf
    %4137 = vmax.xlane.f32.xlu0 %v4136
    %v4138 = vpop.xlane.xlu0 %4137
    %v4139 = vsel %vm3922, %v3866, -inf
    %4140 = vmax.xlane.f32.xlu0 %v4139
    %v4141 = vpop.xlane.xlu0 %4140
    %v4142 = vsel %vm3922, %v3867, -inf
    %4143 = vmax.xlane.f32.xlu0 %v4142
    %v4144 = vpop.xlane.xlu0 %4143
    %v4145 = vsel %vm3922, %v3868, -inf
    %4146 = vmax.xlane.f32.xlu0 %v4145
    %v4147 = vpop.xlane.xlu0 %4146
    %v4148 = vsel %vm3922, %v3869, -inf
    %4149 = vmax.xlane.f32.xlu0 %v4148
    %v4150 = vpop.xlane.xlu0 %4149
    %v4151 = vsel %vm3922, %v3870, -inf
    %4152 = vmax.xlane.f32.xlu0 %v4151
    %v4153 = vpop.xlane.xlu0 %4152
    %v4154 = vsel %vm3922, %v3871, -inf
    %4155 = vmax.xlane.f32.xlu0 %v4154
    %v4156 = vpop.xlane.xlu0 %4155
    %v4157 = vsel %vm3922, %v3872, -inf
    %4158 = vmax.xlane.f32.xlu0 %v4157
    %v4159 = vpop.xlane.xlu0 %4158
    %v4160 = vsel %vm3922, %v3873, -inf
    %4161 = vmax.xlane.f32.xlu0 %v4160
    %v4162 = vpop.xlane.xlu0 %4161
    %v4163 = vsel %vm3922, %v3874, -inf
    %4164 = vmax.xlane.f32.xlu0 %v4163
    %v4165 = vpop.xlane.xlu0 %4164
    %v4166 = vsel %vm3922, %v3875, -inf
    %4167 = vmax.xlane.f32.xlu0 %v4166
    %v4168 = vpop.xlane.xlu0 %4167
    %v4169 = vsel %vm3922, %v3876, -inf
    %4170 = vmax.xlane.f32.xlu0 %v4169
    %v4171 = vpop.xlane.xlu0 %4170
    %v4172 = vsel %vm3922, %v3877, -inf
    %4173 = vmax.xlane.f32.xlu0 %v4172
    %v4174 = vpop.xlane.xlu0 %4173
    %v4175 = vsel %vm3922, %v3878, -inf
    %4176 = vmax.xlane.f32.xlu0 %v4175
    %v4177 = vpop.xlane.xlu0 %4176
    %v4178 = vsel %vm3922, %v3879, -inf
    %4179 = vmax.xlane.f32.xlu0 %v4178
    %v4180 = vpop.xlane.xlu0 %4179
    %v4181 = vsel %vm3922, %v3880, -inf
    %4182 = vmax.xlane.f32.xlu0 %v4181
    %v4183 = vpop.xlane.xlu0 %4182
    %v4184 = vsel %vm3922, %v3881, -inf
    %4185 = vmax.xlane.f32.xlu0 %v4184
    %v4186 = vpop.xlane.xlu0 %4185
    %v4187 = vsel %vm3922, %v3882, -inf
    %4188 = vmax.xlane.f32.xlu0 %v4187
    %v4189 = vpop.xlane.xlu0 %4188
    %v4190 = vsel %vm3922, %v3883, -inf
    %4191 = vmax.xlane.f32.xlu0 %v4190
    %v4192 = vpop.xlane.xlu0 %4191
    %v4193 = vsel %vm3922, %v3884, -inf
    %4194 = vmax.xlane.f32.xlu0 %v4193
    %v4195 = vpop.xlane.xlu0 %4194
    %v4196 = vsel %vm3922, %v3885, -inf
    %4197 = vmax.xlane.f32.xlu0 %v4196
    %v4198 = vpop.xlane.xlu0 %4197
    %v4199 = vsel %vm3922, %v3886, -inf
    %4200 = vmax.xlane.f32.xlu0 %v4199
    %v4201 = vpop.xlane.xlu0 %4200
    %v4202 = vsel %vm3922, %v3887, -inf
    %4203 = vmax.xlane.f32.xlu0 %v4202
    %v4204 = vpop.xlane.xlu0 %4203
    %v4205 = vsel %vm3922, %v3888, -inf
    %4206 = vmax.xlane.f32.xlu0 %v4205
    %v4207 = vpop.xlane.xlu0 %4206
    %v4208 = vsel %vm3922, %v3889, -inf
    %4209 = vmax.xlane.f32.xlu0 %v4208
    %v4210 = vpop.xlane.xlu0 %4209
    %v4211 = vsel %vm3922, %v3890, -inf
    %4212 = vmax.xlane.f32.xlu0 %v4211
    %v4213 = vpop.xlane.xlu0 %4212
    %v4214 = vsel %vm3922, %v3891, -inf
    %4215 = vmax.xlane.f32.xlu0 %v4214
    %v4216 = vpop.xlane.xlu0 %4215
    %v4217 = vsel %vm3922, %v3892, -inf
    %4218 = vmax.xlane.f32.xlu0 %v4217
    %v4219 = vpop.xlane.xlu0 %4218
    %v4220 = vsel %vm3922, %v3893, -inf
    %4221 = vmax.xlane.f32.xlu0 %v4220
    %v4222 = vpop.xlane.xlu0 %4221
    %v4223 = vsel %vm3922, %v3894, -inf
    %4224 = vmax.xlane.f32.xlu0 %v4223
    %v4225 = vpop.xlane.xlu0 %4224
    %v4226 = vsel %vm3922, %v3895, -inf
    %4227 = vmax.xlane.f32.xlu0 %v4226
    %v4228 = vpop.xlane.xlu0 %4227
    %v4229 = vsel %vm3922, %v3896, -inf
    %4230 = vmax.xlane.f32.xlu0 %v4229
    %v4231 = vpop.xlane.xlu0 %4230
    %v4232 = vsel %vm3922, %v3897, -inf
    %4233 = vmax.xlane.f32.xlu0 %v4232
    %v4234 = vpop.xlane.xlu0 %4233
    %v4235 = vsel %vm3922, %v3898, -inf
    %4236 = vmax.xlane.f32.xlu0 %v4235
    %v4237 = vpop.xlane.xlu0 %4236
    %v4238 = vsel %vm3922, %v3899, -inf
    %4239 = vmax.xlane.f32.xlu0 %v4238
    %v4240 = vpop.xlane.xlu0 %4239
    %v4241 = vsel %vm3922, %v3900, -inf
    %4242 = vmax.xlane.f32.xlu0 %v4241
    %v4243 = vpop.xlane.xlu0 %4242
    %v4244 = vsel %vm3922, %v3901, -inf
    %4245 = vmax.xlane.f32.xlu0 %v4244
    %v4246 = vpop.xlane.xlu0 %4245
    %v4247 = vsel %vm3922, %v3902, -inf
    %4248 = vmax.xlane.f32.xlu0 %v4247
    %v4249 = vpop.xlane.xlu0 %4248
    %v4250 = vsel %vm3922, %v3903, -inf
    %4251 = vmax.xlane.f32.xlu0 %v4250
    %v4252 = vpop.xlane.xlu0 %4251
    %v4253 = vsel %vm3922, %v3904, -inf
    %4254 = vmax.xlane.f32.xlu0 %v4253
    %v4255 = vpop.xlane.xlu0 %4254
    %v4256 = vsel %vm3922, %v3905, -inf
    %4257 = vmax.xlane.f32.xlu0 %v4256
    %v4258 = vpop.xlane.xlu0 %4257
    %v4259 = vsel %vm3922, %v3906, -inf
    %4260 = vmax.xlane.f32.xlu0 %v4259
    %v4261 = vpop.xlane.xlu0 %4260
    %v4262 = vsel %vm3922, %v3907, -inf
    %4263 = vmax.xlane.f32.xlu0 %v4262
    %v4264 = vpop.xlane.xlu0 %4263
    %v4265 = vsel %vm3922, %v3908, -inf
    %4266 = vmax.xlane.f32.xlu0 %v4265
    %v4267 = vpop.xlane.xlu0 %4266
    %v4268 = vsel %vm3922, %v3909, -inf
    %4269 = vmax.xlane.f32.xlu0 %v4268
    %v4270 = vpop.xlane.xlu0 %4269
    %v4271 = vsel %vm3922, %v3910, -inf
    %4272 = vmax.xlane.f32.xlu0 %v4271
    %v4273 = vpop.xlane.xlu0 %4272
    %v4274 = vsel %vm3922, %v3911, -inf
    %4275 = vmax.xlane.f32.xlu0 %v4274
    %v4276 = vpop.xlane.xlu0 %4275
    %v4277 = vsel %vm3922, %v3912, -inf
    %4278 = vmax.xlane.f32.xlu0 %v4277
    %v4279 = vpop.xlane.xlu0 %4278
    %v4280 = vsel %vm3922, %v3913, -inf
    %4281 = vmax.xlane.f32.xlu0 %v4280
    %v4282 = vpop.xlane.xlu0 %4281
    %v4283 = vsel %vm3922, %v3914, -inf
    %4284 = vmax.xlane.f32.xlu0 %v4283
    %v4285 = vpop.xlane.xlu0 %4284
    %v4286 = vsel %vm3922, %v3915, -inf
    %4287 = vmax.xlane.f32.xlu0 %v4286
    %v4288 = vpop.xlane.xlu0 %4287
    %v4289 = vsel %vm3922, %v3916, -inf
    %4290 = vmax.xlane.f32.xlu0 %v4289
    %v4291 = vpop.xlane.xlu0 %4290
    %v4292 = vsel %vm3922, %v3917, -inf
    %4293 = vmax.xlane.f32.xlu0 %v4292
    %v4294 = vpop.xlane.xlu0 %4293
    %v4295 = vsel %vm3922, %v3918, -inf
    %4296 = vmax.xlane.f32.xlu0 %v4295
    %v4297 = vpop.xlane.xlu0 %4296
    %v4298 = vsel %vm3922, %v3919, -inf
    %4299 = vmax.xlane.f32.xlu0 %v4298
    %v4300 = vpop.xlane.xlu0 %4299
    %v4301 = vsel %vm3922, %v3920, -inf
    %4302 = vmax.xlane.f32.xlu0 %v4301
    %v4303 = vpop.xlane.xlu0 %4302
    %v4304 = vsel %vm3922, %v3921, -inf
    %4305 = vmax.xlane.f32.xlu0 %v4304
    %v4306 = vpop.xlane.xlu0 %4305
    %v4307 = vsub.f32 %v3794, %v3925
    %v4308 = vsub.f32 %v3795, %v3928
    %v4309 = vsub.f32 %v3796, %v3931
    %v4310 = vsub.f32 %v3797, %v3934
    %v4311 = vsub.f32 %v3798, %v3937
    %v4312 = vsub.f32 %v3799, %v3940
    %v4313 = vsub.f32 %v3800, %v3943
    %v4314 = vsub.f32 %v3801, %v3946
    %v4315 = vsub.f32 %v3802, %v3949
    %v4316 = vsub.f32 %v3803, %v3952
    %v4317 = vsub.f32 %v3804, %v3955
    %v4318 = vsub.f32 %v3805, %v3958
    %v4319 = vsub.f32 %v3806, %v3961
    %v4320 = vsub.f32 %v3807, %v3964
    %v4321 = vsub.f32 %v3808, %v3967
    %v4322 = vsub.f32 %v3809, %v3970
    %v4323 = vsub.f32 %v3810, %v3973
    %v4324 = vsub.f32 %v3811, %v3976
    %v4325 = vsub.f32 %v3812, %v3979
    %v4326 = vsub.f32 %v3813, %v3982
    %v4327 = vsub.f32 %v3814, %v3985
    %v4328 = vsub.f32 %v3815, %v3988
    %v4329 = vsub.f32 %v3816, %v3991
    %v4330 = vsub.f32 %v3817, %v3994
    %v4331 = vsub.f32 %v3818, %v3997
    %v4332 = vsub.f32 %v3819, %v4000
    %v4333 = vsub.f32 %v3820, %v4003
    %v4334 = vsub.f32 %v3821, %v4006
    %v4335 = vsub.f32 %v3822, %v4009
    %v4336 = vsub.f32 %v3823, %v4012
    %v4337 = vsub.f32 %v3824, %v4015
    %v4338 = vsub.f32 %v3825, %v4018
    %v4339 = vsub.f32 %v3826, %v4021
    %v4340 = vsub.f32 %v3827, %v4024
    %v4341 = vsub.f32 %v3828, %v4027
    %v4342 = vsub.f32 %v3829, %v4030
    %v4343 = vsub.f32 %v3830, %v4033
    %v4344 = vsub.f32 %v3831, %v4036
    %v4345 = vsub.f32 %v3832, %v4039
    %v4346 = vsub.f32 %v3833, %v4042
    %v4347 = vsub.f32 %v3834, %v4045
    %v4348 = vsub.f32 %v3835, %v4048
    %v4349 = vsub.f32 %v3836, %v4051
    %v4350 = vsub.f32 %v3837, %v4054
    %v4351 = vsub.f32 %v3838, %v4057
    %v4352 = vsub.f32 %v3839, %v4060
    %v4353 = vsub.f32 %v3840, %v4063
    %v4354 = vsub.f32 %v3841, %v4066
    %v4355 = vsub.f32 %v3842, %v4069
    %v4356 = vsub.f32 %v3843, %v4072
    %v4357 = vsub.f32 %v3844, %v4075
    %v4358 = vsub.f32 %v3845, %v4078
    %v4359 = vsub.f32 %v3846, %v4081
    %v4360 = vsub.f32 %v3847, %v4084
    %v4361 = vsub.f32 %v3848, %v4087
    %v4362 = vsub.f32 %v3849, %v4090
    %v4363 = vsub.f32 %v3850, %v4093
    %v4364 = vsub.f32 %v3851, %v4096
    %v4365 = vsub.f32 %v3852, %v4099
    %v4366 = vsub.f32 %v3853, %v4102
    %v4367 = vsub.f32 %v3854, %v4105
    %v4368 = vsub.f32 %v3855, %v4108
    %v4369 = vsub.f32 %v3856, %v4111
    %v4370 = vsub.f32 %v3857, %v4114
    %v4371 = vsub.f32 %v3858, %v4117
    %v4372 = vsub.f32 %v3859, %v4120
    %v4373 = vsub.f32 %v3860, %v4123
    %v4374 = vsub.f32 %v3861, %v4126
    %v4375 = vsub.f32 %v3862, %v4129
    %v4376 = vsub.f32 %v3863, %v4132
    %v4377 = vsub.f32 %v3864, %v4135
    %v4378 = vsub.f32 %v3865, %v4138
    %v4379 = vsub.f32 %v3866, %v4141
    %v4380 = vsub.f32 %v3867, %v4144
    %v4381 = vsub.f32 %v3868, %v4147
    %v4382 = vsub.f32 %v3869, %v4150
    %v4383 = vsub.f32 %v3870, %v4153
    %v4384 = vsub.f32 %v3871, %v4156
    %v4385 = vsub.f32 %v3872, %v4159
    %v4386 = vsub.f32 %v3873, %v4162
    %v4387 = vsub.f32 %v3874, %v4165
    %v4388 = vsub.f32 %v3875, %v4168
    %v4389 = vsub.f32 %v3876, %v4171
    %v4390 = vsub.f32 %v3877, %v4174
    %v4391 = vsub.f32 %v3878, %v4177
    %v4392 = vsub.f32 %v3879, %v4180
    %v4393 = vsub.f32 %v3880, %v4183
    %v4394 = vsub.f32 %v3881, %v4186
    %v4395 = vsub.f32 %v3882, %v4189
    %v4396 = vsub.f32 %v3883, %v4192
    %v4397 = vsub.f32 %v3884, %v4195
    %v4398 = vsub.f32 %v3885, %v4198
    %v4399 = vsub.f32 %v3886, %v4201
    %v4400 = vsub.f32 %v3887, %v4204
    %v4401 = vsub.f32 %v3888, %v4207
    %v4402 = vsub.f32 %v3889, %v4210
    %v4403 = vsub.f32 %v3890, %v4213
    %v4404 = vsub.f32 %v3891, %v4216
    %v4405 = vsub.f32 %v3892, %v4219
    %v4406 = vsub.f32 %v3893, %v4222
    %v4407 = vsub.f32 %v3894, %v4225
    %v4408 = vsub.f32 %v3895, %v4228
    %v4409 = vsub.f32 %v3896, %v4231
    %v4410 = vsub.f32 %v3897, %v4234
    %v4411 = vsub.f32 %v3898, %v4237
    %v4412 = vsub.f32 %v3899, %v4240
    %v4413 = vsub.f32 %v3900, %v4243
    %v4414 = vsub.f32 %v3901, %v4246
    %v4415 = vsub.f32 %v3902, %v4249
    %v4416 = vsub.f32 %v3903, %v4252
    %v4417 = vsub.f32 %v3904, %v4255
    %v4418 = vsub.f32 %v3905, %v4258
    %v4419 = vsub.f32 %v3906, %v4261
    %v4420 = vsub.f32 %v3907, %v4264
    %v4421 = vsub.f32 %v3908, %v4267
    %v4422 = vsub.f32 %v3909, %v4270
    %v4423 = vsub.f32 %v3910, %v4273
    %v4424 = vsub.f32 %v3911, %v4276
    %v4425 = vsub.f32 %v3912, %v4279
    %v4426 = vsub.f32 %v3913, %v4282
    %v4427 = vsub.f32 %v3914, %v4285
    %v4428 = vsub.f32 %v3915, %v4288
    %v4429 = vsub.f32 %v3916, %v4291
    %v4430 = vsub.f32 %v3917, %v4294
    %v4431 = vsub.f32 %v3918, %v4297
    %v4432 = vsub.f32 %v3919, %v4300
    %v4433 = vsub.f32 %v3920, %v4303
    %v4434 = vsub.f32 %v3921, %v4306
    %v4435 = vmul.f32 %v4307, 1.442695
    %v4436 = vpow.pop %v4435
    %v4437 = vmul.f32 %v4308, 1.442695
    %v4438 = vpow.pop %v4437
    %v4439 = vmul.f32 %v4309, 1.442695
    %v4440 = vpow.pop %v4439
    %v4441 = vmul.f32 %v4310, 1.442695
    %v4442 = vpow.pop %v4441
    %v4443 = vmul.f32 %v4311, 1.442695
    %v4444 = vpow.pop %v4443
    %v4445 = vmul.f32 %v4312, 1.442695
    %v4446 = vpow.pop %v4445
    %v4447 = vmul.f32 %v4313, 1.442695
    %v4448 = vpow.pop %v4447
    %v4449 = vmul.f32 %v4314, 1.442695
    %v4450 = vpow.pop %v4449
    %v4451 = vmul.f32 %v4315, 1.442695
    %v4452 = vpow.pop %v4451
    %v4453 = vmul.f32 %v4316, 1.442695
    %v4454 = vpow.pop %v4453
    %v4455 = vmul.f32 %v4317, 1.442695
    %v4456 = vpow.pop %v4455
    %v4457 = vmul.f32 %v4318, 1.442695
    %v4458 = vpow.pop %v4457
    %v4459 = vmul.f32 %v4319, 1.442695
    %v4460 = vpow.pop %v4459
    %v4461 = vmul.f32 %v4320, 1.442695
    %v4462 = vpow.pop %v4461
    %v4463 = vmul.f32 %v4321, 1.442695
    %v4464 = vpow.pop %v4463
    %v4465 = vmul.f32 %v4322, 1.442695
    %v4466 = vpow.pop %v4465
    %v4467 = vmul.f32 %v4323, 1.442695
    %v4468 = vpow.pop %v4467
    %v4469 = vmul.f32 %v4324, 1.442695
    %v4470 = vpow.pop %v4469
    %v4471 = vmul.f32 %v4325, 1.442695
    %v4472 = vpow.pop %v4471
    %v4473 = vmul.f32 %v4326, 1.442695
    %v4474 = vpow.pop %v4473
    %v4475 = vmul.f32 %v4327, 1.442695
    %v4476 = vpow.pop %v4475
    %v4477 = vmul.f32 %v4328, 1.442695
    %v4478 = vpow.pop %v4477
    %v4479 = vmul.f32 %v4329, 1.442695
    %v4480 = vpow.pop %v4479
    %v4481 = vmul.f32 %v4330, 1.442695
    %v4482 = vpow.pop %v4481
    %v4483 = vmul.f32 %v4331, 1.442695
    %v4484 = vpow.pop %v4483
    %v4485 = vmul.f32 %v4332, 1.442695
    %v4486 = vpow.pop %v4485
    %v4487 = vmul.f32 %v4333, 1.442695
    %v4488 = vpow.pop %v4487
    %v4489 = vmul.f32 %v4334, 1.442695
    %v4490 = vpow.pop %v4489
    %v4491 = vmul.f32 %v4335, 1.442695
    %v4492 = vpow.pop %v4491
    %v4493 = vmul.f32 %v4336, 1.442695
    %v4494 = vpow.pop %v4493
    %v4495 = vmul.f32 %v4337, 1.442695
    %v4496 = vpow.pop %v4495
    %v4497 = vmul.f32 %v4338, 1.442695
    %v4498 = vpow.pop %v4497
    %v4499 = vmul.f32 %v4339, 1.442695
    %v4500 = vpow.pop %v4499
    %v4501 = vmul.f32 %v4340, 1.442695
    %v4502 = vpow.pop %v4501
    %v4503 = vmul.f32 %v4341, 1.442695
    %v4504 = vpow.pop %v4503
    %v4505 = vmul.f32 %v4342, 1.442695
    %v4506 = vpow.pop %v4505
    %v4507 = vmul.f32 %v4343, 1.442695
    %v4508 = vpow.pop %v4507
    %v4509 = vmul.f32 %v4344, 1.442695
    %v4510 = vpow.pop %v4509
    %v4511 = vmul.f32 %v4345, 1.442695
    %v4512 = vpow.pop %v4511
    %v4513 = vmul.f32 %v4346, 1.442695
    %v4514 = vpow.pop %v4513
    %v4515 = vmul.f32 %v4347, 1.442695
    %v4516 = vpow.pop %v4515
    %v4517 = vmul.f32 %v4348, 1.442695
    %v4518 = vpow.pop %v4517
    %v4519 = vmul.f32 %v4349, 1.442695
    %v4520 = vpow.pop %v4519
    %v4521 = vmul.f32 %v4350, 1.442695
    %v4522 = vpow.pop %v4521
    %v4523 = vmul.f32 %v4351, 1.442695
    %v4524 = vpow.pop %v4523
    %v4525 = vmul.f32 %v4352, 1.442695
    %v4526 = vpow.pop %v4525
    %v4527 = vmul.f32 %v4353, 1.442695
    %v4528 = vpow.pop %v4527
    %v4529 = vmul.f32 %v4354, 1.442695
    %v4530 = vpow.pop %v4529
    %v4531 = vmul.f32 %v4355, 1.442695
    %v4532 = vpow.pop %v4531
    %v4533 = vmul.f32 %v4356, 1.442695
    %v4534 = vpow.pop %v4533
    %v4535 = vmul.f32 %v4357, 1.442695
    %v4536 = vpow.pop %v4535
    %v4537 = vmul.f32 %v4358, 1.442695
    %v4538 = vpow.pop %v4537
    %v4539 = vmul.f32 %v4359, 1.442695
    %v4540 = vpow.pop %v4539
    %v4541 = vmul.f32 %v4360, 1.442695
    %v4542 = vpow.pop %v4541
    %v4543 = vmul.f32 %v4361, 1.442695
    %v4544 = vpow.pop %v4543
    %v4545 = vmul.f32 %v4362, 1.442695
    %v4546 = vpow.pop %v4545
    %v4547 = vmul.f32 %v4363, 1.442695
    %v4548 = vpow.pop %v4547
    %v4549 = vmul.f32 %v4364, 1.442695
    %v4550 = vpow.pop %v4549
    %v4551 = vmul.f32 %v4365, 1.442695
    %v4552 = vpow.pop %v4551
    %v4553 = vmul.f32 %v4366, 1.442695
    %v4554 = vpow.pop %v4553
    %v4555 = vmul.f32 %v4367, 1.442695
    %v4556 = vpow.pop %v4555
    %v4557 = vmul.f32 %v4368, 1.442695
    %v4558 = vpow.pop %v4557
    %v4559 = vmul.f32 %v4369, 1.442695
    %v4560 = vpow.pop %v4559
    %v4561 = vmul.f32 %v4370, 1.442695
    %v4562 = vpow.pop %v4561
    %v4563 = vmul.f32 %v4371, 1.442695
    %v4564 = vpow.pop %v4563
    %v4565 = vmul.f32 %v4372, 1.442695
    %v4566 = vpow.pop %v4565
    %v4567 = vmul.f32 %v4373, 1.442695
    %v4568 = vpow.pop %v4567
    %v4569 = vmul.f32 %v4374, 1.442695
    %v4570 = vpow.pop %v4569
    %v4571 = vmul.f32 %v4375, 1.442695
    %v4572 = vpow.pop %v4571
    %v4573 = vmul.f32 %v4376, 1.442695
    %v4574 = vpow.pop %v4573
    %v4575 = vmul.f32 %v4377, 1.442695
    %v4576 = vpow.pop %v4575
    %v4577 = vmul.f32 %v4378, 1.442695
    %v4578 = vpow.pop %v4577
    %v4579 = vmul.f32 %v4379, 1.442695
    %v4580 = vpow.pop %v4579
    %v4581 = vmul.f32 %v4380, 1.442695
    %v4582 = vpow.pop %v4581
    %v4583 = vmul.f32 %v4381, 1.442695
    %v4584 = vpow.pop %v4583
    %v4585 = vmul.f32 %v4382, 1.442695
    %v4586 = vpow.pop %v4585
    %v4587 = vmul.f32 %v4383, 1.442695
    %v4588 = vpow.pop %v4587
    %v4589 = vmul.f32 %v4384, 1.442695
    %v4590 = vpow.pop %v4589
    %v4591 = vmul.f32 %v4385, 1.442695
    %v4592 = vpow.pop %v4591
    %v4593 = vmul.f32 %v4386, 1.442695
    %v4594 = vpow.pop %v4593
    %v4595 = vmul.f32 %v4387, 1.442695
    %v4596 = vpow.pop %v4595
    %v4597 = vmul.f32 %v4388, 1.442695
    %v4598 = vpow.pop %v4597
    %v4599 = vmul.f32 %v4389, 1.442695
    %v4600 = vpow.pop %v4599
    %v4601 = vmul.f32 %v4390, 1.442695
    %v4602 = vpow.pop %v4601
    %v4603 = vmul.f32 %v4391, 1.442695
    %v4604 = vpow.pop %v4603
    %v4605 = vmul.f32 %v4392, 1.442695
    %v4606 = vpow.pop %v4605
    %v4607 = vmul.f32 %v4393, 1.442695
    %v4608 = vpow.pop %v4607
    %v4609 = vmul.f32 %v4394, 1.442695
    %v4610 = vpow.pop %v4609
    %v4611 = vmul.f32 %v4395, 1.442695
    %v4612 = vpow.pop %v4611
    %v4613 = vmul.f32 %v4396, 1.442695
    %v4614 = vpow.pop %v4613
    %v4615 = vmul.f32 %v4397, 1.442695
    %v4616 = vpow.pop %v4615
    %v4617 = vmul.f32 %v4398, 1.442695
    %v4618 = vpow.pop %v4617
    %v4619 = vmul.f32 %v4399, 1.442695
    %v4620 = vpow.pop %v4619
    %v4621 = vmul.f32 %v4400, 1.442695
    %v4622 = vpow.pop %v4621
    %v4623 = vmul.f32 %v4401, 1.442695
    %v4624 = vpow.pop %v4623
    %v4625 = vmul.f32 %v4402, 1.442695
    %v4626 = vpow.pop %v4625
    %v4627 = vmul.f32 %v4403, 1.442695
    %v4628 = vpow.pop %v4627
    %v4629 = vmul.f32 %v4404, 1.442695
    %v4630 = vpow.pop %v4629
    %v4631 = vmul.f32 %v4405, 1.442695
    %v4632 = vpow.pop %v4631
    %v4633 = vmul.f32 %v4406, 1.442695
    %v4634 = vpow.pop %v4633
    %v4635 = vmul.f32 %v4407, 1.442695
    %v4636 = vpow.pop %v4635
    %v4637 = vmul.f32 %v4408, 1.442695
    %v4638 = vpow.pop %v4637
    %v4639 = vmul.f32 %v4409, 1.442695
    %v4640 = vpow.pop %v4639
    %v4641 = vmul.f32 %v4410, 1.442695
    %v4642 = vpow.pop %v4641
    %v4643 = vmul.f32 %v4411, 1.442695
    %v4644 = vpow.pop %v4643
    %v4645 = vmul.f32 %v4412, 1.442695
    %v4646 = vpow.pop %v4645
    %v4647 = vmul.f32 %v4413, 1.442695
    %v4648 = vpow.pop %v4647
    %v4649 = vmul.f32 %v4414, 1.442695
    %v4650 = vpow.pop %v4649
    %v4651 = vmul.f32 %v4415, 1.442695
    %v4652 = vpow.pop %v4651
    %v4653 = vmul.f32 %v4416, 1.442695
    %v4654 = vpow.pop %v4653
    %v4655 = vmul.f32 %v4417, 1.442695
    %v4656 = vpow.pop %v4655
    %v4657 = vmul.f32 %v4418, 1.442695
    %v4658 = vpow.pop %v4657
    %v4659 = vmul.f32 %v4419, 1.442695
    %v4660 = vpow.pop %v4659
    %v4661 = vmul.f32 %v4420, 1.442695
    %v4662 = vpow.pop %v4661
    %v4663 = vmul.f32 %v4421, 1.442695
    %v4664 = vpow.pop %v4663
    %v4665 = vmul.f32 %v4422, 1.442695
    %v4666 = vpow.pop %v4665
    %v4667 = vmul.f32 %v4423, 1.442695
    %v4668 = vpow.pop %v4667
    %v4669 = vmul.f32 %v4424, 1.442695
    %v4670 = vpow.pop %v4669
    %v4671 = vmul.f32 %v4425, 1.442695
    %v4672 = vpow.pop %v4671
    %v4673 = vmul.f32 %v4426, 1.442695
    %v4674 = vpow.pop %v4673
    %v4675 = vmul.f32 %v4427, 1.442695
    %v4676 = vpow.pop %v4675
    %v4677 = vmul.f32 %v4428, 1.442695
    %v4678 = vpow.pop %v4677
    %v4679 = vmul.f32 %v4429, 1.442695
    %v4680 = vpow.pop %v4679
    %v4681 = vmul.f32 %v4430, 1.442695
    %v4682 = vpow.pop %v4681
    %v4683 = vmul.f32 %v4431, 1.442695
    %v4684 = vpow.pop %v4683
    %v4685 = vmul.f32 %v4432, 1.442695
    %v4686 = vpow.pop %v4685
    %v4687 = vmul.f32 %v4433, 1.442695
    %v4688 = vpow.pop %v4687
    %v4689 = vmul.f32 %v4434, 1.442695
    %v4690 = vpow.pop %v4689
    %v4691 = vsel %vm3922, %v4436, 0.0
    %4692 = vadd.xlane.f32.xlu0 %v4691
    %v4693 = vpop.xlane.xlu0 %4692
    %v4694 = vsel %vm3922, %v4438, 0.0
    %4695 = vadd.xlane.f32.xlu0 %v4694
    %v4696 = vpop.xlane.xlu0 %4695
    %v4697 = vsel %vm3922, %v4440, 0.0
    %4698 = vadd.xlane.f32.xlu0 %v4697
    %v4699 = vpop.xlane.xlu0 %4698
    %v4700 = vsel %vm3922, %v4442, 0.0
    %4701 = vadd.xlane.f32.xlu0 %v4700
    %v4702 = vpop.xlane.xlu0 %4701
    %v4703 = vsel %vm3922, %v4444, 0.0
    %4704 = vadd.xlane.f32.xlu0 %v4703
    %v4705 = vpop.xlane.xlu0 %4704
    %v4706 = vsel %vm3922, %v4446, 0.0
    %4707 = vadd.xlane.f32.xlu0 %v4706
    %v4708 = vpop.xlane.xlu0 %4707
    %v4709 = vsel %vm3922, %v4448, 0.0
    %4710 = vadd.xlane.f32.xlu0 %v4709
    %v4711 = vpop.xlane.xlu0 %4710
    %v4712 = vsel %vm3922, %v4450, 0.0
    %4713 = vadd.xlane.f32.xlu0 %v4712
    %v4714 = vpop.xlane.xlu0 %4713
    %v4715 = vsel %vm3922, %v4452, 0.0
    %4716 = vadd.xlane.f32.xlu0 %v4715
    %v4717 = vpop.xlane.xlu0 %4716
    %v4718 = vsel %vm3922, %v4454, 0.0
    %4719 = vadd.xlane.f32.xlu0 %v4718
    %v4720 = vpop.xlane.xlu0 %4719
    %v4721 = vsel %vm3922, %v4456, 0.0
    %4722 = vadd.xlane.f32.xlu0 %v4721
    %v4723 = vpop.xlane.xlu0 %4722
    %v4724 = vsel %vm3922, %v4458, 0.0
    %4725 = vadd.xlane.f32.xlu0 %v4724
    %v4726 = vpop.xlane.xlu0 %4725
    %v4727 = vsel %vm3922, %v4460, 0.0
    %4728 = vadd.xlane.f32.xlu0 %v4727
    %v4729 = vpop.xlane.xlu0 %4728
    %v4730 = vsel %vm3922, %v4462, 0.0
    %4731 = vadd.xlane.f32.xlu0 %v4730
    %v4732 = vpop.xlane.xlu0 %4731
    %v4733 = vsel %vm3922, %v4464, 0.0
    %4734 = vadd.xlane.f32.xlu0 %v4733
    %v4735 = vpop.xlane.xlu0 %4734
    %v4736 = vsel %vm3922, %v4466, 0.0
    %4737 = vadd.xlane.f32.xlu0 %v4736
    %v4738 = vpop.xlane.xlu0 %4737
    %v4739 = vsel %vm3922, %v4468, 0.0
    %4740 = vadd.xlane.f32.xlu0 %v4739
    %v4741 = vpop.xlane.xlu0 %4740
    %v4742 = vsel %vm3922, %v4470, 0.0
    %4743 = vadd.xlane.f32.xlu0 %v4742
    %v4744 = vpop.xlane.xlu0 %4743
    %v4745 = vsel %vm3922, %v4472, 0.0
    %4746 = vadd.xlane.f32.xlu0 %v4745
    %v4747 = vpop.xlane.xlu0 %4746
    %v4748 = vsel %vm3922, %v4474, 0.0
    %4749 = vadd.xlane.f32.xlu0 %v4748
    %v4750 = vpop.xlane.xlu0 %4749
    %v4751 = vsel %vm3922, %v4476, 0.0
    %4752 = vadd.xlane.f32.xlu0 %v4751
    %v4753 = vpop.xlane.xlu0 %4752
    %v4754 = vsel %vm3922, %v4478, 0.0
    %4755 = vadd.xlane.f32.xlu0 %v4754
    %v4756 = vpop.xlane.xlu0 %4755
    %v4757 = vsel %vm3922, %v4480, 0.0
    %4758 = vadd.xlane.f32.xlu0 %v4757
    %v4759 = vpop.xlane.xlu0 %4758
    %v4760 = vsel %vm3922, %v4482, 0.0
    %4761 = vadd.xlane.f32.xlu0 %v4760
    %v4762 = vpop.xlane.xlu0 %4761
    %v4763 = vsel %vm3922, %v4484, 0.0
    %4764 = vadd.xlane.f32.xlu0 %v4763
    %v4765 = vpop.xlane.xlu0 %4764
    %v4766 = vsel %vm3922, %v4486, 0.0
    %4767 = vadd.xlane.f32.xlu0 %v4766
    %v4768 = vpop.xlane.xlu0 %4767
    %v4769 = vsel %vm3922, %v4488, 0.0
    %4770 = vadd.xlane.f32.xlu0 %v4769
    %v4771 = vpop.xlane.xlu0 %4770
    %v4772 = vsel %vm3922, %v4490, 0.0
    %4773 = vadd.xlane.f32.xlu0 %v4772
    %v4774 = vpop.xlane.xlu0 %4773
    %v4775 = vsel %vm3922, %v4492, 0.0
    %4776 = vadd.xlane.f32.xlu0 %v4775
    %v4777 = vpop.xlane.xlu0 %4776
    %v4778 = vsel %vm3922, %v4494, 0.0
    %4779 = vadd.xlane.f32.xlu0 %v4778
    %v4780 = vpop.xlane.xlu0 %4779
    %v4781 = vsel %vm3922, %v4496, 0.0
    %4782 = vadd.xlane.f32.xlu0 %v4781
    %v4783 = vpop.xlane.xlu0 %4782
    %v4784 = vsel %vm3922, %v4498, 0.0
    %4785 = vadd.xlane.f32.xlu0 %v4784
    %v4786 = vpop.xlane.xlu0 %4785
    %v4787 = vsel %vm3922, %v4500, 0.0
    %4788 = vadd.xlane.f32.xlu0 %v4787
    %v4789 = vpop.xlane.xlu0 %4788
    %v4790 = vsel %vm3922, %v4502, 0.0
    %4791 = vadd.xlane.f32.xlu0 %v4790
    %v4792 = vpop.xlane.xlu0 %4791
    %v4793 = vsel %vm3922, %v4504, 0.0
    %4794 = vadd.xlane.f32.xlu0 %v4793
    %v4795 = vpop.xlane.xlu0 %4794
    %v4796 = vsel %vm3922, %v4506, 0.0
    %4797 = vadd.xlane.f32.xlu0 %v4796
    %v4798 = vpop.xlane.xlu0 %4797
    %v4799 = vsel %vm3922, %v4508, 0.0
    %4800 = vadd.xlane.f32.xlu0 %v4799
    %v4801 = vpop.xlane.xlu0 %4800
    %v4802 = vsel %vm3922, %v4510, 0.0
    %4803 = vadd.xlane.f32.xlu0 %v4802
    %v4804 = vpop.xlane.xlu0 %4803
    %v4805 = vsel %vm3922, %v4512, 0.0
    %4806 = vadd.xlane.f32.xlu0 %v4805
    %v4807 = vpop.xlane.xlu0 %4806
    %v4808 = vsel %vm3922, %v4514, 0.0
    %4809 = vadd.xlane.f32.xlu0 %v4808
    %v4810 = vpop.xlane.xlu0 %4809
    %v4811 = vsel %vm3922, %v4516, 0.0
    %4812 = vadd.xlane.f32.xlu0 %v4811
    %v4813 = vpop.xlane.xlu0 %4812
    %v4814 = vsel %vm3922, %v4518, 0.0
    %4815 = vadd.xlane.f32.xlu0 %v4814
    %v4816 = vpop.xlane.xlu0 %4815
    %v4817 = vsel %vm3922, %v4520, 0.0
    %4818 = vadd.xlane.f32.xlu0 %v4817
    %v4819 = vpop.xlane.xlu0 %4818
    %v4820 = vsel %vm3922, %v4522, 0.0
    %4821 = vadd.xlane.f32.xlu0 %v4820
    %v4822 = vpop.xlane.xlu0 %4821
    %v4823 = vsel %vm3922, %v4524, 0.0
    %4824 = vadd.xlane.f32.xlu0 %v4823
    %v4825 = vpop.xlane.xlu0 %4824
    %v4826 = vsel %vm3922, %v4526, 0.0
    %4827 = vadd.xlane.f32.xlu0 %v4826
    %v4828 = vpop.xlane.xlu0 %4827
    %v4829 = vsel %vm3922, %v4528, 0.0
    %4830 = vadd.xlane.f32.xlu0 %v4829
    %v4831 = vpop.xlane.xlu0 %4830
    %v4832 = vsel %vm3922, %v4530, 0.0
    %4833 = vadd.xlane.f32.xlu0 %v4832
    %v4834 = vpop.xlane.xlu0 %4833
    %v4835 = vsel %vm3922, %v4532, 0.0
    %4836 = vadd.xlane.f32.xlu0 %v4835
    %v4837 = vpop.xlane.xlu0 %4836
    %v4838 = vsel %vm3922, %v4534, 0.0
    %4839 = vadd.xlane.f32.xlu0 %v4838
    %v4840 = vpop.xlane.xlu0 %4839
    %v4841 = vsel %vm3922, %v4536, 0.0
    %4842 = vadd.xlane.f32.xlu0 %v4841
    %v4843 = vpop.xlane.xlu0 %4842
    %v4844 = vsel %vm3922, %v4538, 0.0
    %4845 = vadd.xlane.f32.xlu0 %v4844
    %v4846 = vpop.xlane.xlu0 %4845
    %v4847 = vsel %vm3922, %v4540, 0.0
    %4848 = vadd.xlane.f32.xlu0 %v4847
    %v4849 = vpop.xlane.xlu0 %4848
    %v4850 = vsel %vm3922, %v4542, 0.0
    %4851 = vadd.xlane.f32.xlu0 %v4850
    %v4852 = vpop.xlane.xlu0 %4851
    %v4853 = vsel %vm3922, %v4544, 0.0
    %4854 = vadd.xlane.f32.xlu0 %v4853
    %v4855 = vpop.xlane.xlu0 %4854
    %v4856 = vsel %vm3922, %v4546, 0.0
    %4857 = vadd.xlane.f32.xlu0 %v4856
    %v4858 = vpop.xlane.xlu0 %4857
    %v4859 = vsel %vm3922, %v4548, 0.0
    %4860 = vadd.xlane.f32.xlu0 %v4859
    %v4861 = vpop.xlane.xlu0 %4860
    %v4862 = vsel %vm3922, %v4550, 0.0
    %4863 = vadd.xlane.f32.xlu0 %v4862
    %v4864 = vpop.xlane.xlu0 %4863
    %v4865 = vsel %vm3922, %v4552, 0.0
    %4866 = vadd.xlane.f32.xlu0 %v4865
    %v4867 = vpop.xlane.xlu0 %4866
    %v4868 = vsel %vm3922, %v4554, 0.0
    %4869 = vadd.xlane.f32.xlu0 %v4868
    %v4870 = vpop.xlane.xlu0 %4869
    %v4871 = vsel %vm3922, %v4556, 0.0
    %4872 = vadd.xlane.f32.xlu0 %v4871
    %v4873 = vpop.xlane.xlu0 %4872
    %v4874 = vsel %vm3922, %v4558, 0.0
    %4875 = vadd.xlane.f32.xlu0 %v4874
    %v4876 = vpop.xlane.xlu0 %4875
    %v4877 = vsel %vm3922, %v4560, 0.0
    %4878 = vadd.xlane.f32.xlu0 %v4877
    %v4879 = vpop.xlane.xlu0 %4878
    %v4880 = vsel %vm3922, %v4562, 0.0
    %4881 = vadd.xlane.f32.xlu0 %v4880
    %v4882 = vpop.xlane.xlu0 %4881
    %v4883 = vsel %vm3922, %v4564, 0.0
    %4884 = vadd.xlane.f32.xlu0 %v4883
    %v4885 = vpop.xlane.xlu0 %4884
    %v4886 = vsel %vm3922, %v4566, 0.0
    %4887 = vadd.xlane.f32.xlu0 %v4886
    %v4888 = vpop.xlane.xlu0 %4887
    %v4889 = vsel %vm3922, %v4568, 0.0
    %4890 = vadd.xlane.f32.xlu0 %v4889
    %v4891 = vpop.xlane.xlu0 %4890
    %v4892 = vsel %vm3922, %v4570, 0.0
    %4893 = vadd.xlane.f32.xlu0 %v4892
    %v4894 = vpop.xlane.xlu0 %4893
    %v4895 = vsel %vm3922, %v4572, 0.0
    %4896 = vadd.xlane.f32.xlu0 %v4895
    %v4897 = vpop.xlane.xlu0 %4896
    %v4898 = vsel %vm3922, %v4574, 0.0
    %4899 = vadd.xlane.f32.xlu0 %v4898
    %v4900 = vpop.xlane.xlu0 %4899
    %v4901 = vsel %vm3922, %v4576, 0.0
    %4902 = vadd.xlane.f32.xlu0 %v4901
    %v4903 = vpop.xlane.xlu0 %4902
    %v4904 = vsel %vm3922, %v4578, 0.0
    %4905 = vadd.xlane.f32.xlu0 %v4904
    %v4906 = vpop.xlane.xlu0 %4905
    %v4907 = vsel %vm3922, %v4580, 0.0
    %4908 = vadd.xlane.f32.xlu0 %v4907
    %v4909 = vpop.xlane.xlu0 %4908
    %v4910 = vsel %vm3922, %v4582, 0.0
    %4911 = vadd.xlane.f32.xlu0 %v4910
    %v4912 = vpop.xlane.xlu0 %4911
    %v4913 = vsel %vm3922, %v4584, 0.0
    %4914 = vadd.xlane.f32.xlu0 %v4913
    %v4915 = vpop.xlane.xlu0 %4914
    %v4916 = vsel %vm3922, %v4586, 0.0
    %4917 = vadd.xlane.f32.xlu0 %v4916
    %v4918 = vpop.xlane.xlu0 %4917
    %v4919 = vsel %vm3922, %v4588, 0.0
    %4920 = vadd.xlane.f32.xlu0 %v4919
    %v4921 = vpop.xlane.xlu0 %4920
    %v4922 = vsel %vm3922, %v4590, 0.0
    %4923 = vadd.xlane.f32.xlu0 %v4922
    %v4924 = vpop.xlane.xlu0 %4923
    %v4925 = vsel %vm3922, %v4592, 0.0
    %4926 = vadd.xlane.f32.xlu0 %v4925
    %v4927 = vpop.xlane.xlu0 %4926
    %v4928 = vsel %vm3922, %v4594, 0.0
    %4929 = vadd.xlane.f32.xlu0 %v4928
    %v4930 = vpop.xlane.xlu0 %4929
    %v4931 = vsel %vm3922, %v4596, 0.0
    %4932 = vadd.xlane.f32.xlu0 %v4931
    %v4933 = vpop.xlane.xlu0 %4932
    %v4934 = vsel %vm3922, %v4598, 0.0
    %4935 = vadd.xlane.f32.xlu0 %v4934
    %v4936 = vpop.xlane.xlu0 %4935
    %v4937 = vsel %vm3922, %v4600, 0.0
    %4938 = vadd.xlane.f32.xlu0 %v4937
    %v4939 = vpop.xlane.xlu0 %4938
    %v4940 = vsel %vm3922, %v4602, 0.0
    %4941 = vadd.xlane.f32.xlu0 %v4940
    %v4942 = vpop.xlane.xlu0 %4941
    %v4943 = vsel %vm3922, %v4604, 0.0
    %4944 = vadd.xlane.f32.xlu0 %v4943
    %v4945 = vpop.xlane.xlu0 %4944
    %v4946 = vsel %vm3922, %v4606, 0.0
    %4947 = vadd.xlane.f32.xlu0 %v4946
    %v4948 = vpop.xlane.xlu0 %4947
    %v4949 = vsel %vm3922, %v4608, 0.0
    %4950 = vadd.xlane.f32.xlu0 %v4949
    %v4951 = vpop.xlane.xlu0 %4950
    %v4952 = vsel %vm3922, %v4610, 0.0
    %4953 = vadd.xlane.f32.xlu0 %v4952
    %v4954 = vpop.xlane.xlu0 %4953
    %v4955 = vsel %vm3922, %v4612, 0.0
    %4956 = vadd.xlane.f32.xlu0 %v4955
    %v4957 = vpop.xlane.xlu0 %4956
    %v4958 = vsel %vm3922, %v4614, 0.0
    %4959 = vadd.xlane.f32.xlu0 %v4958
    %v4960 = vpop.xlane.xlu0 %4959
    %v4961 = vsel %vm3922, %v4616, 0.0
    %4962 = vadd.xlane.f32.xlu0 %v4961
    %v4963 = vpop.xlane.xlu0 %4962
    %v4964 = vsel %vm3922, %v4618, 0.0
    %4965 = vadd.xlane.f32.xlu0 %v4964
    %v4966 = vpop.xlane.xlu0 %4965
    %v4967 = vsel %vm3922, %v4620, 0.0
    %4968 = vadd.xlane.f32.xlu0 %v4967
    %v4969 = vpop.xlane.xlu0 %4968
    %v4970 = vsel %vm3922, %v4622, 0.0
    %4971 = vadd.xlane.f32.xlu0 %v4970
    %v4972 = vpop.xlane.xlu0 %4971
    %v4973 = vsel %vm3922, %v4624, 0.0
    %4974 = vadd.xlane.f32.xlu0 %v4973
    %v4975 = vpop.xlane.xlu0 %4974
    %v4976 = vsel %vm3922, %v4626, 0.0
    %4977 = vadd.xlane.f32.xlu0 %v4976
    %v4978 = vpop.xlane.xlu0 %4977
    %v4979 = vsel %vm3922, %v4628, 0.0
    %4980 = vadd.xlane.f32.xlu0 %v4979
    %v4981 = vpop.xlane.xlu0 %4980
    %v4982 = vsel %vm3922, %v4630, 0.0
    %4983 = vadd.xlane.f32.xlu0 %v4982
    %v4984 = vpop.xlane.xlu0 %4983
    %v4985 = vsel %vm3922, %v4632, 0.0
    %4986 = vadd.xlane.f32.xlu0 %v4985
    %v4987 = vpop.xlane.xlu0 %4986
    %v4988 = vsel %vm3922, %v4634, 0.0
    %4989 = vadd.xlane.f32.xlu0 %v4988
    %v4990 = vpop.xlane.xlu0 %4989
    %v4991 = vsel %vm3922, %v4636, 0.0
    %4992 = vadd.xlane.f32.xlu0 %v4991
    %v4993 = vpop.xlane.xlu0 %4992
    %v4994 = vsel %vm3922, %v4638, 0.0
    %4995 = vadd.xlane.f32.xlu0 %v4994
    %v4996 = vpop.xlane.xlu0 %4995
    %v4997 = vsel %vm3922, %v4640, 0.0
    %4998 = vadd.xlane.f32.xlu0 %v4997
    %v4999 = vpop.xlane.xlu0 %4998
    %v5000 = vsel %vm3922, %v4642, 0.0
    %5001 = vadd.xlane.f32.xlu0 %v5000
    %v5002 = vpop.xlane.xlu0 %5001
    %v5003 = vsel %vm3922, %v4644, 0.0
    %5004 = vadd.xlane.f32.xlu0 %v5003
    %v5005 = vpop.xlane.xlu0 %5004
    %v5006 = vsel %vm3922, %v4646, 0.0
    %5007 = vadd.xlane.f32.xlu0 %v5006
    %v5008 = vpop.xlane.xlu0 %5007
    %v5009 = vsel %vm3922, %v4648, 0.0
    %5010 = vadd.xlane.f32.xlu0 %v5009
    %v5011 = vpop.xlane.xlu0 %5010
    %v5012 = vsel %vm3922, %v4650, 0.0
    %5013 = vadd.xlane.f32.xlu0 %v5012
    %v5014 = vpop.xlane.xlu0 %5013
    %v5015 = vsel %vm3922, %v4652, 0.0
    %5016 = vadd.xlane.f32.xlu0 %v5015
    %v5017 = vpop.xlane.xlu0 %5016
    %v5018 = vsel %vm3922, %v4654, 0.0
    %5019 = vadd.xlane.f32.xlu0 %v5018
    %v5020 = vpop.xlane.xlu0 %5019
    %v5021 = vsel %vm3922, %v4656, 0.0
    %5022 = vadd.xlane.f32.xlu0 %v5021
    %v5023 = vpop.xlane.xlu0 %5022
    %v5024 = vsel %vm3922, %v4658, 0.0
    %5025 = vadd.xlane.f32.xlu0 %v5024
    %v5026 = vpop.xlane.xlu0 %5025
    %v5027 = vsel %vm3922, %v4660, 0.0
    %5028 = vadd.xlane.f32.xlu0 %v5027
    %v5029 = vpop.xlane.xlu0 %5028
    %v5030 = vsel %vm3922, %v4662, 0.0
    %5031 = vadd.xlane.f32.xlu0 %v5030
    %v5032 = vpop.xlane.xlu0 %5031
    %v5033 = vsel %vm3922, %v4664, 0.0
    %5034 = vadd.xlane.f32.xlu0 %v5033
    %v5035 = vpop.xlane.xlu0 %5034
    %v5036 = vsel %vm3922, %v4666, 0.0
    %5037 = vadd.xlane.f32.xlu0 %v5036
    %v5038 = vpop.xlane.xlu0 %5037
    %v5039 = vsel %vm3922, %v4668, 0.0
    %5040 = vadd.xlane.f32.xlu0 %v5039
    %v5041 = vpop.xlane.xlu0 %5040
    %v5042 = vsel %vm3922, %v4670, 0.0
    %5043 = vadd.xlane.f32.xlu0 %v5042
    %v5044 = vpop.xlane.xlu0 %5043
    %v5045 = vsel %vm3922, %v4672, 0.0
    %5046 = vadd.xlane.f32.xlu0 %v5045
    %v5047 = vpop.xlane.xlu0 %5046
    %v5048 = vsel %vm3922, %v4674, 0.0
    %5049 = vadd.xlane.f32.xlu0 %v5048
    %v5050 = vpop.xlane.xlu0 %5049
    %v5051 = vsel %vm3922, %v4676, 0.0
    %5052 = vadd.xlane.f32.xlu0 %v5051
    %v5053 = vpop.xlane.xlu0 %5052
    %v5054 = vsel %vm3922, %v4678, 0.0
    %5055 = vadd.xlane.f32.xlu0 %v5054
    %v5056 = vpop.xlane.xlu0 %5055
    %v5057 = vsel %vm3922, %v4680, 0.0
    %5058 = vadd.xlane.f32.xlu0 %v5057
    %v5059 = vpop.xlane.xlu0 %5058
    %v5060 = vsel %vm3922, %v4682, 0.0
    %5061 = vadd.xlane.f32.xlu0 %v5060
    %v5062 = vpop.xlane.xlu0 %5061
    %v5063 = vsel %vm3922, %v4684, 0.0
    %5064 = vadd.xlane.f32.xlu0 %v5063
    %v5065 = vpop.xlane.xlu0 %5064
    %v5066 = vsel %vm3922, %v4686, 0.0
    %5067 = vadd.xlane.f32.xlu0 %v5066
    %v5068 = vpop.xlane.xlu0 %5067
    %v5069 = vsel %vm3922, %v4688, 0.0
    %5070 = vadd.xlane.f32.xlu0 %v5069
    %v5071 = vpop.xlane.xlu0 %5070
    %v5072 = vsel %vm3922, %v4690, 0.0
    %5073 = vadd.xlane.f32.xlu0 %v5072
    %v5074 = vpop.xlane.xlu0 %5073
    %v5075 = vrcp.pop %v4693
    %v5076 = vrcp.pop %v4696
    %v5077 = vrcp.pop %v4699
    %v5078 = vrcp.pop %v4702
    %v5079 = vrcp.pop %v4705
    %v5080 = vrcp.pop %v4708
    %v5081 = vrcp.pop %v4711
    %v5082 = vrcp.pop %v4714
    %v5083 = vrcp.pop %v4717
    %v5084 = vrcp.pop %v4720
    %v5085 = vrcp.pop %v4723
    %v5086 = vrcp.pop %v4726
    %v5087 = vrcp.pop %v4729
    %v5088 = vrcp.pop %v4732
    %v5089 = vrcp.pop %v4735
    %v5090 = vrcp.pop %v4738
    %v5091 = vrcp.pop %v4741
    %v5092 = vrcp.pop %v4744
    %v5093 = vrcp.pop %v4747
    %v5094 = vrcp.pop %v4750
    %v5095 = vrcp.pop %v4753
    %v5096 = vrcp.pop %v4756
    %v5097 = vrcp.pop %v4759
    %v5098 = vrcp.pop %v4762
    %v5099 = vrcp.pop %v4765
    %v5100 = vrcp.pop %v4768
    %v5101 = vrcp.pop %v4771
    %v5102 = vrcp.pop %v4774
    %v5103 = vrcp.pop %v4777
    %v5104 = vrcp.pop %v4780
    %v5105 = vrcp.pop %v4783
    %v5106 = vrcp.pop %v4786
    %v5107 = vrcp.pop %v4789
    %v5108 = vrcp.pop %v4792
    %v5109 = vrcp.pop %v4795
    %v5110 = vrcp.pop %v4798
    %v5111 = vrcp.pop %v4801
    %v5112 = vrcp.pop %v4804
    %v5113 = vrcp.pop %v4807
    %v5114 = vrcp.pop %v4810
    %v5115 = vrcp.pop %v4813
    %v5116 = vrcp.pop %v4816
    %v5117 = vrcp.pop %v4819
    %v5118 = vrcp.pop %v4822
    %v5119 = vrcp.pop %v4825
    %v5120 = vrcp.pop %v4828
    %v5121 = vrcp.pop %v4831
    %v5122 = vrcp.pop %v4834
    %v5123 = vrcp.pop %v4837
    %v5124 = vrcp.pop %v4840
    %v5125 = vrcp.pop %v4843
    %v5126 = vrcp.pop %v4846
    %v5127 = vrcp.pop %v4849
    %v5128 = vrcp.pop %v4852
    %v5129 = vrcp.pop %v4855
    %v5130 = vrcp.pop %v4858
    %v5131 = vrcp.pop %v4861
    %v5132 = vrcp.pop %v4864
    %v5133 = vrcp.pop %v4867
    %v5134 = vrcp.pop %v4870
    %v5135 = vrcp.pop %v4873
    %v5136 = vrcp.pop %v4876
    %v5137 = vrcp.pop %v4879
    %v5138 = vrcp.pop %v4882
    %v5139 = vrcp.pop %v4885
    %v5140 = vrcp.pop %v4888
    %v5141 = vrcp.pop %v4891
    %v5142 = vrcp.pop %v4894
    %v5143 = vrcp.pop %v4897
    %v5144 = vrcp.pop %v4900
    %v5145 = vrcp.pop %v4903
    %v5146 = vrcp.pop %v4906
    %v5147 = vrcp.pop %v4909
    %v5148 = vrcp.pop %v4912
    %v5149 = vrcp.pop %v4915
    %v5150 = vrcp.pop %v4918
    %v5151 = vrcp.pop %v4921
    %v5152 = vrcp.pop %v4924
    %v5153 = vrcp.pop %v4927
    %v5154 = vrcp.pop %v4930
    %v5155 = vrcp.pop %v4933
    %v5156 = vrcp.pop %v4936
    %v5157 = vrcp.pop %v4939
    %v5158 = vrcp.pop %v4942
    %v5159 = vrcp.pop %v4945
    %v5160 = vrcp.pop %v4948
    %v5161 = vrcp.pop %v4951
    %v5162 = vrcp.pop %v4954
    %v5163 = vrcp.pop %v4957
    %v5164 = vrcp.pop %v4960
    %v5165 = vrcp.pop %v4963
    %v5166 = vrcp.pop %v4966
    %v5167 = vrcp.pop %v4969
    %v5168 = vrcp.pop %v4972
    %v5169 = vrcp.pop %v4975
    %v5170 = vrcp.pop %v4978
    %v5171 = vrcp.pop %v4981
    %v5172 = vrcp.pop %v4984
    %v5173 = vrcp.pop %v4987
    %v5174 = vrcp.pop %v4990
    %v5175 = vrcp.pop %v4993
    %v5176 = vrcp.pop %v4996
    %v5177 = vrcp.pop %v4999
    %v5178 = vrcp.pop %v5002
    %v5179 = vrcp.pop %v5005
    %v5180 = vrcp.pop %v5008
    %v5181 = vrcp.pop %v5011
    %v5182 = vrcp.pop %v5014
    %v5183 = vrcp.pop %v5017
    %v5184 = vrcp.pop %v5020
    %v5185 = vrcp.pop %v5023
    %v5186 = vrcp.pop %v5026
    %v5187 = vrcp.pop %v5029
    %v5188 = vrcp.pop %v5032
    %v5189 = vrcp.pop %v5035
    %v5190 = vrcp.pop %v5038
    %v5191 = vrcp.pop %v5041
    %v5192 = vrcp.pop %v5044
    %v5193 = vrcp.pop %v5047
    %v5194 = vrcp.pop %v5050
    %v5195 = vrcp.pop %v5053
    %v5196 = vrcp.pop %v5056
    %v5197 = vrcp.pop %v5059
    %v5198 = vrcp.pop %v5062
    %v5199 = vrcp.pop %v5065
    %v5200 = vrcp.pop %v5068
    %v5201 = vrcp.pop %v5071
    %v5202 = vrcp.pop %v5074
    %v5203 = vmul.f32 %v4436, %v5075
    %v5204 = vmul.f32 %v4438, %v5076
    %v5205 = vmul.f32 %v4440, %v5077
    %v5206 = vmul.f32 %v4442, %v5078
    %v5207 = vmul.f32 %v4444, %v5079
    %v5208 = vmul.f32 %v4446, %v5080
    %v5209 = vmul.f32 %v4448, %v5081
    %v5210 = vmul.f32 %v4450, %v5082
    %v5211 = vmul.f32 %v4452, %v5083
    %v5212 = vmul.f32 %v4454, %v5084
    %v5213 = vmul.f32 %v4456, %v5085
    %v5214 = vmul.f32 %v4458, %v5086
    %v5215 = vmul.f32 %v4460, %v5087
    %v5216 = vmul.f32 %v4462, %v5088
    %v5217 = vmul.f32 %v4464, %v5089
    %v5218 = vmul.f32 %v4466, %v5090
    %v5219 = vmul.f32 %v4468, %v5091
    %v5220 = vmul.f32 %v4470, %v5092
    %v5221 = vmul.f32 %v4472, %v5093
    %v5222 = vmul.f32 %v4474, %v5094
    %v5223 = vmul.f32 %v4476, %v5095
    %v5224 = vmul.f32 %v4478, %v5096
    %v5225 = vmul.f32 %v4480, %v5097
    %v5226 = vmul.f32 %v4482, %v5098
    %v5227 = vmul.f32 %v4484, %v5099
    %v5228 = vmul.f32 %v4486, %v5100
    %v5229 = vmul.f32 %v4488, %v5101
    %v5230 = vmul.f32 %v4490, %v5102
    %v5231 = vmul.f32 %v4492, %v5103
    %v5232 = vmul.f32 %v4494, %v5104
    %v5233 = vmul.f32 %v4496, %v5105
    %v5234 = vmul.f32 %v4498, %v5106
    %v5235 = vmul.f32 %v4500, %v5107
    %v5236 = vmul.f32 %v4502, %v5108
    %v5237 = vmul.f32 %v4504, %v5109
    %v5238 = vmul.f32 %v4506, %v5110
    %v5239 = vmul.f32 %v4508, %v5111
    %v5240 = vmul.f32 %v4510, %v5112
    %v5241 = vmul.f32 %v4512, %v5113
    %v5242 = vmul.f32 %v4514, %v5114
    %v5243 = vmul.f32 %v4516, %v5115
    %v5244 = vmul.f32 %v4518, %v5116
    %v5245 = vmul.f32 %v4520, %v5117
    %v5246 = vmul.f32 %v4522, %v5118
    %v5247 = vmul.f32 %v4524, %v5119
    %v5248 = vmul.f32 %v4526, %v5120
    %v5249 = vmul.f32 %v4528, %v5121
    %v5250 = vmul.f32 %v4530, %v5122
    %v5251 = vmul.f32 %v4532, %v5123
    %v5252 = vmul.f32 %v4534, %v5124
    %v5253 = vmul.f32 %v4536, %v5125
    %v5254 = vmul.f32 %v4538, %v5126
    %v5255 = vmul.f32 %v4540, %v5127
    %v5256 = vmul.f32 %v4542, %v5128
    %v5257 = vmul.f32 %v4544, %v5129
    %v5258 = vmul.f32 %v4546, %v5130
    %v5259 = vmul.f32 %v4548, %v5131
    %v5260 = vmul.f32 %v4550, %v5132
    %v5261 = vmul.f32 %v4552, %v5133
    %v5262 = vmul.f32 %v4554, %v5134
    %v5263 = vmul.f32 %v4556, %v5135
    %v5264 = vmul.f32 %v4558, %v5136
    %v5265 = vmul.f32 %v4560, %v5137
    %v5266 = vmul.f32 %v4562, %v5138
    %v5267 = vmul.f32 %v4564, %v5139
    %v5268 = vmul.f32 %v4566, %v5140
    %v5269 = vmul.f32 %v4568, %v5141
    %v5270 = vmul.f32 %v4570, %v5142
    %v5271 = vmul.f32 %v4572, %v5143
    %v5272 = vmul.f32 %v4574, %v5144
    %v5273 = vmul.f32 %v4576, %v5145
    %v5274 = vmul.f32 %v4578, %v5146
    %v5275 = vmul.f32 %v4580, %v5147
    %v5276 = vmul.f32 %v4582, %v5148
    %v5277 = vmul.f32 %v4584, %v5149
    %v5278 = vmul.f32 %v4586, %v5150
    %v5279 = vmul.f32 %v4588, %v5151
    %v5280 = vmul.f32 %v4590, %v5152
    %v5281 = vmul.f32 %v4592, %v5153
    %v5282 = vmul.f32 %v4594, %v5154
    %v5283 = vmul.f32 %v4596, %v5155
    %v5284 = vmul.f32 %v4598, %v5156
    %v5285 = vmul.f32 %v4600, %v5157
    %v5286 = vmul.f32 %v4602, %v5158
    %v5287 = vmul.f32 %v4604, %v5159
    %v5288 = vmul.f32 %v4606, %v5160
    %v5289 = vmul.f32 %v4608, %v5161
    %v5290 = vmul.f32 %v4610, %v5162
    %v5291 = vmul.f32 %v4612, %v5163
    %v5292 = vmul.f32 %v4614, %v5164
    %v5293 = vmul.f32 %v4616, %v5165
    %v5294 = vmul.f32 %v4618, %v5166
    %v5295 = vmul.f32 %v4620, %v5167
    %v5296 = vmul.f32 %v4622, %v5168
    %v5297 = vmul.f32 %v4624, %v5169
    %v5298 = vmul.f32 %v4626, %v5170
    %v5299 = vmul.f32 %v4628, %v5171
    %v5300 = vmul.f32 %v4630, %v5172
    %v5301 = vmul.f32 %v4632, %v5173
    %v5302 = vmul.f32 %v4634, %v5174
    %v5303 = vmul.f32 %v4636, %v5175
    %v5304 = vmul.f32 %v4638, %v5176
    %v5305 = vmul.f32 %v4640, %v5177
    %v5306 = vmul.f32 %v4642, %v5178
    %v5307 = vmul.f32 %v4644, %v5179
    %v5308 = vmul.f32 %v4646, %v5180
    %v5309 = vmul.f32 %v4648, %v5181
    %v5310 = vmul.f32 %v4650, %v5182
    %v5311 = vmul.f32 %v4652, %v5183
    %v5312 = vmul.f32 %v4654, %v5184
    %v5313 = vmul.f32 %v4656, %v5185
    %v5314 = vmul.f32 %v4658, %v5186
    %v5315 = vmul.f32 %v4660, %v5187
    %v5316 = vmul.f32 %v4662, %v5188
    %v5317 = vmul.f32 %v4664, %v5189
    %v5318 = vmul.f32 %v4666, %v5190
    %v5319 = vmul.f32 %v4668, %v5191
    %v5320 = vmul.f32 %v4670, %v5192
    %v5321 = vmul.f32 %v4672, %v5193
    %v5322 = vmul.f32 %v4674, %v5194
    %v5323 = vmul.f32 %v4676, %v5195
    %v5324 = vmul.f32 %v4678, %v5196
    %v5325 = vmul.f32 %v4680, %v5197
    %v5326 = vmul.f32 %v4682, %v5198
    %v5327 = vmul.f32 %v4684, %v5199
    %v5328 = vmul.f32 %v4686, %v5200
    %v5329 = vmul.f32 %v4688, %v5201
    %v5330 = vmul.f32 %v4690, %v5202
    %v5331 = vpack.c.bf16 %v5204, %v5203
    %v5332 = vpack.c.bf16 %v5206, %v5205
    %v5333 = vpack.c.bf16 %v5208, %v5207
    %v5334 = vpack.c.bf16 %v5210, %v5209
    %v5335 = vpack.c.bf16 %v5212, %v5211
    %v5336 = vpack.c.bf16 %v5214, %v5213
    %v5337 = vpack.c.bf16 %v5216, %v5215
    %v5338 = vpack.c.bf16 %v5218, %v5217
    %v5339 = vpack.c.bf16 %v5220, %v5219
    %v5340 = vpack.c.bf16 %v5222, %v5221
    %v5341 = vpack.c.bf16 %v5224, %v5223
    %v5342 = vpack.c.bf16 %v5226, %v5225
    %v5343 = vpack.c.bf16 %v5228, %v5227
    %v5344 = vpack.c.bf16 %v5230, %v5229
    %v5345 = vpack.c.bf16 %v5232, %v5231
    %v5346 = vpack.c.bf16 %v5234, %v5233
    %v5347 = vpack.c.bf16 %v5236, %v5235
    %v5348 = vpack.c.bf16 %v5238, %v5237
    %v5349 = vpack.c.bf16 %v5240, %v5239
    %v5350 = vpack.c.bf16 %v5242, %v5241
    %v5351 = vpack.c.bf16 %v5244, %v5243
    %v5352 = vpack.c.bf16 %v5246, %v5245
    %v5353 = vpack.c.bf16 %v5248, %v5247
    %v5354 = vpack.c.bf16 %v5250, %v5249
    %v5355 = vpack.c.bf16 %v5252, %v5251
    %v5356 = vpack.c.bf16 %v5254, %v5253
    %v5357 = vpack.c.bf16 %v5256, %v5255
    %v5358 = vpack.c.bf16 %v5258, %v5257
    %v5359 = vpack.c.bf16 %v5260, %v5259
    %v5360 = vpack.c.bf16 %v5262, %v5261
    %v5361 = vpack.c.bf16 %v5264, %v5263
    %v5362 = vpack.c.bf16 %v5266, %v5265
    %v5363 = vpack.c.bf16 %v5268, %v5267
    %v5364 = vpack.c.bf16 %v5270, %v5269
    %v5365 = vpack.c.bf16 %v5272, %v5271
    %v5366 = vpack.c.bf16 %v5274, %v5273
    %v5367 = vpack.c.bf16 %v5276, %v5275
    %v5368 = vpack.c.bf16 %v5278, %v5277
    %v5369 = vpack.c.bf16 %v5280, %v5279
    %v5370 = vpack.c.bf16 %v5282, %v5281
    %v5371 = vpack.c.bf16 %v5284, %v5283
    %v5372 = vpack.c.bf16 %v5286, %v5285
    %v5373 = vpack.c.bf16 %v5288, %v5287
    %v5374 = vpack.c.bf16 %v5290, %v5289
    %v5375 = vpack.c.bf16 %v5292, %v5291
    %v5376 = vpack.c.bf16 %v5294, %v5293
    %v5377 = vpack.c.bf16 %v5296, %v5295
    %v5378 = vpack.c.bf16 %v5298, %v5297
    %v5379 = vpack.c.bf16 %v5300, %v5299
    %v5380 = vpack.c.bf16 %v5302, %v5301
    %v5381 = vpack.c.bf16 %v5304, %v5303
    %v5382 = vpack.c.bf16 %v5306, %v5305
    %v5383 = vpack.c.bf16 %v5308, %v5307
    %v5384 = vpack.c.bf16 %v5310, %v5309
    %v5385 = vpack.c.bf16 %v5312, %v5311
    %v5386 = vpack.c.bf16 %v5314, %v5313
    %v5387 = vpack.c.bf16 %v5316, %v5315
    %v5388 = vpack.c.bf16 %v5318, %v5317
    %v5389 = vpack.c.bf16 %v5320, %v5319
    %v5390 = vpack.c.bf16 %v5322, %v5321
    %v5391 = vpack.c.bf16 %v5324, %v5323
    %v5392 = vpack.c.bf16 %v5326, %v5325
    %v5393 = vpack.c.bf16 %v5328, %v5327
    %v5394 = vpack.c.bf16 %v5330, %v5329
    %v5396 = vsel %vm3922, %v5331, 0
    %v5399 = vsel %vm3922, %v5332, 0
    %5401 = vmatprep.subr.bf16.mxu0 0
    %5402 = vmatpush1.bf16.msra.mxu0 %v1745
    %5403 = vmatprep.subr.bf16.mxu0 0
    %5404 = vmatpush1.bf16.msra.mxu0 %v1746
    %5405 = vmatprep.subr.bf16.mxu0 0
    %5406 = vmatpush1.bf16.msra.mxu0 0
    %5407 = vmatprep.subr.bf16.mxu0 0
    %5408 = vmatpush1.bf16.msra.mxu0 0
    %5409 = vmatprep.subr.bf16.mxu0 0
    %5410 = vmatpush1.bf16.msra.mxu0 0
    %5411 = vmatprep.subr.bf16.mxu0 0
    %5412 = vmatpush1.bf16.msra.mxu0 0
    %5413 = vmatprep.subr.bf16.mxu0 0
    %5414 = vmatpush1.bf16.msra.mxu0 0
    %5415 = vmatprep.subr.bf16.mxu0 0
    %5416 = vmatpush1.bf16.msra.mxu0 0
    %5417 = vmatprep.subr.bf16.mxu0 0
    %5418 = vmatpush1.bf16.msra.mxu0 0
    %5419 = vmatprep.subr.bf16.mxu0 0
    %5420 = vmatpush1.bf16.msra.mxu0 0
    %5421 = vmatprep.subr.bf16.mxu0 0
    %5422 = vmatpush1.bf16.msra.mxu0 0
    %5423 = vmatprep.subr.bf16.mxu0 0
    %5424 = vmatpush1.bf16.msra.mxu0 0
    %5425 = vmatprep.subr.bf16.mxu0 0
    %5426 = vmatpush1.bf16.msra.mxu0 0
    %5427 = vmatprep.subr.bf16.mxu0 0
    %5428 = vmatpush1.bf16.msra.mxu0 0
    %5429 = vmatprep.subr.bf16.mxu0 0
    %5430 = vmatpush1.bf16.msra.mxu0 0
    %5431 = vmatprep.subr.bf16.mxu0 0
    %5432 = vmatpush1.bf16.msra.mxu0 0
    %5433 = vmatprep.mubr.bf16.mxu0 0
    %5434 = vmatmul.mubr.bf16.gmra.mrb[0].mxu0 %v5396
    %v5435 = vpop.f32.mrb[0].mxu0
    %v5436 = vadd.f32 0.0, %v5435
    %v5437 = vpop.f32.mrb[0].mxu0
    %v5438 = vpop.f32.mrb[0].mxu0
    %v5439 = vadd.f32 0.0, %v5438
    %v5440 = vpop.f32.mrb[0].mxu0
    %5441 = vmatprep.mubr.bf16.mxu0 0
    %5442 = vmatmul.mubr.bf16.gmra.mrb[0].mxu0 %v5399
    %v5443 = vpop.f32.mrb[0].mxu0
    %v5444 = vadd.f32 0.0, %v5443
    %v5445 = vpop.f32.mrb[0].mxu0
    %v5446 = vpop.f32.mrb[0].mxu0
    %v5447 = vadd.f32 0.0, %v5446
    %v5448 = vpop.f32.mrb[0].mxu0
    %5449 = vdwg.mxu0
    %v5451 = vsel %vm3922, %v5333, 0
    %v5454 = vsel %vm3922, %v5334, 0
    %5456 = vmatprep.subr.bf16.mxu0 0
    %5457 = vmatpush1.bf16.msra.mxu0 %v1747
    %5458 = vmatprep.subr.bf16.mxu0 0
    %5459 = vmatpush1.bf16.msra.mxu0 %v1748
    %5460 = vmatprep.subr.bf16.mxu0 0
    %5461 = vmatpush1.bf16.msra.mxu0 0
    %5462 = vmatprep.subr.bf16.mxu0 0
    %5463 = vmatpush1.bf16.msra.mxu0 0
    %5464 = vmatprep.subr.bf16.mxu0 0
    %5465 = vmatpush1.bf16.msra.mxu0 0
    %5466 = vmatprep.subr.bf16.mxu0 0
    %5467 = vmatpush1.bf16.msra.mxu0 0
    %5468 = vmatprep.subr.bf16.mxu0 0
    %5469 = vmatpush1.bf16.msra.mxu0 0
    %5470 = vmatprep.subr.bf16.mxu0 0
    %5471 = vmatpush1.bf16.msra.mxu0 0
    %5472 = vmatprep.subr.bf16.mxu0 0
    %5473 = vmatpush1.bf16.msra.mxu0 0
    %5474 = vmatprep.subr.bf16.mxu0 0
    %5475 = vmatpush1.bf16.msra.mxu0 0
    %5476 = vmatprep.subr.bf16.mxu0 0
    %5477 = vmatpush1.bf16.msra.mxu0 0
    %5478 = vmatprep.subr.bf16.mxu0 0
    %5479 = vmatpush1.bf16.msra.mxu0 0
    %5480 = vmatprep.subr.bf16.mxu0 0
    %5481 = vmatpush1.bf16.msra.mxu0 0
    %5482 = vmatprep.subr.bf16.mxu0 0
    %5483 = vmatpush1.bf16.msra.mxu0 0
    %5484 = vmatprep.subr.bf16.mxu0 0
    %5485 = vmatpush1.bf16.msra.mxu0 0
    %5486 = vmatprep.subr.bf16.mxu0 0
    %5487 = vmatpush1.bf16.msra.mxu0 0
    %5488 = vmatprep.mubr.bf16.mxu0 0
    %5489 = vmatmul.mubr.bf16.gmra.mrb[0].mxu0 %v5451
    %v5490 = vpop.f32.mrb[0].mxu0
    %v5491 = vadd.f32 0.0, %v5490
    %v5492 = vpop.f32.mrb[0].mxu0
    %v5493 = vpop.f32.mrb[0].mxu0
    %v5494 = vadd.f32 0.0, %v5493
    %v5495 = vpop.f32.mrb[0].mxu0
    %5496 = vmatprep.mubr.bf16.mxu0 0
    %5497 = vmatmul.mubr.bf16.gmra.mrb[0].mxu0 %v5454
    %v5498 = vpop.f32.mrb[0].mxu0
    %v5499 = vadd.f32 0.0, %v5498
    %v5500 = vpop.f32.mrb[0].mxu0
    %v5501 = vpop.f32.mrb[0].mxu0
    %v5502 = vadd.f32 0.0, %v5501
    %v5503 = vpop.f32.mrb[0].mxu0
    %5504 = vdwg.mxu0
    %v5506 = vsel %vm3922, %v5335, 0
    %v5509 = vsel %vm3922, %v5336, 0
    %5511 = vmatprep.subr.bf16.mxu0 0
    %5512 = vmatpush1.bf16.msra.mxu0 %v1749
    %5513 = vmatprep.subr.bf16.mxu0 0
    %5514 = vmatpush1.bf16.msra.mxu0 %v1750
    %5515 = vmatprep.subr.bf16.mxu0 0
    %5516 = vmatpush1.bf16.msra.mxu0 0
    %5517 = vmatprep.subr.bf16.mxu0 0
    %5518 = vmatpush1.bf16.msra.mxu0 0
    %5519 = vmatprep.subr.bf16.mxu0 0
    %5520 = vmatpush1.bf16.msra.mxu0 0
    %5521 = vmatprep.subr.bf16.mxu0 0
    %5522 = vmatpush1.bf16.msra.mxu0 0
    %5523 = vmatprep.subr.bf16.mxu0 0
    %5524 = vmatpush1.bf16.msra.mxu0 0
    %5525 = vmatprep.subr.bf16.mxu0 0
    %5526 = vmatpush1.bf16.msra.mxu0 0
    %5527 = vmatprep.subr.bf16.mxu0 0
    %5528 = vmatpush1.bf16.msra.mxu0 0
    %5529 = vmatprep.subr.bf16.mxu0 0
    %5530 = vmatpush1.bf16.msra.mxu0 0
    %5531 = vmatprep.subr.bf16.mxu0 0
    %5532 = vmatpush1.bf16.msra.mxu0 0
    %5533 = vmatprep.subr.bf16.mxu0 0
    %5534 = vmatpush1.bf16.msra.mxu0 0
    %5535 = vmatprep.subr.bf16.mxu0 0
    %5536 = vmatpush1.bf16.msra.mxu0 0
    %5537 = vmatprep.subr.bf16.mxu0 0
    %5538 = vmatpush1.bf16.msra.mxu0 0
    %5539 = vmatprep.subr.bf16.mxu0 0
    %5540 = vmatpush1.bf16.msra.mxu0 0
    %5541 = vmatprep.subr.bf16.mxu0 0
    %5542 = vmatpush1.bf16.msra.mxu0 0
    %5543 = vmatprep.mubr.bf16.mxu0 0
    %5544 = vmatmul.mubr.bf16.gmra.mrb[0].mxu0 %v5506
    %v5545 = vpop.f32.mrb[0].mxu0
    %v5546 = vadd.f32 0.0, %v5545
    %v5547 = vpop.f32.mrb[0].mxu0
    %v5548 = vpop.f32.mrb[0].mxu0
    %v5549 = vadd.f32 0.0, %v5548
    %v5550 = vpop.f32.mrb[0].mxu0
    %5551 = vmatprep.mubr.bf16.mxu0 0
    %5552 = vmatmul.mubr.bf16.gmra.mrb[0].mxu0 %v5509
    %v5553 = vpop.f32.mrb[0].mxu0
    %v5554 = vadd.f32 0.0, %v5553
    %v5555 = vpop.f32.mrb[0].mxu0
    %v5556 = vpop.f32.mrb[0].mxu0
    %v5557 = vadd.f32 0.0, %v5556
    %v5558 = vpop.f32.mrb[0].mxu0
    %5559 = vdwg.mxu0
    %v5561 = vsel %vm3922, %v5337, 0
    %v5564 = vsel %vm3922, %v5338, 0
    %5566 = vmatprep.subr.bf16.mxu0 0
    %5567 = vmatpush1.bf16.msra.mxu0 %v1751
    %5568 = vmatprep.subr.bf16.mxu0 0
    %5569 = vmatpush1.bf16.msra.mxu0 %v1752
    %5570 = vmatprep.subr.bf16.mxu0 0
    %5571 = vmatpush1.bf16.msra.mxu0 0
    %5572 = vmatprep.subr.bf16.mxu0 0
    %5573 = vmatpush1.bf16.msra.mxu0 0
    %5574 = vmatprep.subr.bf16.mxu0 0
    %5575 = vmatpush1.bf16.msra.mxu0 0
    %5576 = vmatprep.subr.bf16.mxu0 0
    %5577 = vmatpush1.bf16.msra.mxu0 0
    %5578 = vmatprep.subr.bf16.mxu0 0
    %5579 = vmatpush1.bf16.msra.mxu0 0
    %5580 = vmatprep.subr.bf16.mxu0 0
    %5581 = vmatpush1.bf16.msra.mxu0 0
    %5582 = vmatprep.subr.bf16.mxu0 0
    %5583 = vmatpush1.bf16.msra.mxu0 0
    %5584 = vmatprep.subr.bf16.mxu0 0
    %5585 = vmatpush1.bf16.msra.mxu0 0
    %5586 = vmatprep.subr.bf16.mxu0 0
    %5587 = vmatpush1.bf16.msra.mxu0 0
    %5588 = vmatprep.subr.bf16.mxu0 0
    %5589 = vmatpush1.bf16.msra.mxu0 0
    %5590 = vmatprep.subr.bf16.mxu0 0
    %5591 = vmatpush1.bf16.msra.mxu0 0
    %5592 = vmatprep.subr.bf16.mxu0 0
    %5593 = vmatpush1.bf16.msra.mxu0 0
    %5594 = vmatprep.subr.bf16.mxu0 0
    %5595 = vmatpush1.bf16.msra.mxu0 0
    %5596 = vmatprep.subr.bf16.mxu0 0
    %5597 = vmatpush1.bf16.msra.mxu0 0
    %5598 = vmatprep.mubr.bf16.mxu0 0
    %5599 = vmatmul.mubr.bf16.gmra.mrb[0].mxu0 %v5561
    %v5600 = vpop.f32.mrb[0].mxu0
    %v5601 = vadd.f32 0.0, %v5600
    %v5602 = vpop.f32.mrb[0].mxu0
    %v5603 = vpop.f32.mrb[0].mxu0
    %v5604 = vadd.f32 0.0, %v5603
    %v5605 = vpop.f32.mrb[0].mxu0
    %5606 = vmatprep.mubr.bf16.mxu0 0
    %5607 = vmatmul.mubr.bf16.gmra.mrb[0].mxu0 %v5564
    %v5608 = vpop.f32.mrb[0].mxu0
    %v5609 = vadd.f32 0.0, %v5608
    %v5610 = vpop.f32.mrb[0].mxu0
    %v5611 = vpop.f32.mrb[0].mxu0
    %v5612 = vadd.f32 0.0, %v5611
    %v5613 = vpop.f32.mrb[0].mxu0
    %5614 = vdwg.mxu0
    %v5616 = vsel %vm3922, %v5339, 0
    %v5619 = vsel %vm3922, %v5340, 0
    %5621 = vmatprep.subr.bf16.mxu0 0
    %5622 = vmatpush1.bf16.msra.mxu0 %v1753
    %5623 = vmatprep.subr.bf16.mxu0 0
    %5624 = vmatpush1.bf16.msra.mxu0 %v1754
    %5625 = vmatprep.subr.bf16.mxu0 0
    %5626 = vmatpush1.bf16.msra.mxu0 0
    %5627 = vmatprep.subr.bf16.mxu0 0
    %5628 = vmatpush1.bf16.msra.mxu0 0
    %5629 = vmatprep.subr.bf16.mxu0 0
    %5630 = vmatpush1.bf16.msra.mxu0 0
    %5631 = vmatprep.subr.bf16.mxu0 0
    %5632 = vmatpush1.bf16.msra.mxu0 0
    %5633 = vmatprep.subr.bf16.mxu0 0
    %5634 = vmatpush1.bf16.msra.mxu0 0
    %5635 = vmatprep.subr.bf16.mxu0 0
    %5636 = vmatpush1.bf16.msra.mxu0 0
    %5637 = vmatprep.subr.bf16.mxu0 0
    %5638 = vmatpush1.bf16.msra.mxu0 0
    %5639 = vmatprep.subr.bf16.mxu0 0
    %5640 = vmatpush1.bf16.msra.mxu0 0
    %5641 = vmatprep.subr.bf16.mxu0 0
    %5642 = vmatpush1.bf16.msra.mxu0 0
    %5643 = vmatprep.subr.bf16.mxu0 0
    %5644 = vmatpush1.bf16.msra.mxu0 0
    %5645 = vmatprep.subr.bf16.mxu0 0
    %5646 = vmatpush1.bf16.msra.mxu0 0
    %5647 = vmatprep.subr.bf16.mxu0 0
    %5648 = vmatpush1.bf16.msra.mxu0 0
    %5649 = vmatprep.subr.bf16.mxu0 0
    %5650 = vmatpush1.bf16.msra.mxu0 0
    %5651 = vmatprep.subr.bf16.mxu0 0
    %5652 = vmatpush1.bf16.msra.mxu0 0
    %5653 = vmatprep.mubr.bf16.mxu0 0
    %5654 = vmatmul.mubr.bf16.gmra.mrb[0].mxu0 %v5616
    %v5655 = vpop.f32.mrb[0].mxu0
    %v5656 = vadd.f32 0.0, %v5655
    %v5657 = vpop.f32.mrb[0].mxu0
    %v5658 = vpop.f32.mrb[0].mxu0
    %v5659 = vadd.f32 0.0, %v5658
    %v5660 = vpop.f32.mrb[0].mxu0
    %5661 = vmatprep.mubr.bf16.mxu0 0
    %5662 = vmatmul.mubr.bf16.gmra.mrb[0].mxu0 %v5619
    %v5663 = vpop.f32.mrb[0].mxu0
    %v5664 = vadd.f32 0.0, %v5663
    %v5665 = vpop.f32.mrb[0].mxu0
    %v5666 = vpop.f32.mrb[0].mxu0
    %v5667 = vadd.f32 0.0, %v5666
    %v5668 = vpop.f32.mrb[0].mxu0
    %5669 = vdwg.mxu0
    %v5671 = vsel %vm3922, %v5341, 0
    %v5674 = vsel %vm3922, %v5342, 0
    %5676 = vmatprep.subr.bf16.mxu0 0
    %5677 = vmatpush1.bf16.msra.mxu0 %v1755
    %5678 = vmatprep.subr.bf16.mxu0 0
    %5679 = vmatpush1.bf16.msra.mxu0 %v1756
    %5680 = vmatprep.subr.bf16.mxu0 0
    %5681 = vmatpush1.bf16.msra.mxu0 0
    %5682 = vmatprep.subr.bf16.mxu0 0
    %5683 = vmatpush1.bf16.msra.mxu0 0
    %5684 = vmatprep.subr.bf16.mxu0 0
    %5685 = vmatpush1.bf16.msra.mxu0 0
    %5686 = vmatprep.subr.bf16.mxu0 0
    %5687 = vmatpush1.bf16.msra.mxu0 0
    %5688 = vmatprep.subr.bf16.mxu0 0
    %5689 = vmatpush1.bf16.msra.mxu0 0
    %5690 = vmatprep.subr.bf16.mxu0 0
    %5691 = vmatpush1.bf16.msra.mxu0 0
    %5692 = vmatprep.subr.bf16.mxu0 0
    %5693 = vmatpush1.bf16.msra.mxu0 0
    %5694 = vmatprep.subr.bf16.mxu0 0
    %5695 = vmatpush1.bf16.msra.mxu0 0
    %5696 = vmatprep.subr.bf16.mxu0 0
    %5697 = vmatpush1.bf16.msra.mxu0 0
    %5698 = vmatprep.subr.bf16.mxu0 0
    %5699 = vmatpush1.bf16.msra.mxu0 0
    %5700 = vmatprep.subr.bf16.mxu0 0
    %5701 = vmatpush1.bf16.msra.mxu0 0
    %5702 = vmatprep.subr.bf16.mxu0 0
    %5703 = vmatpush1.bf16.msra.mxu0 0
    %5704 = vmatprep.subr.bf16.mxu0 0
    %5705 = vmatpush1.bf16.msra.mxu0 0
    %5706 = vmatprep.subr.bf16.mxu0 0
    %5707 = vmatpush1.bf16.msra.mxu0 0
    %5708 = vmatprep.mubr.bf16.mxu0 0
    %5709 = vmatmul.mubr.bf16.gmra.mrb[0].mxu0 %v5671
    %v5710 = vpop.f32.mrb[0].mxu0
    %v5711 = vadd.f32 0.0, %v5710
    %v5712 = vpop.f32.mrb[0].mxu0
    %v5713 = vpop.f32.mrb[0].mxu0
    %v5714 = vadd.f32 0.0, %v5713
    %v5715 = vpop.f32.mrb[0].mxu0
    %5716 = vmatprep.mubr.bf16.mxu0 0
    %5717 = vmatmul.mubr.bf16.gmra.mrb[0].mxu0 %v5674
    %v5718 = vpop.f32.mrb[0].mxu0
    %v5719 = vadd.f32 0.0, %v5718
    %v5720 = vpop.f32.mrb[0].mxu0
    %v5721 = vpop.f32.mrb[0].mxu0
    %v5722 = vadd.f32 0.0, %v5721
    %v5723 = vpop.f32.mrb[0].mxu0
    %5724 = vdwg.mxu0
    %v5726 = vsel %vm3922, %v5343, 0
    %v5729 = vsel %vm3922, %v5344, 0
    %5731 = vmatprep.subr.bf16.mxu0 0
    %5732 = vmatpush1.bf16.msra.mxu0 %v1757
    %5733 = vmatprep.subr.bf16.mxu0 0
    %5734 = vmatpush1.bf16.msra.mxu0 %v1758
    %5735 = vmatprep.subr.bf16.mxu0 0
    %5736 = vmatpush1.bf16.msra.mxu0 0
    %5737 = vmatprep.subr.bf16.mxu0 0
    %5738 = vmatpush1.bf16.msra.mxu0 0
    %5739 = vmatprep.subr.bf16.mxu0 0
    %5740 = vmatpush1.bf16.msra.mxu0 0
    %5741 = vmatprep.subr.bf16.mxu0 0
    %5742 = vmatpush1.bf16.msra.mxu0 0
    %5743 = vmatprep.subr.bf16.mxu0 0
    %5744 = vmatpush1.bf16.msra.mxu0 0
    %5745 = vmatprep.subr.bf16.mxu0 0
    %5746 = vmatpush1.bf16.msra.mxu0 0
    %5747 = vmatprep.subr.bf16.mxu0 0
    %5748 = vmatpush1.bf16.msra.mxu0 0
    %5749 = vmatprep.subr.bf16.mxu0 0
    %5750 = vmatpush1.bf16.msra.mxu0 0
    %5751 = vmatprep.subr.bf16.mxu0 0
    %5752 = vmatpush1.bf16.msra.mxu0 0
    %5753 = vmatprep.subr.bf16.mxu0 0
    %5754 = vmatpush1.bf16.msra.mxu0 0
    %5755 = vmatprep.subr.bf16.mxu0 0
    %5756 = vmatpush1.bf16.msra.mxu0 0
    %5757 = vmatprep.subr.bf16.mxu0 0
    %5758 = vmatpush1.bf16.msra.mxu0 0
    %5759 = vmatprep.subr.bf16.mxu0 0
    %5760 = vmatpush1.bf16.msra.mxu0 0
    %5761 = vmatprep.subr.bf16.mxu0 0
    %5762 = vmatpush1.bf16.msra.mxu0 0
    %5763 = vmatprep.mubr.bf16.mxu0 0
    %5764 = vmatmul.mubr.bf16.gmra.mrb[0].mxu0 %v5726
    %v5765 = vpop.f32.mrb[0].mxu0
    %v5766 = vadd.f32 0.0, %v5765
    %v5767 = vpop.f32.mrb[0].mxu0
    %v5768 = vpop.f32.mrb[0].mxu0
    %v5769 = vadd.f32 0.0, %v5768
    %v5770 = vpop.f32.mrb[0].mxu0
    %5771 = vmatprep.mubr.bf16.mxu0 0
    %5772 = vmatmul.mubr.bf16.gmra.mrb[0].mxu0 %v5729
    %v5773 = vpop.f32.mrb[0].mxu0
    %v5774 = vadd.f32 0.0, %v5773
    %v5775 = vpop.f32.mrb[0].mxu0
    %v5776 = vpop.f32.mrb[0].mxu0
    %v5777 = vadd.f32 0.0, %v5776
    %v5778 = vpop.f32.mrb[0].mxu0
    %5779 = vdwg.mxu0
    %v5781 = vsel %vm3922, %v5345, 0
    %v5784 = vsel %vm3922, %v5346, 0
    %5786 = vmatprep.subr.bf16.mxu0 0
    %5787 = vmatpush1.bf16.msra.mxu0 %v1759
    %5788 = vmatprep.subr.bf16.mxu0 0
    %5789 = vmatpush1.bf16.msra.mxu0 %v1760
    %5790 = vmatprep.subr.bf16.mxu0 0
    %5791 = vmatpush1.bf16.msra.mxu0 0
    %5792 = vmatprep.subr.bf16.mxu0 0
    %5793 = vmatpush1.bf16.msra.mxu0 0
    %5794 = vmatprep.subr.bf16.mxu0 0
    %5795 = vmatpush1.bf16.msra.mxu0 0
    %5796 = vmatprep.subr.bf16.mxu0 0
    %5797 = vmatpush1.bf16.msra.mxu0 0
    %5798 = vmatprep.subr.bf16.mxu0 0
    %5799 = vmatpush1.bf16.msra.mxu0 0
    %5800 = vmatprep.subr.bf16.mxu0 0
    %5801 = vmatpush1.bf16.msra.mxu0 0
    %5802 = vmatprep.subr.bf16.mxu0 0
    %5803 = vmatpush1.bf16.msra.mxu0 0
    %5804 = vmatprep.subr.bf16.mxu0 0
    %5805 = vmatpush1.bf16.msra.mxu0 0
    %5806 = vmatprep.subr.bf16.mxu0 0
    %5807 = vmatpush1.bf16.msra.mxu0 0
    %5808 = vmatprep.subr.bf16.mxu0 0
    %5809 = vmatpush1.bf16.msra.mxu0 0
    %5810 = vmatprep.subr.bf16.mxu0 0
    %5811 = vmatpush1.bf16.msra.mxu0 0
    %5812 = vmatprep.subr.bf16.mxu0 0
    %5813 = vmatpush1.bf16.msra.mxu0 0
    %5814 = vmatprep.subr.bf16.mxu0 0
    %5815 = vmatpush1.bf16.msra.mxu0 0
    %5816 = vmatprep.subr.bf16.mxu0 0
    %5817 = vmatpush1.bf16.msra.mxu0 0
    %5818 = vmatprep.mubr.bf16.mxu0 0
    %5819 = vmatmul.mubr.bf16.gmra.mrb[0].mxu0 %v5781
    %v5820 = vpop.f32.mrb[0].mxu0
    %v5821 = vadd.f32 0.0, %v5820
    %v5822 = vpop.f32.mrb[0].mxu0
    %v5823 = vpop.f32.mrb[0].mxu0
    %v5824 = vadd.f32 0.0, %v5823
    %v5825 = vpop.f32.mrb[0].mxu0
    %5826 = vmatprep.mubr.bf16.mxu0 0
    %5827 = vmatmul.mubr.bf16.gmra.mrb[0].mxu0 %v5784
    %v5828 = vpop.f32.mrb[0].mxu0
    %v5829 = vadd.f32 0.0, %v5828
    %v5830 = vpop.f32.mrb[0].mxu0
    %v5831 = vpop.f32.mrb[0].mxu0
    %v5832 = vadd.f32 0.0, %v5831
    %v5833 = vpop.f32.mrb[0].mxu0
    %5834 = vdwg.mxu0
    %v5836 = vsel %vm3922, %v5347, 0
    %v5839 = vsel %vm3922, %v5348, 0
    %5841 = vmatprep.subr.bf16.mxu0 0
    %5842 = vmatpush1.bf16.msra.mxu0 %v1761
    %5843 = vmatprep.subr.bf16.mxu0 0
    %5844 = vmatpush1.bf16.msra.mxu0 %v1762
    %5845 = vmatprep.subr.bf16.mxu0 0
    %5846 = vmatpush1.bf16.msra.mxu0 0
    %5847 = vmatprep.subr.bf16.mxu0 0
    %5848 = vmatpush1.bf16.msra.mxu0 0
    %5849 = vmatprep.subr.bf16.mxu0 0
    %5850 = vmatpush1.bf16.msra.mxu0 0
    %5851 = vmatprep.subr.bf16.mxu0 0
    %5852 = vmatpush1.bf16.msra.mxu0 0
    %5853 = vmatprep.subr.bf16.mxu0 0
    %5854 = vmatpush1.bf16.msra.mxu0 0
    %5855 = vmatprep.subr.bf16.mxu0 0
    %5856 = vmatpush1.bf16.msra.mxu0 0
    %5857 = vmatprep.subr.bf16.mxu0 0
    %5858 = vmatpush1.bf16.msra.mxu0 0
    %5859 = vmatprep.subr.bf16.mxu0 0
    %5860 = vmatpush1.bf16.msra.mxu0 0
    %5861 = vmatprep.subr.bf16.mxu0 0
    %5862 = vmatpush1.bf16.msra.mxu0 0
    %5863 = vmatprep.subr.bf16.mxu0 0
    %5864 = vmatpush1.bf16.msra.mxu0 0
    %5865 = vmatprep.subr.bf16.mxu0 0
    %5866 = vmatpush1.bf16.msra.mxu0 0
    %5867 = vmatprep.subr.bf16.mxu0 0
    %5868 = vmatpush1.bf16.msra.mxu0 0
    %5869 = vmatprep.subr.bf16.mxu0 0
    %5870 = vmatpush1.bf16.msra.mxu0 0
    %5871 = vmatprep.subr.bf16.mxu0 0
    %5872 = vmatpush1.bf16.msra.mxu0 0
    %5873 = vmatprep.mubr.bf16.mxu0 0
    %5874 = vmatmul.mubr.bf16.gmra.mrb[0].mxu0 %v5836
    %v5875 = vpop.f32.mrb[0].mxu0
    %v5876 = vadd.f32 0.0, %v5875
    %v5877 = vpop.f32.mrb[0].mxu0
    %v5878 = vpop.f32.mrb[0].mxu0
    %v5879 = vadd.f32 0.0, %v5878
    %v5880 = vpop.f32.mrb[0].mxu0
    %5881 = vmatprep.mubr.bf16.mxu0 0
    %5882 = vmatmul.mubr.bf16.gmra.mrb[0].mxu0 %v5839
    %v5883 = vpop.f32.mrb[0].mxu0
    %v5884 = vadd.f32 0.0, %v5883
    %v5885 = vpop.f32.mrb[0].mxu0
    %v5886 = vpop.f32.mrb[0].mxu0
    %v5887 = vadd.f32 0.0, %v5886
    %v5888 = vpop.f32.mrb[0].mxu0
    %5889 = vdwg.mxu0
    %v5891 = vsel %vm3922, %v5349, 0
    %v5894 = vsel %vm3922, %v5350, 0
    %5896 = vmatprep.subr.bf16.mxu0 0
    %5897 = vmatpush1.bf16.msra.mxu0 %v1763
    %5898 = vmatprep.subr.bf16.mxu0 0
    %5899 = vmatpush1.bf16.msra.mxu0 %v1764
    %5900 = vmatprep.subr.bf16.mxu0 0
    %5901 = vmatpush1.bf16.msra.mxu0 0
    %5902 = vmatprep.subr.bf16.mxu0 0
    %5903 = vmatpush1.bf16.msra.mxu0 0
    %5904 = vmatprep.subr.bf16.mxu0 0
    %5905 = vmatpush1.bf16.msra.mxu0 0
    %5906 = vmatprep.subr.bf16.mxu0 0
    %5907 = vmatpush1.bf16.msra.mxu0 0
    %5908 = vmatprep.subr.bf16.mxu0 0
    %5909 = vmatpush1.bf16.msra.mxu0 0
    %5910 = vmatprep.subr.bf16.mxu0 0
    %5911 = vmatpush1.bf16.msra.mxu0 0
    %5912 = vmatprep.subr.bf16.mxu0 0
    %5913 = vmatpush1.bf16.msra.mxu0 0
    %5914 = vmatprep.subr.bf16.mxu0 0
    %5915 = vmatpush1.bf16.msra.mxu0 0
    %5916 = vmatprep.subr.bf16.mxu0 0
    %5917 = vmatpush1.bf16.msra.mxu0 0
    %5918 = vmatprep.subr.bf16.mxu0 0
    %5919 = vmatpush1.bf16.msra.mxu0 0
    %5920 = vmatprep.subr.bf16.mxu0 0
    %5921 = vmatpush1.bf16.msra.mxu0 0
    %5922 = vmatprep.subr.bf16.mxu0 0
    %5923 = vmatpush1.bf16.msra.mxu0 0
    %5924 = vmatprep.subr.bf16.mxu0 0
    %5925 = vmatpush1.bf16.msra.mxu0 0
    %5926 = vmatprep.subr.bf16.mxu0 0
    %5927 = vmatpush1.bf16.msra.mxu0 0
    %5928 = vmatprep.mubr.bf16.mxu0 0
    %5929 = vmatmul.mubr.bf16.gmra.mrb[0].mxu0 %v5891
    %v5930 = vpop.f32.mrb[0].mxu0
    %v5931 = vadd.f32 0.0, %v5930
    %v5932 = vpop.f32.mrb[0].mxu0
    %v5933 = vpop.f32.mrb[0].mxu0
    %v5934 = vadd.f32 0.0, %v5933
    %v5935 = vpop.f32.mrb[0].mxu0
    %5936 = vmatprep.mubr.bf16.mxu0 0
    %5937 = vmatmul.mubr.bf16.gmra.mrb[0].mxu0 %v5894
    %v5938 = vpop.f32.mrb[0].mxu0
    %v5939 = vadd.f32 0.0, %v5938
    %v5940 = vpop.f32.mrb[0].mxu0
    %v5941 = vpop.f32.mrb[0].mxu0
    %v5942 = vadd.f32 0.0, %v5941
    %v5943 = vpop.f32.mrb[0].mxu0
    %5944 = vdwg.mxu0
    %v5946 = vsel %vm3922, %v5351, 0
    %v5949 = vsel %vm3922, %v5352, 0
    %5951 = vmatprep.subr.bf16.mxu0 0
    %5952 = vmatpush1.bf16.msra.mxu0 %v1765
    %5953 = vmatprep.subr.bf16.mxu0 0
    %5954 = vmatpush1.bf16.msra.mxu0 %v1766
    %5955 = vmatprep.subr.bf16.mxu0 0
    %5956 = vmatpush1.bf16.msra.mxu0 0
    %5957 = vmatprep.subr.bf16.mxu0 0
    %5958 = vmatpush1.bf16.msra.mxu0 0
    %5959 = vmatprep.subr.bf16.mxu0 0
    %5960 = vmatpush1.bf16.msra.mxu0 0
    %5961 = vmatprep.subr.bf16.mxu0 0
    %5962 = vmatpush1.bf16.msra.mxu0 0
    %5963 = vmatprep.subr.bf16.mxu0 0
    %5964 = vmatpush1.bf16.msra.mxu0 0
    %5965 = vmatprep.subr.bf16.mxu0 0
    %5966 = vmatpush1.bf16.msra.mxu0 0
    %5967 = vmatprep.subr.bf16.mxu0 0
    %5968 = vmatpush1.bf16.msra.mxu0 0
    %5969 = vmatprep.subr.bf16.mxu0 0
    %5970 = vmatpush1.bf16.msra.mxu0 0
    %5971 = vmatprep.subr.bf16.mxu0 0
    %5972 = vmatpush1.bf16.msra.mxu0 0
    %5973 = vmatprep.subr.bf16.mxu0 0
    %5974 = vmatpush1.bf16.msra.mxu0 0
    %5975 = vmatprep.subr.bf16.mxu0 0
    %5976 = vmatpush1.bf16.msra.mxu0 0
    %5977 = vmatprep.subr.bf16.mxu0 0
    %5978 = vmatpush1.bf16.msra.mxu0 0
    %5979 = vmatprep.subr.bf16.mxu0 0
    %5980 = vmatpush1.bf16.msra.mxu0 0
    %5981 = vmatprep.subr.bf16.mxu0 0
    %5982 = vmatpush1.bf16.msra.mxu0 0
    %5983 = vmatprep.mubr.bf16.mxu0 0
    %5984 = vmatmul.mubr.bf16.gmra.mrb[0].mxu0 %v5946
    %v5985 = vpop.f32.mrb[0].mxu0
    %v5986 = vadd.f32 0.0, %v5985
    %v5987 = vpop.f32.mrb[0].mxu0
    %v5988 = vpop.f32.mrb[0].mxu0
    %v5989 = vadd.f32 0.0, %v5988
    %v5990 = vpop.f32.mrb[0].mxu0
    %5991 = vmatprep.mubr.bf16.mxu0 0
    %5992 = vmatmul.mubr.bf16.gmra.mrb[0].mxu0 %v5949
    %v5993 = vpop.f32.mrb[0].mxu0
    %v5994 = vadd.f32 0.0, %v5993
    %v5995 = vpop.f32.mrb[0].mxu0
    %v5996 = vpop.f32.mrb[0].mxu0
    %v5997 = vadd.f32 0.0, %v5996
    %v5998 = vpop.f32.mrb[0].mxu0
    %5999 = vdwg.mxu0
    %v6001 = vsel %vm3922, %v5353, 0
    %v6004 = vsel %vm3922, %v5354, 0
    %6006 = vmatprep.subr.bf16.mxu0 0
    %6007 = vmatpush1.bf16.msra.mxu0 %v1767
    %6008 = vmatprep.subr.bf16.mxu0 0
    %6009 = vmatpush1.bf16.msra.mxu0 %v1768
    %6010 = vmatprep.subr.bf16.mxu0 0
    %6011 = vmatpush1.bf16.msra.mxu0 0
    %6012 = vmatprep.subr.bf16.mxu0 0
    %6013 = vmatpush1.bf16.msra.mxu0 0
    %6014 = vmatprep.subr.bf16.mxu0 0
    %6015 = vmatpush1.bf16.msra.mxu0 0
    %6016 = vmatprep.subr.bf16.mxu0 0
    %6017 = vmatpush1.bf16.msra.mxu0 0
    %6018 = vmatprep.subr.bf16.mxu0 0
    %6019 = vmatpush1.bf16.msra.mxu0 0
    %6020 = vmatprep.subr.bf16.mxu0 0
    %6021 = vmatpush1.bf16.msra.mxu0 0
    %6022 = vmatprep.subr.bf16.mxu0 0
    %6023 = vmatpush1.bf16.msra.mxu0 0
    %6024 = vmatprep.subr.bf16.mxu0 0
    %6025 = vmatpush1.bf16.msra.mxu0 0
    %6026 = vmatprep.subr.bf16.mxu0 0
    %6027 = vmatpush1.bf16.msra.mxu0 0
    %6028 = vmatprep.subr.bf16.mxu0 0
    %6029 = vmatpush1.bf16.msra.mxu0 0
    %6030 = vmatprep.subr.bf16.mxu0 0
    %6031 = vmatpush1.bf16.msra.mxu0 0
    %6032 = vmatprep.subr.bf16.mxu0 0
    %6033 = vmatpush1.bf16.msra.mxu0 0
    %6034 = vmatprep.subr.bf16.mxu0 0
    %6035 = vmatpush1.bf16.msra.mxu0 0
    %6036 = vmatprep.subr.bf16.mxu0 0
    %6037 = vmatpush1.bf16.msra.mxu0 0
    %6038 = vmatprep.mubr.bf16.mxu0 0
    %6039 = vmatmul.mubr.bf16.gmra.mrb[0].mxu0 %v6001
    %v6040 = vpop.f32.mrb[0].mxu0
    %v6041 = vadd.f32 0.0, %v6040
    %v6042 = vpop.f32.mrb[0].mxu0
    %v6043 = vpop.f32.mrb[0].mxu0
    %v6044 = vadd.f32 0.0, %v6043
    %v6045 = vpop.f32.mrb[0].mxu0
    %6046 = vmatprep.mubr.bf16.mxu0 0
    %6047 = vmatmul.mubr.bf16.gmra.mrb[0].mxu0 %v6004
    %v6048 = vpop.f32.mrb[0].mxu0
    %v6049 = vadd.f32 0.0, %v6048
    %v6050 = vpop.f32.mrb[0].mxu0
    %v6051 = vpop.f32.mrb[0].mxu0
    %v6052 = vadd.f32 0.0, %v6051
    %v6053 = vpop.f32.mrb[0].mxu0
    %6054 = vdwg.mxu0
    %v6056 = vsel %vm3922, %v5355, 0
    %v6059 = vsel %vm3922, %v5356, 0
    %6061 = vmatprep.subr.bf16.mxu0 0
    %6062 = vmatpush1.bf16.msra.mxu0 %v1769
    %6063 = vmatprep.subr.bf16.mxu0 0
    %6064 = vmatpush1.bf16.msra.mxu0 %v1770
    %6065 = vmatprep.subr.bf16.mxu0 0
    %6066 = vmatpush1.bf16.msra.mxu0 0
    %6067 = vmatprep.subr.bf16.mxu0 0
    %6068 = vmatpush1.bf16.msra.mxu0 0
    %6069 = vmatprep.subr.bf16.mxu0 0
    %6070 = vmatpush1.bf16.msra.mxu0 0
    %6071 = vmatprep.subr.bf16.mxu0 0
    %6072 = vmatpush1.bf16.msra.mxu0 0
    %6073 = vmatprep.subr.bf16.mxu0 0
    %6074 = vmatpush1.bf16.msra.mxu0 0
    %6075 = vmatprep.subr.bf16.mxu0 0
    %6076 = vmatpush1.bf16.msra.mxu0 0
    %6077 = vmatprep.subr.bf16.mxu0 0
    %6078 = vmatpush1.bf16.msra.mxu0 0
    %6079 = vmatprep.subr.bf16.mxu0 0
    %6080 = vmatpush1.bf16.msra.mxu0 0
    %6081 = vmatprep.subr.bf16.mxu0 0
    %6082 = vmatpush1.bf16.msra.mxu0 0
    %6083 = vmatprep.subr.bf16.mxu0 0
    %6084 = vmatpush1.bf16.msra.mxu0 0
    %6085 = vmatprep.subr.bf16.mxu0 0
    %6086 = vmatpush1.bf16.msra.mxu0 0
    %6087 = vmatprep.subr.bf16.mxu0 0
    %6088 = vmatpush1.bf16.msra.mxu0 0
    %6089 = vmatprep.subr.bf16.mxu0 0
    %6090 = vmatpush1.bf16.msra.mxu0 0
    %6091 = vmatprep.subr.bf16.mxu0 0
    %6092 = vmatpush1.bf16.msra.mxu0 0
    %6093 = vmatprep.mubr.bf16.mxu0 0
    %6094 = vmatmul.mubr.bf16.gmra.mrb[0].mxu0 %v6056
    %v6095 = vpop.f32.mrb[0].mxu0
    %v6096 = vadd.f32 0.0, %v6095
    %v6097 = vpop.f32.mrb[0].mxu0
    %v6098 = vpop.f32.mrb[0].mxu0
    %v6099 = vadd.f32 0.0, %v6098
    %v6100 = vpop.f32.mrb[0].mxu0
    %6101 = vmatprep.mubr.bf16.mxu0 0
    %6102 = vmatmul.mubr.bf16.gmra.mrb[0].mxu0 %v6059
    %v6103 = vpop.f32.mrb[0].mxu0
    %v6104 = vadd.f32 0.0, %v6103
    %v6105 = vpop.f32.mrb[0].mxu0
    %v6106 = vpop.f32.mrb[0].mxu0
    %v6107 = vadd.f32 0.0, %v6106
    %v6108 = vpop.f32.mrb[0].mxu0
    %6109 = vdwg.mxu0
    %v6111 = vsel %vm3922, %v5357, 0
    %v6114 = vsel %vm3922, %v5358, 0
    %6116 = vmatprep.subr.bf16.mxu0 0
    %6117 = vmatpush1.bf16.msra.mxu0 %v1771
    %6118 = vmatprep.subr.bf16.mxu0 0
    %6119 = vmatpush1.bf16.msra.mxu0 %v1772
    %6120 = vmatprep.subr.bf16.mxu0 0
    %6121 = vmatpush1.bf16.msra.mxu0 0
    %6122 = vmatprep.subr.bf16.mxu0 0
    %6123 = vmatpush1.bf16.msra.mxu0 0
    %6124 = vmatprep.subr.bf16.mxu0 0
    %6125 = vmatpush1.bf16.msra.mxu0 0
    %6126 = vmatprep.subr.bf16.mxu0 0
    %6127 = vmatpush1.bf16.msra.mxu0 0
    %6128 = vmatprep.subr.bf16.mxu0 0
    %6129 = vmatpush1.bf16.msra.mxu0 0
    %6130 = vmatprep.subr.bf16.mxu0 0
    %6131 = vmatpush1.bf16.msra.mxu0 0
    %6132 = vmatprep.subr.bf16.mxu0 0
    %6133 = vmatpush1.bf16.msra.mxu0 0
    %6134 = vmatprep.subr.bf16.mxu0 0
    %6135 = vmatpush1.bf16.msra.mxu0 0
    %6136 = vmatprep.subr.bf16.mxu0 0
    %6137 = vmatpush1.bf16.msra.mxu0 0
    %6138 = vmatprep.subr.bf16.mxu0 0
    %6139 = vmatpush1.bf16.msra.mxu0 0
    %6140 = vmatprep.subr.bf16.mxu0 0
    %6141 = vmatpush1.bf16.msra.mxu0 0
    %6142 = vmatprep.subr.bf16.mxu0 0
    %6143 = vmatpush1.bf16.msra.mxu0 0
    %6144 = vmatprep.subr.bf16.mxu0 0
    %6145 = vmatpush1.bf16.msra.mxu0 0
    %6146 = vmatprep.subr.bf16.mxu0 0
    %6147 = vmatpush1.bf16.msra.mxu0 0
    %6148 = vmatprep.mubr.bf16.mxu0 0
    %6149 = vmatmul.mubr.bf16.gmra.mrb[0].mxu0 %v6111
    %v6150 = vpop.f32.mrb[0].mxu0
    %v6151 = vadd.f32 0.0, %v6150
    %v6152 = vpop.f32.mrb[0].mxu0
    %v6153 = vpop.f32.mrb[0].mxu0
    %v6154 = vadd.f32 0.0, %v6153
    %v6155 = vpop.f32.mrb[0].mxu0
    %6156 = vmatprep.mubr.bf16.mxu0 0
    %6157 = vmatmul.mubr.bf16.gmra.mrb[0].mxu0 %v6114
    %v6158 = vpop.f32.mrb[0].mxu0
    %v6159 = vadd.f32 0.0, %v6158
    %v6160 = vpop.f32.mrb[0].mxu0
    %v6161 = vpop.f32.mrb[0].mxu0
    %v6162 = vadd.f32 0.0, %v6161
    %v6163 = vpop.f32.mrb[0].mxu0
    %6164 = vdwg.mxu0
    %v6166 = vsel %vm3922, %v5359, 0
    %v6169 = vsel %vm3922, %v5360, 0
    %6171 = vmatprep.subr.bf16.mxu0 0
    %6172 = vmatpush1.bf16.msra.mxu0 %v1773
    %6173 = vmatprep.subr.bf16.mxu0 0
    %6174 = vmatpush1.bf16.msra.mxu0 %v1774
    %6175 = vmatprep.subr.bf16.mxu0 0
    %6176 = vmatpush1.bf16.msra.mxu0 0
    %6177 = vmatprep.subr.bf16.mxu0 0
    %6178 = vmatpush1.bf16.msra.mxu0 0
    %6179 = vmatprep.subr.bf16.mxu0 0
    %6180 = vmatpush1.bf16.msra.mxu0 0
    %6181 = vmatprep.subr.bf16.mxu0 0
    %6182 = vmatpush1.bf16.msra.mxu0 0
    %6183 = vmatprep.subr.bf16.mxu0 0
    %6184 = vmatpush1.bf16.msra.mxu0 0
    %6185 = vmatprep.subr.bf16.mxu0 0
    %6186 = vmatpush1.bf16.msra.mxu0 0
    %6187 = vmatprep.subr.bf16.mxu0 0
    %6188 = vmatpush1.bf16.msra.mxu0 0
    %6189 = vmatprep.subr.bf16.mxu0 0
    %6190 = vmatpush1.bf16.msra.mxu0 0
    %6191 = vmatprep.subr.bf16.mxu0 0
    %6192 = vmatpush1.bf16.msra.mxu0 0
    %6193 = vmatprep.subr.bf16.mxu0 0
    %6194 = vmatpush1.bf16.msra.mxu0 0
    %6195 = vmatprep.subr.bf16.mxu0 0
    %6196 = vmatpush1.bf16.msra.mxu0 0
    %6197 = vmatprep.subr.bf16.mxu0 0
    %6198 = vmatpush1.bf16.msra.mxu0 0
    %6199 = vmatprep.subr.bf16.mxu0 0
    %6200 = vmatpush1.bf16.msra.mxu0 0
    %6201 = vmatprep.subr.bf16.mxu0 0
    %6202 = vmatpush1.bf16.msra.mxu0 0
    %6203 = vmatprep.mubr.bf16.mxu0 0
    %6204 = vmatmul.mubr.bf16.gmra.mrb[0].mxu0 %v6166
    %v6205 = vpop.f32.mrb[0].mxu0
    %v6206 = vadd.f32 0.0, %v6205
    %v6207 = vpop.f32.mrb[0].mxu0
    %v6208 = vpop.f32.mrb[0].mxu0
    %v6209 = vadd.f32 0.0, %v6208
    %v6210 = vpop.f32.mrb[0].mxu0
    %6211 = vmatprep.mubr.bf16.mxu0 0
    %6212 = vmatmul.mubr.bf16.gmra.mrb[0].mxu0 %v6169
    %v6213 = vpop.f32.mrb[0].mxu0
    %v6214 = vadd.f32 0.0, %v6213
    %v6215 = vpop.f32.mrb[0].mxu0
    %v6216 = vpop.f32.mrb[0].mxu0
    %v6217 = vadd.f32 0.0, %v6216
    %v6218 = vpop.f32.mrb[0].mxu0
    %6219 = vdwg.mxu0
    %v6221 = vsel %vm3922, %v5361, 0
    %v6224 = vsel %vm3922, %v5362, 0
    %6226 = vmatprep.subr.bf16.mxu0 0
    %6227 = vmatpush1.bf16.msra.mxu0 %v1775
    %6228 = vmatprep.subr.bf16.mxu0 0
    %6229 = vmatpush1.bf16.msra.mxu0 %v1776
    %6230 = vmatprep.subr.bf16.mxu0 0
    %6231 = vmatpush1.bf16.msra.mxu0 0
    %6232 = vmatprep.subr.bf16.mxu0 0
    %6233 = vmatpush1.bf16.msra.mxu0 0
    %6234 = vmatprep.subr.bf16.mxu0 0
    %6235 = vmatpush1.bf16.msra.mxu0 0
    %6236 = vmatprep.subr.bf16.mxu0 0
    %6237 = vmatpush1.bf16.msra.mxu0 0
    %6238 = vmatprep.subr.bf16.mxu0 0
    %6239 = vmatpush1.bf16.msra.mxu0 0
    %6240 = vmatprep.subr.bf16.mxu0 0
    %6241 = vmatpush1.bf16.msra.mxu0 0
    %6242 = vmatprep.subr.bf16.mxu0 0
    %6243 = vmatpush1.bf16.msra.mxu0 0
    %6244 = vmatprep.subr.bf16.mxu0 0
    %6245 = vmatpush1.bf16.msra.mxu0 0
    %6246 = vmatprep.subr.bf16.mxu0 0
    %6247 = vmatpush1.bf16.msra.mxu0 0
    %6248 = vmatprep.subr.bf16.mxu0 0
    %6249 = vmatpush1.bf16.msra.mxu0 0
    %6250 = vmatprep.subr.bf16.mxu0 0
    %6251 = vmatpush1.bf16.msra.mxu0 0
    %6252 = vmatprep.subr.bf16.mxu0 0
    %6253 = vmatpush1.bf16.msra.mxu0 0
    %6254 = vmatprep.subr.bf16.mxu0 0
    %6255 = vmatpush1.bf16.msra.mxu0 0
    %6256 = vmatprep.subr.bf16.mxu0 0
    %6257 = vmatpush1.bf16.msra.mxu0 0
    %6258 = vmatprep.mubr.bf16.mxu0 0
    %6259 = vmatmul.mubr.bf16.gmra.mrb[0].mxu0 %v6221
    %v6260 = vpop.f32.mrb[0].mxu0
    %v6261 = vadd.f32 0.0, %v6260
    %v6262 = vpop.f32.mrb[0].mxu0
    %v6263 = vpop.f32.mrb[0].mxu0
    %v6264 = vadd.f32 0.0, %v6263
    %v6265 = vpop.f32.mrb[0].mxu0
    %6266 = vmatprep.mubr.bf16.mxu0 0
    %6267 = vmatmul.mubr.bf16.gmra.mrb[0].mxu0 %v6224
    %v6268 = vpop.f32.mrb[0].mxu0
    %v6269 = vadd.f32 0.0, %v6268
    %v6270 = vpop.f32.mrb[0].mxu0
    %v6271 = vpop.f32.mrb[0].mxu0
    %v6272 = vadd.f32 0.0, %v6271
    %v6273 = vpop.f32.mrb[0].mxu0
    %6274 = vdwg.mxu0
    %v6276 = vsel %vm3922, %v5363, 0
    %v6279 = vsel %vm3922, %v5364, 0
    %6281 = vmatprep.subr.bf16.mxu0 0
    %6282 = vmatpush1.bf16.msra.mxu0 %v1777
    %6283 = vmatprep.subr.bf16.mxu0 0
    %6284 = vmatpush1.bf16.msra.mxu0 %v1778
    %6285 = vmatprep.subr.bf16.mxu0 0
    %6286 = vmatpush1.bf16.msra.mxu0 0
    %6287 = vmatprep.subr.bf16.mxu0 0
    %6288 = vmatpush1.bf16.msra.mxu0 0
    %6289 = vmatprep.subr.bf16.mxu0 0
    %6290 = vmatpush1.bf16.msra.mxu0 0
    %6291 = vmatprep.subr.bf16.mxu0 0
    %6292 = vmatpush1.bf16.msra.mxu0 0
    %6293 = vmatprep.subr.bf16.mxu0 0
    %6294 = vmatpush1.bf16.msra.mxu0 0
    %6295 = vmatprep.subr.bf16.mxu0 0
    %6296 = vmatpush1.bf16.msra.mxu0 0
    %6297 = vmatprep.subr.bf16.mxu0 0
    %6298 = vmatpush1.bf16.msra.mxu0 0
    %6299 = vmatprep.subr.bf16.mxu0 0
    %6300 = vmatpush1.bf16.msra.mxu0 0
    %6301 = vmatprep.subr.bf16.mxu0 0
    %6302 = vmatpush1.bf16.msra.mxu0 0
    %6303 = vmatprep.subr.bf16.mxu0 0
    %6304 = vmatpush1.bf16.msra.mxu0 0
    %6305 = vmatprep.subr.bf16.mxu0 0
    %6306 = vmatpush1.bf16.msra.mxu0 0
    %6307 = vmatprep.subr.bf16.mxu0 0
    %6308 = vmatpush1.bf16.msra.mxu0 0
    %6309 = vmatprep.subr.bf16.mxu0 0
    %6310 = vmatpush1.bf16.msra.mxu0 0
    %6311 = vmatprep.subr.bf16.mxu0 0
    %6312 = vmatpush1.bf16.msra.mxu0 0
    %6313 = vmatprep.mubr.bf16.mxu0 0
    %6314 = vmatmul.mubr.bf16.gmra.mrb[0].mxu0 %v6276
    %v6315 = vpop.f32.mrb[0].mxu0
    %v6316 = vadd.f32 0.0, %v6315
    %v6317 = vpop.f32.mrb[0].mxu0
    %v6318 = vpop.f32.mrb[0].mxu0
    %v6319 = vadd.f32 0.0, %v6318
    %v6320 = vpop.f32.mrb[0].mxu0
    %6321 = vmatprep.mubr.bf16.mxu0 0
    %6322 = vmatmul.mubr.bf16.gmra.mrb[0].mxu0 %v6279
    %v6323 = vpop.f32.mrb[0].mxu0
    %v6324 = vadd.f32 0.0, %v6323
    %v6325 = vpop.f32.mrb[0].mxu0
    %v6326 = vpop.f32.mrb[0].mxu0
    %v6327 = vadd.f32 0.0, %v6326
    %v6328 = vpop.f32.mrb[0].mxu0
    %6329 = vdwg.mxu0
    %v6331 = vsel %vm3922, %v5365, 0
    %v6334 = vsel %vm3922, %v5366, 0
    %6336 = vmatprep.subr.bf16.mxu0 0
    %6337 = vmatpush1.bf16.msra.mxu0 %v1779
    %6338 = vmatprep.subr.bf16.mxu0 0
    %6339 = vmatpush1.bf16.msra.mxu0 %v1780
    %6340 = vmatprep.subr.bf16.mxu0 0
    %6341 = vmatpush1.bf16.msra.mxu0 0
    %6342 = vmatprep.subr.bf16.mxu0 0
    %6343 = vmatpush1.bf16.msra.mxu0 0
    %6344 = vmatprep.subr.bf16.mxu0 0
    %6345 = vmatpush1.bf16.msra.mxu0 0
    %6346 = vmatprep.subr.bf16.mxu0 0
    %6347 = vmatpush1.bf16.msra.mxu0 0
    %6348 = vmatprep.subr.bf16.mxu0 0
    %6349 = vmatpush1.bf16.msra.mxu0 0
    %6350 = vmatprep.subr.bf16.mxu0 0
    %6351 = vmatpush1.bf16.msra.mxu0 0
    %6352 = vmatprep.subr.bf16.mxu0 0
    %6353 = vmatpush1.bf16.msra.mxu0 0
    %6354 = vmatprep.subr.bf16.mxu0 0
    %6355 = vmatpush1.bf16.msra.mxu0 0
    %6356 = vmatprep.subr.bf16.mxu0 0
    %6357 = vmatpush1.bf16.msra.mxu0 0
    %6358 = vmatprep.subr.bf16.mxu0 0
    %6359 = vmatpush1.bf16.msra.mxu0 0
    %6360 = vmatprep.subr.bf16.mxu0 0
    %6361 = vmatpush1.bf16.msra.mxu0 0
    %6362 = vmatprep.subr.bf16.mxu0 0
    %6363 = vmatpush1.bf16.msra.mxu0 0
    %6364 = vmatprep.subr.bf16.mxu0 0
    %6365 = vmatpush1.bf16.msra.mxu0 0
    %6366 = vmatprep.subr.bf16.mxu0 0
    %6367 = vmatpush1.bf16.msra.mxu0 0
    %6368 = vmatprep.mubr.bf16.mxu0 0
    %6369 = vmatmul.mubr.bf16.gmra.mrb[0].mxu0 %v6331
    %v6370 = vpop.f32.mrb[0].mxu0
    %v6371 = vadd.f32 0.0, %v6370
    %v6372 = vpop.f32.mrb[0].mxu0
    %v6373 = vpop.f32.mrb[0].mxu0
    %v6374 = vadd.f32 0.0, %v6373
    %v6375 = vpop.f32.mrb[0].mxu0
    %6376 = vmatprep.mubr.bf16.mxu0 0
    %6377 = vmatmul.mubr.bf16.gmra.mrb[0].mxu0 %v6334
    %v6378 = vpop.f32.mrb[0].mxu0
    %v6379 = vadd.f32 0.0, %v6378
    %v6380 = vpop.f32.mrb[0].mxu0
    %v6381 = vpop.f32.mrb[0].mxu0
    %v6382 = vadd.f32 0.0, %v6381
    %v6383 = vpop.f32.mrb[0].mxu0
    %6384 = vdwg.mxu0
    %v6386 = vsel %vm3922, %v5367, 0
    %v6389 = vsel %vm3922, %v5368, 0
    %6391 = vmatprep.subr.bf16.mxu0 0
    %6392 = vmatpush1.bf16.msra.mxu0 %v1781
    %6393 = vmatprep.subr.bf16.mxu0 0
    %6394 = vmatpush1.bf16.msra.mxu0 %v1782
    %6395 = vmatprep.subr.bf16.mxu0 0
    %6396 = vmatpush1.bf16.msra.mxu0 0
    %6397 = vmatprep.subr.bf16.mxu0 0
    %6398 = vmatpush1.bf16.msra.mxu0 0
    %6399 = vmatprep.subr.bf16.mxu0 0
    %6400 = vmatpush1.bf16.msra.mxu0 0
    %6401 = vmatprep.subr.bf16.mxu0 0
    %6402 = vmatpush1.bf16.msra.mxu0 0
    %6403 = vmatprep.subr.bf16.mxu0 0
    %6404 = vmatpush1.bf16.msra.mxu0 0
    %6405 = vmatprep.subr.bf16.mxu0 0
    %6406 = vmatpush1.bf16.msra.mxu0 0
    %6407 = vmatprep.subr.bf16.mxu0 0
    %6408 = vmatpush1.bf16.msra.mxu0 0
    %6409 = vmatprep.subr.bf16.mxu0 0
    %6410 = vmatpush1.bf16.msra.mxu0 0
    %6411 = vmatprep.subr.bf16.mxu0 0
    %6412 = vmatpush1.bf16.msra.mxu0 0
    %6413 = vmatprep.subr.bf16.mxu0 0
    %6414 = vmatpush1.bf16.msra.mxu0 0
    %6415 = vmatprep.subr.bf16.mxu0 0
    %6416 = vmatpush1.bf16.msra.mxu0 0
    %6417 = vmatprep.subr.bf16.mxu0 0
    %6418 = vmatpush1.bf16.msra.mxu0 0
    %6419 = vmatprep.subr.bf16.mxu0 0
    %6420 = vmatpush1.bf16.msra.mxu0 0
    %6421 = vmatprep.subr.bf16.mxu0 0
    %6422 = vmatpush1.bf16.msra.mxu0 0
    %6423 = vmatprep.mubr.bf16.mxu0 0
    %6424 = vmatmul.mubr.bf16.gmra.mrb[0].mxu0 %v6386
    %v6425 = vpop.f32.mrb[0].mxu0
    %v6426 = vadd.f32 0.0, %v6425
    %v6427 = vpop.f32.mrb[0].mxu0
    %v6428 = vpop.f32.mrb[0].mxu0
    %v6429 = vadd.f32 0.0, %v6428
    %v6430 = vpop.f32.mrb[0].mxu0
    %6431 = vmatprep.mubr.bf16.mxu0 0
    %6432 = vmatmul.mubr.bf16.gmra.mrb[0].mxu0 %v6389
    %v6433 = vpop.f32.mrb[0].mxu0
    %v6434 = vadd.f32 0.0, %v6433
    %v6435 = vpop.f32.mrb[0].mxu0
    %v6436 = vpop.f32.mrb[0].mxu0
    %v6437 = vadd.f32 0.0, %v6436
    %v6438 = vpop.f32.mrb[0].mxu0
    %6439 = vdwg.mxu0
    %v6441 = vsel %vm3922, %v5369, 0
    %v6444 = vsel %vm3922, %v5370, 0
    %6446 = vmatprep.subr.bf16.mxu0 0
    %6447 = vmatpush1.bf16.msra.mxu0 %v1783
    %6448 = vmatprep.subr.bf16.mxu0 0
    %6449 = vmatpush1.bf16.msra.mxu0 %v1784
    %6450 = vmatprep.subr.bf16.mxu0 0
    %6451 = vmatpush1.bf16.msra.mxu0 0
    %6452 = vmatprep.subr.bf16.mxu0 0
    %6453 = vmatpush1.bf16.msra.mxu0 0
    %6454 = vmatprep.subr.bf16.mxu0 0
    %6455 = vmatpush1.bf16.msra.mxu0 0
    %6456 = vmatprep.subr.bf16.mxu0 0
    %6457 = vmatpush1.bf16.msra.mxu0 0
    %6458 = vmatprep.subr.bf16.mxu0 0
    %6459 = vmatpush1.bf16.msra.mxu0 0
    %6460 = vmatprep.subr.bf16.mxu0 0
    %6461 = vmatpush1.bf16.msra.mxu0 0
    %6462 = vmatprep.subr.bf16.mxu0 0
    %6463 = vmatpush1.bf16.msra.mxu0 0
    %6464 = vmatprep.subr.bf16.mxu0 0
    %6465 = vmatpush1.bf16.msra.mxu0 0
    %6466 = vmatprep.subr.bf16.mxu0 0
    %6467 = vmatpush1.bf16.msra.mxu0 0
    %6468 = vmatprep.subr.bf16.mxu0 0
    %6469 = vmatpush1.bf16.msra.mxu0 0
    %6470 = vmatprep.subr.bf16.mxu0 0
    %6471 = vmatpush1.bf16.msra.mxu0 0
    %6472 = vmatprep.subr.bf16.mxu0 0
    %6473 = vmatpush1.bf16.msra.mxu0 0
    %6474 = vmatprep.subr.bf16.mxu0 0
    %6475 = vmatpush1.bf16.msra.mxu0 0
    %6476 = vmatprep.subr.bf16.mxu0 0
    %6477 = vmatpush1.bf16.msra.mxu0 0
    %6478 = vmatprep.mubr.bf16.mxu0 0
    %6479 = vmatmul.mubr.bf16.gmra.mrb[0].mxu0 %v6441
    %v6480 = vpop.f32.mrb[0].mxu0
    %v6481 = vadd.f32 0.0, %v6480
    %v6482 = vpop.f32.mrb[0].mxu0
    %v6483 = vpop.f32.mrb[0].mxu0
    %v6484 = vadd.f32 0.0, %v6483
    %v6485 = vpop.f32.mrb[0].mxu0
    %6486 = vmatprep.mubr.bf16.mxu0 0
    %6487 = vmatmul.mubr.bf16.gmra.mrb[0].mxu0 %v6444
    %v6488 = vpop.f32.mrb[0].mxu0
    %v6489 = vadd.f32 0.0, %v6488
    %v6490 = vpop.f32.mrb[0].mxu0
    %v6491 = vpop.f32.mrb[0].mxu0
    %v6492 = vadd.f32 0.0, %v6491
    %v6493 = vpop.f32.mrb[0].mxu0
    %6494 = vdwg.mxu0
    %v6496 = vsel %vm3922, %v5371, 0
    %v6499 = vsel %vm3922, %v5372, 0
    %6501 = vmatprep.subr.bf16.mxu0 0
    %6502 = vmatpush1.bf16.msra.mxu0 %v1785
    %6503 = vmatprep.subr.bf16.mxu0 0
    %6504 = vmatpush1.bf16.msra.mxu0 %v1786
    %6505 = vmatprep.subr.bf16.mxu0 0
    %6506 = vmatpush1.bf16.msra.mxu0 0
    %6507 = vmatprep.subr.bf16.mxu0 0
    %6508 = vmatpush1.bf16.msra.mxu0 0
    %6509 = vmatprep.subr.bf16.mxu0 0
    %6510 = vmatpush1.bf16.msra.mxu0 0
    %6511 = vmatprep.subr.bf16.mxu0 0
    %6512 = vmatpush1.bf16.msra.mxu0 0
    %6513 = vmatprep.subr.bf16.mxu0 0
    %6514 = vmatpush1.bf16.msra.mxu0 0
    %6515 = vmatprep.subr.bf16.mxu0 0
    %6516 = vmatpush1.bf16.msra.mxu0 0
    %6517 = vmatprep.subr.bf16.mxu0 0
    %6518 = vmatpush1.bf16.msra.mxu0 0
    %6519 = vmatprep.subr.bf16.mxu0 0
    %6520 = vmatpush1.bf16.msra.mxu0 0
    %6521 = vmatprep.subr.bf16.mxu0 0
    %6522 = vmatpush1.bf16.msra.mxu0 0
    %6523 = vmatprep.subr.bf16.mxu0 0
    %6524 = vmatpush1.bf16.msra.mxu0 0
    %6525 = vmatprep.subr.bf16.mxu0 0
    %6526 = vmatpush1.bf16.msra.mxu0 0
    %6527 = vmatprep.subr.bf16.mxu0 0
    %6528 = vmatpush1.bf16.msra.mxu0 0
    %6529 = vmatprep.subr.bf16.mxu0 0
    %6530 = vmatpush1.bf16.msra.mxu0 0
    %6531 = vmatprep.subr.bf16.mxu0 0
    %6532 = vmatpush1.bf16.msra.mxu0 0
    %6533 = vmatprep.mubr.bf16.mxu0 0
    %6534 = vmatmul.mubr.bf16.gmra.mrb[0].mxu0 %v6496
    %v6535 = vpop.f32.mrb[0].mxu0
    %v6536 = vadd.f32 0.0, %v6535
    %v6537 = vpop.f32.mrb[0].mxu0
    %v6538 = vpop.f32.mrb[0].mxu0
    %v6539 = vadd.f32 0.0, %v6538
    %v6540 = vpop.f32.mrb[0].mxu0
    %6541 = vmatprep.mubr.bf16.mxu0 0
    %6542 = vmatmul.mubr.bf16.gmra.mrb[0].mxu0 %v6499
    %v6543 = vpop.f32.mrb[0].mxu0
    %v6544 = vadd.f32 0.0, %v6543
    %v6545 = vpop.f32.mrb[0].mxu0
    %v6546 = vpop.f32.mrb[0].mxu0
    %v6547 = vadd.f32 0.0, %v6546
    %v6548 = vpop.f32.mrb[0].mxu0
    %6549 = vdwg.mxu0
    %v6551 = vsel %vm3922, %v5373, 0
    %v6554 = vsel %vm3922, %v5374, 0
    %6556 = vmatprep.subr.bf16.mxu0 0
    %6557 = vmatpush1.bf16.msra.mxu0 %v1787
    %6558 = vmatprep.subr.bf16.mxu0 0
    %6559 = vmatpush1.bf16.msra.mxu0 %v1788
    %6560 = vmatprep.subr.bf16.mxu0 0
    %6561 = vmatpush1.bf16.msra.mxu0 0
    %6562 = vmatprep.subr.bf16.mxu0 0
    %6563 = vmatpush1.bf16.msra.mxu0 0
    %6564 = vmatprep.subr.bf16.mxu0 0
    %6565 = vmatpush1.bf16.msra.mxu0 0
    %6566 = vmatprep.subr.bf16.mxu0 0
    %6567 = vmatpush1.bf16.msra.mxu0 0
    %6568 = vmatprep.subr.bf16.mxu0 0
    %6569 = vmatpush1.bf16.msra.mxu0 0
    %6570 = vmatprep.subr.bf16.mxu0 0
    %6571 = vmatpush1.bf16.msra.mxu0 0
    %6572 = vmatprep.subr.bf16.mxu0 0
    %6573 = vmatpush1.bf16.msra.mxu0 0
    %6574 = vmatprep.subr.bf16.mxu0 0
    %6575 = vmatpush1.bf16.msra.mxu0 0
    %6576 = vmatprep.subr.bf16.mxu0 0
    %6577 = vmatpush1.bf16.msra.mxu0 0
    %6578 = vmatprep.subr.bf16.mxu0 0
    %6579 = vmatpush1.bf16.msra.mxu0 0
    %6580 = vmatprep.subr.bf16.mxu0 0
    %6581 = vmatpush1.bf16.msra.mxu0 0
    %6582 = vmatprep.subr.bf16.mxu0 0
    %6583 = vmatpush1.bf16.msra.mxu0 0
    %6584 = vmatprep.subr.bf16.mxu0 0
    %6585 = vmatpush1.bf16.msra.mxu0 0
    %6586 = vmatprep.subr.bf16.mxu0 0
    %6587 = vmatpush1.bf16.msra.mxu0 0
    %6588 = vmatprep.mubr.bf16.mxu0 0
    %6589 = vmatmul.mubr.bf16.gmra.mrb[0].mxu0 %v6551
    %v6590 = vpop.f32.mrb[0].mxu0
    %v6591 = vadd.f32 0.0, %v6590
    %v6592 = vpop.f32.mrb[0].mxu0
    %v6593 = vpop.f32.mrb[0].mxu0
    %v6594 = vadd.f32 0.0, %v6593
    %v6595 = vpop.f32.mrb[0].mxu0
    %6596 = vmatprep.mubr.bf16.mxu0 0
    %6597 = vmatmul.mubr.bf16.gmra.mrb[0].mxu0 %v6554
    %v6598 = vpop.f32.mrb[0].mxu0
    %v6599 = vadd.f32 0.0, %v6598
    %v6600 = vpop.f32.mrb[0].mxu0
    %v6601 = vpop.f32.mrb[0].mxu0
    %v6602 = vadd.f32 0.0, %v6601
    %v6603 = vpop.f32.mrb[0].mxu0
    %6604 = vdwg.mxu0
    %v6606 = vsel %vm3922, %v5375, 0
    %v6609 = vsel %vm3922, %v5376, 0
    %6611 = vmatprep.subr.bf16.mxu0 0
    %6612 = vmatpush1.bf16.msra.mxu0 %v1789
    %6613 = vmatprep.subr.bf16.mxu0 0
    %6614 = vmatpush1.bf16.msra.mxu0 %v1790
    %6615 = vmatprep.subr.bf16.mxu0 0
    %6616 = vmatpush1.bf16.msra.mxu0 0
    %6617 = vmatprep.subr.bf16.mxu0 0
    %6618 = vmatpush1.bf16.msra.mxu0 0
    %6619 = vmatprep.subr.bf16.mxu0 0
    %6620 = vmatpush1.bf16.msra.mxu0 0
    %6621 = vmatprep.subr.bf16.mxu0 0
    %6622 = vmatpush1.bf16.msra.mxu0 0
    %6623 = vmatprep.subr.bf16.mxu0 0
    %6624 = vmatpush1.bf16.msra.mxu0 0
    %6625 = vmatprep.subr.bf16.mxu0 0
    %6626 = vmatpush1.bf16.msra.mxu0 0
    %6627 = vmatprep.subr.bf16.mxu0 0
    %6628 = vmatpush1.bf16.msra.mxu0 0
    %6629 = vmatprep.subr.bf16.mxu0 0
    %6630 = vmatpush1.bf16.msra.mxu0 0
    %6631 = vmatprep.subr.bf16.mxu0 0
    %6632 = vmatpush1.bf16.msra.mxu0 0
    %6633 = vmatprep.subr.bf16.mxu0 0
    %6634 = vmatpush1.bf16.msra.mxu0 0
    %6635 = vmatprep.subr.bf16.mxu0 0
    %6636 = vmatpush1.bf16.msra.mxu0 0
    %6637 = vmatprep.subr.bf16.mxu0 0
    %6638 = vmatpush1.bf16.msra.mxu0 0
    %6639 = vmatprep.subr.bf16.mxu0 0
    %6640 = vmatpush1.bf16.msra.mxu0 0
    %6641 = vmatprep.subr.bf16.mxu0 0
    %6642 = vmatpush1.bf16.msra.mxu0 0
    %6643 = vmatprep.mubr.bf16.mxu0 0
    %6644 = vmatmul.mubr.bf16.gmra.mrb[0].mxu0 %v6606
    %v6645 = vpop.f32.mrb[0].mxu0
    %v6646 = vadd.f32 0.0, %v6645
    %v6647 = vpop.f32.mrb[0].mxu0
    %v6648 = vpop.f32.mrb[0].mxu0
    %v6649 = vadd.f32 0.0, %v6648
    %v6650 = vpop.f32.mrb[0].mxu0
    %6651 = vmatprep.mubr.bf16.mxu0 0
    %6652 = vmatmul.mubr.bf16.gmra.mrb[0].mxu0 %v6609
    %v6653 = vpop.f32.mrb[0].mxu0
    %v6654 = vadd.f32 0.0, %v6653
    %v6655 = vpop.f32.mrb[0].mxu0
    %v6656 = vpop.f32.mrb[0].mxu0
    %v6657 = vadd.f32 0.0, %v6656
    %v6658 = vpop.f32.mrb[0].mxu0
    %6659 = vdwg.mxu0
    %v6661 = vsel %vm3922, %v5377, 0
    %v6664 = vsel %vm3922, %v5378, 0
    %6666 = vmatprep.subr.bf16.mxu0 0
    %6667 = vmatpush1.bf16.msra.mxu0 %v1791
    %6668 = vmatprep.subr.bf16.mxu0 0
    %6669 = vmatpush1.bf16.msra.mxu0 %v1792
    %6670 = vmatprep.subr.bf16.mxu0 0
    %6671 = vmatpush1.bf16.msra.mxu0 0
    %6672 = vmatprep.subr.bf16.mxu0 0
    %6673 = vmatpush1.bf16.msra.mxu0 0
    %6674 = vmatprep.subr.bf16.mxu0 0
    %6675 = vmatpush1.bf16.msra.mxu0 0
    %6676 = vmatprep.subr.bf16.mxu0 0
    %6677 = vmatpush1.bf16.msra.mxu0 0
    %6678 = vmatprep.subr.bf16.mxu0 0
    %6679 = vmatpush1.bf16.msra.mxu0 0
    %6680 = vmatprep.subr.bf16.mxu0 0
    %6681 = vmatpush1.bf16.msra.mxu0 0
    %6682 = vmatprep.subr.bf16.mxu0 0
    %6683 = vmatpush1.bf16.msra.mxu0 0
    %6684 = vmatprep.subr.bf16.mxu0 0
    %6685 = vmatpush1.bf16.msra.mxu0 0
    %6686 = vmatprep.subr.bf16.mxu0 0
    %6687 = vmatpush1.bf16.msra.mxu0 0
    %6688 = vmatprep.subr.bf16.mxu0 0
    %6689 = vmatpush1.bf16.msra.mxu0 0
    %6690 = vmatprep.subr.bf16.mxu0 0
    %6691 = vmatpush1.bf16.msra.mxu0 0
    %6692 = vmatprep.subr.bf16.mxu0 0
    %6693 = vmatpush1.bf16.msra.mxu0 0
    %6694 = vmatprep.subr.bf16.mxu0 0
    %6695 = vmatpush1.bf16.msra.mxu0 0
    %6696 = vmatprep.subr.bf16.mxu0 0
    %6697 = vmatpush1.bf16.msra.mxu0 0
    %6698 = vmatprep.mubr.bf16.mxu0 0
    %6699 = vmatmul.mubr.bf16.gmra.mrb[0].mxu0 %v6661
    %v6700 = vpop.f32.mrb[0].mxu0
    %v6701 = vadd.f32 0.0, %v6700
    %v6702 = vpop.f32.mrb[0].mxu0
    %v6703 = vpop.f32.mrb[0].mxu0
    %v6704 = vadd.f32 0.0, %v6703
    %v6705 = vpop.f32.mrb[0].mxu0
    %6706 = vmatprep.mubr.bf16.mxu0 0
    %6707 = vmatmul.mubr.bf16.gmra.mrb[0].mxu0 %v6664
    %v6708 = vpop.f32.mrb[0].mxu0
    %v6709 = vadd.f32 0.0, %v6708
    %v6710 = vpop.f32.mrb[0].mxu0
    %v6711 = vpop.f32.mrb[0].mxu0
    %v6712 = vadd.f32 0.0, %v6711
    %v6713 = vpop.f32.mrb[0].mxu0
    %6714 = vdwg.mxu0
    %v6716 = vsel %vm3922, %v5379, 0
    %v6719 = vsel %vm3922, %v5380, 0
    %6721 = vmatprep.subr.bf16.mxu0 0
    %6722 = vmatpush1.bf16.msra.mxu0 %v1793
    %6723 = vmatprep.subr.bf16.mxu0 0
    %6724 = vmatpush1.bf16.msra.mxu0 %v1794
    %6725 = vmatprep.subr.bf16.mxu0 0
    %6726 = vmatpush1.bf16.msra.mxu0 0
    %6727 = vmatprep.subr.bf16.mxu0 0
    %6728 = vmatpush1.bf16.msra.mxu0 0
    %6729 = vmatprep.subr.bf16.mxu0 0
    %6730 = vmatpush1.bf16.msra.mxu0 0
    %6731 = vmatprep.subr.bf16.mxu0 0
    %6732 = vmatpush1.bf16.msra.mxu0 0
    %6733 = vmatprep.subr.bf16.mxu0 0
    %6734 = vmatpush1.bf16.msra.mxu0 0
    %6735 = vmatprep.subr.bf16.mxu0 0
    %6736 = vmatpush1.bf16.msra.mxu0 0
    %6737 = vmatprep.subr.bf16.mxu0 0
    %6738 = vmatpush1.bf16.msra.mxu0 0
    %6739 = vmatprep.subr.bf16.mxu0 0
    %6740 = vmatpush1.bf16.msra.mxu0 0
    %6741 = vmatprep.subr.bf16.mxu0 0
    %6742 = vmatpush1.bf16.msra.mxu0 0
    %6743 = vmatprep.subr.bf16.mxu0 0
    %6744 = vmatpush1.bf16.msra.mxu0 0
    %6745 = vmatprep.subr.bf16.mxu0 0
    %6746 = vmatpush1.bf16.msra.mxu0 0
    %6747 = vmatprep.subr.bf16.mxu0 0
    %6748 = vmatpush1.bf16.msra.mxu0 0
    %6749 = vmatprep.subr.bf16.mxu0 0
    %6750 = vmatpush1.bf16.msra.mxu0 0
    %6751 = vmatprep.subr.bf16.mxu0 0
    %6752 = vmatpush1.bf16.msra.mxu0 0
    %6753 = vmatprep.mubr.bf16.mxu0 0
    %6754 = vmatmul.mubr.bf16.gmra.mrb[0].mxu0 %v6716
    %v6755 = vpop.f32.mrb[0].mxu0
    %v6756 = vadd.f32 0.0, %v6755
    %v6757 = vpop.f32.mrb[0].mxu0
    %v6758 = vpop.f32.mrb[0].mxu0
    %v6759 = vadd.f32 0.0, %v6758
    %v6760 = vpop.f32.mrb[0].mxu0
    %6761 = vmatprep.mubr.bf16.mxu0 0
    %6762 = vmatmul.mubr.bf16.gmra.mrb[0].mxu0 %v6719
    %v6763 = vpop.f32.mrb[0].mxu0
    %v6764 = vadd.f32 0.0, %v6763
    %v6765 = vpop.f32.mrb[0].mxu0
    %v6766 = vpop.f32.mrb[0].mxu0
    %v6767 = vadd.f32 0.0, %v6766
    %v6768 = vpop.f32.mrb[0].mxu0
    %6769 = vdwg.mxu0
    %v6771 = vsel %vm3922, %v5381, 0
    %v6774 = vsel %vm3922, %v5382, 0
    %6776 = vmatprep.subr.bf16.mxu0 0
    %6777 = vmatpush1.bf16.msra.mxu0 %v1795
    %6778 = vmatprep.subr.bf16.mxu0 0
    %6779 = vmatpush1.bf16.msra.mxu0 %v1796
    %6780 = vmatprep.subr.bf16.mxu0 0
    %6781 = vmatpush1.bf16.msra.mxu0 0
    %6782 = vmatprep.subr.bf16.mxu0 0
    %6783 = vmatpush1.bf16.msra.mxu0 0
    %6784 = vmatprep.subr.bf16.mxu0 0
    %6785 = vmatpush1.bf16.msra.mxu0 0
    %6786 = vmatprep.subr.bf16.mxu0 0
    %6787 = vmatpush1.bf16.msra.mxu0 0
    %6788 = vmatprep.subr.bf16.mxu0 0
    %6789 = vmatpush1.bf16.msra.mxu0 0
    %6790 = vmatprep.subr.bf16.mxu0 0
    %6791 = vmatpush1.bf16.msra.mxu0 0
    %6792 = vmatprep.subr.bf16.mxu0 0
    %6793 = vmatpush1.bf16.msra.mxu0 0
    %6794 = vmatprep.subr.bf16.mxu0 0
    %6795 = vmatpush1.bf16.msra.mxu0 0
    %6796 = vmatprep.subr.bf16.mxu0 0
    %6797 = vmatpush1.bf16.msra.mxu0 0
    %6798 = vmatprep.subr.bf16.mxu0 0
    %6799 = vmatpush1.bf16.msra.mxu0 0
    %6800 = vmatprep.subr.bf16.mxu0 0
    %6801 = vmatpush1.bf16.msra.mxu0 0
    %6802 = vmatprep.subr.bf16.mxu0 0
    %6803 = vmatpush1.bf16.msra.mxu0 0
    %6804 = vmatprep.subr.bf16.mxu0 0
    %6805 = vmatpush1.bf16.msra.mxu0 0
    %6806 = vmatprep.subr.bf16.mxu0 0
    %6807 = vmatpush1.bf16.msra.mxu0 0
    %6808 = vmatprep.mubr.bf16.mxu0 0
    %6809 = vmatmul.mubr.bf16.gmra.mrb[0].mxu0 %v6771
    %v6810 = vpop.f32.mrb[0].mxu0
    %v6811 = vadd.f32 0.0, %v6810
    %v6812 = vpop.f32.mrb[0].mxu0
    %v6813 = vpop.f32.mrb[0].mxu0
    %v6814 = vadd.f32 0.0, %v6813
    %v6815 = vpop.f32.mrb[0].mxu0
    %6816 = vmatprep.mubr.bf16.mxu0 0
    %6817 = vmatmul.mubr.bf16.gmra.mrb[0].mxu0 %v6774
    %v6818 = vpop.f32.mrb[0].mxu0
    %v6819 = vadd.f32 0.0, %v6818
    %v6820 = vpop.f32.mrb[0].mxu0
    %v6821 = vpop.f32.mrb[0].mxu0
    %v6822 = vadd.f32 0.0, %v6821
    %v6823 = vpop.f32.mrb[0].mxu0
    %6824 = vdwg.mxu0
    %v6826 = vsel %vm3922, %v5383, 0
    %v6829 = vsel %vm3922, %v5384, 0
    %6831 = vmatprep.subr.bf16.mxu0 0
    %6832 = vmatpush1.bf16.msra.mxu0 %v1797
    %6833 = vmatprep.subr.bf16.mxu0 0
    %6834 = vmatpush1.bf16.msra.mxu0 %v1798
    %6835 = vmatprep.subr.bf16.mxu0 0
    %6836 = vmatpush1.bf16.msra.mxu0 0
    %6837 = vmatprep.subr.bf16.mxu0 0
    %6838 = vmatpush1.bf16.msra.mxu0 0
    %6839 = vmatprep.subr.bf16.mxu0 0
    %6840 = vmatpush1.bf16.msra.mxu0 0
    %6841 = vmatprep.subr.bf16.mxu0 0
    %6842 = vmatpush1.bf16.msra.mxu0 0
    %6843 = vmatprep.subr.bf16.mxu0 0
    %6844 = vmatpush1.bf16.msra.mxu0 0
    %6845 = vmatprep.subr.bf16.mxu0 0
    %6846 = vmatpush1.bf16.msra.mxu0 0
    %6847 = vmatprep.subr.bf16.mxu0 0
    %6848 = vmatpush1.bf16.msra.mxu0 0
    %6849 = vmatprep.subr.bf16.mxu0 0
    %6850 = vmatpush1.bf16.msra.mxu0 0
    %6851 = vmatprep.subr.bf16.mxu0 0
    %6852 = vmatpush1.bf16.msra.mxu0 0
    %6853 = vmatprep.subr.bf16.mxu0 0
    %6854 = vmatpush1.bf16.msra.mxu0 0
    %6855 = vmatprep.subr.bf16.mxu0 0
    %6856 = vmatpush1.bf16.msra.mxu0 0
    %6857 = vmatprep.subr.bf16.mxu0 0
    %6858 = vmatpush1.bf16.msra.mxu0 0
    %6859 = vmatprep.subr.bf16.mxu0 0
    %6860 = vmatpush1.bf16.msra.mxu0 0
    %6861 = vmatprep.subr.bf16.mxu0 0
    %6862 = vmatpush1.bf16.msra.mxu0 0
    %6863 = vmatprep.mubr.bf16.mxu0 0
    %6864 = vmatmul.mubr.bf16.gmra.mrb[0].mxu0 %v6826
    %v6865 = vpop.f32.mrb[0].mxu0
    %v6866 = vadd.f32 0.0, %v6865
    %v6867 = vpop.f32.mrb[0].mxu0
    %v6868 = vpop.f32.mrb[0].mxu0
    %v6869 = vadd.f32 0.0, %v6868
    %v6870 = vpop.f32.mrb[0].mxu0
    %6871 = vmatprep.mubr.bf16.mxu0 0
    %6872 = vmatmul.mubr.bf16.gmra.mrb[0].mxu0 %v6829
    %v6873 = vpop.f32.mrb[0].mxu0
    %v6874 = vadd.f32 0.0, %v6873
    %v6875 = vpop.f32.mrb[0].mxu0
    %v6876 = vpop.f32.mrb[0].mxu0
    %v6877 = vadd.f32 0.0, %v6876
    %v6878 = vpop.f32.mrb[0].mxu0
    %6879 = vdwg.mxu0
    %v6881 = vsel %vm3922, %v5385, 0
    %v6884 = vsel %vm3922, %v5386, 0
    %6886 = vmatprep.subr.bf16.mxu0 0
    %6887 = vmatpush1.bf16.msra.mxu0 %v1799
    %6888 = vmatprep.subr.bf16.mxu0 0
    %6889 = vmatpush1.bf16.msra.mxu0 %v1800
    %6890 = vmatprep.subr.bf16.mxu0 0
    %6891 = vmatpush1.bf16.msra.mxu0 0
    %6892 = vmatprep.subr.bf16.mxu0 0
    %6893 = vmatpush1.bf16.msra.mxu0 0
    %6894 = vmatprep.subr.bf16.mxu0 0
    %6895 = vmatpush1.bf16.msra.mxu0 0
    %6896 = vmatprep.subr.bf16.mxu0 0
    %6897 = vmatpush1.bf16.msra.mxu0 0
    %6898 = vmatprep.subr.bf16.mxu0 0
    %6899 = vmatpush1.bf16.msra.mxu0 0
    %6900 = vmatprep.subr.bf16.mxu0 0
    %6901 = vmatpush1.bf16.msra.mxu0 0
    %6902 = vmatprep.subr.bf16.mxu0 0
    %6903 = vmatpush1.bf16.msra.mxu0 0
    %6904 = vmatprep.subr.bf16.mxu0 0
    %6905 = vmatpush1.bf16.msra.mxu0 0
    %6906 = vmatprep.subr.bf16.mxu0 0
    %6907 = vmatpush1.bf16.msra.mxu0 0
    %6908 = vmatprep.subr.bf16.mxu0 0
    %6909 = vmatpush1.bf16.msra.mxu0 0
    %6910 = vmatprep.subr.bf16.mxu0 0
    %6911 = vmatpush1.bf16.msra.mxu0 0
    %6912 = vmatprep.subr.bf16.mxu0 0
    %6913 = vmatpush1.bf16.msra.mxu0 0
    %6914 = vmatprep.subr.bf16.mxu0 0
    %6915 = vmatpush1.bf16.msra.mxu0 0
    %6916 = vmatprep.subr.bf16.mxu0 0
    %6917 = vmatpush1.bf16.msra.mxu0 0
    %6918 = vmatprep.mubr.bf16.mxu0 0
    %6919 = vmatmul.mubr.bf16.gmra.mrb[0].mxu0 %v6881
    %v6920 = vpop.f32.mrb[0].mxu0
    %v6921 = vadd.f32 0.0, %v6920
    %v6922 = vpop.f32.mrb[0].mxu0
    %v6923 = vpop.f32.mrb[0].mxu0
    %v6924 = vadd.f32 0.0, %v6923
    %v6925 = vpop.f32.mrb[0].mxu0
    %6926 = vmatprep.mubr.bf16.mxu0 0
    %6927 = vmatmul.mubr.bf16.gmra.mrb[0].mxu0 %v6884
    %v6928 = vpop.f32.mrb[0].mxu0
    %v6929 = vadd.f32 0.0, %v6928
    %v6930 = vpop.f32.mrb[0].mxu0
    %v6931 = vpop.f32.mrb[0].mxu0
    %v6932 = vadd.f32 0.0, %v6931
    %v6933 = vpop.f32.mrb[0].mxu0
    %6934 = vdwg.mxu0
    %v6936 = vsel %vm3922, %v5387, 0
    %v6939 = vsel %vm3922, %v5388, 0
    %6941 = vmatprep.subr.bf16.mxu0 0
    %6942 = vmatpush1.bf16.msra.mxu0 %v1801
    %6943 = vmatprep.subr.bf16.mxu0 0
    %6944 = vmatpush1.bf16.msra.mxu0 %v1802
    %6945 = vmatprep.subr.bf16.mxu0 0
    %6946 = vmatpush1.bf16.msra.mxu0 0
    %6947 = vmatprep.subr.bf16.mxu0 0
    %6948 = vmatpush1.bf16.msra.mxu0 0
    %6949 = vmatprep.subr.bf16.mxu0 0
    %6950 = vmatpush1.bf16.msra.mxu0 0
    %6951 = vmatprep.subr.bf16.mxu0 0
    %6952 = vmatpush1.bf16.msra.mxu0 0
    %6953 = vmatprep.subr.bf16.mxu0 0
    %6954 = vmatpush1.bf16.msra.mxu0 0
    %6955 = vmatprep.subr.bf16.mxu0 0
    %6956 = vmatpush1.bf16.msra.mxu0 0
    %6957 = vmatprep.subr.bf16.mxu0 0
    %6958 = vmatpush1.bf16.msra.mxu0 0
    %6959 = vmatprep.subr.bf16.mxu0 0
    %6960 = vmatpush1.bf16.msra.mxu0 0
    %6961 = vmatprep.subr.bf16.mxu0 0
    %6962 = vmatpush1.bf16.msra.mxu0 0
    %6963 = vmatprep.subr.bf16.mxu0 0
    %6964 = vmatpush1.bf16.msra.mxu0 0
    %6965 = vmatprep.subr.bf16.mxu0 0
    %6966 = vmatpush1.bf16.msra.mxu0 0
    %6967 = vmatprep.subr.bf16.mxu0 0
    %6968 = vmatpush1.bf16.msra.mxu0 0
    %6969 = vmatprep.subr.bf16.mxu0 0
    %6970 = vmatpush1.bf16.msra.mxu0 0
    %6971 = vmatprep.subr.bf16.mxu0 0
    %6972 = vmatpush1.bf16.msra.mxu0 0
    %6973 = vmatprep.mubr.bf16.mxu0 0
    %6974 = vmatmul.mubr.bf16.gmra.mrb[0].mxu0 %v6936
    %v6975 = vpop.f32.mrb[0].mxu0
    %v6976 = vadd.f32 0.0, %v6975
    %v6977 = vpop.f32.mrb[0].mxu0
    %v6978 = vpop.f32.mrb[0].mxu0
    %v6979 = vadd.f32 0.0, %v6978
    %v6980 = vpop.f32.mrb[0].mxu0
    %6981 = vmatprep.mubr.bf16.mxu0 0
    %6982 = vmatmul.mubr.bf16.gmra.mrb[0].mxu0 %v6939
    %v6983 = vpop.f32.mrb[0].mxu0
    %v6984 = vadd.f32 0.0, %v6983
    %v6985 = vpop.f32.mrb[0].mxu0
    %v6986 = vpop.f32.mrb[0].mxu0
    %v6987 = vadd.f32 0.0, %v6986
    %v6988 = vpop.f32.mrb[0].mxu0
    %6989 = vdwg.mxu0
    %v6991 = vsel %vm3922, %v5389, 0
    %v6994 = vsel %vm3922, %v5390, 0
    %6996 = vmatprep.subr.bf16.mxu0 0
    %6997 = vmatpush1.bf16.msra.mxu0 %v1803
    %6998 = vmatprep.subr.bf16.mxu0 0
    %6999 = vmatpush1.bf16.msra.mxu0 %v1804
    %7000 = vmatprep.subr.bf16.mxu0 0
    %7001 = vmatpush1.bf16.msra.mxu0 0
    %7002 = vmatprep.subr.bf16.mxu0 0
    %7003 = vmatpush1.bf16.msra.mxu0 0
    %7004 = vmatprep.subr.bf16.mxu0 0
    %7005 = vmatpush1.bf16.msra.mxu0 0
    %7006 = vmatprep.subr.bf16.mxu0 0
    %7007 = vmatpush1.bf16.msra.mxu0 0
    %7008 = vmatprep.subr.bf16.mxu0 0
    %7009 = vmatpush1.bf16.msra.mxu0 0
    %7010 = vmatprep.subr.bf16.mxu0 0
    %7011 = vmatpush1.bf16.msra.mxu0 0
    %7012 = vmatprep.subr.bf16.mxu0 0
    %7013 = vmatpush1.bf16.msra.mxu0 0
    %7014 = vmatprep.subr.bf16.mxu0 0
    %7015 = vmatpush1.bf16.msra.mxu0 0
    %7016 = vmatprep.subr.bf16.mxu0 0
    %7017 = vmatpush1.bf16.msra.mxu0 0
    %7018 = vmatprep.subr.bf16.mxu0 0
    %7019 = vmatpush1.bf16.msra.mxu0 0
    %7020 = vmatprep.subr.bf16.mxu0 0
    %7021 = vmatpush1.bf16.msra.mxu0 0
    %7022 = vmatprep.subr.bf16.mxu0 0
    %7023 = vmatpush1.bf16.msra.mxu0 0
    %7024 = vmatprep.subr.bf16.mxu0 0
    %7025 = vmatpush1.bf16.msra.mxu0 0
    %7026 = vmatprep.subr.bf16.mxu0 0
    %7027 = vmatpush1.bf16.msra.mxu0 0
    %7028 = vmatprep.mubr.bf16.mxu0 0
    %7029 = vmatmul.mubr.bf16.gmra.mrb[0].mxu0 %v6991
    %v7030 = vpop.f32.mrb[0].mxu0
    %v7031 = vadd.f32 0.0, %v7030
    %v7032 = vpop.f32.mrb[0].mxu0
    %v7033 = vpop.f32.mrb[0].mxu0
    %v7034 = vadd.f32 0.0, %v7033
    %v7035 = vpop.f32.mrb[0].mxu0
    %7036 = vmatprep.mubr.bf16.mxu0 0
    %7037 = vmatmul.mubr.bf16.gmra.mrb[0].mxu0 %v6994
    %v7038 = vpop.f32.mrb[0].mxu0
    %v7039 = vadd.f32 0.0, %v7038
    %v7040 = vpop.f32.mrb[0].mxu0
    %v7041 = vpop.f32.mrb[0].mxu0
    %v7042 = vadd.f32 0.0, %v7041
    %v7043 = vpop.f32.mrb[0].mxu0
    %7044 = vdwg.mxu0
    %v7046 = vsel %vm3922, %v5391, 0
    %v7049 = vsel %vm3922, %v5392, 0
    %7051 = vmatprep.subr.bf16.mxu0 0
    %7052 = vmatpush1.bf16.msra.mxu0 %v1805
    %7053 = vmatprep.subr.bf16.mxu0 0
    %7054 = vmatpush1.bf16.msra.mxu0 %v1806
    %7055 = vmatprep.subr.bf16.mxu0 0
    %7056 = vmatpush1.bf16.msra.mxu0 0
    %7057 = vmatprep.subr.bf16.mxu0 0
    %7058 = vmatpush1.bf16.msra.mxu0 0
    %7059 = vmatprep.subr.bf16.mxu0 0
    %7060 = vmatpush1.bf16.msra.mxu0 0
    %7061 = vmatprep.subr.bf16.mxu0 0
    %7062 = vmatpush1.bf16.msra.mxu0 0
    %7063 = vmatprep.subr.bf16.mxu0 0
    %7064 = vmatpush1.bf16.msra.mxu0 0
    %7065 = vmatprep.subr.bf16.mxu0 0
    %7066 = vmatpush1.bf16.msra.mxu0 0
    %7067 = vmatprep.subr.bf16.mxu0 0
    %7068 = vmatpush1.bf16.msra.mxu0 0
    %7069 = vmatprep.subr.bf16.mxu0 0
    %7070 = vmatpush1.bf16.msra.mxu0 0
    %7071 = vmatprep.subr.bf16.mxu0 0
    %7072 = vmatpush1.bf16.msra.mxu0 0
    %7073 = vmatprep.subr.bf16.mxu0 0
    %7074 = vmatpush1.bf16.msra.mxu0 0
    %7075 = vmatprep.subr.bf16.mxu0 0
    %7076 = vmatpush1.bf16.msra.mxu0 0
    %7077 = vmatprep.subr.bf16.mxu0 0
    %7078 = vmatpush1.bf16.msra.mxu0 0
    %7079 = vmatprep.subr.bf16.mxu0 0
    %7080 = vmatpush1.bf16.msra.mxu0 0
    %7081 = vmatprep.subr.bf16.mxu0 0
    %7082 = vmatpush1.bf16.msra.mxu0 0
    %7083 = vmatprep.mubr.bf16.mxu0 0
    %7084 = vmatmul.mubr.bf16.gmra.mrb[0].mxu0 %v7046
    %v7085 = vpop.f32.mrb[0].mxu0
    %v7086 = vadd.f32 0.0, %v7085
    %v7087 = vpop.f32.mrb[0].mxu0
    %v7088 = vpop.f32.mrb[0].mxu0
    %v7089 = vadd.f32 0.0, %v7088
    %v7090 = vpop.f32.mrb[0].mxu0
    %7091 = vmatprep.mubr.bf16.mxu0 0
    %7092 = vmatmul.mubr.bf16.gmra.mrb[0].mxu0 %v7049
    %v7093 = vpop.f32.mrb[0].mxu0
    %v7094 = vadd.f32 0.0, %v7093
    %v7095 = vpop.f32.mrb[0].mxu0
    %v7096 = vpop.f32.mrb[0].mxu0
    %v7097 = vadd.f32 0.0, %v7096
    %v7098 = vpop.f32.mrb[0].mxu0
    %7099 = vdwg.mxu0
    %v7101 = vsel %vm3922, %v5393, 0
    %v7104 = vsel %vm3922, %v5394, 0
    %7106 = vmatprep.subr.bf16.mxu0 0
    %7107 = vmatpush1.bf16.msra.mxu0 %v1807
    %7108 = vmatprep.subr.bf16.mxu0 0
    %7109 = vmatpush1.bf16.msra.mxu0 %v1808
    %7110 = vmatprep.subr.bf16.mxu0 0
    %7111 = vmatpush1.bf16.msra.mxu0 0
    %7112 = vmatprep.subr.bf16.mxu0 0
    %7113 = vmatpush1.bf16.msra.mxu0 0
    %7114 = vmatprep.subr.bf16.mxu0 0
    %7115 = vmatpush1.bf16.msra.mxu0 0
    %7116 = vmatprep.subr.bf16.mxu0 0
    %7117 = vmatpush1.bf16.msra.mxu0 0
    %7118 = vmatprep.subr.bf16.mxu0 0
    %7119 = vmatpush1.bf16.msra.mxu0 0
    %7120 = vmatprep.subr.bf16.mxu0 0
    %7121 = vmatpush1.bf16.msra.mxu0 0
    %7122 = vmatprep.subr.bf16.mxu0 0
    %7123 = vmatpush1.bf16.msra.mxu0 0
    %7124 = vmatprep.subr.bf16.mxu0 0
    %7125 = vmatpush1.bf16.msra.mxu0 0
    %7126 = vmatprep.subr.bf16.mxu0 0
    %7127 = vmatpush1.bf16.msra.mxu0 0
    %7128 = vmatprep.subr.bf16.mxu0 0
    %7129 = vmatpush1.bf16.msra.mxu0 0
    %7130 = vmatprep.subr.bf16.mxu0 0
    %7131 = vmatpush1.bf16.msra.mxu0 0
    %7132 = vmatprep.subr.bf16.mxu0 0
    %7133 = vmatpush1.bf16.msra.mxu0 0
    %7134 = vmatprep.subr.bf16.mxu0 0
    %7135 = vmatpush1.bf16.msra.mxu0 0
    %7136 = vmatprep.subr.bf16.mxu0 0
    %7137 = vmatpush1.bf16.msra.mxu0 0
    %7138 = vmatprep.mubr.bf16.mxu0 0
    %7139 = vmatmul.mubr.bf16.gmra.mrb[0].mxu0 %v7101
    %v7140 = vpop.f32.mrb[0].mxu0
    %v7141 = vadd.f32 0.0, %v7140
    %v7142 = vpop.f32.mrb[0].mxu0
    %v7143 = vpop.f32.mrb[0].mxu0
    %v7144 = vadd.f32 0.0, %v7143
    %v7145 = vpop.f32.mrb[0].mxu0
    %7146 = vmatprep.mubr.bf16.mxu0 0
    %7147 = vmatmul.mubr.bf16.gmra.mrb[0].mxu0 %v7104
    %v7148 = vpop.f32.mrb[0].mxu0
    %v7149 = vadd.f32 0.0, %v7148
    %v7150 = vpop.f32.mrb[0].mxu0
    %v7151 = vpop.f32.mrb[0].mxu0
    %v7152 = vadd.f32 0.0, %v7151
    %v7153 = vpop.f32.mrb[0].mxu0
    %7154 = vdwg.mxu0
    %7171 = vrot.lane.b32.xlu0 %v5656, 8
    %v7172 = vpop.permute.xlu0 %7171
    %7173 = vrot.lane.b32.xlu0 %v5659, 8
    %v7174 = vpop.permute.xlu0 %7173
    %7175 = vrot.lane.b32.xlu0 %v5664, 8
    %v7176 = vpop.permute.xlu0 %7175
    %7177 = vrot.lane.b32.xlu0 %v5667, 8
    %v7178 = vpop.permute.xlu0 %7177
    %7179 = vrot.lane.b32.xlu0 %v5711, 8
    %v7180 = vpop.permute.xlu0 %7179
    %7181 = vrot.lane.b32.xlu0 %v5714, 8
    %v7182 = vpop.permute.xlu0 %7181
    %7183 = vrot.lane.b32.xlu0 %v5719, 8
    %v7184 = vpop.permute.xlu0 %7183
    %7185 = vrot.lane.b32.xlu0 %v5722, 8
    %v7186 = vpop.permute.xlu0 %7185
    %7187 = vrot.lane.b32.xlu0 %v5766, 8
    %v7188 = vpop.permute.xlu0 %7187
    %7189 = vrot.lane.b32.xlu0 %v5769, 8
    %v7190 = vpop.permute.xlu0 %7189
    %7191 = vrot.lane.b32.xlu0 %v5774, 8
    %v7192 = vpop.permute.xlu0 %7191
    %7193 = vrot.lane.b32.xlu0 %v5777, 8
    %v7194 = vpop.permute.xlu0 %7193
    %7195 = vrot.lane.b32.xlu0 %v5821, 8
    %v7196 = vpop.permute.xlu0 %7195
    %7197 = vrot.lane.b32.xlu0 %v5824, 8
    %v7198 = vpop.permute.xlu0 %7197
    %7199 = vrot.lane.b32.xlu0 %v5829, 8
    %v7200 = vpop.permute.xlu0 %7199
    %7201 = vrot.lane.b32.xlu0 %v5832, 8
    %v7202 = vpop.permute.xlu0 %7201
    %7235 = vrot.lane.b32.xlu0 %v5876, 16
    %v7236 = vpop.permute.xlu0 %7235
    %7237 = vrot.lane.b32.xlu0 %v5879, 16
    %v7238 = vpop.permute.xlu0 %7237
    %7239 = vrot.lane.b32.xlu0 %v5884, 16
    %v7240 = vpop.permute.xlu0 %7239
    %7241 = vrot.lane.b32.xlu0 %v5887, 16
    %v7242 = vpop.permute.xlu0 %7241
    %7243 = vrot.lane.b32.xlu0 %v5931, 16
    %v7244 = vpop.permute.xlu0 %7243
    %7245 = vrot.lane.b32.xlu0 %v5934, 16
    %v7246 = vpop.permute.xlu0 %7245
    %7247 = vrot.lane.b32.xlu0 %v5939, 16
    %v7248 = vpop.permute.xlu0 %7247
    %7249 = vrot.lane.b32.xlu0 %v5942, 16
    %v7250 = vpop.permute.xlu0 %7249
    %7251 = vrot.lane.b32.xlu0 %v5986, 16
    %v7252 = vpop.permute.xlu0 %7251
    %7253 = vrot.lane.b32.xlu0 %v5989, 16
    %v7254 = vpop.permute.xlu0 %7253
    %7255 = vrot.lane.b32.xlu0 %v5994, 16
    %v7256 = vpop.permute.xlu0 %7255
    %7257 = vrot.lane.b32.xlu0 %v5997, 16
    %v7258 = vpop.permute.xlu0 %7257
    %7259 = vrot.lane.b32.xlu0 %v6041, 16
    %v7260 = vpop.permute.xlu0 %7259
    %7261 = vrot.lane.b32.xlu0 %v6044, 16
    %v7262 = vpop.permute.xlu0 %7261
    %7263 = vrot.lane.b32.xlu0 %v6049, 16
    %v7264 = vpop.permute.xlu0 %7263
    %7265 = vrot.lane.b32.xlu0 %v6052, 16
    %v7266 = vpop.permute.xlu0 %7265
    %7299 = vrot.lane.b32.xlu0 %v6096, 24
    %v7300 = vpop.permute.xlu0 %7299
    %7301 = vrot.lane.b32.xlu0 %v6099, 24
    %v7302 = vpop.permute.xlu0 %7301
    %7303 = vrot.lane.b32.xlu0 %v6104, 24
    %v7304 = vpop.permute.xlu0 %7303
    %7305 = vrot.lane.b32.xlu0 %v6107, 24
    %v7306 = vpop.permute.xlu0 %7305
    %7307 = vrot.lane.b32.xlu0 %v6151, 24
    %v7308 = vpop.permute.xlu0 %7307
    %7309 = vrot.lane.b32.xlu0 %v6154, 24
    %v7310 = vpop.permute.xlu0 %7309
    %7311 = vrot.lane.b32.xlu0 %v6159, 24
    %v7312 = vpop.permute.xlu0 %7311
    %7313 = vrot.lane.b32.xlu0 %v6162, 24
    %v7314 = vpop.permute.xlu0 %7313
    %7315 = vrot.lane.b32.xlu0 %v6206, 24
    %v7316 = vpop.permute.xlu0 %7315
    %7317 = vrot.lane.b32.xlu0 %v6209, 24
    %v7318 = vpop.permute.xlu0 %7317
    %7319 = vrot.lane.b32.xlu0 %v6214, 24
    %v7320 = vpop.permute.xlu0 %7319
    %7321 = vrot.lane.b32.xlu0 %v6217, 24
    %v7322 = vpop.permute.xlu0 %7321
    %7323 = vrot.lane.b32.xlu0 %v6261, 24
    %v7324 = vpop.permute.xlu0 %7323
    %7325 = vrot.lane.b32.xlu0 %v6264, 24
    %v7326 = vpop.permute.xlu0 %7325
    %7327 = vrot.lane.b32.xlu0 %v6269, 24
    %v7328 = vpop.permute.xlu0 %7327
    %7329 = vrot.lane.b32.xlu0 %v6272, 24
    %v7330 = vpop.permute.xlu0 %7329
    %7363 = vrot.lane.b32.xlu0 %v6316, 32
    %v7364 = vpop.permute.xlu0 %7363
    %7365 = vrot.lane.b32.xlu0 %v6319, 32
    %v7366 = vpop.permute.xlu0 %7365
    %7367 = vrot.lane.b32.xlu0 %v6324, 32
    %v7368 = vpop.permute.xlu0 %7367
    %7369 = vrot.lane.b32.xlu0 %v6327, 32
    %v7370 = vpop.permute.xlu0 %7369
    %7371 = vrot.lane.b32.xlu0 %v6371, 32
    %v7372 = vpop.permute.xlu0 %7371
    %7373 = vrot.lane.b32.xlu0 %v6374, 32
    %v7374 = vpop.permute.xlu0 %7373
    %7375 = vrot.lane.b32.xlu0 %v6379, 32
    %v7376 = vpop.permute.xlu0 %7375
    %7377 = vrot.lane.b32.xlu0 %v6382, 32
    %v7378 = vpop.permute.xlu0 %7377
    %7379 = vrot.lane.b32.xlu0 %v6426, 32
    %v7380 = vpop.permute.xlu0 %7379
    %7381 = vrot.lane.b32.xlu0 %v6429, 32
    %v7382 = vpop.permute.xlu0 %7381
    %7383 = vrot.lane.b32.xlu0 %v6434, 32
    %v7384 = vpop.permute.xlu0 %7383
    %7385 = vrot.lane.b32.xlu0 %v6437, 32
    %v7386 = vpop.permute.xlu0 %7385
    %7387 = vrot.lane.b32.xlu0 %v6481, 32
    %v7388 = vpop.permute.xlu0 %7387
    %7389 = vrot.lane.b32.xlu0 %v6484, 32
    %v7390 = vpop.permute.xlu0 %7389
    %7391 = vrot.lane.b32.xlu0 %v6489, 32
    %v7392 = vpop.permute.xlu0 %7391
    %7393 = vrot.lane.b32.xlu0 %v6492, 32
    %v7394 = vpop.permute.xlu0 %7393
    %7427 = vrot.lane.b32.xlu0 %v6536, 40
    %v7428 = vpop.permute.xlu0 %7427
    %7429 = vrot.lane.b32.xlu0 %v6539, 40
    %v7430 = vpop.permute.xlu0 %7429
    %7431 = vrot.lane.b32.xlu0 %v6544, 40
    %v7432 = vpop.permute.xlu0 %7431
    %7433 = vrot.lane.b32.xlu0 %v6547, 40
    %v7434 = vpop.permute.xlu0 %7433
    %7435 = vrot.lane.b32.xlu0 %v6591, 40
    %v7436 = vpop.permute.xlu0 %7435
    %7437 = vrot.lane.b32.xlu0 %v6594, 40
    %v7438 = vpop.permute.xlu0 %7437
    %7439 = vrot.lane.b32.xlu0 %v6599, 40
    %v7440 = vpop.permute.xlu0 %7439
    %7441 = vrot.lane.b32.xlu0 %v6602, 40
    %v7442 = vpop.permute.xlu0 %7441
    %7443 = vrot.lane.b32.xlu0 %v6646, 40
    %v7444 = vpop.permute.xlu0 %7443
    %7445 = vrot.lane.b32.xlu0 %v6649, 40
    %v7446 = vpop.permute.xlu0 %7445
    %7447 = vrot.lane.b32.xlu0 %v6654, 40
    %v7448 = vpop.permute.xlu0 %7447
    %7449 = vrot.lane.b32.xlu0 %v6657, 40
    %v7450 = vpop.permute.xlu0 %7449
    %7451 = vrot.lane.b32.xlu0 %v6701, 40
    %v7452 = vpop.permute.xlu0 %7451
    %7453 = vrot.lane.b32.xlu0 %v6704, 40
    %v7454 = vpop.permute.xlu0 %7453
    %7455 = vrot.lane.b32.xlu0 %v6709, 40
    %v7456 = vpop.permute.xlu0 %7455
    %7457 = vrot.lane.b32.xlu0 %v6712, 40
    %v7458 = vpop.permute.xlu0 %7457
    %7491 = vrot.lane.b32.xlu0 %v6756, 48
    %v7492 = vpop.permute.xlu0 %7491
    %7493 = vrot.lane.b32.xlu0 %v6759, 48
    %v7494 = vpop.permute.xlu0 %7493
    %7495 = vrot.lane.b32.xlu0 %v6764, 48
    %v7496 = vpop.permute.xlu0 %7495
    %7497 = vrot.lane.b32.xlu0 %v6767, 48
    %v7498 = vpop.permute.xlu0 %7497
    %7499 = vrot.lane.b32.xlu0 %v6811, 48
    %v7500 = vpop.permute.xlu0 %7499
    %7501 = vrot.lane.b32.xlu0 %v6814, 48
    %v7502 = vpop.permute.xlu0 %7501
    %7503 = vrot.lane.b32.xlu0 %v6819, 48
    %v7504 = vpop.permute.xlu0 %7503
    %7505 = vrot.lane.b32.xlu0 %v6822, 48
    %v7506 = vpop.permute.xlu0 %7505
    %7507 = vrot.lane.b32.xlu0 %v6866, 48
    %v7508 = vpop.permute.xlu0 %7507
    %7509 = vrot.lane.b32.xlu0 %v6869, 48
    %v7510 = vpop.permute.xlu0 %7509
    %7511 = vrot.lane.b32.xlu0 %v6874, 48
    %v7512 = vpop.permute.xlu0 %7511
    %7513 = vrot.lane.b32.xlu0 %v6877, 48
    %v7514 = vpop.permute.xlu0 %7513
    %7515 = vrot.lane.b32.xlu0 %v6921, 48
    %v7516 = vpop.permute.xlu0 %7515
    %7517 = vrot.lane.b32.xlu0 %v6924, 48
    %v7518 = vpop.permute.xlu0 %7517
    %7519 = vrot.lane.b32.xlu0 %v6929, 48
    %v7520 = vpop.permute.xlu0 %7519
    %7521 = vrot.lane.b32.xlu0 %v6932, 48
    %v7522 = vpop.permute.xlu0 %7521
    %7555 = vrot.lane.b32.xlu0 %v6976, 56
    %v7556 = vpop.permute.xlu0 %7555
    %7557 = vrot.lane.b32.xlu0 %v6979, 56
    %v7558 = vpop.permute.xlu0 %7557
    %7559 = vrot.lane.b32.xlu0 %v6984, 56
    %v7560 = vpop.permute.xlu0 %7559
    %7561 = vrot.lane.b32.xlu0 %v6987, 56
    %v7562 = vpop.permute.xlu0 %7561
    %7563 = vrot.lane.b32.xlu0 %v7031, 56
    %v7564 = vpop.permute.xlu0 %7563
    %7565 = vrot.lane.b32.xlu0 %v7034, 56
    %v7566 = vpop.permute.xlu0 %7565
    %7567 = vrot.lane.b32.xlu0 %v7039, 56
    %v7568 = vpop.permute.xlu0 %7567
    %7569 = vrot.lane.b32.xlu0 %v7042, 56
    %v7570 = vpop.permute.xlu0 %7569
    %7571 = vrot.lane.b32.xlu0 %v7086, 56
    %v7572 = vpop.permute.xlu0 %7571
    %7573 = vrot.lane.b32.xlu0 %v7089, 56
    %v7574 = vpop.permute.xlu0 %7573
    %7575 = vrot.lane.b32.xlu0 %v7094, 56
    %v7576 = vpop.permute.xlu0 %7575
    %7577 = vrot.lane.b32.xlu0 %v7097, 56
    %v7578 = vpop.permute.xlu0 %7577
    %7579 = vrot.lane.b32.xlu0 %v7141, 56
    %v7580 = vpop.permute.xlu0 %7579
    %7581 = vrot.lane.b32.xlu0 %v7144, 56
    %v7582 = vpop.permute.xlu0 %7581
    %7583 = vrot.lane.b32.xlu0 %v7149, 56
    %v7584 = vpop.permute.xlu0 %7583
    %7585 = vrot.lane.b32.xlu0 %v7152, 56
    %v7586 = vpop.permute.xlu0 %7585
    %v7603 = vsel %vm1809, %v5436, %v7172
    %v7604 = vsel %vm1809, %v5439, %v7174
    %v7605 = vsel %vm1809, %v5444, %v7176
    %v7606 = vsel %vm1809, %v5447, %v7178
    %v7607 = vsel %vm1809, %v5491, %v7180
    %v7608 = vsel %vm1809, %v5494, %v7182
    %v7609 = vsel %vm1809, %v5499, %v7184
    %v7610 = vsel %vm1809, %v5502, %v7186
    %v7611 = vsel %vm1809, %v5546, %v7188
    %v7612 = vsel %vm1809, %v5549, %v7190
    %v7613 = vsel %vm1809, %v5554, %v7192
    %v7614 = vsel %vm1809, %v5557, %v7194
    %v7615 = vsel %vm1809, %v5601, %v7196
    %v7616 = vsel %vm1809, %v5604, %v7198
    %v7617 = vsel %vm1809, %v5609, %v7200
    %v7618 = vsel %vm1809, %v5612, %v7202
    %vm7619 = vcmask 130048
    %v7620 = vsel %vm7619, %v7603, %v7236
    %v7621 = vsel %vm7619, %v7604, %v7238
    %v7622 = vsel %vm7619, %v7605, %v7240
    %v7623 = vsel %vm7619, %v7606, %v7242
    %v7624 = vsel %vm7619, %v7607, %v7244
    %v7625 = vsel %vm7619, %v7608, %v7246
    %v7626 = vsel %vm7619, %v7609, %v7248
    %v7627 = vsel %vm7619, %v7610, %v7250
    %v7628 = vsel %vm7619, %v7611, %v7252
    %v7629 = vsel %vm7619, %v7612, %v7254
    %v7630 = vsel %vm7619, %v7613, %v7256
    %v7631 = vsel %vm7619, %v7614, %v7258
    %v7632 = vsel %vm7619, %v7615, %v7260
    %v7633 = vsel %vm7619, %v7616, %v7262
    %v7634 = vsel %vm7619, %v7617, %v7264
    %v7635 = vsel %vm7619, %v7618, %v7266
    %vm7636 = vcmask 195584
    %v7637 = vsel %vm7636, %v7620, %v7300
    %v7638 = vsel %vm7636, %v7621, %v7302
    %v7639 = vsel %vm7636, %v7622, %v7304
    %v7640 = vsel %vm7636, %v7623, %v7306
    %v7641 = vsel %vm7636, %v7624, %v7308
    %v7642 = vsel %vm7636, %v7625, %v7310
    %v7643 = vsel %vm7636, %v7626, %v7312
    %v7644 = vsel %vm7636, %v7627, %v7314
    %v7645 = vsel %vm7636, %v7628, %v7316
    %v7646 = vsel %vm7636, %v7629, %v7318
    %v7647 = vsel %vm7636, %v7630, %v7320
    %v7648 = vsel %vm7636, %v7631, %v7322
    %v7649 = vsel %vm7636, %v7632, %v7324
    %v7650 = vsel %vm7636, %v7633, %v7326
    %v7651 = vsel %vm7636, %v7634, %v7328
    %v7652 = vsel %vm7636, %v7635, %v7330
    %v7653 = vsel %vm3922, %v7637, %v7364
    %v7654 = vsel %vm3922, %v7638, %v7366
    %v7655 = vsel %vm3922, %v7639, %v7368
    %v7656 = vsel %vm3922, %v7640, %v7370
    %v7657 = vsel %vm3922, %v7641, %v7372
    %v7658 = vsel %vm3922, %v7642, %v7374
    %v7659 = vsel %vm3922, %v7643, %v7376
    %v7660 = vsel %vm3922, %v7644, %v7378
    %v7661 = vsel %vm3922, %v7645, %v7380
    %v7662 = vsel %vm3922, %v7646, %v7382
    %v7663 = vsel %vm3922, %v7647, %v7384
    %v7664 = vsel %vm3922, %v7648, %v7386
    %v7665 = vsel %vm3922, %v7649, %v7388
    %v7666 = vsel %vm3922, %v7650, %v7390
    %v7667 = vsel %vm3922, %v7651, %v7392
    %v7668 = vsel %vm3922, %v7652, %v7394
    %vm7669 = vcmask 326656
    %v7670 = vsel %vm7669, %v7653, %v7428
    %v7671 = vsel %vm7669, %v7654, %v7430
    %v7672 = vsel %vm7669, %v7655, %v7432
    %v7673 = vsel %vm7669, %v7656, %v7434
    %v7674 = vsel %vm7669, %v7657, %v7436
    %v7675 = vsel %vm7669, %v7658, %v7438
    %v7676 = vsel %vm7669, %v7659, %v7440
    %v7677 = vsel %vm7669, %v7660, %v7442
    %v7678 = vsel %vm7669, %v7661, %v7444
    %v7679 = vsel %vm7669, %v7662, %v7446
    %v7680 = vsel %vm7669, %v7663, %v7448
    %v7681 = vsel %vm7669, %v7664, %v7450
    %v7682 = vsel %vm7669, %v7665, %v7452
    %v7683 = vsel %vm7669, %v7666, %v7454
    %v7684 = vsel %vm7669, %v7667, %v7456
    %v7685 = vsel %vm7669, %v7668, %v7458
    %vm7686 = vcmask 392192
    %v7687 = vsel %vm7686, %v7670, %v7492
    %v7688 = vsel %vm7686, %v7671, %v7494
    %v7689 = vsel %vm7686, %v7672, %v7496
    %v7690 = vsel %vm7686, %v7673, %v7498
    %v7691 = vsel %vm7686, %v7674, %v7500
    %v7692 = vsel %vm7686, %v7675, %v7502
    %v7693 = vsel %vm7686, %v7676, %v7504
    %v7694 = vsel %vm7686, %v7677, %v7506
    %v7695 = vsel %vm7686, %v7678, %v7508
    %v7696 = vsel %vm7686, %v7679, %v7510
    %v7697 = vsel %vm7686, %v7680, %v7512
    %v7698 = vsel %vm7686, %v7681, %v7514
    %v7699 = vsel %vm7686, %v7682, %v7516
    %v7700 = vsel %vm7686, %v7683, %v7518
    %v7701 = vsel %vm7686, %v7684, %v7520
    %v7702 = vsel %vm7686, %v7685, %v7522
    %vm7703 = vcmask 457728
    %v7704 = vsel %vm7703, %v7687, %v7556
    %v7705 = vsel %vm7703, %v7688, %v7558
    %v7706 = vsel %vm7703, %v7689, %v7560
    %v7707 = vsel %vm7703, %v7690, %v7562
    %v7708 = vsel %vm7703, %v7691, %v7564
    %v7709 = vsel %vm7703, %v7692, %v7566
    %v7710 = vsel %vm7703, %v7693, %v7568
    %v7711 = vsel %vm7703, %v7694, %v7570
    %v7712 = vsel %vm7703, %v7695, %v7572
    %v7713 = vsel %vm7703, %v7696, %v7574
    %v7714 = vsel %vm7703, %v7697, %v7576
    %v7715 = vsel %vm7703, %v7698, %v7578
    %v7716 = vsel %vm7703, %v7699, %v7580
    %v7717 = vsel %vm7703, %v7700, %v7582
    %v7718 = vsel %vm7703, %v7701, %v7584
    %v7719 = vsel %vm7703, %v7702, %v7586
    %v7720 = vpack.c.bf16 %v7705, %v7704
    %v7721 = vpack.c.bf16 %v7707, %v7706
    %v7722 = vpack.c.bf16 %v7709, %v7708
    %v7723 = vpack.c.bf16 %v7711, %v7710
    %v7724 = vpack.c.bf16 %v7713, %v7712
    %v7725 = vpack.c.bf16 %v7715, %v7714
    %v7726 = vpack.c.bf16 %v7717, %v7716
    %v7727 = vpack.c.bf16 %v7719, %v7718
    %v7728 = vld [vmem:[#allocation9] sm:$0xf]
    %v7729 = vld [vmem:[#allocation9 + $0x4] sm:$0xf]
    %v7730 = vld [vmem:[#allocation9 + $0x8] sm:$0xf]
    %v7731 = vld [vmem:[#allocation9 + $0xc] sm:$0xf]
    %v7732 = vld [vmem:[#allocation9 + $0x10] sm:$0xf]
    %v7733 = vld [vmem:[#allocation9 + $0x14] sm:$0xf]
    %v7734 = vld [vmem:[#allocation9 + $0x18] sm:$0xf]
    %v7735 = vld [vmem:[#allocation9 + $0x1c] sm:$0xf]
    %v7736 = vld [vmem:[%s5] sm:$0x1]
    %v7738 = vlaneseq
    %v7739 = vshrl.u32 %v7738, 7
    %v7740 = vsub.s32 0, %v7739
    %v7741 = vrot.slane %v7736, %v7740
    %v7751 = vunpack.c.l.b16 %v7728
    %v7752 = vunpack.c.l.b16 %v7729
    %v7753 = vunpack.c.l.b16 %v7730
    %v7754 = vunpack.c.l.b16 %v7731
    %v7755 = vunpack.c.l.b16 %v7732
    %v7756 = vunpack.c.l.b16 %v7733
    %v7757 = vunpack.c.l.b16 %v7734
    %v7758 = vunpack.c.l.b16 %v7735
    %v7759 = vpack.c.b16 %v7752, %v7751
    %v7760 = vpack.c.b16 %v7754, %v7753
    %v7761 = vpack.c.b16 %v7756, %v7755
    %v7762 = vpack.c.b16 %v7758, %v7757
    %v7768 = vsel %vm165, %v7720, 0
    %v7771 = vsel %vm165, %v7721, 0
    %v7774 = vsel %vm165, %v7722, 0
    %v7777 = vsel %vm165, %v7723, 0
    %v7780 = vsel %vm165, %v7724, 0
    %v7783 = vsel %vm165, %v7725, 0
    %v7786 = vsel %vm165, %v7726, 0
    %v7789 = vsel %vm165, %v7727, 0
    %7791 = vmatprep.subr.bf16.mxu0 0
    %7792 = vmatpush1.bf16.msra.mxu0 %v7759
    %7793 = vmatprep.subr.bf16.mxu0 0
    %7794 = vmatpush1.bf16.msra.mxu0 %v7760
    %7795 = vmatprep.subr.bf16.mxu0 0
    %7796 = vmatpush1.bf16.msra.mxu0 %v7761
    %7797 = vmatprep.subr.bf16.mxu0 0
    %7798 = vmatpush1.bf16.msra.mxu0 %v7762
    %7799 = vmatprep.subr.bf16.mxu0 0
    %7800 = vmatpush1.bf16.msra.mxu0 0
    %7801 = vmatprep.subr.bf16.mxu0 0
    %7802 = vmatpush1.bf16.msra.mxu0 0
    %7803 = vmatprep.subr.bf16.mxu0 0
    %7804 = vmatpush1.bf16.msra.mxu0 0
    %7805 = vmatprep.subr.bf16.mxu0 0
    %7806 = vmatpush1.bf16.msra.mxu0 0
    %7807 = vmatprep.subr.bf16.mxu0 0
    %7808 = vmatpush1.bf16.msra.mxu0 0
    %7809 = vmatprep.subr.bf16.mxu0 0
    %7810 = vmatpush1.bf16.msra.mxu0 0
    %7811 = vmatprep.subr.bf16.mxu0 0
    %7812 = vmatpush1.bf16.msra.mxu0 0
    %7813 = vmatprep.subr.bf16.mxu0 0
    %7814 = vmatpush1.bf16.msra.mxu0 0
    %7815 = vmatprep.subr.bf16.mxu0 0
    %7816 = vmatpush1.bf16.msra.mxu0 0
    %7817 = vmatprep.subr.bf16.mxu0 0
    %7818 = vmatpush1.bf16.msra.mxu0 0
    %7819 = vmatprep.subr.bf16.mxu0 0
    %7820 = vmatpush1.bf16.msra.mxu0 0
    %7821 = vmatprep.subr.bf16.mxu0 0
    %7822 = vmatpush1.bf16.msra.mxu0 0
    %7823 = vmatprep.mubr.bf16.mxu0 0
    %7824 = vmatmul.mubr.bf16.gmra.mrb[0].mxu0 %v7768
    %v7825 = vpop.f32.mrb[0].mxu0
    %v7826 = vadd.f32 %v7741, %v7825
    %v7827 = vpop.f32.mrb[0].mxu0
    %v7828 = vpop.f32.mrb[0].mxu0
    %v7829 = vadd.f32 %v7741, %v7828
    %v7830 = vpop.f32.mrb[0].mxu0
    %7831 = vmatprep.mubr.bf16.mxu0 0
    %7832 = vmatmul.mubr.bf16.gmra.mrb[0].mxu0 %v7771
    %v7833 = vpop.f32.mrb[0].mxu0
    %v7834 = vadd.f32 %v7741, %v7833
    %v7835 = vpop.f32.mrb[0].mxu0
    %v7836 = vpop.f32.mrb[0].mxu0
    %v7837 = vpop.f32.mrb[0].mxu0
    %7838 = vmatprep.mubr.bf16.mxu0 0
    %7839 = vmatmul.mubr.bf16.gmra.mrb[0].mxu0 %v7774
    %v7840 = vpop.f32.mrb[0].mxu0
    %v7841 = vadd.f32 %v7741, %v7840
    %v7842 = vpop.f32.mrb[0].mxu0
    %v7843 = vpop.f32.mrb[0].mxu0
    %v7844 = vadd.f32 %v7741, %v7843
    %v7845 = vpop.f32.mrb[0].mxu0
    %7846 = vmatprep.mubr.bf16.mxu0 0
    %7847 = vmatmul.mubr.bf16.gmra.mrb[0].mxu0 %v7777
    %v7848 = vpop.f32.mrb[0].mxu0
    %v7849 = vadd.f32 %v7741, %v7848
    %v7850 = vpop.f32.mrb[0].mxu0
    %v7851 = vpop.f32.mrb[0].mxu0
    %v7852 = vpop.f32.mrb[0].mxu0
    %7853 = vmatprep.mubr.bf16.mxu0 0
    %7854 = vmatmul.mubr.bf16.gmra.mrb[0].mxu0 %v7780
    %v7855 = vpop.f32.mrb[0].mxu0
    %v7856 = vadd.f32 %v7741, %v7855
    %v7857 = vpop.f32.mrb[0].mxu0
    %v7858 = vpop.f32.mrb[0].mxu0
    %v7859 = vadd.f32 %v7741, %v7858
    %v7860 = vpop.f32.mrb[0].mxu0
    %7861 = vmatprep.mubr.bf16.mxu0 0
    %7862 = vmatmul.mubr.bf16.gmra.mrb[0].mxu0 %v7783
    %v7863 = vpop.f32.mrb[0].mxu0
    %v7864 = vadd.f32 %v7741, %v7863
    %v7865 = vpop.f32.mrb[0].mxu0
    %v7866 = vpop.f32.mrb[0].mxu0
    %v7867 = vpop.f32.mrb[0].mxu0
    %7868 = vmatprep.mubr.bf16.mxu0 0
    %7869 = vmatmul.mubr.bf16.gmra.mrb[0].mxu0 %v7786
    %v7870 = vpop.f32.mrb[0].mxu0
    %v7871 = vadd.f32 %v7741, %v7870
    %v7872 = vpop.f32.mrb[0].mxu0
    %v7873 = vpop.f32.mrb[0].mxu0
    %v7874 = vadd.f32 %v7741, %v7873
    %v7875 = vpop.f32.mrb[0].mxu0
    %7876 = vmatprep.mubr.bf16.mxu0 0
    %7877 = vmatmul.mubr.bf16.gmra.mrb[0].mxu0 %v7789
    %v7878 = vpop.f32.mrb[0].mxu0
    %v7879 = vadd.f32 %v7741, %v7878
    %v7880 = vpop.f32.mrb[0].mxu0
    %v7881 = vpop.f32.mrb[0].mxu0
    %v7882 = vpop.f32.mrb[0].mxu0
    %7883 = vdwg.mxu0
    %7884 = vst.msk [vmem:[%s7] sm:$0xff] %vm165, %v7826
    %7885 = vst.msk [vmem:[%s7 + $0x8] sm:$0xff] %vm165, %v7829
    %vm7886 = vcmask 516096
    %7887 = vst.msk [vmem:[%s7 + $0x10] sm:$0x1] %vm7886, %v7834
    %7888 = vst.msk [vmem:[%s7 + $0x18] sm:$0xff] %vm165, %v7841
    %7889 = vst.msk [vmem:[%s7 + $0x20] sm:$0xff] %vm165, %v7844
    %7890 = vst.msk [vmem:[%s7 + $0x28] sm:$0x1] %vm7886, %v7849
    %7891 = vst.msk [vmem:[%s7 + $0x30] sm:$0xff] %vm165, %v7856
    %7892 = vst.msk [vmem:[%s7 + $0x38] sm:$0xff] %vm165, %v7859
    %7893 = vst.msk [vmem:[%s7 + $0x40] sm:$0x1] %vm7886, %v7864
    %7894 = vst.msk [vmem:[%s7 + $0x48] sm:$0xff] %vm165, %v7871
    %7895 = vst.msk [vmem:[%s7 + $0x50] sm:$0xff] %vm165, %v7874
    %7896 = vst.msk [vmem:[%s7 + $0x58] sm:$0x1] %vm7886, %v7879
    // Predicated region
    $region54: #{tpu_custom_call.1} parent=1 // pred_check
      _
    $region55: #{tpu_custom_call.1} parent=1 // pred_check_branch
      %7898 = sbr.rel (0) target = $region57
    $region56: #{tpu_custom_call.1} parent=1 // pred_region
      _
    $region57: #{tpu_custom_call.1} parent=1 // pred_fallthru
      _
    // Predicated region
    $region58: #{tpu_custom_call.1} parent=1 // pred_check
      _
    $region59: #{tpu_custom_call.1} parent=1 // pred_check_branch
      %7900 = sbr.rel (0) target = $region61
    $region60: #{tpu_custom_call.1} parent=1 // pred_region
      _
    $region61: #{tpu_custom_call.1} parent=1 // pred_fallthru
      _
    %7901 = vsyncpa [#allocation3], 1
    %7902 = vsyncpa [#allocation5], 1
    %7903 = vsyncpa [#allocation8], 1
    %7904 = vsyncpa [#allocation11], 1

</llo_original>
